<compile_context>
chip_gen: v7x
topology: tpu7x:2x2x1
jax: 0.10.0
libtpu: 0.0.40
codegen_flags: <defaults>
</compile_context>

<pallas_src>
import functools
import math

import jax
import jax.numpy as jnp
from jax.experimental import pallas as pl
from jax.experimental.pallas import tpu as pltpu


def _mha_kernel(x_ref, w_in_t_ref, b_in_ref, w_out_g_ref, b_out_ref, o_ref, *,
                heads, b_blk):
    """Multi-head self-attention for one block of `b_blk` batch elements.

    x_ref:       (b_blk, L, E)        bf16  (pre-cast in wrapper)
    w_in_t_ref:  (E, 3E)              bf16  [Wq^T | Wk^T | Wv^T], 1/sqrt(hd) folded into Wq^T
    b_in_ref:    (1, 3E)              f32   (1/sqrt(hd) folded into bq)
    w_out_g_ref: (b_blk*heads, hd, E) bf16  W_out^T split per head, tiled over the batch block
    b_out_ref:   (1, E)               f32
    o_ref:       (b_blk, L*E)         f32   lane-dense output slab
    """
    _, L, E = x_ref.shape
    hd = E // heads
    g = b_blk * heads

    # --- In-projection: one fat matmul with M = b_blk*L rows, f32 accumulate. --
    x2 = x_ref[...].reshape(b_blk * L, E)                       # leading-dim merge (free)
    qkv = jnp.dot(x2, w_in_t_ref[...],
                  preferred_element_type=jnp.float32) + b_in_ref[...]   # (b_blk*L, 3E) f32
    qkv = qkv.astype(jnp.bfloat16)

    # --- Single fused head-split relayout for q, k, v together. ---------------
    # PyTorch packs in_proj rows as (which, head, d) and E == heads*hd, so the
    # transposed weight's column j == (which*heads + h)*hd + d.
    qkv = qkv.reshape(b_blk, L, 3 * heads, hd)
    qkv = jnp.transpose(qkv, (0, 2, 1, 3))                      # (b_blk, 3*heads, L, hd)
    q = qkv[:, 0 * heads:1 * heads].reshape(g, L, hd)           # leading-dim slices: cheap
    k = qkv[:, 1 * heads:2 * heads].reshape(g, L, hd)
    v = qkv[:, 2 * heads:3 * heads].reshape(g, L, hd)

    # --- Scores + softmax (elementwise math strictly in f32: v5e-safe). -------
    s = jnp.einsum('gqd,gkd->gqk', q, k,
                   preferred_element_type=jnp.float32)          # (g, L, L)
    s = s - jnp.max(s, axis=-1, keepdims=True)
    p = jnp.exp(s)
    # approx reciprocal on the EUP slot (~free); rows sum to 1 +- ~1e-3.
    p = p * pl.reciprocal(jnp.sum(p, axis=-1, keepdims=True), approx=True)

    o = jnp.einsum('gqk,gkd->gqd', p.astype(jnp.bfloat16), v,
                   preferred_element_type=jnp.float32)          # (g, L, hd) f32

    # --- Out-projection with no head-merge transpose: per-head partial
    #     projections batched over g, then a sum over the (leading) head axis.
    t = jnp.einsum('gqd,gde->gqe', o.astype(jnp.bfloat16), w_out_g_ref[...],
                   preferred_element_type=jnp.float32)          # (g, L, E)
    out = t.reshape(b_blk, heads, L, E).sum(axis=1) + b_out_ref[...]   # (b_blk, L, E)

    # --- Lane-dense store: last dim L*E (2048 here) -> unmasked vector stores.
    o_ref[...] = out.reshape(b_blk, L * E).astype(o_ref.dtype)


def multi_head_attention_forward(x_nchw, w_in, b_in, w_out, b_out, *, heads):
    B, C, H, W = x_nchw.shape
    L, E = H * W, C
    assert E % heads == 0, "embed dim must be divisible by heads"
    hd = E // heads
    scale = 1.0 / math.sqrt(hd)

    # Batch-block size: fatten the matmul M dim toward 128-256 rows while
    # keeping the per-step block comfortably inside VMEM.
    b_blk = 1
    for d in (8, 4, 2):
        if B % d == 0 and d * L <= 512:
            b_blk = d
            break
    g = b_blk * heads

    # Fold the 1/sqrt(hd) query scale into Wq / bq (rows 0..E of the packed
    # in-projection), pre-transpose once, and cast matmul weights to bf16
    # (accumulation stays f32 inside the kernel).
    row_scale = jnp.concatenate([jnp.full((E,), scale, jnp.float32),
                                 jnp.ones((2 * E,), jnp.float32)])
    w_in_t = jnp.transpose(w_in * row_scale[:, None]).astype(jnp.bfloat16)   # (E, 3E)
    b_in_s = (b_in * row_scale).reshape(1, 3 * E).astype(jnp.float32)

    # W_out^T reshaped per head to (heads, hd, E) and tiled over the batch block
    # so the kernel consumes it as a (g, hd, E) batched contraction (no in-kernel
    # head-merge transpose).
    w_out_h = jnp.transpose(w_out).reshape(heads, hd, E).astype(jnp.bfloat16)
    w_out_g = jnp.tile(w_out_h, (b_blk, 1, 1))                               # (g, hd, E)
    b_out_r = b_out.reshape(1, E).astype(jnp.float32)

    # x.view(B, C, -1).permute(2, 0, 1) -> (L, B, E); we keep (B, L, E) (attention
    # is independent per batch element) and pre-cast to bf16 so the only per-step
    # streamed tensor moves half the HBM bytes.
    x_seq = jnp.transpose(x_nchw.reshape(B, C, L), (0, 2, 1)).astype(jnp.bfloat16)

    out_flat = pl.pallas_call(
        functools.partial(_mha_kernel, heads=heads, b_blk=b_blk),
        out_shape=jax.ShapeDtypeStruct((B, L * E), jnp.float32),
        grid=(B // b_blk,),
        in_specs=[
            pl.BlockSpec((b_blk, L, E), lambda b: (b, 0, 0)),    # x (bf16)
            pl.BlockSpec((E, 3 * E), lambda b: (0, 0)),          # W_in^T (scaled, bf16)
            pl.BlockSpec((1, 3 * E), lambda b: (0, 0)),          # b_in  (scaled, f32)
            pl.BlockSpec((g, hd, E), lambda b: (0, 0, 0)),       # W_out^T per head (bf16)
            pl.BlockSpec((1, E), lambda b: (0, 0)),              # b_out (f32)
        ],
        out_specs=pl.BlockSpec((b_blk, L * E), lambda b: (b, 0)),
        compiler_params=pltpu.CompilerParams(
            dimension_semantics=("parallel",),
            vmem_limit_bytes=32 * 1024 * 1024),
    )(x_seq, w_in_t, b_in_s, w_out_g, b_out_r)

    # Undo the lane-dense flattening, then mirror the module's
    # permute(1, 2, 0).view(B, C, int(sqrt(L)), -1) exactly (equals (B, C, H, W)
    # whenever H == W; for H != W the module itself scrambles the spatial layout).
    out_seq = out_flat.reshape(B, L, E)
    out = jnp.transpose(out_seq, (0, 2, 1))                                  # (B, E, L)
    side = int(math.isqrt(L))
    return out.reshape(B, C, side, L // side)


def _reference_jax(x_nchw, w_in, b_in, w_out, b_out, *, heads):
    """Pure-JAX (f32) replica of nn.MultiheadAttention self-attention (dropout=0)."""
    B, C, H, W = x_nchw.shape
    L, E = H * W, C
    hd = E // heads
    x = jnp.transpose(x_nchw.reshape(B, C, L), (0, 2, 1))             # (B, L, E)
    qkv = jnp.einsum('ble,fe->blf', x, w_in) + b_in                    # (B, L, 3E)
    q, k, v = jnp.split(qkv, 3, axis=-1)
    q = q * (hd ** -0.5)
    q = q.reshape(B, L, heads, hd).transpose(0, 2, 1, 3)
    k = k.reshape(B, L, heads, hd).transpose(0, 2, 1, 3)
    v = v.reshape(B, L, heads, hd).transpose(0, 2, 1, 3)
    s = jnp.einsum('bhqd,bhkd->bhqk', q, k)
    p = jax.nn.softmax(s, axis=-1)
    o = jnp.einsum('bhqk,bhkd->bhqd', p, v)
    o = o.transpose(0, 2, 1, 3).reshape(B, L, E)
    o = jnp.einsum('ble,fe->blf', o, w_out) + b_out
    o = jnp.transpose(o, (0, 2, 1))
    return o.reshape(B, C, int(math.isqrt(L)), -1)


if __name__ == "__main__":
    # Small shapes: batch=2, channels=32 (embed dim), spatial 8x8 -> seq len 64.
    B, C, H, W = 2, 32, 8, 8
    heads = 4

    key = jax.random.PRNGKey(0)
    kx, k1, k2, k3, k4 = jax.random.split(key, 5)

    x = jax.random.normal(kx, (B, C, H, W), dtype=jnp.float32)

    # Deterministic parameter init (shapes match nn.MultiheadAttention(C, heads)).
    w_in = jax.random.normal(k1, (3 * C, C), dtype=jnp.float32) * (1.0 / C ** 0.5)
    b_in = jax.random.normal(k2, (3 * C,), dtype=jnp.float32) * 0.02
    w_out = jax.random.normal(k3, (C, C), dtype=jnp.float32) * (1.0 / C ** 0.5)
    b_out = jax.random.normal(k4, (C,), dtype=jnp.float32) * 0.02

    y = multi_head_attention_forward(x, w_in, b_in, w_out, b_out, heads=heads)
    y = jax.block_until_ready(y)

    y_ref = _reference_jax(x, w_in, b_in, w_out, b_out, heads=heads)
    assert y.shape == (B, C, H, W), y.shape
    # Tolerance loosened because matmul operands are bf16 (f32 accumulate) and
    # the softmax denominator uses the approximate EUP reciprocal; structural
    # errors would show up as O(1) mismatches.
    assert jnp.allclose(y, y_ref, atol=1e-1, rtol=1e-1), "mismatch vs JAX reference"

    print("KERNEL_OK")
</pallas_src>

<mosaic_0001>
module attributes {stable_mosaic.version = 11 : i64} {
  func.func @_mha_kernel(%arg0: i32, %arg1: memref<2x64x32xbf16, #tpu.memory_space<vmem>>, %arg2: memref<32x96xbf16, #tpu.memory_space<vmem>>, %arg3: memref<1x96xf32, #tpu.memory_space<vmem>>, %arg4: memref<8x8x32xbf16, #tpu.memory_space<vmem>>, %arg5: memref<1x32xf32, #tpu.memory_space<vmem>>, %arg6: memref<2x2048xf32, #tpu.memory_space<vmem>>) attributes {dimension_semantics = [#tpu.dimension_semantics<parallel>], iteration_bounds = array<i64: 1>, scalar_prefetch = 0 : i64, scratch_operands = 0 : i64, tpu.core_type = #tpu.core_type<tc>, window_params = [{transform_indices = @transform_0, window_bounds = array<i64: 2, 64, 32>}, {pipeline_mode = #tpu.pipeline_mode<synchronous>, transform_indices = @transform_1, window_bounds = array<i64: 32, 96>}, {pipeline_mode = #tpu.pipeline_mode<synchronous>, transform_indices = @transform_2, window_bounds = array<i64: 1, 96>}, {pipeline_mode = #tpu.pipeline_mode<synchronous>, transform_indices = @transform_3, window_bounds = array<i64: 8, 8, 32>}, {pipeline_mode = #tpu.pipeline_mode<synchronous>, transform_indices = @transform_4, window_bounds = array<i64: 1, 32>}, {transform_indices = @transform_5, window_bounds = array<i64: 2, 2048>}]} {
    %c0 = arith.constant 0 : index
    %c0_0 = arith.constant 0 : index
    %c0_1 = arith.constant 0 : index
    %0 = vector.load %arg1[%c0, %c0_0, %c0_1] : memref<2x64x32xbf16, #tpu.memory_space<vmem>>, vector<2x64x32xbf16>
    %1 = vector.shape_cast %0 : vector<2x64x32xbf16> to vector<128x32xbf16>
    %c0_2 = arith.constant 0 : index
    %c0_3 = arith.constant 0 : index
    %2 = vector.load %arg2[%c0_2, %c0_3] : memref<32x96xbf16, #tpu.memory_space<vmem>>, vector<32x96xbf16>
    %cst = arith.constant dense<0.000000e+00> : vector<128x96xf32>
    %3 = tpu.matmul %1, %2, %cst {dimension_numbers = #tpu.dot_dimension_numbers<[1], [0], [0], [1], [0, 0, 1, 1], [], []>} : vector<128x32xbf16>, vector<32x96xbf16>, vector<128x96xf32> -> vector<128x96xf32>
    %c0_4 = arith.constant 0 : index
    %c0_5 = arith.constant 0 : index
    %4 = vector.load %arg3[%c0_4, %c0_5] : memref<1x96xf32, #tpu.memory_space<vmem>>, vector<1x96xf32>
    %5 = vector.broadcast %4 : vector<1x96xf32> to vector<128x96xf32>
    %6 = arith.addf %3, %5 : vector<128x96xf32>
    %7 = arith.truncf %6 : vector<128x96xf32> to vector<128x96xbf16>
    %8 = vector.shape_cast %7 : vector<128x96xbf16> to vector<2x64x12x8xbf16>
    %9 = tpu.transpose %8, [0, 2, 1, 3] : vector<2x64x12x8xbf16> -> vector<2x12x64x8xbf16>
    %10 = vector.extract_strided_slice %9 {offsets = [0, 0, 0, 0], sizes = [2, 4, 64, 8], strides = [1, 1, 1, 1]} : vector<2x12x64x8xbf16> to vector<2x4x64x8xbf16>
    %11 = vector.shape_cast %10 : vector<2x4x64x8xbf16> to vector<8x64x8xbf16>
    %12 = vector.extract_strided_slice %9 {offsets = [0, 4, 0, 0], sizes = [2, 4, 64, 8], strides = [1, 1, 1, 1]} : vector<2x12x64x8xbf16> to vector<2x4x64x8xbf16>
    %13 = vector.shape_cast %12 : vector<2x4x64x8xbf16> to vector<8x64x8xbf16>
    %14 = vector.extract_strided_slice %9 {offsets = [0, 8, 0, 0], sizes = [2, 4, 64, 8], strides = [1, 1, 1, 1]} : vector<2x12x64x8xbf16> to vector<2x4x64x8xbf16>
    %15 = vector.shape_cast %14 : vector<2x4x64x8xbf16> to vector<8x64x8xbf16>
    "tpu.trace_start"() <{level = 10 : i32, message = "gqd,gkd->gqk"}> : () -> ()
    %cst_6 = arith.constant dense<0.000000e+00> : vector<8x64x64xf32>
    %16 = tpu.matmul %11, %13, %cst_6 {dimension_numbers = #tpu.dot_dimension_numbers<[2], [2], [1], [1], [0, 0, 0, 1, 1, 1], [0], [0]>} : vector<8x64x8xbf16>, vector<8x64x8xbf16>, vector<8x64x64xf32> -> vector<8x64x64xf32>
    "tpu.trace_stop"() : () -> ()
    %cst_7 = arith.constant dense<0xFF800000> : vector<8x64xf32>
    %17 = vector.multi_reduction <maximumf>, %16, %cst_7 [2] : vector<8x64x64xf32> to vector<8x64xf32>
    %18 = vector.shape_cast %17 : vector<8x64xf32> to vector<8x64x1xf32>
    %19 = vector.broadcast %18 : vector<8x64x1xf32> to vector<8x64x64xf32>
    %20 = arith.subf %16, %19 : vector<8x64x64xf32>
    %21 = math.exp %20 : vector<8x64x64xf32>
    %cst_8 = arith.constant dense<0.000000e+00> : vector<8x64xf32>
    %22 = vector.multi_reduction <add>, %21, %cst_8 [2] : vector<8x64x64xf32> to vector<8x64xf32>
    %23 = vector.shape_cast %22 : vector<8x64xf32> to vector<8x64x1xf32>
    %24 = tpu.reciprocal %23 {approx = true} : vector<8x64x1xf32> -> vector<8x64x1xf32>
    %25 = vector.broadcast %24 : vector<8x64x1xf32> to vector<8x64x64xf32>
    %26 = arith.mulf %21, %25 : vector<8x64x64xf32>
    %27 = arith.truncf %26 : vector<8x64x64xf32> to vector<8x64x64xbf16>
    "tpu.trace_start"() <{level = 10 : i32, message = "gqk,gkd->gqd"}> : () -> ()
    %cst_9 = arith.constant dense<0.000000e+00> : vector<8x64x8xf32>
    %28 = tpu.matmul %27, %15, %cst_9 {dimension_numbers = #tpu.dot_dimension_numbers<[2], [1], [1], [2], [0, 0, 0, 1, 1, 2], [0], [0]>} : vector<8x64x64xbf16>, vector<8x64x8xbf16>, vector<8x64x8xf32> -> vector<8x64x8xf32>
    "tpu.trace_stop"() : () -> ()
    %29 = arith.truncf %28 : vector<8x64x8xf32> to vector<8x64x8xbf16>
    %c0_10 = arith.constant 0 : index
    %c0_11 = arith.constant 0 : index
    %c0_12 = arith.constant 0 : index
    %30 = vector.load %arg4[%c0_10, %c0_11, %c0_12] : memref<8x8x32xbf16, #tpu.memory_space<vmem>>, vector<8x8x32xbf16>
    "tpu.trace_start"() <{level = 10 : i32, message = "gqd,gde->gqe"}> : () -> ()
    %cst_13 = arith.constant dense<0.000000e+00> : vector<8x64x32xf32>
    %31 = tpu.matmul %29, %30, %cst_13 {dimension_numbers = #tpu.dot_dimension_numbers<[2], [1], [1], [2], [0, 0, 0, 1, 1, 2], [0], [0]>} : vector<8x64x8xbf16>, vector<8x8x32xbf16>, vector<8x64x32xf32> -> vector<8x64x32xf32>
    "tpu.trace_stop"() : () -> ()
    %32 = vector.shape_cast %31 : vector<8x64x32xf32> to vector<2x4x64x32xf32>
    %cst_14 = arith.constant dense<0.000000e+00> : vector<2x64x32xf32>
    %33 = vector.multi_reduction <add>, %32, %cst_14 [1] : vector<2x4x64x32xf32> to vector<2x64x32xf32>
    %c0_15 = arith.constant 0 : index
    %c0_16 = arith.constant 0 : index
    %34 = vector.load %arg5[%c0_15, %c0_16] : memref<1x32xf32, #tpu.memory_space<vmem>>, vector<1x32xf32>
    %35 = vector.shape_cast %34 : vector<1x32xf32> to vector<1x1x32xf32>
    %36 = vector.broadcast %35 : vector<1x1x32xf32> to vector<2x64x32xf32>
    %37 = arith.addf %33, %36 : vector<2x64x32xf32>
    %38 = vector.shape_cast %37 : vector<2x64x32xf32> to vector<2x2048xf32>
    %c0_17 = arith.constant 0 : index
    %c0_18 = arith.constant 0 : index
    %39 = vector.load %arg6[%c0_17, %c0_18] : memref<2x2048xf32, #tpu.memory_space<vmem>>, vector<2x2048xf32>
    tpu.vector_store %arg6[%c0_17, %c0_18], %38 {strides = array<i32>} : memref<2x2048xf32, #tpu.memory_space<vmem>>, vector<2x2048xf32>,
    return
  }
  func.func @transform_0(%arg0: i32) -> (i32, i32, i32) {
    %c0_i32 = arith.constant 0 : i32
    %c0_i32_0 = arith.constant 0 : i32
    %c0_i32_1 = arith.constant 0 : i32
    return %arg0, %c0_i32, %c0_i32_0 : i32, i32, i32
  }
  func.func @transform_1(%arg0: i32) -> (i32, i32) {
    %c0_i32 = arith.constant 0 : i32
    %c0_i32_0 = arith.constant 0 : i32
    %c0_i32_1 = arith.constant 0 : i32
    return %c0_i32, %c0_i32_0 : i32, i32
  }
  func.func @transform_2(%arg0: i32) -> (i32, i32) {
    %c0_i32 = arith.constant 0 : i32
    %c0_i32_0 = arith.constant 0 : i32
    %c0_i32_1 = arith.constant 0 : i32
    return %c0_i32, %c0_i32_0 : i32, i32
  }
  func.func @transform_3(%arg0: i32) -> (i32, i32, i32) {
    %c0_i32 = arith.constant 0 : i32
    %c0_i32_0 = arith.constant 0 : i32
    %c0_i32_1 = arith.constant 0 : i32
    %c0_i32_2 = arith.constant 0 : i32
    return %c0_i32, %c0_i32_0, %c0_i32_1 : i32, i32, i32
  }
  func.func @transform_4(%arg0: i32) -> (i32, i32) {
    %c0_i32 = arith.constant 0 : i32
    %c0_i32_0 = arith.constant 0 : i32
    %c0_i32_1 = arith.constant 0 : i32
    return %c0_i32, %c0_i32_0 : i32, i32
  }
  func.func @transform_5(%arg0: i32) -> (i32, i32) {
    %c0_i32 = arith.constant 0 : i32
    %c0_i32_0 = arith.constant 0 : i32
    return %arg0, %c0_i32 : i32, i32
  }
}

</mosaic_0001>

<llo_original>
// kernel: tpu_custom_call.1
$region0: #{tpu_custom_call.1}
  #allocation0 [shape = 'u32[]', space=smem, size = 0x4, offset = 0x4, fixed_abs, tag = 'smem constant byte address 0x4 - core index']
  #allocation1 [shape = 'u32[144,128]{1,0:T(1,128)}', space=vmem, size = 0x12000, scoped, tag = 'internal scratch']
  %s0 = inlined_call_operand.vmem [shape: bf16[2,64,32], index: 0, kind: input, shape index: {}]
  %s1 = inlined_call_operand.vmem [shape: bf16[32,96], index: 1, kind: input, shape index: {}]
  %s2 = inlined_call_operand.vmem [shape: f32[1,96], index: 2, kind: input, shape index: {}]
  %s3 = inlined_call_operand.vmem [shape: bf16[8,8,32], index: 3, kind: input, shape index: {}]
  %s4 = inlined_call_operand.vmem [shape: f32[1,32], index: 4, kind: input, shape index: {}]
  %s5 = inlined_call_operand.hbm [shape: f32[2,2048], index: 5, kind: output, shape index: {}]
  %s6 = sld [smem:[#allocation0]]
  $region30: #{tpu_custom_call.1} parent=0
    _
  %s8 = ssub.s32 1, %s6
  %s9 = scalar_select 0, %s8, %s6
  $region1: #{tpu_custom_call.1} parent=0
    #allocation2 [shape = 'u8[16384]{0}', space=vmem, size = 0x4000, scoped, tag = 'output window, operand 0, single buffered']
    #allocation3 [shape = 's32[1]{0}', space=sflag, size = 0x4, scoped, tag = 'scoped memory for tpu_custom_call.1']
    %10 = vsyncpa [#allocation3], 0
    // Predicated region
    $region2: #{tpu_custom_call.1} parent=1 // pred_check
      _
    $region3: #{tpu_custom_call.1} parent=1 // pred_check_branch
      %12 = sbr.rel (0) target = $region5
    $region4: #{tpu_custom_call.1} parent=1 // pred_region
      _
    $region5: #{tpu_custom_call.1} parent=1 // pred_fallthru
      _
    // Predicated region
    $region6: #{tpu_custom_call.1} parent=1 // pred_check
      _
    $region7: #{tpu_custom_call.1} parent=1 // pred_check_branch
      %14 = sbr.rel (0) target = $region9
    $region8: #{tpu_custom_call.1} parent=1 // pred_region
      _
    $region9: #{tpu_custom_call.1} parent=1 // pred_fallthru
      _
    // Predicated region
    $region10: #{tpu_custom_call.1} parent=1 // pred_check
      _
    $region11: #{tpu_custom_call.1} parent=1 // pred_check_branch
      %16 = sbr.rel (0) target = $region13
    $region12: #{tpu_custom_call.1} parent=1 // pred_region
      _
    $region13: #{tpu_custom_call.1} parent=1 // pred_fallthru
      _
    // Predicated region
    $region14: #{tpu_custom_call.1} parent=1 // pred_check
      _
    $region15: #{tpu_custom_call.1} parent=1 // pred_check_branch
      %18 = sbr.rel (0) target = $region17
    $region16: #{tpu_custom_call.1} parent=1 // pred_region
      _
    $region17: #{tpu_custom_call.1} parent=1 // pred_fallthru
      _
    // Predicated region
    $region18: #{tpu_custom_call.1} parent=1 // pred_check
      _
    $region19: #{tpu_custom_call.1} parent=1 // pred_check_branch
      %20 = sbr.rel (0) target = $region21
    $region20: #{tpu_custom_call.1} parent=1 // pred_region
      _
    $region21: #{tpu_custom_call.1} parent=1 // pred_fallthru
      _
    %v22 = vld [vmem:[%s0] sm:$0xf]
    %v23 = vld [vmem:[%s0 + $0x4] sm:$0xf]
    %v24 = vld [vmem:[%s0 + $0x8] sm:$0xf]
    %v25 = vld [vmem:[%s0 + $0xc] sm:$0xf]
    %v26 = vld [vmem:[%s0 + $0x10] sm:$0xf]
    %v27 = vld [vmem:[%s0 + $0x14] sm:$0xf]
    %v28 = vld [vmem:[%s0 + $0x18] sm:$0xf]
    %v29 = vld [vmem:[%s0 + $0x1c] sm:$0xf]
    %v30 = vld [vmem:[%s0 + $0x20] sm:$0xf]
    %v31 = vld [vmem:[%s0 + $0x24] sm:$0xf]
    %v32 = vld [vmem:[%s0 + $0x28] sm:$0xf]
    %v33 = vld [vmem:[%s0 + $0x2c] sm:$0xf]
    %v34 = vld [vmem:[%s0 + $0x30] sm:$0xf]
    %v35 = vld [vmem:[%s0 + $0x34] sm:$0xf]
    %v36 = vld [vmem:[%s0 + $0x38] sm:$0xf]
    %v37 = vld [vmem:[%s0 + $0x3c] sm:$0xf]
    %v38 = vld [vmem:[%s1] sm:$0xf]
    %v39 = vld [vmem:[%s1 + $0x4] sm:$0xf]
    %v40 = vld [vmem:[%s1 + $0x8] sm:$0xf]
    %v41 = vld [vmem:[%s1 + $0xc] sm:$0xf]
    %v42 = vld [vmem:[%s2] sm:$0x1]
    %v44 = vlaneseq
    %v45 = vshrl.u32 %v44, 7
    %v46 = vsub.s32 0, %v45
    %v47 = vrot.slane %v42, %v46
    %v65 = vunpack.c.l.b16 %v22
    %v66 = vunpack.c.l.b16 %v23
    %v67 = vunpack.c.l.b16 %v24
    %v68 = vunpack.c.l.b16 %v25
    %v69 = vunpack.c.l.b16 %v26
    %v70 = vunpack.c.l.b16 %v27
    %v71 = vunpack.c.l.b16 %v28
    %v72 = vunpack.c.l.b16 %v29
    %v73 = vunpack.c.l.b16 %v30
    %v74 = vunpack.c.l.b16 %v31
    %v75 = vunpack.c.l.b16 %v32
    %v76 = vunpack.c.l.b16 %v33
    %v77 = vunpack.c.l.b16 %v34
    %v78 = vunpack.c.l.b16 %v35
    %v79 = vunpack.c.l.b16 %v36
    %v80 = vunpack.c.l.b16 %v37
    %v81 = vpack.c.b16 %v66, %v65
    %v82 = vpack.c.b16 %v68, %v67
    %v83 = vpack.c.b16 %v70, %v69
    %v84 = vpack.c.b16 %v72, %v71
    %v85 = vpack.c.b16 %v74, %v73
    %v86 = vpack.c.b16 %v76, %v75
    %v87 = vpack.c.b16 %v78, %v77
    %v88 = vpack.c.b16 %v80, %v79
    %v93 = vunpack.c.l.b16 %v38
    %v94 = vunpack.c.l.b16 %v39
    %v95 = vunpack.c.l.b16 %v40
    %v96 = vunpack.c.l.b16 %v41
    %v97 = vpack.c.b16 %v94, %v93
    %v98 = vpack.c.b16 %v96, %v95
    %vm101 = vcmask 261120
    %v103 = vsel %vm101, %v81, 0
    %v106 = vsel %vm101, %v82, 0
    %v109 = vsel %vm101, %v83, 0
    %v112 = vsel %vm101, %v84, 0
    %v115 = vsel %vm101, %v85, 0
    %v118 = vsel %vm101, %v86, 0
    %v121 = vsel %vm101, %v87, 0
    %v124 = vsel %vm101, %v88, 0
    %126 = vmatprep.subr.bf16.mxu0 0
    %127 = vmatpush1.bf16.msra.mxu0 %v97
    %128 = vmatprep.subr.bf16.mxu0 0
    %129 = vmatpush1.bf16.msra.mxu0 %v98
    %130 = vmatprep.subr.bf16.mxu0 0
    %131 = vmatpush1.bf16.msra.mxu0 0
    %132 = vmatprep.subr.bf16.mxu0 0
    %133 = vmatpush1.bf16.msra.mxu0 0
    %134 = vmatprep.subr.bf16.mxu0 0
    %135 = vmatpush1.bf16.msra.mxu0 0
    %136 = vmatprep.subr.bf16.mxu0 0
    %137 = vmatpush1.bf16.msra.mxu0 0
    %138 = vmatprep.subr.bf16.mxu0 0
    %139 = vmatpush1.bf16.msra.mxu0 0
    %140 = vmatprep.subr.bf16.mxu0 0
    %141 = vmatpush1.bf16.msra.mxu0 0
    %142 = vmatprep.subr.bf16.mxu0 0
    %143 = vmatpush1.bf16.msra.mxu0 0
    %144 = vmatprep.subr.bf16.mxu0 0
    %145 = vmatpush1.bf16.msra.mxu0 0
    %146 = vmatprep.subr.bf16.mxu0 0
    %147 = vmatpush1.bf16.msra.mxu0 0
    %148 = vmatprep.subr.bf16.mxu0 0
    %149 = vmatpush1.bf16.msra.mxu0 0
    %150 = vmatprep.subr.bf16.mxu0 0
    %151 = vmatpush1.bf16.msra.mxu0 0
    %152 = vmatprep.subr.bf16.mxu0 0
    %153 = vmatpush1.bf16.msra.mxu0 0
    %154 = vmatprep.subr.bf16.mxu0 0
    %155 = vmatpush1.bf16.msra.mxu0 0
    %156 = vmatprep.subr.bf16.mxu0 0
    %157 = vmatpush1.bf16.msra.mxu0 0
    %158 = vmatprep.mubr.bf16.mxu0 0
    %159 = vmatmul.mubr.bf16.gmra.mrb[0].mxu0 %v103
    %v160 = vpop.f32.mrb[0].mxu0
    %v161 = vadd.f32 %v47, %v160
    %v162 = vpop.f32.mrb[0].mxu0
    %v163 = vpop.f32.mrb[0].mxu0
    %v164 = vadd.f32 %v47, %v163
    %v165 = vpop.f32.mrb[0].mxu0
    %166 = vmatprep.mubr.bf16.mxu0 0
    %167 = vmatmul.mubr.bf16.gmra.mrb[0].mxu0 %v106
    %v168 = vpop.f32.mrb[0].mxu0
    %v169 = vadd.f32 %v47, %v168
    %v170 = vpop.f32.mrb[0].mxu0
    %v171 = vpop.f32.mrb[0].mxu0
    %v172 = vadd.f32 %v47, %v171
    %v173 = vpop.f32.mrb[0].mxu0
    %174 = vmatprep.mubr.bf16.mxu0 0
    %175 = vmatmul.mubr.bf16.gmra.mrb[0].mxu0 %v109
    %v176 = vpop.f32.mrb[0].mxu0
    %v177 = vadd.f32 %v47, %v176
    %v178 = vpop.f32.mrb[0].mxu0
    %v179 = vpop.f32.mrb[0].mxu0
    %v180 = vadd.f32 %v47, %v179
    %v181 = vpop.f32.mrb[0].mxu0
    %182 = vmatprep.mubr.bf16.mxu0 0
    %183 = vmatmul.mubr.bf16.gmra.mrb[0].mxu0 %v112
    %v184 = vpop.f32.mrb[0].mxu0
    %v185 = vadd.f32 %v47, %v184
    %v186 = vpop.f32.mrb[0].mxu0
    %v187 = vpop.f32.mrb[0].mxu0
    %v188 = vadd.f32 %v47, %v187
    %v189 = vpop.f32.mrb[0].mxu0
    %190 = vmatprep.mubr.bf16.mxu0 0
    %191 = vmatmul.mubr.bf16.gmra.mrb[0].mxu0 %v115
    %v192 = vpop.f32.mrb[0].mxu0
    %v193 = vadd.f32 %v47, %v192
    %v194 = vpop.f32.mrb[0].mxu0
    %v195 = vpop.f32.mrb[0].mxu0
    %v196 = vadd.f32 %v47, %v195
    %v197 = vpop.f32.mrb[0].mxu0
    %198 = vmatprep.mubr.bf16.mxu0 0
    %199 = vmatmul.mubr.bf16.gmra.mrb[0].mxu0 %v118
    %v200 = vpop.f32.mrb[0].mxu0
    %v201 = vadd.f32 %v47, %v200
    %v202 = vpop.f32.mrb[0].mxu0
    %v203 = vpop.f32.mrb[0].mxu0
    %v204 = vadd.f32 %v47, %v203
    %v205 = vpop.f32.mrb[0].mxu0
    %206 = vmatprep.mubr.bf16.mxu0 0
    %207 = vmatmul.mubr.bf16.gmra.mrb[0].mxu0 %v121
    %v208 = vpop.f32.mrb[0].mxu0
    %v209 = vadd.f32 %v47, %v208
    %v210 = vpop.f32.mrb[0].mxu0
    %v211 = vpop.f32.mrb[0].mxu0
    %v212 = vadd.f32 %v47, %v211
    %v213 = vpop.f32.mrb[0].mxu0
    %214 = vmatprep.mubr.bf16.mxu0 0
    %215 = vmatmul.mubr.bf16.gmra.mrb[0].mxu0 %v124
    %v216 = vpop.f32.mrb[0].mxu0
    %v217 = vadd.f32 %v47, %v216
    %v218 = vpop.f32.mrb[0].mxu0
    %v219 = vpop.f32.mrb[0].mxu0
    %v220 = vadd.f32 %v47, %v219
    %v221 = vpop.f32.mrb[0].mxu0
    %222 = vdwg.mxu0
    %v223 = vpack.c.bf16 %v164, %v161
    %v224 = vpack.c.bf16 %v172, %v169
    %v225 = vpack.c.bf16 %v180, %v177
    %v226 = vpack.c.bf16 %v188, %v185
    %v227 = vpack.c.bf16 %v196, %v193
    %v228 = vpack.c.bf16 %v204, %v201
    %v229 = vpack.c.bf16 %v212, %v209
    %v230 = vpack.c.bf16 %v220, %v217
    %239 = vrot.lane.b32.xlu0 %v223, 120
    %v240 = vpop.permute.xlu0 %239
    %241 = vrot.lane.b32.xlu0 %v224, 120
    %v242 = vpop.permute.xlu0 %241
    %243 = vrot.lane.b32.xlu0 %v225, 120
    %v244 = vpop.permute.xlu0 %243
    %245 = vrot.lane.b32.xlu0 %v226, 120
    %v246 = vpop.permute.xlu0 %245
    %247 = vrot.lane.b32.xlu0 %v227, 120
    %v248 = vpop.permute.xlu0 %247
    %249 = vrot.lane.b32.xlu0 %v228, 120
    %v250 = vpop.permute.xlu0 %249
    %251 = vrot.lane.b32.xlu0 %v229, 120
    %v252 = vpop.permute.xlu0 %251
    %253 = vrot.lane.b32.xlu0 %v230, 120
    %v254 = vpop.permute.xlu0 %253
    %255 = vrot.lane.b32.xlu0 %v223, 112
    %v256 = vpop.permute.xlu0 %255
    %257 = vrot.lane.b32.xlu0 %v224, 112
    %v258 = vpop.permute.xlu0 %257
    %259 = vrot.lane.b32.xlu0 %v225, 112
    %v260 = vpop.permute.xlu0 %259
    %261 = vrot.lane.b32.xlu0 %v226, 112
    %v262 = vpop.permute.xlu0 %261
    %263 = vrot.lane.b32.xlu0 %v227, 112
    %v264 = vpop.permute.xlu0 %263
    %265 = vrot.lane.b32.xlu0 %v228, 112
    %v266 = vpop.permute.xlu0 %265
    %267 = vrot.lane.b32.xlu0 %v229, 112
    %v268 = vpop.permute.xlu0 %267
    %269 = vrot.lane.b32.xlu0 %v230, 112
    %v270 = vpop.permute.xlu0 %269
    %271 = vrot.lane.b32.xlu0 %v223, 104
    %v272 = vpop.permute.xlu0 %271
    %273 = vrot.lane.b32.xlu0 %v224, 104
    %v274 = vpop.permute.xlu0 %273
    %275 = vrot.lane.b32.xlu0 %v225, 104
    %v276 = vpop.permute.xlu0 %275
    %277 = vrot.lane.b32.xlu0 %v226, 104
    %v278 = vpop.permute.xlu0 %277
    %279 = vrot.lane.b32.xlu0 %v227, 104
    %v280 = vpop.permute.xlu0 %279
    %281 = vrot.lane.b32.xlu0 %v228, 104
    %v282 = vpop.permute.xlu0 %281
    %283 = vrot.lane.b32.xlu0 %v229, 104
    %v284 = vpop.permute.xlu0 %283
    %285 = vrot.lane.b32.xlu0 %v230, 104
    %v286 = vpop.permute.xlu0 %285
    %287 = vrot.lane.b32.xlu0 %v223, 96
    %v288 = vpop.permute.xlu0 %287
    %289 = vrot.lane.b32.xlu0 %v224, 96
    %v290 = vpop.permute.xlu0 %289
    %291 = vrot.lane.b32.xlu0 %v225, 96
    %v292 = vpop.permute.xlu0 %291
    %293 = vrot.lane.b32.xlu0 %v226, 96
    %v294 = vpop.permute.xlu0 %293
    %295 = vrot.lane.b32.xlu0 %v227, 96
    %v296 = vpop.permute.xlu0 %295
    %297 = vrot.lane.b32.xlu0 %v228, 96
    %v298 = vpop.permute.xlu0 %297
    %299 = vrot.lane.b32.xlu0 %v229, 96
    %v300 = vpop.permute.xlu0 %299
    %301 = vrot.lane.b32.xlu0 %v230, 96
    %v302 = vpop.permute.xlu0 %301
    %303 = vrot.lane.b32.xlu0 %v223, 88
    %v304 = vpop.permute.xlu0 %303
    %305 = vrot.lane.b32.xlu0 %v224, 88
    %v306 = vpop.permute.xlu0 %305
    %307 = vrot.lane.b32.xlu0 %v225, 88
    %v308 = vpop.permute.xlu0 %307
    %309 = vrot.lane.b32.xlu0 %v226, 88
    %v310 = vpop.permute.xlu0 %309
    %311 = vrot.lane.b32.xlu0 %v227, 88
    %v312 = vpop.permute.xlu0 %311
    %313 = vrot.lane.b32.xlu0 %v228, 88
    %v314 = vpop.permute.xlu0 %313
    %315 = vrot.lane.b32.xlu0 %v229, 88
    %v316 = vpop.permute.xlu0 %315
    %317 = vrot.lane.b32.xlu0 %v230, 88
    %v318 = vpop.permute.xlu0 %317
    %319 = vrot.lane.b32.xlu0 %v223, 80
    %v320 = vpop.permute.xlu0 %319
    %321 = vrot.lane.b32.xlu0 %v224, 80
    %v322 = vpop.permute.xlu0 %321
    %323 = vrot.lane.b32.xlu0 %v225, 80
    %v324 = vpop.permute.xlu0 %323
    %325 = vrot.lane.b32.xlu0 %v226, 80
    %v326 = vpop.permute.xlu0 %325
    %327 = vrot.lane.b32.xlu0 %v227, 80
    %v328 = vpop.permute.xlu0 %327
    %329 = vrot.lane.b32.xlu0 %v228, 80
    %v330 = vpop.permute.xlu0 %329
    %331 = vrot.lane.b32.xlu0 %v229, 80
    %v332 = vpop.permute.xlu0 %331
    %333 = vrot.lane.b32.xlu0 %v230, 80
    %v334 = vpop.permute.xlu0 %333
    %335 = vrot.lane.b32.xlu0 %v223, 72
    %v336 = vpop.permute.xlu0 %335
    %337 = vrot.lane.b32.xlu0 %v224, 72
    %v338 = vpop.permute.xlu0 %337
    %339 = vrot.lane.b32.xlu0 %v225, 72
    %v340 = vpop.permute.xlu0 %339
    %341 = vrot.lane.b32.xlu0 %v226, 72
    %v342 = vpop.permute.xlu0 %341
    %343 = vrot.lane.b32.xlu0 %v227, 72
    %v344 = vpop.permute.xlu0 %343
    %345 = vrot.lane.b32.xlu0 %v228, 72
    %v346 = vpop.permute.xlu0 %345
    %347 = vrot.lane.b32.xlu0 %v229, 72
    %v348 = vpop.permute.xlu0 %347
    %349 = vrot.lane.b32.xlu0 %v230, 72
    %v350 = vpop.permute.xlu0 %349
    %351 = vrot.lane.b32.xlu0 %v223, 64
    %v352 = vpop.permute.xlu0 %351
    %353 = vrot.lane.b32.xlu0 %v224, 64
    %v354 = vpop.permute.xlu0 %353
    %355 = vrot.lane.b32.xlu0 %v225, 64
    %v356 = vpop.permute.xlu0 %355
    %357 = vrot.lane.b32.xlu0 %v226, 64
    %v358 = vpop.permute.xlu0 %357
    %359 = vrot.lane.b32.xlu0 %v227, 64
    %v360 = vpop.permute.xlu0 %359
    %361 = vrot.lane.b32.xlu0 %v228, 64
    %v362 = vpop.permute.xlu0 %361
    %363 = vrot.lane.b32.xlu0 %v229, 64
    %v364 = vpop.permute.xlu0 %363
    %365 = vrot.lane.b32.xlu0 %v230, 64
    %v366 = vpop.permute.xlu0 %365
    %367 = vrot.lane.b32.xlu0 %v223, 56
    %v368 = vpop.permute.xlu0 %367
    %369 = vrot.lane.b32.xlu0 %v224, 56
    %v370 = vpop.permute.xlu0 %369
    %371 = vrot.lane.b32.xlu0 %v225, 56
    %v372 = vpop.permute.xlu0 %371
    %373 = vrot.lane.b32.xlu0 %v226, 56
    %v374 = vpop.permute.xlu0 %373
    %375 = vrot.lane.b32.xlu0 %v227, 56
    %v376 = vpop.permute.xlu0 %375
    %377 = vrot.lane.b32.xlu0 %v228, 56
    %v378 = vpop.permute.xlu0 %377
    %379 = vrot.lane.b32.xlu0 %v229, 56
    %v380 = vpop.permute.xlu0 %379
    %381 = vrot.lane.b32.xlu0 %v230, 56
    %v382 = vpop.permute.xlu0 %381
    %383 = vrot.lane.b32.xlu0 %v223, 48
    %v384 = vpop.permute.xlu0 %383
    %385 = vrot.lane.b32.xlu0 %v224, 48
    %v386 = vpop.permute.xlu0 %385
    %387 = vrot.lane.b32.xlu0 %v225, 48
    %v388 = vpop.permute.xlu0 %387
    %389 = vrot.lane.b32.xlu0 %v226, 48
    %v390 = vpop.permute.xlu0 %389
    %391 = vrot.lane.b32.xlu0 %v227, 48
    %v392 = vpop.permute.xlu0 %391
    %393 = vrot.lane.b32.xlu0 %v228, 48
    %v394 = vpop.permute.xlu0 %393
    %395 = vrot.lane.b32.xlu0 %v229, 48
    %v396 = vpop.permute.xlu0 %395
    %397 = vrot.lane.b32.xlu0 %v230, 48
    %v398 = vpop.permute.xlu0 %397
    %399 = vrot.lane.b32.xlu0 %v223, 40
    %v400 = vpop.permute.xlu0 %399
    %401 = vrot.lane.b32.xlu0 %v224, 40
    %v402 = vpop.permute.xlu0 %401
    %403 = vrot.lane.b32.xlu0 %v225, 40
    %v404 = vpop.permute.xlu0 %403
    %405 = vrot.lane.b32.xlu0 %v226, 40
    %v406 = vpop.permute.xlu0 %405
    %407 = vrot.lane.b32.xlu0 %v227, 40
    %v408 = vpop.permute.xlu0 %407
    %409 = vrot.lane.b32.xlu0 %v228, 40
    %v410 = vpop.permute.xlu0 %409
    %411 = vrot.lane.b32.xlu0 %v229, 40
    %v412 = vpop.permute.xlu0 %411
    %413 = vrot.lane.b32.xlu0 %v230, 40
    %v414 = vpop.permute.xlu0 %413
    %v417 = vpack.i.b16 %v240, %v223
    %v419 = vshrl.u32 %v223, 16
    %v420 = vshrl.u32 %v240, 16
    %v421 = vpack.i.b16 %v420, %v419
    %v425 = vpack.i.b16 %v272, %v256
    %v427 = vshrl.u32 %v256, 16
    %v428 = vshrl.u32 %v272, 16
    %v429 = vpack.i.b16 %v428, %v427
    %v433 = vpack.i.b16 %v304, %v288
    %v435 = vshrl.u32 %v288, 16
    %v436 = vshrl.u32 %v304, 16
    %v437 = vpack.i.b16 %v436, %v435
    %v441 = vpack.i.b16 %v336, %v320
    %v443 = vshrl.u32 %v320, 16
    %v444 = vshrl.u32 %v336, 16
    %v445 = vpack.i.b16 %v444, %v443
    %v449 = vpack.i.b16 %v368, %v352
    %v451 = vshrl.u32 %v352, 16
    %v452 = vshrl.u32 %v368, 16
    %v453 = vpack.i.b16 %v452, %v451
    %v457 = vpack.i.b16 %v400, %v384
    %v459 = vshrl.u32 %v384, 16
    %v460 = vshrl.u32 %v400, 16
    %v461 = vpack.i.b16 %v460, %v459
    %v464 = vpack.i.b16 0, 0
    %v466 = vshrl.u32 0, 16
    %v467 = vpack.i.b16 %v466, %v466
    %v471 = vpack.i.b16 %v242, %v224
    %v473 = vshrl.u32 %v224, 16
    %v474 = vshrl.u32 %v242, 16
    %v475 = vpack.i.b16 %v474, %v473
    %v479 = vpack.i.b16 %v274, %v258
    %v481 = vshrl.u32 %v258, 16
    %v482 = vshrl.u32 %v274, 16
    %v483 = vpack.i.b16 %v482, %v481
    %v487 = vpack.i.b16 %v306, %v290
    %v489 = vshrl.u32 %v290, 16
    %v490 = vshrl.u32 %v306, 16
    %v491 = vpack.i.b16 %v490, %v489
    %v495 = vpack.i.b16 %v338, %v322
    %v497 = vshrl.u32 %v322, 16
    %v498 = vshrl.u32 %v338, 16
    %v499 = vpack.i.b16 %v498, %v497
    %v503 = vpack.i.b16 %v370, %v354
    %v505 = vshrl.u32 %v354, 16
    %v506 = vshrl.u32 %v370, 16
    %v507 = vpack.i.b16 %v506, %v505
    %v511 = vpack.i.b16 %v402, %v386
    %v513 = vshrl.u32 %v386, 16
    %v514 = vshrl.u32 %v402, 16
    %v515 = vpack.i.b16 %v514, %v513
    %v519 = vpack.i.b16 %v244, %v225
    %v521 = vshrl.u32 %v225, 16
    %v522 = vshrl.u32 %v244, 16
    %v523 = vpack.i.b16 %v522, %v521
    %v527 = vpack.i.b16 %v276, %v260
    %v529 = vshrl.u32 %v260, 16
    %v530 = vshrl.u32 %v276, 16
    %v531 = vpack.i.b16 %v530, %v529
    %v535 = vpack.i.b16 %v308, %v292
    %v537 = vshrl.u32 %v292, 16
    %v538 = vshrl.u32 %v308, 16
    %v539 = vpack.i.b16 %v538, %v537
    %v543 = vpack.i.b16 %v340, %v324
    %v545 = vshrl.u32 %v324, 16
    %v546 = vshrl.u32 %v340, 16
    %v547 = vpack.i.b16 %v546, %v545
    %v551 = vpack.i.b16 %v372, %v356
    %v553 = vshrl.u32 %v356, 16
    %v554 = vshrl.u32 %v372, 16
    %v555 = vpack.i.b16 %v554, %v553
    %v559 = vpack.i.b16 %v404, %v388
    %v561 = vshrl.u32 %v388, 16
    %v562 = vshrl.u32 %v404, 16
    %v563 = vpack.i.b16 %v562, %v561
    %v567 = vpack.i.b16 %v246, %v226
    %v569 = vshrl.u32 %v226, 16
    %v570 = vshrl.u32 %v246, 16
    %v571 = vpack.i.b16 %v570, %v569
    %v575 = vpack.i.b16 %v278, %v262
    %v577 = vshrl.u32 %v262, 16
    %v578 = vshrl.u32 %v278, 16
    %v579 = vpack.i.b16 %v578, %v577
    %v583 = vpack.i.b16 %v310, %v294
    %v585 = vshrl.u32 %v294, 16
    %v586 = vshrl.u32 %v310, 16
    %v587 = vpack.i.b16 %v586, %v585
    %v591 = vpack.i.b16 %v342, %v326
    %v593 = vshrl.u32 %v326, 16
    %v594 = vshrl.u32 %v342, 16
    %v595 = vpack.i.b16 %v594, %v593
    %v599 = vpack.i.b16 %v374, %v358
    %v601 = vshrl.u32 %v358, 16
    %v602 = vshrl.u32 %v374, 16
    %v603 = vpack.i.b16 %v602, %v601
    %v607 = vpack.i.b16 %v406, %v390
    %v609 = vshrl.u32 %v390, 16
    %v610 = vshrl.u32 %v406, 16
    %v611 = vpack.i.b16 %v610, %v609
    %v615 = vpack.i.b16 %v248, %v227
    %v617 = vshrl.u32 %v227, 16
    %v618 = vshrl.u32 %v248, 16
    %v619 = vpack.i.b16 %v618, %v617
    %v623 = vpack.i.b16 %v280, %v264
    %v625 = vshrl.u32 %v264, 16
    %v626 = vshrl.u32 %v280, 16
    %v627 = vpack.i.b16 %v626, %v625
    %v631 = vpack.i.b16 %v312, %v296
    %v633 = vshrl.u32 %v296, 16
    %v634 = vshrl.u32 %v312, 16
    %v635 = vpack.i.b16 %v634, %v633
    %v639 = vpack.i.b16 %v344, %v328
    %v641 = vshrl.u32 %v328, 16
    %v642 = vshrl.u32 %v344, 16
    %v643 = vpack.i.b16 %v642, %v641
    %v647 = vpack.i.b16 %v376, %v360
    %v649 = vshrl.u32 %v360, 16
    %v650 = vshrl.u32 %v376, 16
    %v651 = vpack.i.b16 %v650, %v649
    %v655 = vpack.i.b16 %v408, %v392
    %v657 = vshrl.u32 %v392, 16
    %v658 = vshrl.u32 %v408, 16
    %v659 = vpack.i.b16 %v658, %v657
    %v663 = vpack.i.b16 %v250, %v228
    %v665 = vshrl.u32 %v228, 16
    %v666 = vshrl.u32 %v250, 16
    %v667 = vpack.i.b16 %v666, %v665
    %v671 = vpack.i.b16 %v282, %v266
    %v673 = vshrl.u32 %v266, 16
    %v674 = vshrl.u32 %v282, 16
    %v675 = vpack.i.b16 %v674, %v673
    %v679 = vpack.i.b16 %v314, %v298
    %v681 = vshrl.u32 %v298, 16
    %v682 = vshrl.u32 %v314, 16
    %v683 = vpack.i.b16 %v682, %v681
    %v687 = vpack.i.b16 %v346, %v330
    %v689 = vshrl.u32 %v330, 16
    %v690 = vshrl.u32 %v346, 16
    %v691 = vpack.i.b16 %v690, %v689
    %v695 = vpack.i.b16 %v378, %v362
    %v697 = vshrl.u32 %v362, 16
    %v698 = vshrl.u32 %v378, 16
    %v699 = vpack.i.b16 %v698, %v697
    %v703 = vpack.i.b16 %v410, %v394
    %v705 = vshrl.u32 %v394, 16
    %v706 = vshrl.u32 %v410, 16
    %v707 = vpack.i.b16 %v706, %v705
    %v711 = vpack.i.b16 %v252, %v229
    %v713 = vshrl.u32 %v229, 16
    %v714 = vshrl.u32 %v252, 16
    %v715 = vpack.i.b16 %v714, %v713
    %v719 = vpack.i.b16 %v284, %v268
    %v721 = vshrl.u32 %v268, 16
    %v722 = vshrl.u32 %v284, 16
    %v723 = vpack.i.b16 %v722, %v721
    %v727 = vpack.i.b16 %v316, %v300
    %v729 = vshrl.u32 %v300, 16
    %v730 = vshrl.u32 %v316, 16
    %v731 = vpack.i.b16 %v730, %v729
    %v735 = vpack.i.b16 %v348, %v332
    %v737 = vshrl.u32 %v332, 16
    %v738 = vshrl.u32 %v348, 16
    %v739 = vpack.i.b16 %v738, %v737
    %v743 = vpack.i.b16 %v380, %v364
    %v745 = vshrl.u32 %v364, 16
    %v746 = vshrl.u32 %v380, 16
    %v747 = vpack.i.b16 %v746, %v745
    %v751 = vpack.i.b16 %v412, %v396
    %v753 = vshrl.u32 %v396, 16
    %v754 = vshrl.u32 %v412, 16
    %v755 = vpack.i.b16 %v754, %v753
    %v759 = vpack.i.b16 %v254, %v230
    %v761 = vshrl.u32 %v230, 16
    %v762 = vshrl.u32 %v254, 16
    %v763 = vpack.i.b16 %v762, %v761
    %v767 = vpack.i.b16 %v286, %v270
    %v769 = vshrl.u32 %v270, 16
    %v770 = vshrl.u32 %v286, 16
    %v771 = vpack.i.b16 %v770, %v769
    %v775 = vpack.i.b16 %v318, %v302
    %v777 = vshrl.u32 %v302, 16
    %v778 = vshrl.u32 %v318, 16
    %v779 = vpack.i.b16 %v778, %v777
    %v783 = vpack.i.b16 %v350, %v334
    %v785 = vshrl.u32 %v334, 16
    %v786 = vshrl.u32 %v350, 16
    %v787 = vpack.i.b16 %v786, %v785
    %v791 = vpack.i.b16 %v382, %v366
    %v793 = vshrl.u32 %v366, 16
    %v794 = vshrl.u32 %v382, 16
    %v795 = vpack.i.b16 %v794, %v793
    %v799 = vpack.i.b16 %v414, %v398
    %v801 = vshrl.u32 %v398, 16
    %v802 = vshrl.u32 %v414, 16
    %v803 = vpack.i.b16 %v802, %v801
    %v805 = vcombine.low %v417, %v433
    %v806 = vcombine.high %v417, %v433
    %v808 = vunpack.c.l.s4 1983009808
    %v809 = vunpack.c.0.s8 %v808
    %v810 = vlaneseq
    %v811 = vshrl.u32 %v810, 7
    %v812 = vsub.s32 %v809, %v811
    %v813 = vrot.slane %v805, %v812
    %v815 = vunpack.c.l.s4 1983009808
    %v816 = vunpack.c.0.s8 %v815
    %v817 = vlaneseq
    %v818 = vshrl.u32 %v817, 7
    %v819 = vsub.s32 %v816, %v818
    %v820 = vrot.slane %v806, %v819
    %v821 = vcombine.low %v425, %v441
    %v822 = vcombine.high %v425, %v441
    %v824 = vunpack.c.l.s4 1983009808
    %v825 = vunpack.c.0.s8 %v824
    %v826 = vlaneseq
    %v827 = vshrl.u32 %v826, 7
    %v828 = vsub.s32 %v825, %v827
    %v829 = vrot.slane %v821, %v828
    %v831 = vunpack.c.l.s4 1983009808
    %v832 = vunpack.c.0.s8 %v831
    %v833 = vlaneseq
    %v834 = vshrl.u32 %v833, 7
    %v835 = vsub.s32 %v832, %v834
    %v836 = vrot.slane %v822, %v835
    %v837 = vcombine.high %v449, %v464
    %v839 = vunpack.c.l.s4 1983009808
    %v840 = vunpack.c.0.s8 %v839
    %v841 = vlaneseq
    %v842 = vshrl.u32 %v841, 7
    %v843 = vsub.s32 %v840, %v842
    %v844 = vrot.slane %v449, %v843
    %v846 = vunpack.c.l.s4 1983009808
    %v847 = vunpack.c.0.s8 %v846
    %v848 = vlaneseq
    %v849 = vshrl.u32 %v848, 7
    %v850 = vsub.s32 %v847, %v849
    %v851 = vrot.slane %v837, %v850
    %v852 = vcombine.high %v457, %v464
    %v854 = vunpack.c.l.s4 1983009808
    %v855 = vunpack.c.0.s8 %v854
    %v856 = vlaneseq
    %v857 = vshrl.u32 %v856, 7
    %v858 = vsub.s32 %v855, %v857
    %v859 = vrot.slane %v457, %v858
    %v861 = vunpack.c.l.s4 1983009808
    %v862 = vunpack.c.0.s8 %v861
    %v863 = vlaneseq
    %v864 = vshrl.u32 %v863, 7
    %v865 = vsub.s32 %v862, %v864
    %v866 = vrot.slane %v852, %v865
    %v867 = vcombine.low %v813, %v829
    %v868 = vcombine.high %v813, %v829
    %v870 = vunpack.c.l.s4 1934713408
    %v871 = vunpack.c.0.s8 %v870
    %v872 = vlaneseq
    %v873 = vshrl.u32 %v872, 7
    %v874 = vsub.s32 %v871, %v873
    %v875 = vrot.slane %v867, %v874
    %v877 = vunpack.c.l.s4 1934713408
    %v878 = vunpack.c.0.s8 %v877
    %v879 = vlaneseq
    %v880 = vshrl.u32 %v879, 7
    %v881 = vsub.s32 %v878, %v880
    %v882 = vrot.slane %v868, %v881
    %v883 = vcombine.low %v820, %v836
    %v884 = vcombine.high %v820, %v836
    %v886 = vunpack.c.l.s4 1934713408
    %v887 = vunpack.c.0.s8 %v886
    %v888 = vlaneseq
    %v889 = vshrl.u32 %v888, 7
    %v890 = vsub.s32 %v887, %v889
    %v891 = vrot.slane %v883, %v890
    %v893 = vunpack.c.l.s4 1934713408
    %v894 = vunpack.c.0.s8 %v893
    %v895 = vlaneseq
    %v896 = vshrl.u32 %v895, 7
    %v897 = vsub.s32 %v894, %v896
    %v898 = vrot.slane %v884, %v897
    %v899 = vcombine.low %v844, %v859
    %v900 = vcombine.high %v844, %v859
    %v902 = vunpack.c.l.s4 1934713408
    %v903 = vunpack.c.0.s8 %v902
    %v904 = vlaneseq
    %v905 = vshrl.u32 %v904, 7
    %v906 = vsub.s32 %v903, %v905
    %v907 = vrot.slane %v899, %v906
    %v909 = vunpack.c.l.s4 1934713408
    %v910 = vunpack.c.0.s8 %v909
    %v911 = vlaneseq
    %v912 = vshrl.u32 %v911, 7
    %v913 = vsub.s32 %v910, %v912
    %v914 = vrot.slane %v900, %v913
    %v915 = vcombine.low %v851, %v866
    %v916 = vcombine.high %v851, %v866
    %v918 = vunpack.c.l.s4 1934713408
    %v919 = vunpack.c.0.s8 %v918
    %v920 = vlaneseq
    %v921 = vshrl.u32 %v920, 7
    %v922 = vsub.s32 %v919, %v921
    %v923 = vrot.slane %v915, %v922
    %v925 = vunpack.c.l.s4 1934713408
    %v926 = vunpack.c.0.s8 %v925
    %v927 = vlaneseq
    %v928 = vshrl.u32 %v927, 7
    %v929 = vsub.s32 %v926, %v928
    %v930 = vrot.slane %v916, %v929
    %v931 = vcombine.low %v875, %v907
    %v932 = vcombine.high %v875, %v907
    %v933 = vcombine.low %v882, %v914
    %v934 = vcombine.high %v882, %v914
    %v935 = vcombine.low %v891, %v923
    %v936 = vcombine.high %v891, %v923
    %v937 = vcombine.low %v898, %v930
    %v938 = vcombine.high %v898, %v930
    %v939 = vcombine.low %v421, %v437
    %v940 = vcombine.high %v421, %v437
    %v942 = vunpack.c.l.s4 1983009808
    %v943 = vunpack.c.0.s8 %v942
    %v944 = vlaneseq
    %v945 = vshrl.u32 %v944, 7
    %v946 = vsub.s32 %v943, %v945
    %v947 = vrot.slane %v939, %v946
    %v949 = vunpack.c.l.s4 1983009808
    %v950 = vunpack.c.0.s8 %v949
    %v951 = vlaneseq
    %v952 = vshrl.u32 %v951, 7
    %v953 = vsub.s32 %v950, %v952
    %v954 = vrot.slane %v940, %v953
    %v955 = vcombine.low %v429, %v445
    %v956 = vcombine.high %v429, %v445
    %v958 = vunpack.c.l.s4 1983009808
    %v959 = vunpack.c.0.s8 %v958
    %v960 = vlaneseq
    %v961 = vshrl.u32 %v960, 7
    %v962 = vsub.s32 %v959, %v961
    %v963 = vrot.slane %v955, %v962
    %v965 = vunpack.c.l.s4 1983009808
    %v966 = vunpack.c.0.s8 %v965
    %v967 = vlaneseq
    %v968 = vshrl.u32 %v967, 7
    %v969 = vsub.s32 %v966, %v968
    %v970 = vrot.slane %v956, %v969
    %v971 = vcombine.high %v453, %v467
    %v973 = vunpack.c.l.s4 1983009808
    %v974 = vunpack.c.0.s8 %v973
    %v975 = vlaneseq
    %v976 = vshrl.u32 %v975, 7
    %v977 = vsub.s32 %v974, %v976
    %v978 = vrot.slane %v453, %v977
    %v980 = vunpack.c.l.s4 1983009808
    %v981 = vunpack.c.0.s8 %v980
    %v982 = vlaneseq
    %v983 = vshrl.u32 %v982, 7
    %v984 = vsub.s32 %v981, %v983
    %v985 = vrot.slane %v971, %v984
    %v986 = vcombine.high %v461, %v467
    %v988 = vunpack.c.l.s4 1983009808
    %v989 = vunpack.c.0.s8 %v988
    %v990 = vlaneseq
    %v991 = vshrl.u32 %v990, 7
    %v992 = vsub.s32 %v989, %v991
    %v993 = vrot.slane %v461, %v992
    %v995 = vunpack.c.l.s4 1983009808
    %v996 = vunpack.c.0.s8 %v995
    %v997 = vlaneseq
    %v998 = vshrl.u32 %v997, 7
    %v999 = vsub.s32 %v996, %v998
    %v1000 = vrot.slane %v986, %v999
    %v1001 = vcombine.low %v947, %v963
    %v1002 = vcombine.high %v947, %v963
    %v1004 = vunpack.c.l.s4 1934713408
    %v1005 = vunpack.c.0.s8 %v1004
    %v1006 = vlaneseq
    %v1007 = vshrl.u32 %v1006, 7
    %v1008 = vsub.s32 %v1005, %v1007
    %v1009 = vrot.slane %v1001, %v1008
    %v1011 = vunpack.c.l.s4 1934713408
    %v1012 = vunpack.c.0.s8 %v1011
    %v1013 = vlaneseq
    %v1014 = vshrl.u32 %v1013, 7
    %v1015 = vsub.s32 %v1012, %v1014
    %v1016 = vrot.slane %v1002, %v1015
    %v1017 = vcombine.low %v954, %v970
    %v1018 = vcombine.high %v954, %v970
    %v1020 = vunpack.c.l.s4 1934713408
    %v1021 = vunpack.c.0.s8 %v1020
    %v1022 = vlaneseq
    %v1023 = vshrl.u32 %v1022, 7
    %v1024 = vsub.s32 %v1021, %v1023
    %v1025 = vrot.slane %v1017, %v1024
    %v1027 = vunpack.c.l.s4 1934713408
    %v1028 = vunpack.c.0.s8 %v1027
    %v1029 = vlaneseq
    %v1030 = vshrl.u32 %v1029, 7
    %v1031 = vsub.s32 %v1028, %v1030
    %v1032 = vrot.slane %v1018, %v1031
    %v1033 = vcombine.low %v978, %v993
    %v1034 = vcombine.high %v978, %v993
    %v1036 = vunpack.c.l.s4 1934713408
    %v1037 = vunpack.c.0.s8 %v1036
    %v1038 = vlaneseq
    %v1039 = vshrl.u32 %v1038, 7
    %v1040 = vsub.s32 %v1037, %v1039
    %v1041 = vrot.slane %v1033, %v1040
    %v1043 = vunpack.c.l.s4 1934713408
    %v1044 = vunpack.c.0.s8 %v1043
    %v1045 = vlaneseq
    %v1046 = vshrl.u32 %v1045, 7
    %v1047 = vsub.s32 %v1044, %v1046
    %v1048 = vrot.slane %v1034, %v1047
    %v1049 = vcombine.low %v985, %v1000
    %v1050 = vcombine.high %v985, %v1000
    %v1052 = vunpack.c.l.s4 1934713408
    %v1053 = vunpack.c.0.s8 %v1052
    %v1054 = vlaneseq
    %v1055 = vshrl.u32 %v1054, 7
    %v1056 = vsub.s32 %v1053, %v1055
    %v1057 = vrot.slane %v1049, %v1056
    %v1059 = vunpack.c.l.s4 1934713408
    %v1060 = vunpack.c.0.s8 %v1059
    %v1061 = vlaneseq
    %v1062 = vshrl.u32 %v1061, 7
    %v1063 = vsub.s32 %v1060, %v1062
    %v1064 = vrot.slane %v1050, %v1063
    %v1065 = vcombine.low %v1009, %v1041
    %v1066 = vcombine.high %v1009, %v1041
    %v1067 = vcombine.low %v1016, %v1048
    %v1068 = vcombine.high %v1016, %v1048
    %v1069 = vcombine.low %v1025, %v1057
    %v1070 = vcombine.high %v1025, %v1057
    %v1071 = vcombine.low %v1032, %v1064
    %v1072 = vcombine.high %v1032, %v1064
    %v1073 = vcombine.low %v471, %v487
    %v1074 = vcombine.high %v471, %v487
    %v1076 = vunpack.c.l.s4 1983009808
    %v1077 = vunpack.c.0.s8 %v1076
    %v1078 = vlaneseq
    %v1079 = vshrl.u32 %v1078, 7
    %v1080 = vsub.s32 %v1077, %v1079
    %v1081 = vrot.slane %v1073, %v1080
    %v1083 = vunpack.c.l.s4 1983009808
    %v1084 = vunpack.c.0.s8 %v1083
    %v1085 = vlaneseq
    %v1086 = vshrl.u32 %v1085, 7
    %v1087 = vsub.s32 %v1084, %v1086
    %v1088 = vrot.slane %v1074, %v1087
    %v1089 = vcombine.low %v479, %v495
    %v1090 = vcombine.high %v479, %v495
    %v1092 = vunpack.c.l.s4 1983009808
    %v1093 = vunpack.c.0.s8 %v1092
    %v1094 = vlaneseq
    %v1095 = vshrl.u32 %v1094, 7
    %v1096 = vsub.s32 %v1093, %v1095
    %v1097 = vrot.slane %v1089, %v1096
    %v1099 = vunpack.c.l.s4 1983009808
    %v1100 = vunpack.c.0.s8 %v1099
    %v1101 = vlaneseq
    %v1102 = vshrl.u32 %v1101, 7
    %v1103 = vsub.s32 %v1100, %v1102
    %v1104 = vrot.slane %v1090, %v1103
    %v1105 = vcombine.high %v503, %v464
    %v1107 = vunpack.c.l.s4 1983009808
    %v1108 = vunpack.c.0.s8 %v1107
    %v1109 = vlaneseq
    %v1110 = vshrl.u32 %v1109, 7
    %v1111 = vsub.s32 %v1108, %v1110
    %v1112 = vrot.slane %v503, %v1111
    %v1114 = vunpack.c.l.s4 1983009808
    %v1115 = vunpack.c.0.s8 %v1114
    %v1116 = vlaneseq
    %v1117 = vshrl.u32 %v1116, 7
    %v1118 = vsub.s32 %v1115, %v1117
    %v1119 = vrot.slane %v1105, %v1118
    %v1120 = vcombine.high %v511, %v464
    %v1122 = vunpack.c.l.s4 1983009808
    %v1123 = vunpack.c.0.s8 %v1122
    %v1124 = vlaneseq
    %v1125 = vshrl.u32 %v1124, 7
    %v1126 = vsub.s32 %v1123, %v1125
    %v1127 = vrot.slane %v511, %v1126
    %v1129 = vunpack.c.l.s4 1983009808
    %v1130 = vunpack.c.0.s8 %v1129
    %v1131 = vlaneseq
    %v1132 = vshrl.u32 %v1131, 7
    %v1133 = vsub.s32 %v1130, %v1132
    %v1134 = vrot.slane %v1120, %v1133
    %v1135 = vcombine.low %v1081, %v1097
    %v1136 = vcombine.high %v1081, %v1097
    %v1138 = vunpack.c.l.s4 1934713408
    %v1139 = vunpack.c.0.s8 %v1138
    %v1140 = vlaneseq
    %v1141 = vshrl.u32 %v1140, 7
    %v1142 = vsub.s32 %v1139, %v1141
    %v1143 = vrot.slane %v1135, %v1142
    %v1145 = vunpack.c.l.s4 1934713408
    %v1146 = vunpack.c.0.s8 %v1145
    %v1147 = vlaneseq
    %v1148 = vshrl.u32 %v1147, 7
    %v1149 = vsub.s32 %v1146, %v1148
    %v1150 = vrot.slane %v1136, %v1149
    %v1151 = vcombine.low %v1088, %v1104
    %v1152 = vcombine.high %v1088, %v1104
    %v1154 = vunpack.c.l.s4 1934713408
    %v1155 = vunpack.c.0.s8 %v1154
    %v1156 = vlaneseq
    %v1157 = vshrl.u32 %v1156, 7
    %v1158 = vsub.s32 %v1155, %v1157
    %v1159 = vrot.slane %v1151, %v1158
    %v1161 = vunpack.c.l.s4 1934713408
    %v1162 = vunpack.c.0.s8 %v1161
    %v1163 = vlaneseq
    %v1164 = vshrl.u32 %v1163, 7
    %v1165 = vsub.s32 %v1162, %v1164
    %v1166 = vrot.slane %v1152, %v1165
    %v1167 = vcombine.low %v1112, %v1127
    %v1168 = vcombine.high %v1112, %v1127
    %v1170 = vunpack.c.l.s4 1934713408
    %v1171 = vunpack.c.0.s8 %v1170
    %v1172 = vlaneseq
    %v1173 = vshrl.u32 %v1172, 7
    %v1174 = vsub.s32 %v1171, %v1173
    %v1175 = vrot.slane %v1167, %v1174
    %v1177 = vunpack.c.l.s4 1934713408
    %v1178 = vunpack.c.0.s8 %v1177
    %v1179 = vlaneseq
    %v1180 = vshrl.u32 %v1179, 7
    %v1181 = vsub.s32 %v1178, %v1180
    %v1182 = vrot.slane %v1168, %v1181
    %v1183 = vcombine.low %v1119, %v1134
    %v1184 = vcombine.high %v1119, %v1134
    %v1186 = vunpack.c.l.s4 1934713408
    %v1187 = vunpack.c.0.s8 %v1186
    %v1188 = vlaneseq
    %v1189 = vshrl.u32 %v1188, 7
    %v1190 = vsub.s32 %v1187, %v1189
    %v1191 = vrot.slane %v1183, %v1190
    %v1193 = vunpack.c.l.s4 1934713408
    %v1194 = vunpack.c.0.s8 %v1193
    %v1195 = vlaneseq
    %v1196 = vshrl.u32 %v1195, 7
    %v1197 = vsub.s32 %v1194, %v1196
    %v1198 = vrot.slane %v1184, %v1197
    %v1199 = vcombine.low %v1143, %v1175
    %v1200 = vcombine.high %v1143, %v1175
    %v1201 = vcombine.low %v1150, %v1182
    %v1202 = vcombine.high %v1150, %v1182
    %v1203 = vcombine.low %v1159, %v1191
    %v1204 = vcombine.high %v1159, %v1191
    %v1205 = vcombine.low %v1166, %v1198
    %v1206 = vcombine.high %v1166, %v1198
    %v1207 = vcombine.low %v475, %v491
    %v1208 = vcombine.high %v475, %v491
    %v1210 = vunpack.c.l.s4 1983009808
    %v1211 = vunpack.c.0.s8 %v1210
    %v1212 = vlaneseq
    %v1213 = vshrl.u32 %v1212, 7
    %v1214 = vsub.s32 %v1211, %v1213
    %v1215 = vrot.slane %v1207, %v1214
    %v1217 = vunpack.c.l.s4 1983009808
    %v1218 = vunpack.c.0.s8 %v1217
    %v1219 = vlaneseq
    %v1220 = vshrl.u32 %v1219, 7
    %v1221 = vsub.s32 %v1218, %v1220
    %v1222 = vrot.slane %v1208, %v1221
    %v1223 = vcombine.low %v483, %v499
    %v1224 = vcombine.high %v483, %v499
    %v1226 = vunpack.c.l.s4 1983009808
    %v1227 = vunpack.c.0.s8 %v1226
    %v1228 = vlaneseq
    %v1229 = vshrl.u32 %v1228, 7
    %v1230 = vsub.s32 %v1227, %v1229
    %v1231 = vrot.slane %v1223, %v1230
    %v1233 = vunpack.c.l.s4 1983009808
    %v1234 = vunpack.c.0.s8 %v1233
    %v1235 = vlaneseq
    %v1236 = vshrl.u32 %v1235, 7
    %v1237 = vsub.s32 %v1234, %v1236
    %v1238 = vrot.slane %v1224, %v1237
    %v1239 = vcombine.high %v507, %v467
    %v1241 = vunpack.c.l.s4 1983009808
    %v1242 = vunpack.c.0.s8 %v1241
    %v1243 = vlaneseq
    %v1244 = vshrl.u32 %v1243, 7
    %v1245 = vsub.s32 %v1242, %v1244
    %v1246 = vrot.slane %v507, %v1245
    %v1248 = vunpack.c.l.s4 1983009808
    %v1249 = vunpack.c.0.s8 %v1248
    %v1250 = vlaneseq
    %v1251 = vshrl.u32 %v1250, 7
    %v1252 = vsub.s32 %v1249, %v1251
    %v1253 = vrot.slane %v1239, %v1252
    %v1254 = vcombine.high %v515, %v467
    %v1256 = vunpack.c.l.s4 1983009808
    %v1257 = vunpack.c.0.s8 %v1256
    %v1258 = vlaneseq
    %v1259 = vshrl.u32 %v1258, 7
    %v1260 = vsub.s32 %v1257, %v1259
    %v1261 = vrot.slane %v515, %v1260
    %v1263 = vunpack.c.l.s4 1983009808
    %v1264 = vunpack.c.0.s8 %v1263
    %v1265 = vlaneseq
    %v1266 = vshrl.u32 %v1265, 7
    %v1267 = vsub.s32 %v1264, %v1266
    %v1268 = vrot.slane %v1254, %v1267
    %v1269 = vcombine.low %v1215, %v1231
    %v1270 = vcombine.high %v1215, %v1231
    %v1272 = vunpack.c.l.s4 1934713408
    %v1273 = vunpack.c.0.s8 %v1272
    %v1274 = vlaneseq
    %v1275 = vshrl.u32 %v1274, 7
    %v1276 = vsub.s32 %v1273, %v1275
    %v1277 = vrot.slane %v1269, %v1276
    %v1279 = vunpack.c.l.s4 1934713408
    %v1280 = vunpack.c.0.s8 %v1279
    %v1281 = vlaneseq
    %v1282 = vshrl.u32 %v1281, 7
    %v1283 = vsub.s32 %v1280, %v1282
    %v1284 = vrot.slane %v1270, %v1283
    %v1285 = vcombine.low %v1222, %v1238
    %v1286 = vcombine.high %v1222, %v1238
    %v1288 = vunpack.c.l.s4 1934713408
    %v1289 = vunpack.c.0.s8 %v1288
    %v1290 = vlaneseq
    %v1291 = vshrl.u32 %v1290, 7
    %v1292 = vsub.s32 %v1289, %v1291
    %v1293 = vrot.slane %v1285, %v1292
    %v1295 = vunpack.c.l.s4 1934713408
    %v1296 = vunpack.c.0.s8 %v1295
    %v1297 = vlaneseq
    %v1298 = vshrl.u32 %v1297, 7
    %v1299 = vsub.s32 %v1296, %v1298
    %v1300 = vrot.slane %v1286, %v1299
    %v1301 = vcombine.low %v1246, %v1261
    %v1302 = vcombine.high %v1246, %v1261
    %v1304 = vunpack.c.l.s4 1934713408
    %v1305 = vunpack.c.0.s8 %v1304
    %v1306 = vlaneseq
    %v1307 = vshrl.u32 %v1306, 7
    %v1308 = vsub.s32 %v1305, %v1307
    %v1309 = vrot.slane %v1301, %v1308
    %v1311 = vunpack.c.l.s4 1934713408
    %v1312 = vunpack.c.0.s8 %v1311
    %v1313 = vlaneseq
    %v1314 = vshrl.u32 %v1313, 7
    %v1315 = vsub.s32 %v1312, %v1314
    %v1316 = vrot.slane %v1302, %v1315
    %v1317 = vcombine.low %v1253, %v1268
    %v1318 = vcombine.high %v1253, %v1268
    %v1320 = vunpack.c.l.s4 1934713408
    %v1321 = vunpack.c.0.s8 %v1320
    %v1322 = vlaneseq
    %v1323 = vshrl.u32 %v1322, 7
    %v1324 = vsub.s32 %v1321, %v1323
    %v1325 = vrot.slane %v1317, %v1324
    %v1327 = vunpack.c.l.s4 1934713408
    %v1328 = vunpack.c.0.s8 %v1327
    %v1329 = vlaneseq
    %v1330 = vshrl.u32 %v1329, 7
    %v1331 = vsub.s32 %v1328, %v1330
    %v1332 = vrot.slane %v1318, %v1331
    %v1333 = vcombine.low %v1277, %v1309
    %v1334 = vcombine.high %v1277, %v1309
    %v1335 = vcombine.low %v1284, %v1316
    %v1336 = vcombine.high %v1284, %v1316
    %v1337 = vcombine.low %v1293, %v1325
    %v1338 = vcombine.high %v1293, %v1325
    %v1339 = vcombine.low %v1300, %v1332
    %v1340 = vcombine.high %v1300, %v1332
    %v1341 = vcombine.low %v519, %v535
    %v1342 = vcombine.high %v519, %v535
    %v1344 = vunpack.c.l.s4 1983009808
    %v1345 = vunpack.c.0.s8 %v1344
    %v1346 = vlaneseq
    %v1347 = vshrl.u32 %v1346, 7
    %v1348 = vsub.s32 %v1345, %v1347
    %v1349 = vrot.slane %v1341, %v1348
    %v1351 = vunpack.c.l.s4 1983009808
    %v1352 = vunpack.c.0.s8 %v1351
    %v1353 = vlaneseq
    %v1354 = vshrl.u32 %v1353, 7
    %v1355 = vsub.s32 %v1352, %v1354
    %v1356 = vrot.slane %v1342, %v1355
    %v1357 = vcombine.low %v527, %v543
    %v1358 = vcombine.high %v527, %v543
    %v1360 = vunpack.c.l.s4 1983009808
    %v1361 = vunpack.c.0.s8 %v1360
    %v1362 = vlaneseq
    %v1363 = vshrl.u32 %v1362, 7
    %v1364 = vsub.s32 %v1361, %v1363
    %v1365 = vrot.slane %v1357, %v1364
    %v1367 = vunpack.c.l.s4 1983009808
    %v1368 = vunpack.c.0.s8 %v1367
    %v1369 = vlaneseq
    %v1370 = vshrl.u32 %v1369, 7
    %v1371 = vsub.s32 %v1368, %v1370
    %v1372 = vrot.slane %v1358, %v1371
    %v1373 = vcombine.high %v551, %v464
    %v1375 = vunpack.c.l.s4 1983009808
    %v1376 = vunpack.c.0.s8 %v1375
    %v1377 = vlaneseq
    %v1378 = vshrl.u32 %v1377, 7
    %v1379 = vsub.s32 %v1376, %v1378
    %v1380 = vrot.slane %v551, %v1379
    %v1382 = vunpack.c.l.s4 1983009808
    %v1383 = vunpack.c.0.s8 %v1382
    %v1384 = vlaneseq
    %v1385 = vshrl.u32 %v1384, 7
    %v1386 = vsub.s32 %v1383, %v1385
    %v1387 = vrot.slane %v1373, %v1386
    %v1388 = vcombine.high %v559, %v464
    %v1390 = vunpack.c.l.s4 1983009808
    %v1391 = vunpack.c.0.s8 %v1390
    %v1392 = vlaneseq
    %v1393 = vshrl.u32 %v1392, 7
    %v1394 = vsub.s32 %v1391, %v1393
    %v1395 = vrot.slane %v559, %v1394
    %v1397 = vunpack.c.l.s4 1983009808
    %v1398 = vunpack.c.0.s8 %v1397
    %v1399 = vlaneseq
    %v1400 = vshrl.u32 %v1399, 7
    %v1401 = vsub.s32 %v1398, %v1400
    %v1402 = vrot.slane %v1388, %v1401
    %v1403 = vcombine.low %v1349, %v1365
    %v1404 = vcombine.high %v1349, %v1365
    %v1406 = vunpack.c.l.s4 1934713408
    %v1407 = vunpack.c.0.s8 %v1406
    %v1408 = vlaneseq
    %v1409 = vshrl.u32 %v1408, 7
    %v1410 = vsub.s32 %v1407, %v1409
    %v1411 = vrot.slane %v1403, %v1410
    %v1413 = vunpack.c.l.s4 1934713408
    %v1414 = vunpack.c.0.s8 %v1413
    %v1415 = vlaneseq
    %v1416 = vshrl.u32 %v1415, 7
    %v1417 = vsub.s32 %v1414, %v1416
    %v1418 = vrot.slane %v1404, %v1417
    %v1419 = vcombine.low %v1356, %v1372
    %v1420 = vcombine.high %v1356, %v1372
    %v1422 = vunpack.c.l.s4 1934713408
    %v1423 = vunpack.c.0.s8 %v1422
    %v1424 = vlaneseq
    %v1425 = vshrl.u32 %v1424, 7
    %v1426 = vsub.s32 %v1423, %v1425
    %v1427 = vrot.slane %v1419, %v1426
    %v1429 = vunpack.c.l.s4 1934713408
    %v1430 = vunpack.c.0.s8 %v1429
    %v1431 = vlaneseq
    %v1432 = vshrl.u32 %v1431, 7
    %v1433 = vsub.s32 %v1430, %v1432
    %v1434 = vrot.slane %v1420, %v1433
    %v1435 = vcombine.low %v1380, %v1395
    %v1436 = vcombine.high %v1380, %v1395
    %v1438 = vunpack.c.l.s4 1934713408
    %v1439 = vunpack.c.0.s8 %v1438
    %v1440 = vlaneseq
    %v1441 = vshrl.u32 %v1440, 7
    %v1442 = vsub.s32 %v1439, %v1441
    %v1443 = vrot.slane %v1435, %v1442
    %v1445 = vunpack.c.l.s4 1934713408
    %v1446 = vunpack.c.0.s8 %v1445
    %v1447 = vlaneseq
    %v1448 = vshrl.u32 %v1447, 7
    %v1449 = vsub.s32 %v1446, %v1448
    %v1450 = vrot.slane %v1436, %v1449
    %v1451 = vcombine.low %v1387, %v1402
    %v1452 = vcombine.high %v1387, %v1402
    %v1454 = vunpack.c.l.s4 1934713408
    %v1455 = vunpack.c.0.s8 %v1454
    %v1456 = vlaneseq
    %v1457 = vshrl.u32 %v1456, 7
    %v1458 = vsub.s32 %v1455, %v1457
    %v1459 = vrot.slane %v1451, %v1458
    %v1461 = vunpack.c.l.s4 1934713408
    %v1462 = vunpack.c.0.s8 %v1461
    %v1463 = vlaneseq
    %v1464 = vshrl.u32 %v1463, 7
    %v1465 = vsub.s32 %v1462, %v1464
    %v1466 = vrot.slane %v1452, %v1465
    %v1467 = vcombine.low %v1411, %v1443
    %v1468 = vcombine.high %v1411, %v1443
    %v1469 = vcombine.low %v1418, %v1450
    %v1470 = vcombine.high %v1418, %v1450
    %v1471 = vcombine.low %v1427, %v1459
    %v1472 = vcombine.high %v1427, %v1459
    %v1473 = vcombine.low %v1434, %v1466
    %v1474 = vcombine.high %v1434, %v1466
    %v1475 = vcombine.low %v523, %v539
    %v1476 = vcombine.high %v523, %v539
    %v1478 = vunpack.c.l.s4 1983009808
    %v1479 = vunpack.c.0.s8 %v1478
    %v1480 = vlaneseq
    %v1481 = vshrl.u32 %v1480, 7
    %v1482 = vsub.s32 %v1479, %v1481
    %v1483 = vrot.slane %v1475, %v1482
    %v1485 = vunpack.c.l.s4 1983009808
    %v1486 = vunpack.c.0.s8 %v1485
    %v1487 = vlaneseq
    %v1488 = vshrl.u32 %v1487, 7
    %v1489 = vsub.s32 %v1486, %v1488
    %v1490 = vrot.slane %v1476, %v1489
    %v1491 = vcombine.low %v531, %v547
    %v1492 = vcombine.high %v531, %v547
    %v1494 = vunpack.c.l.s4 1983009808
    %v1495 = vunpack.c.0.s8 %v1494
    %v1496 = vlaneseq
    %v1497 = vshrl.u32 %v1496, 7
    %v1498 = vsub.s32 %v1495, %v1497
    %v1499 = vrot.slane %v1491, %v1498
    %v1501 = vunpack.c.l.s4 1983009808
    %v1502 = vunpack.c.0.s8 %v1501
    %v1503 = vlaneseq
    %v1504 = vshrl.u32 %v1503, 7
    %v1505 = vsub.s32 %v1502, %v1504
    %v1506 = vrot.slane %v1492, %v1505
    %v1507 = vcombine.high %v555, %v467
    %v1509 = vunpack.c.l.s4 1983009808
    %v1510 = vunpack.c.0.s8 %v1509
    %v1511 = vlaneseq
    %v1512 = vshrl.u32 %v1511, 7
    %v1513 = vsub.s32 %v1510, %v1512
    %v1514 = vrot.slane %v555, %v1513
    %v1516 = vunpack.c.l.s4 1983009808
    %v1517 = vunpack.c.0.s8 %v1516
    %v1518 = vlaneseq
    %v1519 = vshrl.u32 %v1518, 7
    %v1520 = vsub.s32 %v1517, %v1519
    %v1521 = vrot.slane %v1507, %v1520
    %v1522 = vcombine.high %v563, %v467
    %v1524 = vunpack.c.l.s4 1983009808
    %v1525 = vunpack.c.0.s8 %v1524
    %v1526 = vlaneseq
    %v1527 = vshrl.u32 %v1526, 7
    %v1528 = vsub.s32 %v1525, %v1527
    %v1529 = vrot.slane %v563, %v1528
    %v1531 = vunpack.c.l.s4 1983009808
    %v1532 = vunpack.c.0.s8 %v1531
    %v1533 = vlaneseq
    %v1534 = vshrl.u32 %v1533, 7
    %v1535 = vsub.s32 %v1532, %v1534
    %v1536 = vrot.slane %v1522, %v1535
    %v1537 = vcombine.low %v1483, %v1499
    %v1538 = vcombine.high %v1483, %v1499
    %v1540 = vunpack.c.l.s4 1934713408
    %v1541 = vunpack.c.0.s8 %v1540
    %v1542 = vlaneseq
    %v1543 = vshrl.u32 %v1542, 7
    %v1544 = vsub.s32 %v1541, %v1543
    %v1545 = vrot.slane %v1537, %v1544
    %v1547 = vunpack.c.l.s4 1934713408
    %v1548 = vunpack.c.0.s8 %v1547
    %v1549 = vlaneseq
    %v1550 = vshrl.u32 %v1549, 7
    %v1551 = vsub.s32 %v1548, %v1550
    %v1552 = vrot.slane %v1538, %v1551
    %v1553 = vcombine.low %v1490, %v1506
    %v1554 = vcombine.high %v1490, %v1506
    %v1556 = vunpack.c.l.s4 1934713408
    %v1557 = vunpack.c.0.s8 %v1556
    %v1558 = vlaneseq
    %v1559 = vshrl.u32 %v1558, 7
    %v1560 = vsub.s32 %v1557, %v1559
    %v1561 = vrot.slane %v1553, %v1560
    %v1563 = vunpack.c.l.s4 1934713408
    %v1564 = vunpack.c.0.s8 %v1563
    %v1565 = vlaneseq
    %v1566 = vshrl.u32 %v1565, 7
    %v1567 = vsub.s32 %v1564, %v1566
    %v1568 = vrot.slane %v1554, %v1567
    %v1569 = vcombine.low %v1514, %v1529
    %v1570 = vcombine.high %v1514, %v1529
    %v1572 = vunpack.c.l.s4 1934713408
    %v1573 = vunpack.c.0.s8 %v1572
    %v1574 = vlaneseq
    %v1575 = vshrl.u32 %v1574, 7
    %v1576 = vsub.s32 %v1573, %v1575
    %v1577 = vrot.slane %v1569, %v1576
    %v1579 = vunpack.c.l.s4 1934713408
    %v1580 = vunpack.c.0.s8 %v1579
    %v1581 = vlaneseq
    %v1582 = vshrl.u32 %v1581, 7
    %v1583 = vsub.s32 %v1580, %v1582
    %v1584 = vrot.slane %v1570, %v1583
    %v1585 = vcombine.low %v1521, %v1536
    %v1586 = vcombine.high %v1521, %v1536
    %v1588 = vunpack.c.l.s4 1934713408
    %v1589 = vunpack.c.0.s8 %v1588
    %v1590 = vlaneseq
    %v1591 = vshrl.u32 %v1590, 7
    %v1592 = vsub.s32 %v1589, %v1591
    %v1593 = vrot.slane %v1585, %v1592
    %v1595 = vunpack.c.l.s4 1934713408
    %v1596 = vunpack.c.0.s8 %v1595
    %v1597 = vlaneseq
    %v1598 = vshrl.u32 %v1597, 7
    %v1599 = vsub.s32 %v1596, %v1598
    %v1600 = vrot.slane %v1586, %v1599
    %v1601 = vcombine.low %v1545, %v1577
    %v1602 = vcombine.high %v1545, %v1577
    %v1603 = vcombine.low %v1552, %v1584
    %v1604 = vcombine.high %v1552, %v1584
    %v1605 = vcombine.low %v1561, %v1593
    %v1606 = vcombine.high %v1561, %v1593
    %v1607 = vcombine.low %v1568, %v1600
    %v1608 = vcombine.high %v1568, %v1600
    %v1609 = vcombine.low %v567, %v583
    %v1610 = vcombine.high %v567, %v583
    %v1612 = vunpack.c.l.s4 1983009808
    %v1613 = vunpack.c.0.s8 %v1612
    %v1614 = vlaneseq
    %v1615 = vshrl.u32 %v1614, 7
    %v1616 = vsub.s32 %v1613, %v1615
    %v1617 = vrot.slane %v1609, %v1616
    %v1619 = vunpack.c.l.s4 1983009808
    %v1620 = vunpack.c.0.s8 %v1619
    %v1621 = vlaneseq
    %v1622 = vshrl.u32 %v1621, 7
    %v1623 = vsub.s32 %v1620, %v1622
    %v1624 = vrot.slane %v1610, %v1623
    %v1625 = vcombine.low %v575, %v591
    %v1626 = vcombine.high %v575, %v591
    %v1628 = vunpack.c.l.s4 1983009808
    %v1629 = vunpack.c.0.s8 %v1628
    %v1630 = vlaneseq
    %v1631 = vshrl.u32 %v1630, 7
    %v1632 = vsub.s32 %v1629, %v1631
    %v1633 = vrot.slane %v1625, %v1632
    %v1635 = vunpack.c.l.s4 1983009808
    %v1636 = vunpack.c.0.s8 %v1635
    %v1637 = vlaneseq
    %v1638 = vshrl.u32 %v1637, 7
    %v1639 = vsub.s32 %v1636, %v1638
    %v1640 = vrot.slane %v1626, %v1639
    %v1641 = vcombine.high %v599, %v464
    %v1643 = vunpack.c.l.s4 1983009808
    %v1644 = vunpack.c.0.s8 %v1643
    %v1645 = vlaneseq
    %v1646 = vshrl.u32 %v1645, 7
    %v1647 = vsub.s32 %v1644, %v1646
    %v1648 = vrot.slane %v599, %v1647
    %v1650 = vunpack.c.l.s4 1983009808
    %v1651 = vunpack.c.0.s8 %v1650
    %v1652 = vlaneseq
    %v1653 = vshrl.u32 %v1652, 7
    %v1654 = vsub.s32 %v1651, %v1653
    %v1655 = vrot.slane %v1641, %v1654
    %v1656 = vcombine.high %v607, %v464
    %v1658 = vunpack.c.l.s4 1983009808
    %v1659 = vunpack.c.0.s8 %v1658
    %v1660 = vlaneseq
    %v1661 = vshrl.u32 %v1660, 7
    %v1662 = vsub.s32 %v1659, %v1661
    %v1663 = vrot.slane %v607, %v1662
    %v1665 = vunpack.c.l.s4 1983009808
    %v1666 = vunpack.c.0.s8 %v1665
    %v1667 = vlaneseq
    %v1668 = vshrl.u32 %v1667, 7
    %v1669 = vsub.s32 %v1666, %v1668
    %v1670 = vrot.slane %v1656, %v1669
    %v1671 = vcombine.low %v1617, %v1633
    %v1672 = vcombine.high %v1617, %v1633
    %v1674 = vunpack.c.l.s4 1934713408
    %v1675 = vunpack.c.0.s8 %v1674
    %v1676 = vlaneseq
    %v1677 = vshrl.u32 %v1676, 7
    %v1678 = vsub.s32 %v1675, %v1677
    %v1679 = vrot.slane %v1671, %v1678
    %v1681 = vunpack.c.l.s4 1934713408
    %v1682 = vunpack.c.0.s8 %v1681
    %v1683 = vlaneseq
    %v1684 = vshrl.u32 %v1683, 7
    %v1685 = vsub.s32 %v1682, %v1684
    %v1686 = vrot.slane %v1672, %v1685
    %v1687 = vcombine.low %v1624, %v1640
    %v1688 = vcombine.high %v1624, %v1640
    %v1690 = vunpack.c.l.s4 1934713408
    %v1691 = vunpack.c.0.s8 %v1690
    %v1692 = vlaneseq
    %v1693 = vshrl.u32 %v1692, 7
    %v1694 = vsub.s32 %v1691, %v1693
    %v1695 = vrot.slane %v1687, %v1694
    %v1697 = vunpack.c.l.s4 1934713408
    %v1698 = vunpack.c.0.s8 %v1697
    %v1699 = vlaneseq
    %v1700 = vshrl.u32 %v1699, 7
    %v1701 = vsub.s32 %v1698, %v1700
    %v1702 = vrot.slane %v1688, %v1701
    %v1703 = vcombine.low %v1648, %v1663
    %v1704 = vcombine.high %v1648, %v1663
    %v1706 = vunpack.c.l.s4 1934713408
    %v1707 = vunpack.c.0.s8 %v1706
    %v1708 = vlaneseq
    %v1709 = vshrl.u32 %v1708, 7
    %v1710 = vsub.s32 %v1707, %v1709
    %v1711 = vrot.slane %v1703, %v1710
    %v1713 = vunpack.c.l.s4 1934713408
    %v1714 = vunpack.c.0.s8 %v1713
    %v1715 = vlaneseq
    %v1716 = vshrl.u32 %v1715, 7
    %v1717 = vsub.s32 %v1714, %v1716
    %v1718 = vrot.slane %v1704, %v1717
    %v1719 = vcombine.low %v1655, %v1670
    %v1720 = vcombine.high %v1655, %v1670
    %v1722 = vunpack.c.l.s4 1934713408
    %v1723 = vunpack.c.0.s8 %v1722
    %v1724 = vlaneseq
    %v1725 = vshrl.u32 %v1724, 7
    %v1726 = vsub.s32 %v1723, %v1725
    %v1727 = vrot.slane %v1719, %v1726
    %v1729 = vunpack.c.l.s4 1934713408
    %v1730 = vunpack.c.0.s8 %v1729
    %v1731 = vlaneseq
    %v1732 = vshrl.u32 %v1731, 7
    %v1733 = vsub.s32 %v1730, %v1732
    %v1734 = vrot.slane %v1720, %v1733
    %v1735 = vcombine.low %v1679, %v1711
    %v1736 = vcombine.high %v1679, %v1711
    %v1737 = vcombine.low %v1686, %v1718
    %v1738 = vcombine.high %v1686, %v1718
    %v1739 = vcombine.low %v1695, %v1727
    %v1740 = vcombine.high %v1695, %v1727
    %v1741 = vcombine.low %v1702, %v1734
    %v1742 = vcombine.high %v1702, %v1734
    %v1743 = vcombine.low %v571, %v587
    %v1744 = vcombine.high %v571, %v587
    %v1746 = vunpack.c.l.s4 1983009808
    %v1747 = vunpack.c.0.s8 %v1746
    %v1748 = vlaneseq
    %v1749 = vshrl.u32 %v1748, 7
    %v1750 = vsub.s32 %v1747, %v1749
    %v1751 = vrot.slane %v1743, %v1750
    %v1753 = vunpack.c.l.s4 1983009808
    %v1754 = vunpack.c.0.s8 %v1753
    %v1755 = vlaneseq
    %v1756 = vshrl.u32 %v1755, 7
    %v1757 = vsub.s32 %v1754, %v1756
    %v1758 = vrot.slane %v1744, %v1757
    %v1759 = vcombine.low %v579, %v595
    %v1760 = vcombine.high %v579, %v595
    %v1762 = vunpack.c.l.s4 1983009808
    %v1763 = vunpack.c.0.s8 %v1762
    %v1764 = vlaneseq
    %v1765 = vshrl.u32 %v1764, 7
    %v1766 = vsub.s32 %v1763, %v1765
    %v1767 = vrot.slane %v1759, %v1766
    %v1769 = vunpack.c.l.s4 1983009808
    %v1770 = vunpack.c.0.s8 %v1769
    %v1771 = vlaneseq
    %v1772 = vshrl.u32 %v1771, 7
    %v1773 = vsub.s32 %v1770, %v1772
    %v1774 = vrot.slane %v1760, %v1773
    %v1775 = vcombine.high %v603, %v467
    %v1777 = vunpack.c.l.s4 1983009808
    %v1778 = vunpack.c.0.s8 %v1777
    %v1779 = vlaneseq
    %v1780 = vshrl.u32 %v1779, 7
    %v1781 = vsub.s32 %v1778, %v1780
    %v1782 = vrot.slane %v603, %v1781
    %v1784 = vunpack.c.l.s4 1983009808
    %v1785 = vunpack.c.0.s8 %v1784
    %v1786 = vlaneseq
    %v1787 = vshrl.u32 %v1786, 7
    %v1788 = vsub.s32 %v1785, %v1787
    %v1789 = vrot.slane %v1775, %v1788
    %v1790 = vcombine.high %v611, %v467
    %v1792 = vunpack.c.l.s4 1983009808
    %v1793 = vunpack.c.0.s8 %v1792
    %v1794 = vlaneseq
    %v1795 = vshrl.u32 %v1794, 7
    %v1796 = vsub.s32 %v1793, %v1795
    %v1797 = vrot.slane %v611, %v1796
    %v1799 = vunpack.c.l.s4 1983009808
    %v1800 = vunpack.c.0.s8 %v1799
    %v1801 = vlaneseq
    %v1802 = vshrl.u32 %v1801, 7
    %v1803 = vsub.s32 %v1800, %v1802
    %v1804 = vrot.slane %v1790, %v1803
    %v1805 = vcombine.low %v1751, %v1767
    %v1806 = vcombine.high %v1751, %v1767
    %v1808 = vunpack.c.l.s4 1934713408
    %v1809 = vunpack.c.0.s8 %v1808
    %v1810 = vlaneseq
    %v1811 = vshrl.u32 %v1810, 7
    %v1812 = vsub.s32 %v1809, %v1811
    %v1813 = vrot.slane %v1805, %v1812
    %v1815 = vunpack.c.l.s4 1934713408
    %v1816 = vunpack.c.0.s8 %v1815
    %v1817 = vlaneseq
    %v1818 = vshrl.u32 %v1817, 7
    %v1819 = vsub.s32 %v1816, %v1818
    %v1820 = vrot.slane %v1806, %v1819
    %v1821 = vcombine.low %v1758, %v1774
    %v1822 = vcombine.high %v1758, %v1774
    %v1824 = vunpack.c.l.s4 1934713408
    %v1825 = vunpack.c.0.s8 %v1824
    %v1826 = vlaneseq
    %v1827 = vshrl.u32 %v1826, 7
    %v1828 = vsub.s32 %v1825, %v1827
    %v1829 = vrot.slane %v1821, %v1828
    %v1831 = vunpack.c.l.s4 1934713408
    %v1832 = vunpack.c.0.s8 %v1831
    %v1833 = vlaneseq
    %v1834 = vshrl.u32 %v1833, 7
    %v1835 = vsub.s32 %v1832, %v1834
    %v1836 = vrot.slane %v1822, %v1835
    %v1837 = vcombine.low %v1782, %v1797
    %v1838 = vcombine.high %v1782, %v1797
    %v1840 = vunpack.c.l.s4 1934713408
    %v1841 = vunpack.c.0.s8 %v1840
    %v1842 = vlaneseq
    %v1843 = vshrl.u32 %v1842, 7
    %v1844 = vsub.s32 %v1841, %v1843
    %v1845 = vrot.slane %v1837, %v1844
    %v1847 = vunpack.c.l.s4 1934713408
    %v1848 = vunpack.c.0.s8 %v1847
    %v1849 = vlaneseq
    %v1850 = vshrl.u32 %v1849, 7
    %v1851 = vsub.s32 %v1848, %v1850
    %v1852 = vrot.slane %v1838, %v1851
    %v1853 = vcombine.low %v1789, %v1804
    %v1854 = vcombine.high %v1789, %v1804
    %v1856 = vunpack.c.l.s4 1934713408
    %v1857 = vunpack.c.0.s8 %v1856
    %v1858 = vlaneseq
    %v1859 = vshrl.u32 %v1858, 7
    %v1860 = vsub.s32 %v1857, %v1859
    %v1861 = vrot.slane %v1853, %v1860
    %v1863 = vunpack.c.l.s4 1934713408
    %v1864 = vunpack.c.0.s8 %v1863
    %v1865 = vlaneseq
    %v1866 = vshrl.u32 %v1865, 7
    %v1867 = vsub.s32 %v1864, %v1866
    %v1868 = vrot.slane %v1854, %v1867
    %v1869 = vcombine.low %v1813, %v1845
    %v1870 = vcombine.high %v1813, %v1845
    %v1871 = vcombine.low %v1820, %v1852
    %v1872 = vcombine.high %v1820, %v1852
    %v1873 = vcombine.low %v1829, %v1861
    %v1874 = vcombine.high %v1829, %v1861
    %v1875 = vcombine.low %v1836, %v1868
    %v1876 = vcombine.high %v1836, %v1868
    %v1877 = vcombine.low %v615, %v631
    %v1878 = vcombine.high %v615, %v631
    %v1880 = vunpack.c.l.s4 1983009808
    %v1881 = vunpack.c.0.s8 %v1880
    %v1882 = vlaneseq
    %v1883 = vshrl.u32 %v1882, 7
    %v1884 = vsub.s32 %v1881, %v1883
    %v1885 = vrot.slane %v1877, %v1884
    %v1887 = vunpack.c.l.s4 1983009808
    %v1888 = vunpack.c.0.s8 %v1887
    %v1889 = vlaneseq
    %v1890 = vshrl.u32 %v1889, 7
    %v1891 = vsub.s32 %v1888, %v1890
    %v1892 = vrot.slane %v1878, %v1891
    %v1893 = vcombine.low %v623, %v639
    %v1894 = vcombine.high %v623, %v639
    %v1896 = vunpack.c.l.s4 1983009808
    %v1897 = vunpack.c.0.s8 %v1896
    %v1898 = vlaneseq
    %v1899 = vshrl.u32 %v1898, 7
    %v1900 = vsub.s32 %v1897, %v1899
    %v1901 = vrot.slane %v1893, %v1900
    %v1903 = vunpack.c.l.s4 1983009808
    %v1904 = vunpack.c.0.s8 %v1903
    %v1905 = vlaneseq
    %v1906 = vshrl.u32 %v1905, 7
    %v1907 = vsub.s32 %v1904, %v1906
    %v1908 = vrot.slane %v1894, %v1907
    %v1909 = vcombine.high %v647, %v464
    %v1911 = vunpack.c.l.s4 1983009808
    %v1912 = vunpack.c.0.s8 %v1911
    %v1913 = vlaneseq
    %v1914 = vshrl.u32 %v1913, 7
    %v1915 = vsub.s32 %v1912, %v1914
    %v1916 = vrot.slane %v647, %v1915
    %v1918 = vunpack.c.l.s4 1983009808
    %v1919 = vunpack.c.0.s8 %v1918
    %v1920 = vlaneseq
    %v1921 = vshrl.u32 %v1920, 7
    %v1922 = vsub.s32 %v1919, %v1921
    %v1923 = vrot.slane %v1909, %v1922
    %v1924 = vcombine.high %v655, %v464
    %v1926 = vunpack.c.l.s4 1983009808
    %v1927 = vunpack.c.0.s8 %v1926
    %v1928 = vlaneseq
    %v1929 = vshrl.u32 %v1928, 7
    %v1930 = vsub.s32 %v1927, %v1929
    %v1931 = vrot.slane %v655, %v1930
    %v1933 = vunpack.c.l.s4 1983009808
    %v1934 = vunpack.c.0.s8 %v1933
    %v1935 = vlaneseq
    %v1936 = vshrl.u32 %v1935, 7
    %v1937 = vsub.s32 %v1934, %v1936
    %v1938 = vrot.slane %v1924, %v1937
    %v1939 = vcombine.low %v1885, %v1901
    %v1940 = vcombine.high %v1885, %v1901
    %v1942 = vunpack.c.l.s4 1934713408
    %v1943 = vunpack.c.0.s8 %v1942
    %v1944 = vlaneseq
    %v1945 = vshrl.u32 %v1944, 7
    %v1946 = vsub.s32 %v1943, %v1945
    %v1947 = vrot.slane %v1939, %v1946
    %v1949 = vunpack.c.l.s4 1934713408
    %v1950 = vunpack.c.0.s8 %v1949
    %v1951 = vlaneseq
    %v1952 = vshrl.u32 %v1951, 7
    %v1953 = vsub.s32 %v1950, %v1952
    %v1954 = vrot.slane %v1940, %v1953
    %v1955 = vcombine.low %v1892, %v1908
    %v1956 = vcombine.high %v1892, %v1908
    %v1958 = vunpack.c.l.s4 1934713408
    %v1959 = vunpack.c.0.s8 %v1958
    %v1960 = vlaneseq
    %v1961 = vshrl.u32 %v1960, 7
    %v1962 = vsub.s32 %v1959, %v1961
    %v1963 = vrot.slane %v1955, %v1962
    %v1965 = vunpack.c.l.s4 1934713408
    %v1966 = vunpack.c.0.s8 %v1965
    %v1967 = vlaneseq
    %v1968 = vshrl.u32 %v1967, 7
    %v1969 = vsub.s32 %v1966, %v1968
    %v1970 = vrot.slane %v1956, %v1969
    %v1971 = vcombine.low %v1916, %v1931
    %v1972 = vcombine.high %v1916, %v1931
    %v1974 = vunpack.c.l.s4 1934713408
    %v1975 = vunpack.c.0.s8 %v1974
    %v1976 = vlaneseq
    %v1977 = vshrl.u32 %v1976, 7
    %v1978 = vsub.s32 %v1975, %v1977
    %v1979 = vrot.slane %v1971, %v1978
    %v1981 = vunpack.c.l.s4 1934713408
    %v1982 = vunpack.c.0.s8 %v1981
    %v1983 = vlaneseq
    %v1984 = vshrl.u32 %v1983, 7
    %v1985 = vsub.s32 %v1982, %v1984
    %v1986 = vrot.slane %v1972, %v1985
    %v1987 = vcombine.low %v1923, %v1938
    %v1988 = vcombine.high %v1923, %v1938
    %v1990 = vunpack.c.l.s4 1934713408
    %v1991 = vunpack.c.0.s8 %v1990
    %v1992 = vlaneseq
    %v1993 = vshrl.u32 %v1992, 7
    %v1994 = vsub.s32 %v1991, %v1993
    %v1995 = vrot.slane %v1987, %v1994
    %v1997 = vunpack.c.l.s4 1934713408
    %v1998 = vunpack.c.0.s8 %v1997
    %v1999 = vlaneseq
    %v2000 = vshrl.u32 %v1999, 7
    %v2001 = vsub.s32 %v1998, %v2000
    %v2002 = vrot.slane %v1988, %v2001
    %v2003 = vcombine.low %v1947, %v1979
    %v2004 = vcombine.high %v1947, %v1979
    %v2005 = vcombine.low %v1954, %v1986
    %v2006 = vcombine.high %v1954, %v1986
    %v2007 = vcombine.low %v1963, %v1995
    %v2008 = vcombine.high %v1963, %v1995
    %v2009 = vcombine.low %v1970, %v2002
    %v2010 = vcombine.high %v1970, %v2002
    %v2011 = vcombine.low %v619, %v635
    %v2012 = vcombine.high %v619, %v635
    %v2014 = vunpack.c.l.s4 1983009808
    %v2015 = vunpack.c.0.s8 %v2014
    %v2016 = vlaneseq
    %v2017 = vshrl.u32 %v2016, 7
    %v2018 = vsub.s32 %v2015, %v2017
    %v2019 = vrot.slane %v2011, %v2018
    %v2021 = vunpack.c.l.s4 1983009808
    %v2022 = vunpack.c.0.s8 %v2021
    %v2023 = vlaneseq
    %v2024 = vshrl.u32 %v2023, 7
    %v2025 = vsub.s32 %v2022, %v2024
    %v2026 = vrot.slane %v2012, %v2025
    %v2027 = vcombine.low %v627, %v643
    %v2028 = vcombine.high %v627, %v643
    %v2030 = vunpack.c.l.s4 1983009808
    %v2031 = vunpack.c.0.s8 %v2030
    %v2032 = vlaneseq
    %v2033 = vshrl.u32 %v2032, 7
    %v2034 = vsub.s32 %v2031, %v2033
    %v2035 = vrot.slane %v2027, %v2034
    %v2037 = vunpack.c.l.s4 1983009808
    %v2038 = vunpack.c.0.s8 %v2037
    %v2039 = vlaneseq
    %v2040 = vshrl.u32 %v2039, 7
    %v2041 = vsub.s32 %v2038, %v2040
    %v2042 = vrot.slane %v2028, %v2041
    %v2043 = vcombine.high %v651, %v467
    %v2045 = vunpack.c.l.s4 1983009808
    %v2046 = vunpack.c.0.s8 %v2045
    %v2047 = vlaneseq
    %v2048 = vshrl.u32 %v2047, 7
    %v2049 = vsub.s32 %v2046, %v2048
    %v2050 = vrot.slane %v651, %v2049
    %v2052 = vunpack.c.l.s4 1983009808
    %v2053 = vunpack.c.0.s8 %v2052
    %v2054 = vlaneseq
    %v2055 = vshrl.u32 %v2054, 7
    %v2056 = vsub.s32 %v2053, %v2055
    %v2057 = vrot.slane %v2043, %v2056
    %v2058 = vcombine.high %v659, %v467
    %v2060 = vunpack.c.l.s4 1983009808
    %v2061 = vunpack.c.0.s8 %v2060
    %v2062 = vlaneseq
    %v2063 = vshrl.u32 %v2062, 7
    %v2064 = vsub.s32 %v2061, %v2063
    %v2065 = vrot.slane %v659, %v2064
    %v2067 = vunpack.c.l.s4 1983009808
    %v2068 = vunpack.c.0.s8 %v2067
    %v2069 = vlaneseq
    %v2070 = vshrl.u32 %v2069, 7
    %v2071 = vsub.s32 %v2068, %v2070
    %v2072 = vrot.slane %v2058, %v2071
    %v2073 = vcombine.low %v2019, %v2035
    %v2074 = vcombine.high %v2019, %v2035
    %v2076 = vunpack.c.l.s4 1934713408
    %v2077 = vunpack.c.0.s8 %v2076
    %v2078 = vlaneseq
    %v2079 = vshrl.u32 %v2078, 7
    %v2080 = vsub.s32 %v2077, %v2079
    %v2081 = vrot.slane %v2073, %v2080
    %v2083 = vunpack.c.l.s4 1934713408
    %v2084 = vunpack.c.0.s8 %v2083
    %v2085 = vlaneseq
    %v2086 = vshrl.u32 %v2085, 7
    %v2087 = vsub.s32 %v2084, %v2086
    %v2088 = vrot.slane %v2074, %v2087
    %v2089 = vcombine.low %v2026, %v2042
    %v2090 = vcombine.high %v2026, %v2042
    %v2092 = vunpack.c.l.s4 1934713408
    %v2093 = vunpack.c.0.s8 %v2092
    %v2094 = vlaneseq
    %v2095 = vshrl.u32 %v2094, 7
    %v2096 = vsub.s32 %v2093, %v2095
    %v2097 = vrot.slane %v2089, %v2096
    %v2099 = vunpack.c.l.s4 1934713408
    %v2100 = vunpack.c.0.s8 %v2099
    %v2101 = vlaneseq
    %v2102 = vshrl.u32 %v2101, 7
    %v2103 = vsub.s32 %v2100, %v2102
    %v2104 = vrot.slane %v2090, %v2103
    %v2105 = vcombine.low %v2050, %v2065
    %v2106 = vcombine.high %v2050, %v2065
    %v2108 = vunpack.c.l.s4 1934713408
    %v2109 = vunpack.c.0.s8 %v2108
    %v2110 = vlaneseq
    %v2111 = vshrl.u32 %v2110, 7
    %v2112 = vsub.s32 %v2109, %v2111
    %v2113 = vrot.slane %v2105, %v2112
    %v2115 = vunpack.c.l.s4 1934713408
    %v2116 = vunpack.c.0.s8 %v2115
    %v2117 = vlaneseq
    %v2118 = vshrl.u32 %v2117, 7
    %v2119 = vsub.s32 %v2116, %v2118
    %v2120 = vrot.slane %v2106, %v2119
    %v2121 = vcombine.low %v2057, %v2072
    %v2122 = vcombine.high %v2057, %v2072
    %v2124 = vunpack.c.l.s4 1934713408
    %v2125 = vunpack.c.0.s8 %v2124
    %v2126 = vlaneseq
    %v2127 = vshrl.u32 %v2126, 7
    %v2128 = vsub.s32 %v2125, %v2127
    %v2129 = vrot.slane %v2121, %v2128
    %v2131 = vunpack.c.l.s4 1934713408
    %v2132 = vunpack.c.0.s8 %v2131
    %v2133 = vlaneseq
    %v2134 = vshrl.u32 %v2133, 7
    %v2135 = vsub.s32 %v2132, %v2134
    %v2136 = vrot.slane %v2122, %v2135
    %v2137 = vcombine.low %v2081, %v2113
    %v2138 = vcombine.high %v2081, %v2113
    %v2139 = vcombine.low %v2088, %v2120
    %v2140 = vcombine.high %v2088, %v2120
    %v2141 = vcombine.low %v2097, %v2129
    %v2142 = vcombine.high %v2097, %v2129
    %v2143 = vcombine.low %v2104, %v2136
    %v2144 = vcombine.high %v2104, %v2136
    %v2145 = vcombine.low %v663, %v679
    %v2146 = vcombine.high %v663, %v679
    %v2148 = vunpack.c.l.s4 1983009808
    %v2149 = vunpack.c.0.s8 %v2148
    %v2150 = vlaneseq
    %v2151 = vshrl.u32 %v2150, 7
    %v2152 = vsub.s32 %v2149, %v2151
    %v2153 = vrot.slane %v2145, %v2152
    %v2155 = vunpack.c.l.s4 1983009808
    %v2156 = vunpack.c.0.s8 %v2155
    %v2157 = vlaneseq
    %v2158 = vshrl.u32 %v2157, 7
    %v2159 = vsub.s32 %v2156, %v2158
    %v2160 = vrot.slane %v2146, %v2159
    %v2161 = vcombine.low %v671, %v687
    %v2162 = vcombine.high %v671, %v687
    %v2164 = vunpack.c.l.s4 1983009808
    %v2165 = vunpack.c.0.s8 %v2164
    %v2166 = vlaneseq
    %v2167 = vshrl.u32 %v2166, 7
    %v2168 = vsub.s32 %v2165, %v2167
    %v2169 = vrot.slane %v2161, %v2168
    %v2171 = vunpack.c.l.s4 1983009808
    %v2172 = vunpack.c.0.s8 %v2171
    %v2173 = vlaneseq
    %v2174 = vshrl.u32 %v2173, 7
    %v2175 = vsub.s32 %v2172, %v2174
    %v2176 = vrot.slane %v2162, %v2175
    %v2177 = vcombine.high %v695, %v464
    %v2179 = vunpack.c.l.s4 1983009808
    %v2180 = vunpack.c.0.s8 %v2179
    %v2181 = vlaneseq
    %v2182 = vshrl.u32 %v2181, 7
    %v2183 = vsub.s32 %v2180, %v2182
    %v2184 = vrot.slane %v695, %v2183
    %v2186 = vunpack.c.l.s4 1983009808
    %v2187 = vunpack.c.0.s8 %v2186
    %v2188 = vlaneseq
    %v2189 = vshrl.u32 %v2188, 7
    %v2190 = vsub.s32 %v2187, %v2189
    %v2191 = vrot.slane %v2177, %v2190
    %v2192 = vcombine.high %v703, %v464
    %v2194 = vunpack.c.l.s4 1983009808
    %v2195 = vunpack.c.0.s8 %v2194
    %v2196 = vlaneseq
    %v2197 = vshrl.u32 %v2196, 7
    %v2198 = vsub.s32 %v2195, %v2197
    %v2199 = vrot.slane %v703, %v2198
    %v2201 = vunpack.c.l.s4 1983009808
    %v2202 = vunpack.c.0.s8 %v2201
    %v2203 = vlaneseq
    %v2204 = vshrl.u32 %v2203, 7
    %v2205 = vsub.s32 %v2202, %v2204
    %v2206 = vrot.slane %v2192, %v2205
    %v2207 = vcombine.low %v2153, %v2169
    %v2208 = vcombine.high %v2153, %v2169
    %v2210 = vunpack.c.l.s4 1934713408
    %v2211 = vunpack.c.0.s8 %v2210
    %v2212 = vlaneseq
    %v2213 = vshrl.u32 %v2212, 7
    %v2214 = vsub.s32 %v2211, %v2213
    %v2215 = vrot.slane %v2207, %v2214
    %v2217 = vunpack.c.l.s4 1934713408
    %v2218 = vunpack.c.0.s8 %v2217
    %v2219 = vlaneseq
    %v2220 = vshrl.u32 %v2219, 7
    %v2221 = vsub.s32 %v2218, %v2220
    %v2222 = vrot.slane %v2208, %v2221
    %v2223 = vcombine.low %v2160, %v2176
    %v2224 = vcombine.high %v2160, %v2176
    %v2226 = vunpack.c.l.s4 1934713408
    %v2227 = vunpack.c.0.s8 %v2226
    %v2228 = vlaneseq
    %v2229 = vshrl.u32 %v2228, 7
    %v2230 = vsub.s32 %v2227, %v2229
    %v2231 = vrot.slane %v2223, %v2230
    %v2233 = vunpack.c.l.s4 1934713408
    %v2234 = vunpack.c.0.s8 %v2233
    %v2235 = vlaneseq
    %v2236 = vshrl.u32 %v2235, 7
    %v2237 = vsub.s32 %v2234, %v2236
    %v2238 = vrot.slane %v2224, %v2237
    %v2239 = vcombine.low %v2184, %v2199
    %v2240 = vcombine.high %v2184, %v2199
    %v2242 = vunpack.c.l.s4 1934713408
    %v2243 = vunpack.c.0.s8 %v2242
    %v2244 = vlaneseq
    %v2245 = vshrl.u32 %v2244, 7
    %v2246 = vsub.s32 %v2243, %v2245
    %v2247 = vrot.slane %v2239, %v2246
    %v2249 = vunpack.c.l.s4 1934713408
    %v2250 = vunpack.c.0.s8 %v2249
    %v2251 = vlaneseq
    %v2252 = vshrl.u32 %v2251, 7
    %v2253 = vsub.s32 %v2250, %v2252
    %v2254 = vrot.slane %v2240, %v2253
    %v2255 = vcombine.low %v2191, %v2206
    %v2256 = vcombine.high %v2191, %v2206
    %v2258 = vunpack.c.l.s4 1934713408
    %v2259 = vunpack.c.0.s8 %v2258
    %v2260 = vlaneseq
    %v2261 = vshrl.u32 %v2260, 7
    %v2262 = vsub.s32 %v2259, %v2261
    %v2263 = vrot.slane %v2255, %v2262
    %v2265 = vunpack.c.l.s4 1934713408
    %v2266 = vunpack.c.0.s8 %v2265
    %v2267 = vlaneseq
    %v2268 = vshrl.u32 %v2267, 7
    %v2269 = vsub.s32 %v2266, %v2268
    %v2270 = vrot.slane %v2256, %v2269
    %v2271 = vcombine.low %v2215, %v2247
    %v2272 = vcombine.high %v2215, %v2247
    %v2273 = vcombine.low %v2222, %v2254
    %v2274 = vcombine.high %v2222, %v2254
    %v2275 = vcombine.low %v2231, %v2263
    %v2276 = vcombine.high %v2231, %v2263
    %v2277 = vcombine.low %v2238, %v2270
    %v2278 = vcombine.high %v2238, %v2270
    %v2279 = vcombine.low %v667, %v683
    %v2280 = vcombine.high %v667, %v683
    %v2282 = vunpack.c.l.s4 1983009808
    %v2283 = vunpack.c.0.s8 %v2282
    %v2284 = vlaneseq
    %v2285 = vshrl.u32 %v2284, 7
    %v2286 = vsub.s32 %v2283, %v2285
    %v2287 = vrot.slane %v2279, %v2286
    %v2289 = vunpack.c.l.s4 1983009808
    %v2290 = vunpack.c.0.s8 %v2289
    %v2291 = vlaneseq
    %v2292 = vshrl.u32 %v2291, 7
    %v2293 = vsub.s32 %v2290, %v2292
    %v2294 = vrot.slane %v2280, %v2293
    %v2295 = vcombine.low %v675, %v691
    %v2296 = vcombine.high %v675, %v691
    %v2298 = vunpack.c.l.s4 1983009808
    %v2299 = vunpack.c.0.s8 %v2298
    %v2300 = vlaneseq
    %v2301 = vshrl.u32 %v2300, 7
    %v2302 = vsub.s32 %v2299, %v2301
    %v2303 = vrot.slane %v2295, %v2302
    %v2305 = vunpack.c.l.s4 1983009808
    %v2306 = vunpack.c.0.s8 %v2305
    %v2307 = vlaneseq
    %v2308 = vshrl.u32 %v2307, 7
    %v2309 = vsub.s32 %v2306, %v2308
    %v2310 = vrot.slane %v2296, %v2309
    %v2311 = vcombine.high %v699, %v467
    %v2313 = vunpack.c.l.s4 1983009808
    %v2314 = vunpack.c.0.s8 %v2313
    %v2315 = vlaneseq
    %v2316 = vshrl.u32 %v2315, 7
    %v2317 = vsub.s32 %v2314, %v2316
    %v2318 = vrot.slane %v699, %v2317
    %v2320 = vunpack.c.l.s4 1983009808
    %v2321 = vunpack.c.0.s8 %v2320
    %v2322 = vlaneseq
    %v2323 = vshrl.u32 %v2322, 7
    %v2324 = vsub.s32 %v2321, %v2323
    %v2325 = vrot.slane %v2311, %v2324
    %v2326 = vcombine.high %v707, %v467
    %v2328 = vunpack.c.l.s4 1983009808
    %v2329 = vunpack.c.0.s8 %v2328
    %v2330 = vlaneseq
    %v2331 = vshrl.u32 %v2330, 7
    %v2332 = vsub.s32 %v2329, %v2331
    %v2333 = vrot.slane %v707, %v2332
    %v2335 = vunpack.c.l.s4 1983009808
    %v2336 = vunpack.c.0.s8 %v2335
    %v2337 = vlaneseq
    %v2338 = vshrl.u32 %v2337, 7
    %v2339 = vsub.s32 %v2336, %v2338
    %v2340 = vrot.slane %v2326, %v2339
    %v2341 = vcombine.low %v2287, %v2303
    %v2342 = vcombine.high %v2287, %v2303
    %v2344 = vunpack.c.l.s4 1934713408
    %v2345 = vunpack.c.0.s8 %v2344
    %v2346 = vlaneseq
    %v2347 = vshrl.u32 %v2346, 7
    %v2348 = vsub.s32 %v2345, %v2347
    %v2349 = vrot.slane %v2341, %v2348
    %v2351 = vunpack.c.l.s4 1934713408
    %v2352 = vunpack.c.0.s8 %v2351
    %v2353 = vlaneseq
    %v2354 = vshrl.u32 %v2353, 7
    %v2355 = vsub.s32 %v2352, %v2354
    %v2356 = vrot.slane %v2342, %v2355
    %v2357 = vcombine.low %v2294, %v2310
    %v2358 = vcombine.high %v2294, %v2310
    %v2360 = vunpack.c.l.s4 1934713408
    %v2361 = vunpack.c.0.s8 %v2360
    %v2362 = vlaneseq
    %v2363 = vshrl.u32 %v2362, 7
    %v2364 = vsub.s32 %v2361, %v2363
    %v2365 = vrot.slane %v2357, %v2364
    %v2367 = vunpack.c.l.s4 1934713408
    %v2368 = vunpack.c.0.s8 %v2367
    %v2369 = vlaneseq
    %v2370 = vshrl.u32 %v2369, 7
    %v2371 = vsub.s32 %v2368, %v2370
    %v2372 = vrot.slane %v2358, %v2371
    %v2373 = vcombine.low %v2318, %v2333
    %v2374 = vcombine.high %v2318, %v2333
    %v2376 = vunpack.c.l.s4 1934713408
    %v2377 = vunpack.c.0.s8 %v2376
    %v2378 = vlaneseq
    %v2379 = vshrl.u32 %v2378, 7
    %v2380 = vsub.s32 %v2377, %v2379
    %v2381 = vrot.slane %v2373, %v2380
    %v2383 = vunpack.c.l.s4 1934713408
    %v2384 = vunpack.c.0.s8 %v2383
    %v2385 = vlaneseq
    %v2386 = vshrl.u32 %v2385, 7
    %v2387 = vsub.s32 %v2384, %v2386
    %v2388 = vrot.slane %v2374, %v2387
    %v2389 = vcombine.low %v2325, %v2340
    %v2390 = vcombine.high %v2325, %v2340
    %v2392 = vunpack.c.l.s4 1934713408
    %v2393 = vunpack.c.0.s8 %v2392
    %v2394 = vlaneseq
    %v2395 = vshrl.u32 %v2394, 7
    %v2396 = vsub.s32 %v2393, %v2395
    %v2397 = vrot.slane %v2389, %v2396
    %v2399 = vunpack.c.l.s4 1934713408
    %v2400 = vunpack.c.0.s8 %v2399
    %v2401 = vlaneseq
    %v2402 = vshrl.u32 %v2401, 7
    %v2403 = vsub.s32 %v2400, %v2402
    %v2404 = vrot.slane %v2390, %v2403
    %v2405 = vcombine.low %v2349, %v2381
    %v2406 = vcombine.high %v2349, %v2381
    %v2407 = vcombine.low %v2356, %v2388
    %v2408 = vcombine.high %v2356, %v2388
    %v2409 = vcombine.low %v2365, %v2397
    %v2410 = vcombine.high %v2365, %v2397
    %v2411 = vcombine.low %v2372, %v2404
    %v2412 = vcombine.high %v2372, %v2404
    %v2413 = vcombine.low %v711, %v727
    %v2414 = vcombine.high %v711, %v727
    %v2416 = vunpack.c.l.s4 1983009808
    %v2417 = vunpack.c.0.s8 %v2416
    %v2418 = vlaneseq
    %v2419 = vshrl.u32 %v2418, 7
    %v2420 = vsub.s32 %v2417, %v2419
    %v2421 = vrot.slane %v2413, %v2420
    %v2423 = vunpack.c.l.s4 1983009808
    %v2424 = vunpack.c.0.s8 %v2423
    %v2425 = vlaneseq
    %v2426 = vshrl.u32 %v2425, 7
    %v2427 = vsub.s32 %v2424, %v2426
    %v2428 = vrot.slane %v2414, %v2427
    %v2429 = vcombine.low %v719, %v735
    %v2430 = vcombine.high %v719, %v735
    %v2432 = vunpack.c.l.s4 1983009808
    %v2433 = vunpack.c.0.s8 %v2432
    %v2434 = vlaneseq
    %v2435 = vshrl.u32 %v2434, 7
    %v2436 = vsub.s32 %v2433, %v2435
    %v2437 = vrot.slane %v2429, %v2436
    %v2439 = vunpack.c.l.s4 1983009808
    %v2440 = vunpack.c.0.s8 %v2439
    %v2441 = vlaneseq
    %v2442 = vshrl.u32 %v2441, 7
    %v2443 = vsub.s32 %v2440, %v2442
    %v2444 = vrot.slane %v2430, %v2443
    %v2445 = vcombine.high %v743, %v464
    %v2447 = vunpack.c.l.s4 1983009808
    %v2448 = vunpack.c.0.s8 %v2447
    %v2449 = vlaneseq
    %v2450 = vshrl.u32 %v2449, 7
    %v2451 = vsub.s32 %v2448, %v2450
    %v2452 = vrot.slane %v743, %v2451
    %v2454 = vunpack.c.l.s4 1983009808
    %v2455 = vunpack.c.0.s8 %v2454
    %v2456 = vlaneseq
    %v2457 = vshrl.u32 %v2456, 7
    %v2458 = vsub.s32 %v2455, %v2457
    %v2459 = vrot.slane %v2445, %v2458
    %v2460 = vcombine.high %v751, %v464
    %v2462 = vunpack.c.l.s4 1983009808
    %v2463 = vunpack.c.0.s8 %v2462
    %v2464 = vlaneseq
    %v2465 = vshrl.u32 %v2464, 7
    %v2466 = vsub.s32 %v2463, %v2465
    %v2467 = vrot.slane %v751, %v2466
    %v2469 = vunpack.c.l.s4 1983009808
    %v2470 = vunpack.c.0.s8 %v2469
    %v2471 = vlaneseq
    %v2472 = vshrl.u32 %v2471, 7
    %v2473 = vsub.s32 %v2470, %v2472
    %v2474 = vrot.slane %v2460, %v2473
    %v2475 = vcombine.low %v2421, %v2437
    %v2476 = vcombine.high %v2421, %v2437
    %v2478 = vunpack.c.l.s4 1934713408
    %v2479 = vunpack.c.0.s8 %v2478
    %v2480 = vlaneseq
    %v2481 = vshrl.u32 %v2480, 7
    %v2482 = vsub.s32 %v2479, %v2481
    %v2483 = vrot.slane %v2475, %v2482
    %v2485 = vunpack.c.l.s4 1934713408
    %v2486 = vunpack.c.0.s8 %v2485
    %v2487 = vlaneseq
    %v2488 = vshrl.u32 %v2487, 7
    %v2489 = vsub.s32 %v2486, %v2488
    %v2490 = vrot.slane %v2476, %v2489
    %v2491 = vcombine.low %v2428, %v2444
    %v2492 = vcombine.high %v2428, %v2444
    %v2494 = vunpack.c.l.s4 1934713408
    %v2495 = vunpack.c.0.s8 %v2494
    %v2496 = vlaneseq
    %v2497 = vshrl.u32 %v2496, 7
    %v2498 = vsub.s32 %v2495, %v2497
    %v2499 = vrot.slane %v2491, %v2498
    %v2501 = vunpack.c.l.s4 1934713408
    %v2502 = vunpack.c.0.s8 %v2501
    %v2503 = vlaneseq
    %v2504 = vshrl.u32 %v2503, 7
    %v2505 = vsub.s32 %v2502, %v2504
    %v2506 = vrot.slane %v2492, %v2505
    %v2507 = vcombine.low %v2452, %v2467
    %v2508 = vcombine.high %v2452, %v2467
    %v2510 = vunpack.c.l.s4 1934713408
    %v2511 = vunpack.c.0.s8 %v2510
    %v2512 = vlaneseq
    %v2513 = vshrl.u32 %v2512, 7
    %v2514 = vsub.s32 %v2511, %v2513
    %v2515 = vrot.slane %v2507, %v2514
    %v2517 = vunpack.c.l.s4 1934713408
    %v2518 = vunpack.c.0.s8 %v2517
    %v2519 = vlaneseq
    %v2520 = vshrl.u32 %v2519, 7
    %v2521 = vsub.s32 %v2518, %v2520
    %v2522 = vrot.slane %v2508, %v2521
    %v2523 = vcombine.low %v2459, %v2474
    %v2524 = vcombine.high %v2459, %v2474
    %v2526 = vunpack.c.l.s4 1934713408
    %v2527 = vunpack.c.0.s8 %v2526
    %v2528 = vlaneseq
    %v2529 = vshrl.u32 %v2528, 7
    %v2530 = vsub.s32 %v2527, %v2529
    %v2531 = vrot.slane %v2523, %v2530
    %v2533 = vunpack.c.l.s4 1934713408
    %v2534 = vunpack.c.0.s8 %v2533
    %v2535 = vlaneseq
    %v2536 = vshrl.u32 %v2535, 7
    %v2537 = vsub.s32 %v2534, %v2536
    %v2538 = vrot.slane %v2524, %v2537
    %v2539 = vcombine.low %v2483, %v2515
    %v2540 = vcombine.high %v2483, %v2515
    %v2541 = vcombine.low %v2490, %v2522
    %v2542 = vcombine.high %v2490, %v2522
    %v2543 = vcombine.low %v2499, %v2531
    %v2544 = vcombine.high %v2499, %v2531
    %v2545 = vcombine.low %v2506, %v2538
    %v2546 = vcombine.high %v2506, %v2538
    %v2547 = vcombine.low %v715, %v731
    %v2548 = vcombine.high %v715, %v731
    %v2550 = vunpack.c.l.s4 1983009808
    %v2551 = vunpack.c.0.s8 %v2550
    %v2552 = vlaneseq
    %v2553 = vshrl.u32 %v2552, 7
    %v2554 = vsub.s32 %v2551, %v2553
    %v2555 = vrot.slane %v2547, %v2554
    %v2557 = vunpack.c.l.s4 1983009808
    %v2558 = vunpack.c.0.s8 %v2557
    %v2559 = vlaneseq
    %v2560 = vshrl.u32 %v2559, 7
    %v2561 = vsub.s32 %v2558, %v2560
    %v2562 = vrot.slane %v2548, %v2561
    %v2563 = vcombine.low %v723, %v739
    %v2564 = vcombine.high %v723, %v739
    %v2566 = vunpack.c.l.s4 1983009808
    %v2567 = vunpack.c.0.s8 %v2566
    %v2568 = vlaneseq
    %v2569 = vshrl.u32 %v2568, 7
    %v2570 = vsub.s32 %v2567, %v2569
    %v2571 = vrot.slane %v2563, %v2570
    %v2573 = vunpack.c.l.s4 1983009808
    %v2574 = vunpack.c.0.s8 %v2573
    %v2575 = vlaneseq
    %v2576 = vshrl.u32 %v2575, 7
    %v2577 = vsub.s32 %v2574, %v2576
    %v2578 = vrot.slane %v2564, %v2577
    %v2579 = vcombine.high %v747, %v467
    %v2581 = vunpack.c.l.s4 1983009808
    %v2582 = vunpack.c.0.s8 %v2581
    %v2583 = vlaneseq
    %v2584 = vshrl.u32 %v2583, 7
    %v2585 = vsub.s32 %v2582, %v2584
    %v2586 = vrot.slane %v747, %v2585
    %v2588 = vunpack.c.l.s4 1983009808
    %v2589 = vunpack.c.0.s8 %v2588
    %v2590 = vlaneseq
    %v2591 = vshrl.u32 %v2590, 7
    %v2592 = vsub.s32 %v2589, %v2591
    %v2593 = vrot.slane %v2579, %v2592
    %v2594 = vcombine.high %v755, %v467
    %v2596 = vunpack.c.l.s4 1983009808
    %v2597 = vunpack.c.0.s8 %v2596
    %v2598 = vlaneseq
    %v2599 = vshrl.u32 %v2598, 7
    %v2600 = vsub.s32 %v2597, %v2599
    %v2601 = vrot.slane %v755, %v2600
    %v2603 = vunpack.c.l.s4 1983009808
    %v2604 = vunpack.c.0.s8 %v2603
    %v2605 = vlaneseq
    %v2606 = vshrl.u32 %v2605, 7
    %v2607 = vsub.s32 %v2604, %v2606
    %v2608 = vrot.slane %v2594, %v2607
    %v2609 = vcombine.low %v2555, %v2571
    %v2610 = vcombine.high %v2555, %v2571
    %v2612 = vunpack.c.l.s4 1934713408
    %v2613 = vunpack.c.0.s8 %v2612
    %v2614 = vlaneseq
    %v2615 = vshrl.u32 %v2614, 7
    %v2616 = vsub.s32 %v2613, %v2615
    %v2617 = vrot.slane %v2609, %v2616
    %v2619 = vunpack.c.l.s4 1934713408
    %v2620 = vunpack.c.0.s8 %v2619
    %v2621 = vlaneseq
    %v2622 = vshrl.u32 %v2621, 7
    %v2623 = vsub.s32 %v2620, %v2622
    %v2624 = vrot.slane %v2610, %v2623
    %v2625 = vcombine.low %v2562, %v2578
    %v2626 = vcombine.high %v2562, %v2578
    %v2628 = vunpack.c.l.s4 1934713408
    %v2629 = vunpack.c.0.s8 %v2628
    %v2630 = vlaneseq
    %v2631 = vshrl.u32 %v2630, 7
    %v2632 = vsub.s32 %v2629, %v2631
    %v2633 = vrot.slane %v2625, %v2632
    %v2635 = vunpack.c.l.s4 1934713408
    %v2636 = vunpack.c.0.s8 %v2635
    %v2637 = vlaneseq
    %v2638 = vshrl.u32 %v2637, 7
    %v2639 = vsub.s32 %v2636, %v2638
    %v2640 = vrot.slane %v2626, %v2639
    %v2641 = vcombine.low %v2586, %v2601
    %v2642 = vcombine.high %v2586, %v2601
    %v2644 = vunpack.c.l.s4 1934713408
    %v2645 = vunpack.c.0.s8 %v2644
    %v2646 = vlaneseq
    %v2647 = vshrl.u32 %v2646, 7
    %v2648 = vsub.s32 %v2645, %v2647
    %v2649 = vrot.slane %v2641, %v2648
    %v2651 = vunpack.c.l.s4 1934713408
    %v2652 = vunpack.c.0.s8 %v2651
    %v2653 = vlaneseq
    %v2654 = vshrl.u32 %v2653, 7
    %v2655 = vsub.s32 %v2652, %v2654
    %v2656 = vrot.slane %v2642, %v2655
    %v2657 = vcombine.low %v2593, %v2608
    %v2658 = vcombine.high %v2593, %v2608
    %v2660 = vunpack.c.l.s4 1934713408
    %v2661 = vunpack.c.0.s8 %v2660
    %v2662 = vlaneseq
    %v2663 = vshrl.u32 %v2662, 7
    %v2664 = vsub.s32 %v2661, %v2663
    %v2665 = vrot.slane %v2657, %v2664
    %v2667 = vunpack.c.l.s4 1934713408
    %v2668 = vunpack.c.0.s8 %v2667
    %v2669 = vlaneseq
    %v2670 = vshrl.u32 %v2669, 7
    %v2671 = vsub.s32 %v2668, %v2670
    %v2672 = vrot.slane %v2658, %v2671
    %v2673 = vcombine.low %v2617, %v2649
    %v2674 = vcombine.high %v2617, %v2649
    %v2675 = vcombine.low %v2624, %v2656
    %v2676 = vcombine.high %v2624, %v2656
    %v2677 = vcombine.low %v2633, %v2665
    %v2678 = vcombine.high %v2633, %v2665
    %v2679 = vcombine.low %v2640, %v2672
    %v2680 = vcombine.high %v2640, %v2672
    %v2681 = vcombine.low %v759, %v775
    %v2682 = vcombine.high %v759, %v775
    %v2684 = vunpack.c.l.s4 1983009808
    %v2685 = vunpack.c.0.s8 %v2684
    %v2686 = vlaneseq
    %v2687 = vshrl.u32 %v2686, 7
    %v2688 = vsub.s32 %v2685, %v2687
    %v2689 = vrot.slane %v2681, %v2688
    %v2691 = vunpack.c.l.s4 1983009808
    %v2692 = vunpack.c.0.s8 %v2691
    %v2693 = vlaneseq
    %v2694 = vshrl.u32 %v2693, 7
    %v2695 = vsub.s32 %v2692, %v2694
    %v2696 = vrot.slane %v2682, %v2695
    %v2697 = vcombine.low %v767, %v783
    %v2698 = vcombine.high %v767, %v783
    %v2700 = vunpack.c.l.s4 1983009808
    %v2701 = vunpack.c.0.s8 %v2700
    %v2702 = vlaneseq
    %v2703 = vshrl.u32 %v2702, 7
    %v2704 = vsub.s32 %v2701, %v2703
    %v2705 = vrot.slane %v2697, %v2704
    %v2707 = vunpack.c.l.s4 1983009808
    %v2708 = vunpack.c.0.s8 %v2707
    %v2709 = vlaneseq
    %v2710 = vshrl.u32 %v2709, 7
    %v2711 = vsub.s32 %v2708, %v2710
    %v2712 = vrot.slane %v2698, %v2711
    %v2713 = vcombine.high %v791, %v464
    %v2715 = vunpack.c.l.s4 1983009808
    %v2716 = vunpack.c.0.s8 %v2715
    %v2717 = vlaneseq
    %v2718 = vshrl.u32 %v2717, 7
    %v2719 = vsub.s32 %v2716, %v2718
    %v2720 = vrot.slane %v791, %v2719
    %v2722 = vunpack.c.l.s4 1983009808
    %v2723 = vunpack.c.0.s8 %v2722
    %v2724 = vlaneseq
    %v2725 = vshrl.u32 %v2724, 7
    %v2726 = vsub.s32 %v2723, %v2725
    %v2727 = vrot.slane %v2713, %v2726
    %v2728 = vcombine.high %v799, %v464
    %v2730 = vunpack.c.l.s4 1983009808
    %v2731 = vunpack.c.0.s8 %v2730
    %v2732 = vlaneseq
    %v2733 = vshrl.u32 %v2732, 7
    %v2734 = vsub.s32 %v2731, %v2733
    %v2735 = vrot.slane %v799, %v2734
    %v2737 = vunpack.c.l.s4 1983009808
    %v2738 = vunpack.c.0.s8 %v2737
    %v2739 = vlaneseq
    %v2740 = vshrl.u32 %v2739, 7
    %v2741 = vsub.s32 %v2738, %v2740
    %v2742 = vrot.slane %v2728, %v2741
    %v2743 = vcombine.low %v2689, %v2705
    %v2744 = vcombine.high %v2689, %v2705
    %v2746 = vunpack.c.l.s4 1934713408
    %v2747 = vunpack.c.0.s8 %v2746
    %v2748 = vlaneseq
    %v2749 = vshrl.u32 %v2748, 7
    %v2750 = vsub.s32 %v2747, %v2749
    %v2751 = vrot.slane %v2743, %v2750
    %v2753 = vunpack.c.l.s4 1934713408
    %v2754 = vunpack.c.0.s8 %v2753
    %v2755 = vlaneseq
    %v2756 = vshrl.u32 %v2755, 7
    %v2757 = vsub.s32 %v2754, %v2756
    %v2758 = vrot.slane %v2744, %v2757
    %v2759 = vcombine.low %v2696, %v2712
    %v2760 = vcombine.high %v2696, %v2712
    %v2762 = vunpack.c.l.s4 1934713408
    %v2763 = vunpack.c.0.s8 %v2762
    %v2764 = vlaneseq
    %v2765 = vshrl.u32 %v2764, 7
    %v2766 = vsub.s32 %v2763, %v2765
    %v2767 = vrot.slane %v2759, %v2766
    %v2769 = vunpack.c.l.s4 1934713408
    %v2770 = vunpack.c.0.s8 %v2769
    %v2771 = vlaneseq
    %v2772 = vshrl.u32 %v2771, 7
    %v2773 = vsub.s32 %v2770, %v2772
    %v2774 = vrot.slane %v2760, %v2773
    %v2775 = vcombine.low %v2720, %v2735
    %v2776 = vcombine.high %v2720, %v2735
    %v2778 = vunpack.c.l.s4 1934713408
    %v2779 = vunpack.c.0.s8 %v2778
    %v2780 = vlaneseq
    %v2781 = vshrl.u32 %v2780, 7
    %v2782 = vsub.s32 %v2779, %v2781
    %v2783 = vrot.slane %v2775, %v2782
    %v2785 = vunpack.c.l.s4 1934713408
    %v2786 = vunpack.c.0.s8 %v2785
    %v2787 = vlaneseq
    %v2788 = vshrl.u32 %v2787, 7
    %v2789 = vsub.s32 %v2786, %v2788
    %v2790 = vrot.slane %v2776, %v2789
    %v2791 = vcombine.low %v2727, %v2742
    %v2792 = vcombine.high %v2727, %v2742
    %v2794 = vunpack.c.l.s4 1934713408
    %v2795 = vunpack.c.0.s8 %v2794
    %v2796 = vlaneseq
    %v2797 = vshrl.u32 %v2796, 7
    %v2798 = vsub.s32 %v2795, %v2797
    %v2799 = vrot.slane %v2791, %v2798
    %v2801 = vunpack.c.l.s4 1934713408
    %v2802 = vunpack.c.0.s8 %v2801
    %v2803 = vlaneseq
    %v2804 = vshrl.u32 %v2803, 7
    %v2805 = vsub.s32 %v2802, %v2804
    %v2806 = vrot.slane %v2792, %v2805
    %v2807 = vcombine.low %v2751, %v2783
    %v2808 = vcombine.high %v2751, %v2783
    %v2809 = vcombine.low %v2758, %v2790
    %v2810 = vcombine.high %v2758, %v2790
    %v2811 = vcombine.low %v2767, %v2799
    %v2812 = vcombine.high %v2767, %v2799
    %v2813 = vcombine.low %v2774, %v2806
    %v2814 = vcombine.high %v2774, %v2806
    %v2815 = vcombine.low %v763, %v779
    %v2816 = vcombine.high %v763, %v779
    %v2818 = vunpack.c.l.s4 1983009808
    %v2819 = vunpack.c.0.s8 %v2818
    %v2820 = vlaneseq
    %v2821 = vshrl.u32 %v2820, 7
    %v2822 = vsub.s32 %v2819, %v2821
    %v2823 = vrot.slane %v2815, %v2822
    %v2825 = vunpack.c.l.s4 1983009808
    %v2826 = vunpack.c.0.s8 %v2825
    %v2827 = vlaneseq
    %v2828 = vshrl.u32 %v2827, 7
    %v2829 = vsub.s32 %v2826, %v2828
    %v2830 = vrot.slane %v2816, %v2829
    %v2831 = vcombine.low %v771, %v787
    %v2832 = vcombine.high %v771, %v787
    %v2834 = vunpack.c.l.s4 1983009808
    %v2835 = vunpack.c.0.s8 %v2834
    %v2836 = vlaneseq
    %v2837 = vshrl.u32 %v2836, 7
    %v2838 = vsub.s32 %v2835, %v2837
    %v2839 = vrot.slane %v2831, %v2838
    %v2841 = vunpack.c.l.s4 1983009808
    %v2842 = vunpack.c.0.s8 %v2841
    %v2843 = vlaneseq
    %v2844 = vshrl.u32 %v2843, 7
    %v2845 = vsub.s32 %v2842, %v2844
    %v2846 = vrot.slane %v2832, %v2845
    %v2847 = vcombine.high %v795, %v467
    %v2849 = vunpack.c.l.s4 1983009808
    %v2850 = vunpack.c.0.s8 %v2849
    %v2851 = vlaneseq
    %v2852 = vshrl.u32 %v2851, 7
    %v2853 = vsub.s32 %v2850, %v2852
    %v2854 = vrot.slane %v795, %v2853
    %v2856 = vunpack.c.l.s4 1983009808
    %v2857 = vunpack.c.0.s8 %v2856
    %v2858 = vlaneseq
    %v2859 = vshrl.u32 %v2858, 7
    %v2860 = vsub.s32 %v2857, %v2859
    %v2861 = vrot.slane %v2847, %v2860
    %v2862 = vcombine.high %v803, %v467
    %v2864 = vunpack.c.l.s4 1983009808
    %v2865 = vunpack.c.0.s8 %v2864
    %v2866 = vlaneseq
    %v2867 = vshrl.u32 %v2866, 7
    %v2868 = vsub.s32 %v2865, %v2867
    %v2869 = vrot.slane %v803, %v2868
    %v2871 = vunpack.c.l.s4 1983009808
    %v2872 = vunpack.c.0.s8 %v2871
    %v2873 = vlaneseq
    %v2874 = vshrl.u32 %v2873, 7
    %v2875 = vsub.s32 %v2872, %v2874
    %v2876 = vrot.slane %v2862, %v2875
    %v2877 = vcombine.low %v2823, %v2839
    %v2878 = vcombine.high %v2823, %v2839
    %v2880 = vunpack.c.l.s4 1934713408
    %v2881 = vunpack.c.0.s8 %v2880
    %v2882 = vlaneseq
    %v2883 = vshrl.u32 %v2882, 7
    %v2884 = vsub.s32 %v2881, %v2883
    %v2885 = vrot.slane %v2877, %v2884
    %v2887 = vunpack.c.l.s4 1934713408
    %v2888 = vunpack.c.0.s8 %v2887
    %v2889 = vlaneseq
    %v2890 = vshrl.u32 %v2889, 7
    %v2891 = vsub.s32 %v2888, %v2890
    %v2892 = vrot.slane %v2878, %v2891
    %v2893 = vcombine.low %v2830, %v2846
    %v2894 = vcombine.high %v2830, %v2846
    %v2896 = vunpack.c.l.s4 1934713408
    %v2897 = vunpack.c.0.s8 %v2896
    %v2898 = vlaneseq
    %v2899 = vshrl.u32 %v2898, 7
    %v2900 = vsub.s32 %v2897, %v2899
    %v2901 = vrot.slane %v2893, %v2900
    %v2903 = vunpack.c.l.s4 1934713408
    %v2904 = vunpack.c.0.s8 %v2903
    %v2905 = vlaneseq
    %v2906 = vshrl.u32 %v2905, 7
    %v2907 = vsub.s32 %v2904, %v2906
    %v2908 = vrot.slane %v2894, %v2907
    %v2909 = vcombine.low %v2854, %v2869
    %v2910 = vcombine.high %v2854, %v2869
    %v2912 = vunpack.c.l.s4 1934713408
    %v2913 = vunpack.c.0.s8 %v2912
    %v2914 = vlaneseq
    %v2915 = vshrl.u32 %v2914, 7
    %v2916 = vsub.s32 %v2913, %v2915
    %v2917 = vrot.slane %v2909, %v2916
    %v2919 = vunpack.c.l.s4 1934713408
    %v2920 = vunpack.c.0.s8 %v2919
    %v2921 = vlaneseq
    %v2922 = vshrl.u32 %v2921, 7
    %v2923 = vsub.s32 %v2920, %v2922
    %v2924 = vrot.slane %v2910, %v2923
    %v2925 = vcombine.low %v2861, %v2876
    %v2926 = vcombine.high %v2861, %v2876
    %v2928 = vunpack.c.l.s4 1934713408
    %v2929 = vunpack.c.0.s8 %v2928
    %v2930 = vlaneseq
    %v2931 = vshrl.u32 %v2930, 7
    %v2932 = vsub.s32 %v2929, %v2931
    %v2933 = vrot.slane %v2925, %v2932
    %v2935 = vunpack.c.l.s4 1934713408
    %v2936 = vunpack.c.0.s8 %v2935
    %v2937 = vlaneseq
    %v2938 = vshrl.u32 %v2937, 7
    %v2939 = vsub.s32 %v2936, %v2938
    %v2940 = vrot.slane %v2926, %v2939
    %v2941 = vcombine.low %v2885, %v2917
    %v2942 = vcombine.high %v2885, %v2917
    %v2943 = vcombine.low %v2892, %v2924
    %v2944 = vcombine.high %v2892, %v2924
    %v2945 = vcombine.low %v2901, %v2933
    %v2946 = vcombine.high %v2901, %v2933
    %v2947 = vcombine.low %v2908, %v2940
    %v2948 = vcombine.high %v2908, %v2940
    %v2949 = vcombine.low %v931, %v933
    %v2950 = vcombine.high %v931, %v933
    %v2952 = vunpack.c.l.s4 1983009808
    %v2953 = vunpack.c.0.s8 %v2952
    %v2954 = vlaneseq
    %v2955 = vshrl.u32 %v2954, 7
    %v2956 = vsub.s32 %v2953, %v2955
    %v2957 = vrot.slane %v2949, %v2956
    %v2959 = vunpack.c.l.s4 1983009808
    %v2960 = vunpack.c.0.s8 %v2959
    %v2961 = vlaneseq
    %v2962 = vshrl.u32 %v2961, 7
    %v2963 = vsub.s32 %v2960, %v2962
    %v2964 = vrot.slane %v2950, %v2963
    %v2965 = vcombine.low %v932, %v934
    %v2966 = vcombine.high %v932, %v934
    %v2968 = vunpack.c.l.s4 1983009808
    %v2969 = vunpack.c.0.s8 %v2968
    %v2970 = vlaneseq
    %v2971 = vshrl.u32 %v2970, 7
    %v2972 = vsub.s32 %v2969, %v2971
    %v2973 = vrot.slane %v2965, %v2972
    %v2975 = vunpack.c.l.s4 1983009808
    %v2976 = vunpack.c.0.s8 %v2975
    %v2977 = vlaneseq
    %v2978 = vshrl.u32 %v2977, 7
    %v2979 = vsub.s32 %v2976, %v2978
    %v2980 = vrot.slane %v2966, %v2979
    %v2981 = vcombine.low %v935, %v937
    %v2982 = vcombine.high %v935, %v937
    %v2984 = vunpack.c.l.s4 1983009808
    %v2985 = vunpack.c.0.s8 %v2984
    %v2986 = vlaneseq
    %v2987 = vshrl.u32 %v2986, 7
    %v2988 = vsub.s32 %v2985, %v2987
    %v2989 = vrot.slane %v2981, %v2988
    %v2991 = vunpack.c.l.s4 1983009808
    %v2992 = vunpack.c.0.s8 %v2991
    %v2993 = vlaneseq
    %v2994 = vshrl.u32 %v2993, 7
    %v2995 = vsub.s32 %v2992, %v2994
    %v2996 = vrot.slane %v2982, %v2995
    %v2997 = vcombine.low %v936, %v938
    %v2998 = vcombine.high %v936, %v938
    %v3000 = vunpack.c.l.s4 1983009808
    %v3001 = vunpack.c.0.s8 %v3000
    %v3002 = vlaneseq
    %v3003 = vshrl.u32 %v3002, 7
    %v3004 = vsub.s32 %v3001, %v3003
    %v3005 = vrot.slane %v2997, %v3004
    %v3007 = vunpack.c.l.s4 1983009808
    %v3008 = vunpack.c.0.s8 %v3007
    %v3009 = vlaneseq
    %v3010 = vshrl.u32 %v3009, 7
    %v3011 = vsub.s32 %v3008, %v3010
    %v3012 = vrot.slane %v2998, %v3011
    %v3013 = vcombine.low %v2957, %v2973
    %v3014 = vcombine.high %v2957, %v2973
    %v3016 = vunpack.c.l.s4 1934713408
    %v3017 = vunpack.c.0.s8 %v3016
    %v3018 = vlaneseq
    %v3019 = vshrl.u32 %v3018, 7
    %v3020 = vsub.s32 %v3017, %v3019
    %v3021 = vrot.slane %v3013, %v3020
    %v3023 = vunpack.c.l.s4 1934713408
    %v3024 = vunpack.c.0.s8 %v3023
    %v3025 = vlaneseq
    %v3026 = vshrl.u32 %v3025, 7
    %v3027 = vsub.s32 %v3024, %v3026
    %v3028 = vrot.slane %v3014, %v3027
    %v3029 = vcombine.low %v2964, %v2980
    %v3031 = vunpack.c.l.s4 1934713408
    %v3032 = vunpack.c.0.s8 %v3031
    %v3033 = vlaneseq
    %v3034 = vshrl.u32 %v3033, 7
    %v3035 = vsub.s32 %v3032, %v3034
    %v3036 = vrot.slane %v3029, %v3035
    %v3037 = vcombine.low %v2989, %v3005
    %v3038 = vcombine.high %v2989, %v3005
    %v3040 = vunpack.c.l.s4 1934713408
    %v3041 = vunpack.c.0.s8 %v3040
    %v3042 = vlaneseq
    %v3043 = vshrl.u32 %v3042, 7
    %v3044 = vsub.s32 %v3041, %v3043
    %v3045 = vrot.slane %v3037, %v3044
    %v3047 = vunpack.c.l.s4 1934713408
    %v3048 = vunpack.c.0.s8 %v3047
    %v3049 = vlaneseq
    %v3050 = vshrl.u32 %v3049, 7
    %v3051 = vsub.s32 %v3048, %v3050
    %v3052 = vrot.slane %v3038, %v3051
    %v3053 = vcombine.low %v2996, %v3012
    %v3055 = vunpack.c.l.s4 1934713408
    %v3056 = vunpack.c.0.s8 %v3055
    %v3057 = vlaneseq
    %v3058 = vshrl.u32 %v3057, 7
    %v3059 = vsub.s32 %v3056, %v3058
    %v3060 = vrot.slane %v3053, %v3059
    %v3061 = vcombine.low %v3021, %v3045
    %v3062 = vcombine.high %v3021, %v3045
    %v3063 = vcombine.low %v3028, %v3052
    %v3064 = vcombine.high %v3028, %v3052
    %v3065 = vcombine.low %v3036, %v3060
    %v3066 = vcombine.high %v3036, %v3060
    %v3067 = vcombine.low %v1065, %v1067
    %v3068 = vcombine.high %v1065, %v1067
    %v3070 = vunpack.c.l.s4 1983009808
    %v3071 = vunpack.c.0.s8 %v3070
    %v3072 = vlaneseq
    %v3073 = vshrl.u32 %v3072, 7
    %v3074 = vsub.s32 %v3071, %v3073
    %v3075 = vrot.slane %v3067, %v3074
    %v3077 = vunpack.c.l.s4 1983009808
    %v3078 = vunpack.c.0.s8 %v3077
    %v3079 = vlaneseq
    %v3080 = vshrl.u32 %v3079, 7
    %v3081 = vsub.s32 %v3078, %v3080
    %v3082 = vrot.slane %v3068, %v3081
    %v3083 = vcombine.low %v1066, %v1068
    %v3084 = vcombine.high %v1066, %v1068
    %v3086 = vunpack.c.l.s4 1983009808
    %v3087 = vunpack.c.0.s8 %v3086
    %v3088 = vlaneseq
    %v3089 = vshrl.u32 %v3088, 7
    %v3090 = vsub.s32 %v3087, %v3089
    %v3091 = vrot.slane %v3083, %v3090
    %v3093 = vunpack.c.l.s4 1983009808
    %v3094 = vunpack.c.0.s8 %v3093
    %v3095 = vlaneseq
    %v3096 = vshrl.u32 %v3095, 7
    %v3097 = vsub.s32 %v3094, %v3096
    %v3098 = vrot.slane %v3084, %v3097
    %v3099 = vcombine.low %v1069, %v1071
    %v3100 = vcombine.high %v1069, %v1071
    %v3102 = vunpack.c.l.s4 1983009808
    %v3103 = vunpack.c.0.s8 %v3102
    %v3104 = vlaneseq
    %v3105 = vshrl.u32 %v3104, 7
    %v3106 = vsub.s32 %v3103, %v3105
    %v3107 = vrot.slane %v3099, %v3106
    %v3109 = vunpack.c.l.s4 1983009808
    %v3110 = vunpack.c.0.s8 %v3109
    %v3111 = vlaneseq
    %v3112 = vshrl.u32 %v3111, 7
    %v3113 = vsub.s32 %v3110, %v3112
    %v3114 = vrot.slane %v3100, %v3113
    %v3115 = vcombine.low %v1070, %v1072
    %v3116 = vcombine.high %v1070, %v1072
    %v3118 = vunpack.c.l.s4 1983009808
    %v3119 = vunpack.c.0.s8 %v3118
    %v3120 = vlaneseq
    %v3121 = vshrl.u32 %v3120, 7
    %v3122 = vsub.s32 %v3119, %v3121
    %v3123 = vrot.slane %v3115, %v3122
    %v3125 = vunpack.c.l.s4 1983009808
    %v3126 = vunpack.c.0.s8 %v3125
    %v3127 = vlaneseq
    %v3128 = vshrl.u32 %v3127, 7
    %v3129 = vsub.s32 %v3126, %v3128
    %v3130 = vrot.slane %v3116, %v3129
    %v3131 = vcombine.low %v3075, %v3091
    %v3132 = vcombine.high %v3075, %v3091
    %v3134 = vunpack.c.l.s4 1934713408
    %v3135 = vunpack.c.0.s8 %v3134
    %v3136 = vlaneseq
    %v3137 = vshrl.u32 %v3136, 7
    %v3138 = vsub.s32 %v3135, %v3137
    %v3139 = vrot.slane %v3131, %v3138
    %v3141 = vunpack.c.l.s4 1934713408
    %v3142 = vunpack.c.0.s8 %v3141
    %v3143 = vlaneseq
    %v3144 = vshrl.u32 %v3143, 7
    %v3145 = vsub.s32 %v3142, %v3144
    %v3146 = vrot.slane %v3132, %v3145
    %v3147 = vcombine.low %v3082, %v3098
    %v3149 = vunpack.c.l.s4 1934713408
    %v3150 = vunpack.c.0.s8 %v3149
    %v3151 = vlaneseq
    %v3152 = vshrl.u32 %v3151, 7
    %v3153 = vsub.s32 %v3150, %v3152
    %v3154 = vrot.slane %v3147, %v3153
    %v3155 = vcombine.low %v3107, %v3123
    %v3156 = vcombine.high %v3107, %v3123
    %v3158 = vunpack.c.l.s4 1934713408
    %v3159 = vunpack.c.0.s8 %v3158
    %v3160 = vlaneseq
    %v3161 = vshrl.u32 %v3160, 7
    %v3162 = vsub.s32 %v3159, %v3161
    %v3163 = vrot.slane %v3155, %v3162
    %v3165 = vunpack.c.l.s4 1934713408
    %v3166 = vunpack.c.0.s8 %v3165
    %v3167 = vlaneseq
    %v3168 = vshrl.u32 %v3167, 7
    %v3169 = vsub.s32 %v3166, %v3168
    %v3170 = vrot.slane %v3156, %v3169
    %v3171 = vcombine.low %v3114, %v3130
    %v3173 = vunpack.c.l.s4 1934713408
    %v3174 = vunpack.c.0.s8 %v3173
    %v3175 = vlaneseq
    %v3176 = vshrl.u32 %v3175, 7
    %v3177 = vsub.s32 %v3174, %v3176
    %v3178 = vrot.slane %v3171, %v3177
    %v3179 = vcombine.low %v3139, %v3163
    %v3180 = vcombine.high %v3139, %v3163
    %v3181 = vcombine.low %v3146, %v3170
    %v3182 = vcombine.high %v3146, %v3170
    %v3183 = vcombine.low %v3154, %v3178
    %v3184 = vcombine.high %v3154, %v3178
    %v3185 = vcombine.low %v1199, %v1201
    %v3186 = vcombine.high %v1199, %v1201
    %v3188 = vunpack.c.l.s4 1983009808
    %v3189 = vunpack.c.0.s8 %v3188
    %v3190 = vlaneseq
    %v3191 = vshrl.u32 %v3190, 7
    %v3192 = vsub.s32 %v3189, %v3191
    %v3193 = vrot.slane %v3185, %v3192
    %v3195 = vunpack.c.l.s4 1983009808
    %v3196 = vunpack.c.0.s8 %v3195
    %v3197 = vlaneseq
    %v3198 = vshrl.u32 %v3197, 7
    %v3199 = vsub.s32 %v3196, %v3198
    %v3200 = vrot.slane %v3186, %v3199
    %v3201 = vcombine.low %v1200, %v1202
    %v3202 = vcombine.high %v1200, %v1202
    %v3204 = vunpack.c.l.s4 1983009808
    %v3205 = vunpack.c.0.s8 %v3204
    %v3206 = vlaneseq
    %v3207 = vshrl.u32 %v3206, 7
    %v3208 = vsub.s32 %v3205, %v3207
    %v3209 = vrot.slane %v3201, %v3208
    %v3211 = vunpack.c.l.s4 1983009808
    %v3212 = vunpack.c.0.s8 %v3211
    %v3213 = vlaneseq
    %v3214 = vshrl.u32 %v3213, 7
    %v3215 = vsub.s32 %v3212, %v3214
    %v3216 = vrot.slane %v3202, %v3215
    %v3217 = vcombine.low %v1203, %v1205
    %v3218 = vcombine.high %v1203, %v1205
    %v3220 = vunpack.c.l.s4 1983009808
    %v3221 = vunpack.c.0.s8 %v3220
    %v3222 = vlaneseq
    %v3223 = vshrl.u32 %v3222, 7
    %v3224 = vsub.s32 %v3221, %v3223
    %v3225 = vrot.slane %v3217, %v3224
    %v3227 = vunpack.c.l.s4 1983009808
    %v3228 = vunpack.c.0.s8 %v3227
    %v3229 = vlaneseq
    %v3230 = vshrl.u32 %v3229, 7
    %v3231 = vsub.s32 %v3228, %v3230
    %v3232 = vrot.slane %v3218, %v3231
    %v3233 = vcombine.low %v1204, %v1206
    %v3234 = vcombine.high %v1204, %v1206
    %v3236 = vunpack.c.l.s4 1983009808
    %v3237 = vunpack.c.0.s8 %v3236
    %v3238 = vlaneseq
    %v3239 = vshrl.u32 %v3238, 7
    %v3240 = vsub.s32 %v3237, %v3239
    %v3241 = vrot.slane %v3233, %v3240
    %v3243 = vunpack.c.l.s4 1983009808
    %v3244 = vunpack.c.0.s8 %v3243
    %v3245 = vlaneseq
    %v3246 = vshrl.u32 %v3245, 7
    %v3247 = vsub.s32 %v3244, %v3246
    %v3248 = vrot.slane %v3234, %v3247
    %v3249 = vcombine.low %v3193, %v3209
    %v3250 = vcombine.high %v3193, %v3209
    %v3252 = vunpack.c.l.s4 1934713408
    %v3253 = vunpack.c.0.s8 %v3252
    %v3254 = vlaneseq
    %v3255 = vshrl.u32 %v3254, 7
    %v3256 = vsub.s32 %v3253, %v3255
    %v3257 = vrot.slane %v3249, %v3256
    %v3259 = vunpack.c.l.s4 1934713408
    %v3260 = vunpack.c.0.s8 %v3259
    %v3261 = vlaneseq
    %v3262 = vshrl.u32 %v3261, 7
    %v3263 = vsub.s32 %v3260, %v3262
    %v3264 = vrot.slane %v3250, %v3263
    %v3265 = vcombine.low %v3200, %v3216
    %v3267 = vunpack.c.l.s4 1934713408
    %v3268 = vunpack.c.0.s8 %v3267
    %v3269 = vlaneseq
    %v3270 = vshrl.u32 %v3269, 7
    %v3271 = vsub.s32 %v3268, %v3270
    %v3272 = vrot.slane %v3265, %v3271
    %v3273 = vcombine.low %v3225, %v3241
    %v3274 = vcombine.high %v3225, %v3241
    %v3276 = vunpack.c.l.s4 1934713408
    %v3277 = vunpack.c.0.s8 %v3276
    %v3278 = vlaneseq
    %v3279 = vshrl.u32 %v3278, 7
    %v3280 = vsub.s32 %v3277, %v3279
    %v3281 = vrot.slane %v3273, %v3280
    %v3283 = vunpack.c.l.s4 1934713408
    %v3284 = vunpack.c.0.s8 %v3283
    %v3285 = vlaneseq
    %v3286 = vshrl.u32 %v3285, 7
    %v3287 = vsub.s32 %v3284, %v3286
    %v3288 = vrot.slane %v3274, %v3287
    %v3289 = vcombine.low %v3232, %v3248
    %v3291 = vunpack.c.l.s4 1934713408
    %v3292 = vunpack.c.0.s8 %v3291
    %v3293 = vlaneseq
    %v3294 = vshrl.u32 %v3293, 7
    %v3295 = vsub.s32 %v3292, %v3294
    %v3296 = vrot.slane %v3289, %v3295
    %v3297 = vcombine.low %v3257, %v3281
    %v3298 = vcombine.high %v3257, %v3281
    %v3299 = vcombine.low %v3264, %v3288
    %v3300 = vcombine.high %v3264, %v3288
    %v3301 = vcombine.low %v3272, %v3296
    %v3302 = vcombine.high %v3272, %v3296
    %v3303 = vcombine.low %v1333, %v1335
    %v3304 = vcombine.high %v1333, %v1335
    %v3306 = vunpack.c.l.s4 1983009808
    %v3307 = vunpack.c.0.s8 %v3306
    %v3308 = vlaneseq
    %v3309 = vshrl.u32 %v3308, 7
    %v3310 = vsub.s32 %v3307, %v3309
    %v3311 = vrot.slane %v3303, %v3310
    %v3313 = vunpack.c.l.s4 1983009808
    %v3314 = vunpack.c.0.s8 %v3313
    %v3315 = vlaneseq
    %v3316 = vshrl.u32 %v3315, 7
    %v3317 = vsub.s32 %v3314, %v3316
    %v3318 = vrot.slane %v3304, %v3317
    %v3319 = vcombine.low %v1334, %v1336
    %v3320 = vcombine.high %v1334, %v1336
    %v3322 = vunpack.c.l.s4 1983009808
    %v3323 = vunpack.c.0.s8 %v3322
    %v3324 = vlaneseq
    %v3325 = vshrl.u32 %v3324, 7
    %v3326 = vsub.s32 %v3323, %v3325
    %v3327 = vrot.slane %v3319, %v3326
    %v3329 = vunpack.c.l.s4 1983009808
    %v3330 = vunpack.c.0.s8 %v3329
    %v3331 = vlaneseq
    %v3332 = vshrl.u32 %v3331, 7
    %v3333 = vsub.s32 %v3330, %v3332
    %v3334 = vrot.slane %v3320, %v3333
    %v3335 = vcombine.low %v1337, %v1339
    %v3336 = vcombine.high %v1337, %v1339
    %v3338 = vunpack.c.l.s4 1983009808
    %v3339 = vunpack.c.0.s8 %v3338
    %v3340 = vlaneseq
    %v3341 = vshrl.u32 %v3340, 7
    %v3342 = vsub.s32 %v3339, %v3341
    %v3343 = vrot.slane %v3335, %v3342
    %v3345 = vunpack.c.l.s4 1983009808
    %v3346 = vunpack.c.0.s8 %v3345
    %v3347 = vlaneseq
    %v3348 = vshrl.u32 %v3347, 7
    %v3349 = vsub.s32 %v3346, %v3348
    %v3350 = vrot.slane %v3336, %v3349
    %v3351 = vcombine.low %v1338, %v1340
    %v3352 = vcombine.high %v1338, %v1340
    %v3354 = vunpack.c.l.s4 1983009808
    %v3355 = vunpack.c.0.s8 %v3354
    %v3356 = vlaneseq
    %v3357 = vshrl.u32 %v3356, 7
    %v3358 = vsub.s32 %v3355, %v3357
    %v3359 = vrot.slane %v3351, %v3358
    %v3361 = vunpack.c.l.s4 1983009808
    %v3362 = vunpack.c.0.s8 %v3361
    %v3363 = vlaneseq
    %v3364 = vshrl.u32 %v3363, 7
    %v3365 = vsub.s32 %v3362, %v3364
    %v3366 = vrot.slane %v3352, %v3365
    %v3367 = vcombine.low %v3311, %v3327
    %v3368 = vcombine.high %v3311, %v3327
    %v3370 = vunpack.c.l.s4 1934713408
    %v3371 = vunpack.c.0.s8 %v3370
    %v3372 = vlaneseq
    %v3373 = vshrl.u32 %v3372, 7
    %v3374 = vsub.s32 %v3371, %v3373
    %v3375 = vrot.slane %v3367, %v3374
    %v3377 = vunpack.c.l.s4 1934713408
    %v3378 = vunpack.c.0.s8 %v3377
    %v3379 = vlaneseq
    %v3380 = vshrl.u32 %v3379, 7
    %v3381 = vsub.s32 %v3378, %v3380
    %v3382 = vrot.slane %v3368, %v3381
    %v3383 = vcombine.low %v3318, %v3334
    %v3385 = vunpack.c.l.s4 1934713408
    %v3386 = vunpack.c.0.s8 %v3385
    %v3387 = vlaneseq
    %v3388 = vshrl.u32 %v3387, 7
    %v3389 = vsub.s32 %v3386, %v3388
    %v3390 = vrot.slane %v3383, %v3389
    %v3391 = vcombine.low %v3343, %v3359
    %v3392 = vcombine.high %v3343, %v3359
    %v3394 = vunpack.c.l.s4 1934713408
    %v3395 = vunpack.c.0.s8 %v3394
    %v3396 = vlaneseq
    %v3397 = vshrl.u32 %v3396, 7
    %v3398 = vsub.s32 %v3395, %v3397
    %v3399 = vrot.slane %v3391, %v3398
    %v3401 = vunpack.c.l.s4 1934713408
    %v3402 = vunpack.c.0.s8 %v3401
    %v3403 = vlaneseq
    %v3404 = vshrl.u32 %v3403, 7
    %v3405 = vsub.s32 %v3402, %v3404
    %v3406 = vrot.slane %v3392, %v3405
    %v3407 = vcombine.low %v3350, %v3366
    %v3409 = vunpack.c.l.s4 1934713408
    %v3410 = vunpack.c.0.s8 %v3409
    %v3411 = vlaneseq
    %v3412 = vshrl.u32 %v3411, 7
    %v3413 = vsub.s32 %v3410, %v3412
    %v3414 = vrot.slane %v3407, %v3413
    %v3415 = vcombine.low %v3375, %v3399
    %v3416 = vcombine.high %v3375, %v3399
    %v3417 = vcombine.low %v3382, %v3406
    %v3418 = vcombine.high %v3382, %v3406
    %v3419 = vcombine.low %v3390, %v3414
    %v3420 = vcombine.high %v3390, %v3414
    %v3421 = vcombine.low %v1467, %v1469
    %v3422 = vcombine.high %v1467, %v1469
    %v3424 = vunpack.c.l.s4 1983009808
    %v3425 = vunpack.c.0.s8 %v3424
    %v3426 = vlaneseq
    %v3427 = vshrl.u32 %v3426, 7
    %v3428 = vsub.s32 %v3425, %v3427
    %v3429 = vrot.slane %v3421, %v3428
    %v3431 = vunpack.c.l.s4 1983009808
    %v3432 = vunpack.c.0.s8 %v3431
    %v3433 = vlaneseq
    %v3434 = vshrl.u32 %v3433, 7
    %v3435 = vsub.s32 %v3432, %v3434
    %v3436 = vrot.slane %v3422, %v3435
    %v3437 = vcombine.low %v1468, %v1470
    %v3438 = vcombine.high %v1468, %v1470
    %v3440 = vunpack.c.l.s4 1983009808
    %v3441 = vunpack.c.0.s8 %v3440
    %v3442 = vlaneseq
    %v3443 = vshrl.u32 %v3442, 7
    %v3444 = vsub.s32 %v3441, %v3443
    %v3445 = vrot.slane %v3437, %v3444
    %v3447 = vunpack.c.l.s4 1983009808
    %v3448 = vunpack.c.0.s8 %v3447
    %v3449 = vlaneseq
    %v3450 = vshrl.u32 %v3449, 7
    %v3451 = vsub.s32 %v3448, %v3450
    %v3452 = vrot.slane %v3438, %v3451
    %v3453 = vcombine.low %v1471, %v1473
    %v3454 = vcombine.high %v1471, %v1473
    %v3456 = vunpack.c.l.s4 1983009808
    %v3457 = vunpack.c.0.s8 %v3456
    %v3458 = vlaneseq
    %v3459 = vshrl.u32 %v3458, 7
    %v3460 = vsub.s32 %v3457, %v3459
    %v3461 = vrot.slane %v3453, %v3460
    %v3463 = vunpack.c.l.s4 1983009808
    %v3464 = vunpack.c.0.s8 %v3463
    %v3465 = vlaneseq
    %v3466 = vshrl.u32 %v3465, 7
    %v3467 = vsub.s32 %v3464, %v3466
    %v3468 = vrot.slane %v3454, %v3467
    %v3469 = vcombine.low %v1472, %v1474
    %v3470 = vcombine.high %v1472, %v1474
    %v3472 = vunpack.c.l.s4 1983009808
    %v3473 = vunpack.c.0.s8 %v3472
    %v3474 = vlaneseq
    %v3475 = vshrl.u32 %v3474, 7
    %v3476 = vsub.s32 %v3473, %v3475
    %v3477 = vrot.slane %v3469, %v3476
    %v3479 = vunpack.c.l.s4 1983009808
    %v3480 = vunpack.c.0.s8 %v3479
    %v3481 = vlaneseq
    %v3482 = vshrl.u32 %v3481, 7
    %v3483 = vsub.s32 %v3480, %v3482
    %v3484 = vrot.slane %v3470, %v3483
    %v3485 = vcombine.low %v3429, %v3445
    %v3486 = vcombine.high %v3429, %v3445
    %v3488 = vunpack.c.l.s4 1934713408
    %v3489 = vunpack.c.0.s8 %v3488
    %v3490 = vlaneseq
    %v3491 = vshrl.u32 %v3490, 7
    %v3492 = vsub.s32 %v3489, %v3491
    %v3493 = vrot.slane %v3485, %v3492
    %v3495 = vunpack.c.l.s4 1934713408
    %v3496 = vunpack.c.0.s8 %v3495
    %v3497 = vlaneseq
    %v3498 = vshrl.u32 %v3497, 7
    %v3499 = vsub.s32 %v3496, %v3498
    %v3500 = vrot.slane %v3486, %v3499
    %v3501 = vcombine.low %v3436, %v3452
    %v3503 = vunpack.c.l.s4 1934713408
    %v3504 = vunpack.c.0.s8 %v3503
    %v3505 = vlaneseq
    %v3506 = vshrl.u32 %v3505, 7
    %v3507 = vsub.s32 %v3504, %v3506
    %v3508 = vrot.slane %v3501, %v3507
    %v3509 = vcombine.low %v3461, %v3477
    %v3510 = vcombine.high %v3461, %v3477
    %v3512 = vunpack.c.l.s4 1934713408
    %v3513 = vunpack.c.0.s8 %v3512
    %v3514 = vlaneseq
    %v3515 = vshrl.u32 %v3514, 7
    %v3516 = vsub.s32 %v3513, %v3515
    %v3517 = vrot.slane %v3509, %v3516
    %v3519 = vunpack.c.l.s4 1934713408
    %v3520 = vunpack.c.0.s8 %v3519
    %v3521 = vlaneseq
    %v3522 = vshrl.u32 %v3521, 7
    %v3523 = vsub.s32 %v3520, %v3522
    %v3524 = vrot.slane %v3510, %v3523
    %v3525 = vcombine.low %v3468, %v3484
    %v3527 = vunpack.c.l.s4 1934713408
    %v3528 = vunpack.c.0.s8 %v3527
    %v3529 = vlaneseq
    %v3530 = vshrl.u32 %v3529, 7
    %v3531 = vsub.s32 %v3528, %v3530
    %v3532 = vrot.slane %v3525, %v3531
    %v3533 = vcombine.low %v3493, %v3517
    %v3534 = vcombine.high %v3493, %v3517
    %v3535 = vcombine.low %v3500, %v3524
    %v3536 = vcombine.high %v3500, %v3524
    %v3537 = vcombine.low %v3508, %v3532
    %v3538 = vcombine.high %v3508, %v3532
    %v3539 = vcombine.low %v1601, %v1603
    %v3540 = vcombine.high %v1601, %v1603
    %v3542 = vunpack.c.l.s4 1983009808
    %v3543 = vunpack.c.0.s8 %v3542
    %v3544 = vlaneseq
    %v3545 = vshrl.u32 %v3544, 7
    %v3546 = vsub.s32 %v3543, %v3545
    %v3547 = vrot.slane %v3539, %v3546
    %v3549 = vunpack.c.l.s4 1983009808
    %v3550 = vunpack.c.0.s8 %v3549
    %v3551 = vlaneseq
    %v3552 = vshrl.u32 %v3551, 7
    %v3553 = vsub.s32 %v3550, %v3552
    %v3554 = vrot.slane %v3540, %v3553
    %v3555 = vcombine.low %v1602, %v1604
    %v3556 = vcombine.high %v1602, %v1604
    %v3558 = vunpack.c.l.s4 1983009808
    %v3559 = vunpack.c.0.s8 %v3558
    %v3560 = vlaneseq
    %v3561 = vshrl.u32 %v3560, 7
    %v3562 = vsub.s32 %v3559, %v3561
    %v3563 = vrot.slane %v3555, %v3562
    %v3565 = vunpack.c.l.s4 1983009808
    %v3566 = vunpack.c.0.s8 %v3565
    %v3567 = vlaneseq
    %v3568 = vshrl.u32 %v3567, 7
    %v3569 = vsub.s32 %v3566, %v3568
    %v3570 = vrot.slane %v3556, %v3569
    %v3571 = vcombine.low %v1605, %v1607
    %v3572 = vcombine.high %v1605, %v1607
    %v3574 = vunpack.c.l.s4 1983009808
    %v3575 = vunpack.c.0.s8 %v3574
    %v3576 = vlaneseq
    %v3577 = vshrl.u32 %v3576, 7
    %v3578 = vsub.s32 %v3575, %v3577
    %v3579 = vrot.slane %v3571, %v3578
    %v3581 = vunpack.c.l.s4 1983009808
    %v3582 = vunpack.c.0.s8 %v3581
    %v3583 = vlaneseq
    %v3584 = vshrl.u32 %v3583, 7
    %v3585 = vsub.s32 %v3582, %v3584
    %v3586 = vrot.slane %v3572, %v3585
    %v3587 = vcombine.low %v1606, %v1608
    %v3588 = vcombine.high %v1606, %v1608
    %v3590 = vunpack.c.l.s4 1983009808
    %v3591 = vunpack.c.0.s8 %v3590
    %v3592 = vlaneseq
    %v3593 = vshrl.u32 %v3592, 7
    %v3594 = vsub.s32 %v3591, %v3593
    %v3595 = vrot.slane %v3587, %v3594
    %v3597 = vunpack.c.l.s4 1983009808
    %v3598 = vunpack.c.0.s8 %v3597
    %v3599 = vlaneseq
    %v3600 = vshrl.u32 %v3599, 7
    %v3601 = vsub.s32 %v3598, %v3600
    %v3602 = vrot.slane %v3588, %v3601
    %v3603 = vcombine.low %v3547, %v3563
    %v3604 = vcombine.high %v3547, %v3563
    %v3606 = vunpack.c.l.s4 1934713408
    %v3607 = vunpack.c.0.s8 %v3606
    %v3608 = vlaneseq
    %v3609 = vshrl.u32 %v3608, 7
    %v3610 = vsub.s32 %v3607, %v3609
    %v3611 = vrot.slane %v3603, %v3610
    %v3613 = vunpack.c.l.s4 1934713408
    %v3614 = vunpack.c.0.s8 %v3613
    %v3615 = vlaneseq
    %v3616 = vshrl.u32 %v3615, 7
    %v3617 = vsub.s32 %v3614, %v3616
    %v3618 = vrot.slane %v3604, %v3617
    %v3619 = vcombine.low %v3554, %v3570
    %v3621 = vunpack.c.l.s4 1934713408
    %v3622 = vunpack.c.0.s8 %v3621
    %v3623 = vlaneseq
    %v3624 = vshrl.u32 %v3623, 7
    %v3625 = vsub.s32 %v3622, %v3624
    %v3626 = vrot.slane %v3619, %v3625
    %v3627 = vcombine.low %v3579, %v3595
    %v3628 = vcombine.high %v3579, %v3595
    %v3630 = vunpack.c.l.s4 1934713408
    %v3631 = vunpack.c.0.s8 %v3630
    %v3632 = vlaneseq
    %v3633 = vshrl.u32 %v3632, 7
    %v3634 = vsub.s32 %v3631, %v3633
    %v3635 = vrot.slane %v3627, %v3634
    %v3637 = vunpack.c.l.s4 1934713408
    %v3638 = vunpack.c.0.s8 %v3637
    %v3639 = vlaneseq
    %v3640 = vshrl.u32 %v3639, 7
    %v3641 = vsub.s32 %v3638, %v3640
    %v3642 = vrot.slane %v3628, %v3641
    %v3643 = vcombine.low %v3586, %v3602
    %v3645 = vunpack.c.l.s4 1934713408
    %v3646 = vunpack.c.0.s8 %v3645
    %v3647 = vlaneseq
    %v3648 = vshrl.u32 %v3647, 7
    %v3649 = vsub.s32 %v3646, %v3648
    %v3650 = vrot.slane %v3643, %v3649
    %v3651 = vcombine.low %v3611, %v3635
    %v3652 = vcombine.high %v3611, %v3635
    %v3653 = vcombine.low %v3618, %v3642
    %v3654 = vcombine.high %v3618, %v3642
    %v3655 = vcombine.low %v3626, %v3650
    %v3656 = vcombine.high %v3626, %v3650
    %v3657 = vcombine.low %v1735, %v1737
    %v3658 = vcombine.high %v1735, %v1737
    %v3660 = vunpack.c.l.s4 1983009808
    %v3661 = vunpack.c.0.s8 %v3660
    %v3662 = vlaneseq
    %v3663 = vshrl.u32 %v3662, 7
    %v3664 = vsub.s32 %v3661, %v3663
    %v3665 = vrot.slane %v3657, %v3664
    %v3667 = vunpack.c.l.s4 1983009808
    %v3668 = vunpack.c.0.s8 %v3667
    %v3669 = vlaneseq
    %v3670 = vshrl.u32 %v3669, 7
    %v3671 = vsub.s32 %v3668, %v3670
    %v3672 = vrot.slane %v3658, %v3671
    %v3673 = vcombine.low %v1736, %v1738
    %v3674 = vcombine.high %v1736, %v1738
    %v3676 = vunpack.c.l.s4 1983009808
    %v3677 = vunpack.c.0.s8 %v3676
    %v3678 = vlaneseq
    %v3679 = vshrl.u32 %v3678, 7
    %v3680 = vsub.s32 %v3677, %v3679
    %v3681 = vrot.slane %v3673, %v3680
    %v3683 = vunpack.c.l.s4 1983009808
    %v3684 = vunpack.c.0.s8 %v3683
    %v3685 = vlaneseq
    %v3686 = vshrl.u32 %v3685, 7
    %v3687 = vsub.s32 %v3684, %v3686
    %v3688 = vrot.slane %v3674, %v3687
    %v3689 = vcombine.low %v1739, %v1741
    %v3690 = vcombine.high %v1739, %v1741
    %v3692 = vunpack.c.l.s4 1983009808
    %v3693 = vunpack.c.0.s8 %v3692
    %v3694 = vlaneseq
    %v3695 = vshrl.u32 %v3694, 7
    %v3696 = vsub.s32 %v3693, %v3695
    %v3697 = vrot.slane %v3689, %v3696
    %v3699 = vunpack.c.l.s4 1983009808
    %v3700 = vunpack.c.0.s8 %v3699
    %v3701 = vlaneseq
    %v3702 = vshrl.u32 %v3701, 7
    %v3703 = vsub.s32 %v3700, %v3702
    %v3704 = vrot.slane %v3690, %v3703
    %v3705 = vcombine.low %v1740, %v1742
    %v3706 = vcombine.high %v1740, %v1742
    %v3708 = vunpack.c.l.s4 1983009808
    %v3709 = vunpack.c.0.s8 %v3708
    %v3710 = vlaneseq
    %v3711 = vshrl.u32 %v3710, 7
    %v3712 = vsub.s32 %v3709, %v3711
    %v3713 = vrot.slane %v3705, %v3712
    %v3715 = vunpack.c.l.s4 1983009808
    %v3716 = vunpack.c.0.s8 %v3715
    %v3717 = vlaneseq
    %v3718 = vshrl.u32 %v3717, 7
    %v3719 = vsub.s32 %v3716, %v3718
    %v3720 = vrot.slane %v3706, %v3719
    %v3721 = vcombine.low %v3665, %v3681
    %v3722 = vcombine.high %v3665, %v3681
    %v3724 = vunpack.c.l.s4 1934713408
    %v3725 = vunpack.c.0.s8 %v3724
    %v3726 = vlaneseq
    %v3727 = vshrl.u32 %v3726, 7
    %v3728 = vsub.s32 %v3725, %v3727
    %v3729 = vrot.slane %v3721, %v3728
    %v3731 = vunpack.c.l.s4 1934713408
    %v3732 = vunpack.c.0.s8 %v3731
    %v3733 = vlaneseq
    %v3734 = vshrl.u32 %v3733, 7
    %v3735 = vsub.s32 %v3732, %v3734
    %v3736 = vrot.slane %v3722, %v3735
    %v3737 = vcombine.low %v3672, %v3688
    %v3739 = vunpack.c.l.s4 1934713408
    %v3740 = vunpack.c.0.s8 %v3739
    %v3741 = vlaneseq
    %v3742 = vshrl.u32 %v3741, 7
    %v3743 = vsub.s32 %v3740, %v3742
    %v3744 = vrot.slane %v3737, %v3743
    %v3745 = vcombine.low %v3697, %v3713
    %v3746 = vcombine.high %v3697, %v3713
    %v3748 = vunpack.c.l.s4 1934713408
    %v3749 = vunpack.c.0.s8 %v3748
    %v3750 = vlaneseq
    %v3751 = vshrl.u32 %v3750, 7
    %v3752 = vsub.s32 %v3749, %v3751
    %v3753 = vrot.slane %v3745, %v3752
    %v3755 = vunpack.c.l.s4 1934713408
    %v3756 = vunpack.c.0.s8 %v3755
    %v3757 = vlaneseq
    %v3758 = vshrl.u32 %v3757, 7
    %v3759 = vsub.s32 %v3756, %v3758
    %v3760 = vrot.slane %v3746, %v3759
    %v3761 = vcombine.low %v3704, %v3720
    %v3763 = vunpack.c.l.s4 1934713408
    %v3764 = vunpack.c.0.s8 %v3763
    %v3765 = vlaneseq
    %v3766 = vshrl.u32 %v3765, 7
    %v3767 = vsub.s32 %v3764, %v3766
    %v3768 = vrot.slane %v3761, %v3767
    %v3769 = vcombine.low %v3729, %v3753
    %v3770 = vcombine.high %v3729, %v3753
    %v3771 = vcombine.low %v3736, %v3760
    %v3772 = vcombine.high %v3736, %v3760
    %v3773 = vcombine.low %v3744, %v3768
    %v3774 = vcombine.high %v3744, %v3768
    %v3775 = vcombine.low %v1869, %v1871
    %v3776 = vcombine.high %v1869, %v1871
    %v3778 = vunpack.c.l.s4 1983009808
    %v3779 = vunpack.c.0.s8 %v3778
    %v3780 = vlaneseq
    %v3781 = vshrl.u32 %v3780, 7
    %v3782 = vsub.s32 %v3779, %v3781
    %v3783 = vrot.slane %v3775, %v3782
    %v3785 = vunpack.c.l.s4 1983009808
    %v3786 = vunpack.c.0.s8 %v3785
    %v3787 = vlaneseq
    %v3788 = vshrl.u32 %v3787, 7
    %v3789 = vsub.s32 %v3786, %v3788
    %v3790 = vrot.slane %v3776, %v3789
    %v3791 = vcombine.low %v1870, %v1872
    %v3792 = vcombine.high %v1870, %v1872
    %v3794 = vunpack.c.l.s4 1983009808
    %v3795 = vunpack.c.0.s8 %v3794
    %v3796 = vlaneseq
    %v3797 = vshrl.u32 %v3796, 7
    %v3798 = vsub.s32 %v3795, %v3797
    %v3799 = vrot.slane %v3791, %v3798
    %v3801 = vunpack.c.l.s4 1983009808
    %v3802 = vunpack.c.0.s8 %v3801
    %v3803 = vlaneseq
    %v3804 = vshrl.u32 %v3803, 7
    %v3805 = vsub.s32 %v3802, %v3804
    %v3806 = vrot.slane %v3792, %v3805
    %v3807 = vcombine.low %v1873, %v1875
    %v3808 = vcombine.high %v1873, %v1875
    %v3810 = vunpack.c.l.s4 1983009808
    %v3811 = vunpack.c.0.s8 %v3810
    %v3812 = vlaneseq
    %v3813 = vshrl.u32 %v3812, 7
    %v3814 = vsub.s32 %v3811, %v3813
    %v3815 = vrot.slane %v3807, %v3814
    %v3817 = vunpack.c.l.s4 1983009808
    %v3818 = vunpack.c.0.s8 %v3817
    %v3819 = vlaneseq
    %v3820 = vshrl.u32 %v3819, 7
    %v3821 = vsub.s32 %v3818, %v3820
    %v3822 = vrot.slane %v3808, %v3821
    %v3823 = vcombine.low %v1874, %v1876
    %v3824 = vcombine.high %v1874, %v1876
    %v3826 = vunpack.c.l.s4 1983009808
    %v3827 = vunpack.c.0.s8 %v3826
    %v3828 = vlaneseq
    %v3829 = vshrl.u32 %v3828, 7
    %v3830 = vsub.s32 %v3827, %v3829
    %v3831 = vrot.slane %v3823, %v3830
    %v3833 = vunpack.c.l.s4 1983009808
    %v3834 = vunpack.c.0.s8 %v3833
    %v3835 = vlaneseq
    %v3836 = vshrl.u32 %v3835, 7
    %v3837 = vsub.s32 %v3834, %v3836
    %v3838 = vrot.slane %v3824, %v3837
    %v3839 = vcombine.low %v3783, %v3799
    %v3840 = vcombine.high %v3783, %v3799
    %v3842 = vunpack.c.l.s4 1934713408
    %v3843 = vunpack.c.0.s8 %v3842
    %v3844 = vlaneseq
    %v3845 = vshrl.u32 %v3844, 7
    %v3846 = vsub.s32 %v3843, %v3845
    %v3847 = vrot.slane %v3839, %v3846
    %v3849 = vunpack.c.l.s4 1934713408
    %v3850 = vunpack.c.0.s8 %v3849
    %v3851 = vlaneseq
    %v3852 = vshrl.u32 %v3851, 7
    %v3853 = vsub.s32 %v3850, %v3852
    %v3854 = vrot.slane %v3840, %v3853
    %v3855 = vcombine.low %v3790, %v3806
    %v3857 = vunpack.c.l.s4 1934713408
    %v3858 = vunpack.c.0.s8 %v3857
    %v3859 = vlaneseq
    %v3860 = vshrl.u32 %v3859, 7
    %v3861 = vsub.s32 %v3858, %v3860
    %v3862 = vrot.slane %v3855, %v3861
    %v3863 = vcombine.low %v3815, %v3831
    %v3864 = vcombine.high %v3815, %v3831
    %v3866 = vunpack.c.l.s4 1934713408
    %v3867 = vunpack.c.0.s8 %v3866
    %v3868 = vlaneseq
    %v3869 = vshrl.u32 %v3868, 7
    %v3870 = vsub.s32 %v3867, %v3869
    %v3871 = vrot.slane %v3863, %v3870
    %v3873 = vunpack.c.l.s4 1934713408
    %v3874 = vunpack.c.0.s8 %v3873
    %v3875 = vlaneseq
    %v3876 = vshrl.u32 %v3875, 7
    %v3877 = vsub.s32 %v3874, %v3876
    %v3878 = vrot.slane %v3864, %v3877
    %v3879 = vcombine.low %v3822, %v3838
    %v3881 = vunpack.c.l.s4 1934713408
    %v3882 = vunpack.c.0.s8 %v3881
    %v3883 = vlaneseq
    %v3884 = vshrl.u32 %v3883, 7
    %v3885 = vsub.s32 %v3882, %v3884
    %v3886 = vrot.slane %v3879, %v3885
    %v3887 = vcombine.low %v3847, %v3871
    %v3888 = vcombine.high %v3847, %v3871
    %v3889 = vcombine.low %v3854, %v3878
    %v3890 = vcombine.high %v3854, %v3878
    %v3891 = vcombine.low %v3862, %v3886
    %v3892 = vcombine.high %v3862, %v3886
    %v3893 = vcombine.low %v2003, %v2005
    %v3894 = vcombine.high %v2003, %v2005
    %v3896 = vunpack.c.l.s4 1983009808
    %v3897 = vunpack.c.0.s8 %v3896
    %v3898 = vlaneseq
    %v3899 = vshrl.u32 %v3898, 7
    %v3900 = vsub.s32 %v3897, %v3899
    %v3901 = vrot.slane %v3893, %v3900
    %v3903 = vunpack.c.l.s4 1983009808
    %v3904 = vunpack.c.0.s8 %v3903
    %v3905 = vlaneseq
    %v3906 = vshrl.u32 %v3905, 7
    %v3907 = vsub.s32 %v3904, %v3906
    %v3908 = vrot.slane %v3894, %v3907
    %v3909 = vcombine.low %v2004, %v2006
    %v3910 = vcombine.high %v2004, %v2006
    %v3912 = vunpack.c.l.s4 1983009808
    %v3913 = vunpack.c.0.s8 %v3912
    %v3914 = vlaneseq
    %v3915 = vshrl.u32 %v3914, 7
    %v3916 = vsub.s32 %v3913, %v3915
    %v3917 = vrot.slane %v3909, %v3916
    %v3919 = vunpack.c.l.s4 1983009808
    %v3920 = vunpack.c.0.s8 %v3919
    %v3921 = vlaneseq
    %v3922 = vshrl.u32 %v3921, 7
    %v3923 = vsub.s32 %v3920, %v3922
    %v3924 = vrot.slane %v3910, %v3923
    %v3925 = vcombine.low %v2007, %v2009
    %v3926 = vcombine.high %v2007, %v2009
    %v3928 = vunpack.c.l.s4 1983009808
    %v3929 = vunpack.c.0.s8 %v3928
    %v3930 = vlaneseq
    %v3931 = vshrl.u32 %v3930, 7
    %v3932 = vsub.s32 %v3929, %v3931
    %v3933 = vrot.slane %v3925, %v3932
    %v3935 = vunpack.c.l.s4 1983009808
    %v3936 = vunpack.c.0.s8 %v3935
    %v3937 = vlaneseq
    %v3938 = vshrl.u32 %v3937, 7
    %v3939 = vsub.s32 %v3936, %v3938
    %v3940 = vrot.slane %v3926, %v3939
    %v3941 = vcombine.low %v2008, %v2010
    %v3942 = vcombine.high %v2008, %v2010
    %v3944 = vunpack.c.l.s4 1983009808
    %v3945 = vunpack.c.0.s8 %v3944
    %v3946 = vlaneseq
    %v3947 = vshrl.u32 %v3946, 7
    %v3948 = vsub.s32 %v3945, %v3947
    %v3949 = vrot.slane %v3941, %v3948
    %v3951 = vunpack.c.l.s4 1983009808
    %v3952 = vunpack.c.0.s8 %v3951
    %v3953 = vlaneseq
    %v3954 = vshrl.u32 %v3953, 7
    %v3955 = vsub.s32 %v3952, %v3954
    %v3956 = vrot.slane %v3942, %v3955
    %v3957 = vcombine.low %v3901, %v3917
    %v3958 = vcombine.high %v3901, %v3917
    %v3960 = vunpack.c.l.s4 1934713408
    %v3961 = vunpack.c.0.s8 %v3960
    %v3962 = vlaneseq
    %v3963 = vshrl.u32 %v3962, 7
    %v3964 = vsub.s32 %v3961, %v3963
    %v3965 = vrot.slane %v3957, %v3964
    %v3967 = vunpack.c.l.s4 1934713408
    %v3968 = vunpack.c.0.s8 %v3967
    %v3969 = vlaneseq
    %v3970 = vshrl.u32 %v3969, 7
    %v3971 = vsub.s32 %v3968, %v3970
    %v3972 = vrot.slane %v3958, %v3971
    %v3973 = vcombine.low %v3908, %v3924
    %v3975 = vunpack.c.l.s4 1934713408
    %v3976 = vunpack.c.0.s8 %v3975
    %v3977 = vlaneseq
    %v3978 = vshrl.u32 %v3977, 7
    %v3979 = vsub.s32 %v3976, %v3978
    %v3980 = vrot.slane %v3973, %v3979
    %v3981 = vcombine.low %v3933, %v3949
    %v3982 = vcombine.high %v3933, %v3949
    %v3984 = vunpack.c.l.s4 1934713408
    %v3985 = vunpack.c.0.s8 %v3984
    %v3986 = vlaneseq
    %v3987 = vshrl.u32 %v3986, 7
    %v3988 = vsub.s32 %v3985, %v3987
    %v3989 = vrot.slane %v3981, %v3988
    %v3991 = vunpack.c.l.s4 1934713408
    %v3992 = vunpack.c.0.s8 %v3991
    %v3993 = vlaneseq
    %v3994 = vshrl.u32 %v3993, 7
    %v3995 = vsub.s32 %v3992, %v3994
    %v3996 = vrot.slane %v3982, %v3995
    %v3997 = vcombine.low %v3940, %v3956
    %v3999 = vunpack.c.l.s4 1934713408
    %v4000 = vunpack.c.0.s8 %v3999
    %v4001 = vlaneseq
    %v4002 = vshrl.u32 %v4001, 7
    %v4003 = vsub.s32 %v4000, %v4002
    %v4004 = vrot.slane %v3997, %v4003
    %v4005 = vcombine.low %v3965, %v3989
    %v4006 = vcombine.high %v3965, %v3989
    %v4007 = vcombine.low %v3972, %v3996
    %v4008 = vcombine.high %v3972, %v3996
    %v4009 = vcombine.low %v3980, %v4004
    %v4010 = vcombine.high %v3980, %v4004
    %v4011 = vcombine.low %v2137, %v2139
    %v4012 = vcombine.high %v2137, %v2139
    %v4014 = vunpack.c.l.s4 1983009808
    %v4015 = vunpack.c.0.s8 %v4014
    %v4016 = vlaneseq
    %v4017 = vshrl.u32 %v4016, 7
    %v4018 = vsub.s32 %v4015, %v4017
    %v4019 = vrot.slane %v4011, %v4018
    %v4021 = vunpack.c.l.s4 1983009808
    %v4022 = vunpack.c.0.s8 %v4021
    %v4023 = vlaneseq
    %v4024 = vshrl.u32 %v4023, 7
    %v4025 = vsub.s32 %v4022, %v4024
    %v4026 = vrot.slane %v4012, %v4025
    %v4027 = vcombine.low %v2138, %v2140
    %v4028 = vcombine.high %v2138, %v2140
    %v4030 = vunpack.c.l.s4 1983009808
    %v4031 = vunpack.c.0.s8 %v4030
    %v4032 = vlaneseq
    %v4033 = vshrl.u32 %v4032, 7
    %v4034 = vsub.s32 %v4031, %v4033
    %v4035 = vrot.slane %v4027, %v4034
    %v4037 = vunpack.c.l.s4 1983009808
    %v4038 = vunpack.c.0.s8 %v4037
    %v4039 = vlaneseq
    %v4040 = vshrl.u32 %v4039, 7
    %v4041 = vsub.s32 %v4038, %v4040
    %v4042 = vrot.slane %v4028, %v4041
    %v4043 = vcombine.low %v2141, %v2143
    %v4044 = vcombine.high %v2141, %v2143
    %v4046 = vunpack.c.l.s4 1983009808
    %v4047 = vunpack.c.0.s8 %v4046
    %v4048 = vlaneseq
    %v4049 = vshrl.u32 %v4048, 7
    %v4050 = vsub.s32 %v4047, %v4049
    %v4051 = vrot.slane %v4043, %v4050
    %v4053 = vunpack.c.l.s4 1983009808
    %v4054 = vunpack.c.0.s8 %v4053
    %v4055 = vlaneseq
    %v4056 = vshrl.u32 %v4055, 7
    %v4057 = vsub.s32 %v4054, %v4056
    %v4058 = vrot.slane %v4044, %v4057
    %v4059 = vcombine.low %v2142, %v2144
    %v4060 = vcombine.high %v2142, %v2144
    %v4062 = vunpack.c.l.s4 1983009808
    %v4063 = vunpack.c.0.s8 %v4062
    %v4064 = vlaneseq
    %v4065 = vshrl.u32 %v4064, 7
    %v4066 = vsub.s32 %v4063, %v4065
    %v4067 = vrot.slane %v4059, %v4066
    %v4069 = vunpack.c.l.s4 1983009808
    %v4070 = vunpack.c.0.s8 %v4069
    %v4071 = vlaneseq
    %v4072 = vshrl.u32 %v4071, 7
    %v4073 = vsub.s32 %v4070, %v4072
    %v4074 = vrot.slane %v4060, %v4073
    %v4075 = vcombine.low %v4019, %v4035
    %v4076 = vcombine.high %v4019, %v4035
    %v4078 = vunpack.c.l.s4 1934713408
    %v4079 = vunpack.c.0.s8 %v4078
    %v4080 = vlaneseq
    %v4081 = vshrl.u32 %v4080, 7
    %v4082 = vsub.s32 %v4079, %v4081
    %v4083 = vrot.slane %v4075, %v4082
    %v4085 = vunpack.c.l.s4 1934713408
    %v4086 = vunpack.c.0.s8 %v4085
    %v4087 = vlaneseq
    %v4088 = vshrl.u32 %v4087, 7
    %v4089 = vsub.s32 %v4086, %v4088
    %v4090 = vrot.slane %v4076, %v4089
    %v4091 = vcombine.low %v4026, %v4042
    %v4093 = vunpack.c.l.s4 1934713408
    %v4094 = vunpack.c.0.s8 %v4093
    %v4095 = vlaneseq
    %v4096 = vshrl.u32 %v4095, 7
    %v4097 = vsub.s32 %v4094, %v4096
    %v4098 = vrot.slane %v4091, %v4097
    %v4099 = vcombine.low %v4051, %v4067
    %v4100 = vcombine.high %v4051, %v4067
    %v4102 = vunpack.c.l.s4 1934713408
    %v4103 = vunpack.c.0.s8 %v4102
    %v4104 = vlaneseq
    %v4105 = vshrl.u32 %v4104, 7
    %v4106 = vsub.s32 %v4103, %v4105
    %v4107 = vrot.slane %v4099, %v4106
    %v4109 = vunpack.c.l.s4 1934713408
    %v4110 = vunpack.c.0.s8 %v4109
    %v4111 = vlaneseq
    %v4112 = vshrl.u32 %v4111, 7
    %v4113 = vsub.s32 %v4110, %v4112
    %v4114 = vrot.slane %v4100, %v4113
    %v4115 = vcombine.low %v4058, %v4074
    %v4117 = vunpack.c.l.s4 1934713408
    %v4118 = vunpack.c.0.s8 %v4117
    %v4119 = vlaneseq
    %v4120 = vshrl.u32 %v4119, 7
    %v4121 = vsub.s32 %v4118, %v4120
    %v4122 = vrot.slane %v4115, %v4121
    %v4123 = vcombine.low %v4083, %v4107
    %v4124 = vcombine.high %v4083, %v4107
    %v4125 = vcombine.low %v4090, %v4114
    %v4126 = vcombine.high %v4090, %v4114
    %v4127 = vcombine.low %v4098, %v4122
    %v4128 = vcombine.high %v4098, %v4122
    %v4129 = vcombine.low %v2271, %v2273
    %v4130 = vcombine.high %v2271, %v2273
    %v4132 = vunpack.c.l.s4 1983009808
    %v4133 = vunpack.c.0.s8 %v4132
    %v4134 = vlaneseq
    %v4135 = vshrl.u32 %v4134, 7
    %v4136 = vsub.s32 %v4133, %v4135
    %v4137 = vrot.slane %v4129, %v4136
    %v4139 = vunpack.c.l.s4 1983009808
    %v4140 = vunpack.c.0.s8 %v4139
    %v4141 = vlaneseq
    %v4142 = vshrl.u32 %v4141, 7
    %v4143 = vsub.s32 %v4140, %v4142
    %v4144 = vrot.slane %v4130, %v4143
    %v4145 = vcombine.low %v2272, %v2274
    %v4146 = vcombine.high %v2272, %v2274
    %v4148 = vunpack.c.l.s4 1983009808
    %v4149 = vunpack.c.0.s8 %v4148
    %v4150 = vlaneseq
    %v4151 = vshrl.u32 %v4150, 7
    %v4152 = vsub.s32 %v4149, %v4151
    %v4153 = vrot.slane %v4145, %v4152
    %v4155 = vunpack.c.l.s4 1983009808
    %v4156 = vunpack.c.0.s8 %v4155
    %v4157 = vlaneseq
    %v4158 = vshrl.u32 %v4157, 7
    %v4159 = vsub.s32 %v4156, %v4158
    %v4160 = vrot.slane %v4146, %v4159
    %v4161 = vcombine.low %v2275, %v2277
    %v4162 = vcombine.high %v2275, %v2277
    %v4164 = vunpack.c.l.s4 1983009808
    %v4165 = vunpack.c.0.s8 %v4164
    %v4166 = vlaneseq
    %v4167 = vshrl.u32 %v4166, 7
    %v4168 = vsub.s32 %v4165, %v4167
    %v4169 = vrot.slane %v4161, %v4168
    %v4171 = vunpack.c.l.s4 1983009808
    %v4172 = vunpack.c.0.s8 %v4171
    %v4173 = vlaneseq
    %v4174 = vshrl.u32 %v4173, 7
    %v4175 = vsub.s32 %v4172, %v4174
    %v4176 = vrot.slane %v4162, %v4175
    %v4177 = vcombine.low %v2276, %v2278
    %v4178 = vcombine.high %v2276, %v2278
    %v4180 = vunpack.c.l.s4 1983009808
    %v4181 = vunpack.c.0.s8 %v4180
    %v4182 = vlaneseq
    %v4183 = vshrl.u32 %v4182, 7
    %v4184 = vsub.s32 %v4181, %v4183
    %v4185 = vrot.slane %v4177, %v4184
    %v4187 = vunpack.c.l.s4 1983009808
    %v4188 = vunpack.c.0.s8 %v4187
    %v4189 = vlaneseq
    %v4190 = vshrl.u32 %v4189, 7
    %v4191 = vsub.s32 %v4188, %v4190
    %v4192 = vrot.slane %v4178, %v4191
    %v4193 = vcombine.low %v4137, %v4153
    %v4194 = vcombine.high %v4137, %v4153
    %v4196 = vunpack.c.l.s4 1934713408
    %v4197 = vunpack.c.0.s8 %v4196
    %v4198 = vlaneseq
    %v4199 = vshrl.u32 %v4198, 7
    %v4200 = vsub.s32 %v4197, %v4199
    %v4201 = vrot.slane %v4193, %v4200
    %v4203 = vunpack.c.l.s4 1934713408
    %v4204 = vunpack.c.0.s8 %v4203
    %v4205 = vlaneseq
    %v4206 = vshrl.u32 %v4205, 7
    %v4207 = vsub.s32 %v4204, %v4206
    %v4208 = vrot.slane %v4194, %v4207
    %v4209 = vcombine.low %v4144, %v4160
    %v4211 = vunpack.c.l.s4 1934713408
    %v4212 = vunpack.c.0.s8 %v4211
    %v4213 = vlaneseq
    %v4214 = vshrl.u32 %v4213, 7
    %v4215 = vsub.s32 %v4212, %v4214
    %v4216 = vrot.slane %v4209, %v4215
    %v4217 = vcombine.low %v4169, %v4185
    %v4218 = vcombine.high %v4169, %v4185
    %v4220 = vunpack.c.l.s4 1934713408
    %v4221 = vunpack.c.0.s8 %v4220
    %v4222 = vlaneseq
    %v4223 = vshrl.u32 %v4222, 7
    %v4224 = vsub.s32 %v4221, %v4223
    %v4225 = vrot.slane %v4217, %v4224
    %v4227 = vunpack.c.l.s4 1934713408
    %v4228 = vunpack.c.0.s8 %v4227
    %v4229 = vlaneseq
    %v4230 = vshrl.u32 %v4229, 7
    %v4231 = vsub.s32 %v4228, %v4230
    %v4232 = vrot.slane %v4218, %v4231
    %v4233 = vcombine.low %v4176, %v4192
    %v4235 = vunpack.c.l.s4 1934713408
    %v4236 = vunpack.c.0.s8 %v4235
    %v4237 = vlaneseq
    %v4238 = vshrl.u32 %v4237, 7
    %v4239 = vsub.s32 %v4236, %v4238
    %v4240 = vrot.slane %v4233, %v4239
    %v4241 = vcombine.low %v4201, %v4225
    %v4242 = vcombine.high %v4201, %v4225
    %v4243 = vcombine.low %v4208, %v4232
    %v4244 = vcombine.high %v4208, %v4232
    %v4245 = vcombine.low %v4216, %v4240
    %v4246 = vcombine.high %v4216, %v4240
    %v4247 = vcombine.low %v2405, %v2407
    %v4248 = vcombine.high %v2405, %v2407
    %v4250 = vunpack.c.l.s4 1983009808
    %v4251 = vunpack.c.0.s8 %v4250
    %v4252 = vlaneseq
    %v4253 = vshrl.u32 %v4252, 7
    %v4254 = vsub.s32 %v4251, %v4253
    %v4255 = vrot.slane %v4247, %v4254
    %v4257 = vunpack.c.l.s4 1983009808
    %v4258 = vunpack.c.0.s8 %v4257
    %v4259 = vlaneseq
    %v4260 = vshrl.u32 %v4259, 7
    %v4261 = vsub.s32 %v4258, %v4260
    %v4262 = vrot.slane %v4248, %v4261
    %v4263 = vcombine.low %v2406, %v2408
    %v4264 = vcombine.high %v2406, %v2408
    %v4266 = vunpack.c.l.s4 1983009808
    %v4267 = vunpack.c.0.s8 %v4266
    %v4268 = vlaneseq
    %v4269 = vshrl.u32 %v4268, 7
    %v4270 = vsub.s32 %v4267, %v4269
    %v4271 = vrot.slane %v4263, %v4270
    %v4273 = vunpack.c.l.s4 1983009808
    %v4274 = vunpack.c.0.s8 %v4273
    %v4275 = vlaneseq
    %v4276 = vshrl.u32 %v4275, 7
    %v4277 = vsub.s32 %v4274, %v4276
    %v4278 = vrot.slane %v4264, %v4277
    %v4279 = vcombine.low %v2409, %v2411
    %v4280 = vcombine.high %v2409, %v2411
    %v4282 = vunpack.c.l.s4 1983009808
    %v4283 = vunpack.c.0.s8 %v4282
    %v4284 = vlaneseq
    %v4285 = vshrl.u32 %v4284, 7
    %v4286 = vsub.s32 %v4283, %v4285
    %v4287 = vrot.slane %v4279, %v4286
    %v4289 = vunpack.c.l.s4 1983009808
    %v4290 = vunpack.c.0.s8 %v4289
    %v4291 = vlaneseq
    %v4292 = vshrl.u32 %v4291, 7
    %v4293 = vsub.s32 %v4290, %v4292
    %v4294 = vrot.slane %v4280, %v4293
    %v4295 = vcombine.low %v2410, %v2412
    %v4296 = vcombine.high %v2410, %v2412
    %v4298 = vunpack.c.l.s4 1983009808
    %v4299 = vunpack.c.0.s8 %v4298
    %v4300 = vlaneseq
    %v4301 = vshrl.u32 %v4300, 7
    %v4302 = vsub.s32 %v4299, %v4301
    %v4303 = vrot.slane %v4295, %v4302
    %v4305 = vunpack.c.l.s4 1983009808
    %v4306 = vunpack.c.0.s8 %v4305
    %v4307 = vlaneseq
    %v4308 = vshrl.u32 %v4307, 7
    %v4309 = vsub.s32 %v4306, %v4308
    %v4310 = vrot.slane %v4296, %v4309
    %v4311 = vcombine.low %v4255, %v4271
    %v4312 = vcombine.high %v4255, %v4271
    %v4314 = vunpack.c.l.s4 1934713408
    %v4315 = vunpack.c.0.s8 %v4314
    %v4316 = vlaneseq
    %v4317 = vshrl.u32 %v4316, 7
    %v4318 = vsub.s32 %v4315, %v4317
    %v4319 = vrot.slane %v4311, %v4318
    %v4321 = vunpack.c.l.s4 1934713408
    %v4322 = vunpack.c.0.s8 %v4321
    %v4323 = vlaneseq
    %v4324 = vshrl.u32 %v4323, 7
    %v4325 = vsub.s32 %v4322, %v4324
    %v4326 = vrot.slane %v4312, %v4325
    %v4327 = vcombine.low %v4262, %v4278
    %v4329 = vunpack.c.l.s4 1934713408
    %v4330 = vunpack.c.0.s8 %v4329
    %v4331 = vlaneseq
    %v4332 = vshrl.u32 %v4331, 7
    %v4333 = vsub.s32 %v4330, %v4332
    %v4334 = vrot.slane %v4327, %v4333
    %v4335 = vcombine.low %v4287, %v4303
    %v4336 = vcombine.high %v4287, %v4303
    %v4338 = vunpack.c.l.s4 1934713408
    %v4339 = vunpack.c.0.s8 %v4338
    %v4340 = vlaneseq
    %v4341 = vshrl.u32 %v4340, 7
    %v4342 = vsub.s32 %v4339, %v4341
    %v4343 = vrot.slane %v4335, %v4342
    %v4345 = vunpack.c.l.s4 1934713408
    %v4346 = vunpack.c.0.s8 %v4345
    %v4347 = vlaneseq
    %v4348 = vshrl.u32 %v4347, 7
    %v4349 = vsub.s32 %v4346, %v4348
    %v4350 = vrot.slane %v4336, %v4349
    %v4351 = vcombine.low %v4294, %v4310
    %v4353 = vunpack.c.l.s4 1934713408
    %v4354 = vunpack.c.0.s8 %v4353
    %v4355 = vlaneseq
    %v4356 = vshrl.u32 %v4355, 7
    %v4357 = vsub.s32 %v4354, %v4356
    %v4358 = vrot.slane %v4351, %v4357
    %v4359 = vcombine.low %v4319, %v4343
    %v4360 = vcombine.high %v4319, %v4343
    %v4361 = vcombine.low %v4326, %v4350
    %v4362 = vcombine.high %v4326, %v4350
    %v4363 = vcombine.low %v4334, %v4358
    %v4364 = vcombine.high %v4334, %v4358
    %v4365 = vcombine.low %v2539, %v2541
    %v4366 = vcombine.high %v2539, %v2541
    %v4368 = vunpack.c.l.s4 1983009808
    %v4369 = vunpack.c.0.s8 %v4368
    %v4370 = vlaneseq
    %v4371 = vshrl.u32 %v4370, 7
    %v4372 = vsub.s32 %v4369, %v4371
    %v4373 = vrot.slane %v4365, %v4372
    %v4375 = vunpack.c.l.s4 1983009808
    %v4376 = vunpack.c.0.s8 %v4375
    %v4377 = vlaneseq
    %v4378 = vshrl.u32 %v4377, 7
    %v4379 = vsub.s32 %v4376, %v4378
    %v4380 = vrot.slane %v4366, %v4379
    %v4381 = vcombine.low %v2540, %v2542
    %v4382 = vcombine.high %v2540, %v2542
    %v4384 = vunpack.c.l.s4 1983009808
    %v4385 = vunpack.c.0.s8 %v4384
    %v4386 = vlaneseq
    %v4387 = vshrl.u32 %v4386, 7
    %v4388 = vsub.s32 %v4385, %v4387
    %v4389 = vrot.slane %v4381, %v4388
    %v4391 = vunpack.c.l.s4 1983009808
    %v4392 = vunpack.c.0.s8 %v4391
    %v4393 = vlaneseq
    %v4394 = vshrl.u32 %v4393, 7
    %v4395 = vsub.s32 %v4392, %v4394
    %v4396 = vrot.slane %v4382, %v4395
    %v4397 = vcombine.low %v2543, %v2545
    %v4398 = vcombine.high %v2543, %v2545
    %v4400 = vunpack.c.l.s4 1983009808
    %v4401 = vunpack.c.0.s8 %v4400
    %v4402 = vlaneseq
    %v4403 = vshrl.u32 %v4402, 7
    %v4404 = vsub.s32 %v4401, %v4403
    %v4405 = vrot.slane %v4397, %v4404
    %v4407 = vunpack.c.l.s4 1983009808
    %v4408 = vunpack.c.0.s8 %v4407
    %v4409 = vlaneseq
    %v4410 = vshrl.u32 %v4409, 7
    %v4411 = vsub.s32 %v4408, %v4410
    %v4412 = vrot.slane %v4398, %v4411
    %v4413 = vcombine.low %v2544, %v2546
    %v4414 = vcombine.high %v2544, %v2546
    %v4416 = vunpack.c.l.s4 1983009808
    %v4417 = vunpack.c.0.s8 %v4416
    %v4418 = vlaneseq
    %v4419 = vshrl.u32 %v4418, 7
    %v4420 = vsub.s32 %v4417, %v4419
    %v4421 = vrot.slane %v4413, %v4420
    %v4423 = vunpack.c.l.s4 1983009808
    %v4424 = vunpack.c.0.s8 %v4423
    %v4425 = vlaneseq
    %v4426 = vshrl.u32 %v4425, 7
    %v4427 = vsub.s32 %v4424, %v4426
    %v4428 = vrot.slane %v4414, %v4427
    %v4429 = vcombine.low %v4373, %v4389
    %v4430 = vcombine.high %v4373, %v4389
    %v4432 = vunpack.c.l.s4 1934713408
    %v4433 = vunpack.c.0.s8 %v4432
    %v4434 = vlaneseq
    %v4435 = vshrl.u32 %v4434, 7
    %v4436 = vsub.s32 %v4433, %v4435
    %v4437 = vrot.slane %v4429, %v4436
    %v4439 = vunpack.c.l.s4 1934713408
    %v4440 = vunpack.c.0.s8 %v4439
    %v4441 = vlaneseq
    %v4442 = vshrl.u32 %v4441, 7
    %v4443 = vsub.s32 %v4440, %v4442
    %v4444 = vrot.slane %v4430, %v4443
    %v4445 = vcombine.low %v4380, %v4396
    %v4447 = vunpack.c.l.s4 1934713408
    %v4448 = vunpack.c.0.s8 %v4447
    %v4449 = vlaneseq
    %v4450 = vshrl.u32 %v4449, 7
    %v4451 = vsub.s32 %v4448, %v4450
    %v4452 = vrot.slane %v4445, %v4451
    %v4453 = vcombine.low %v4405, %v4421
    %v4454 = vcombine.high %v4405, %v4421
    %v4456 = vunpack.c.l.s4 1934713408
    %v4457 = vunpack.c.0.s8 %v4456
    %v4458 = vlaneseq
    %v4459 = vshrl.u32 %v4458, 7
    %v4460 = vsub.s32 %v4457, %v4459
    %v4461 = vrot.slane %v4453, %v4460
    %v4463 = vunpack.c.l.s4 1934713408
    %v4464 = vunpack.c.0.s8 %v4463
    %v4465 = vlaneseq
    %v4466 = vshrl.u32 %v4465, 7
    %v4467 = vsub.s32 %v4464, %v4466
    %v4468 = vrot.slane %v4454, %v4467
    %v4469 = vcombine.low %v4412, %v4428
    %v4471 = vunpack.c.l.s4 1934713408
    %v4472 = vunpack.c.0.s8 %v4471
    %v4473 = vlaneseq
    %v4474 = vshrl.u32 %v4473, 7
    %v4475 = vsub.s32 %v4472, %v4474
    %v4476 = vrot.slane %v4469, %v4475
    %v4477 = vcombine.low %v4437, %v4461
    %v4478 = vcombine.high %v4437, %v4461
    %v4479 = vcombine.low %v4444, %v4468
    %v4480 = vcombine.high %v4444, %v4468
    %v4481 = vcombine.low %v4452, %v4476
    %v4482 = vcombine.high %v4452, %v4476
    %v4483 = vcombine.low %v2673, %v2675
    %v4484 = vcombine.high %v2673, %v2675
    %v4486 = vunpack.c.l.s4 1983009808
    %v4487 = vunpack.c.0.s8 %v4486
    %v4488 = vlaneseq
    %v4489 = vshrl.u32 %v4488, 7
    %v4490 = vsub.s32 %v4487, %v4489
    %v4491 = vrot.slane %v4483, %v4490
    %v4493 = vunpack.c.l.s4 1983009808
    %v4494 = vunpack.c.0.s8 %v4493
    %v4495 = vlaneseq
    %v4496 = vshrl.u32 %v4495, 7
    %v4497 = vsub.s32 %v4494, %v4496
    %v4498 = vrot.slane %v4484, %v4497
    %v4499 = vcombine.low %v2674, %v2676
    %v4500 = vcombine.high %v2674, %v2676
    %v4502 = vunpack.c.l.s4 1983009808
    %v4503 = vunpack.c.0.s8 %v4502
    %v4504 = vlaneseq
    %v4505 = vshrl.u32 %v4504, 7
    %v4506 = vsub.s32 %v4503, %v4505
    %v4507 = vrot.slane %v4499, %v4506
    %v4509 = vunpack.c.l.s4 1983009808
    %v4510 = vunpack.c.0.s8 %v4509
    %v4511 = vlaneseq
    %v4512 = vshrl.u32 %v4511, 7
    %v4513 = vsub.s32 %v4510, %v4512
    %v4514 = vrot.slane %v4500, %v4513
    %v4515 = vcombine.low %v2677, %v2679
    %v4516 = vcombine.high %v2677, %v2679
    %v4518 = vunpack.c.l.s4 1983009808
    %v4519 = vunpack.c.0.s8 %v4518
    %v4520 = vlaneseq
    %v4521 = vshrl.u32 %v4520, 7
    %v4522 = vsub.s32 %v4519, %v4521
    %v4523 = vrot.slane %v4515, %v4522
    %v4525 = vunpack.c.l.s4 1983009808
    %v4526 = vunpack.c.0.s8 %v4525
    %v4527 = vlaneseq
    %v4528 = vshrl.u32 %v4527, 7
    %v4529 = vsub.s32 %v4526, %v4528
    %v4530 = vrot.slane %v4516, %v4529
    %v4531 = vcombine.low %v2678, %v2680
    %v4532 = vcombine.high %v2678, %v2680
    %v4534 = vunpack.c.l.s4 1983009808
    %v4535 = vunpack.c.0.s8 %v4534
    %v4536 = vlaneseq
    %v4537 = vshrl.u32 %v4536, 7
    %v4538 = vsub.s32 %v4535, %v4537
    %v4539 = vrot.slane %v4531, %v4538
    %v4541 = vunpack.c.l.s4 1983009808
    %v4542 = vunpack.c.0.s8 %v4541
    %v4543 = vlaneseq
    %v4544 = vshrl.u32 %v4543, 7
    %v4545 = vsub.s32 %v4542, %v4544
    %v4546 = vrot.slane %v4532, %v4545
    %v4547 = vcombine.low %v4491, %v4507
    %v4548 = vcombine.high %v4491, %v4507
    %v4550 = vunpack.c.l.s4 1934713408
    %v4551 = vunpack.c.0.s8 %v4550
    %v4552 = vlaneseq
    %v4553 = vshrl.u32 %v4552, 7
    %v4554 = vsub.s32 %v4551, %v4553
    %v4555 = vrot.slane %v4547, %v4554
    %v4557 = vunpack.c.l.s4 1934713408
    %v4558 = vunpack.c.0.s8 %v4557
    %v4559 = vlaneseq
    %v4560 = vshrl.u32 %v4559, 7
    %v4561 = vsub.s32 %v4558, %v4560
    %v4562 = vrot.slane %v4548, %v4561
    %v4563 = vcombine.low %v4498, %v4514
    %v4565 = vunpack.c.l.s4 1934713408
    %v4566 = vunpack.c.0.s8 %v4565
    %v4567 = vlaneseq
    %v4568 = vshrl.u32 %v4567, 7
    %v4569 = vsub.s32 %v4566, %v4568
    %v4570 = vrot.slane %v4563, %v4569
    %v4571 = vcombine.low %v4523, %v4539
    %v4572 = vcombine.high %v4523, %v4539
    %v4574 = vunpack.c.l.s4 1934713408
    %v4575 = vunpack.c.0.s8 %v4574
    %v4576 = vlaneseq
    %v4577 = vshrl.u32 %v4576, 7
    %v4578 = vsub.s32 %v4575, %v4577
    %v4579 = vrot.slane %v4571, %v4578
    %v4581 = vunpack.c.l.s4 1934713408
    %v4582 = vunpack.c.0.s8 %v4581
    %v4583 = vlaneseq
    %v4584 = vshrl.u32 %v4583, 7
    %v4585 = vsub.s32 %v4582, %v4584
    %v4586 = vrot.slane %v4572, %v4585
    %v4587 = vcombine.low %v4530, %v4546
    %v4589 = vunpack.c.l.s4 1934713408
    %v4590 = vunpack.c.0.s8 %v4589
    %v4591 = vlaneseq
    %v4592 = vshrl.u32 %v4591, 7
    %v4593 = vsub.s32 %v4590, %v4592
    %v4594 = vrot.slane %v4587, %v4593
    %v4595 = vcombine.low %v4555, %v4579
    %v4596 = vcombine.high %v4555, %v4579
    %v4597 = vcombine.low %v4562, %v4586
    %v4598 = vcombine.high %v4562, %v4586
    %v4599 = vcombine.low %v4570, %v4594
    %v4600 = vcombine.high %v4570, %v4594
    %v4601 = vcombine.low %v2807, %v2809
    %v4602 = vcombine.high %v2807, %v2809
    %v4604 = vunpack.c.l.s4 1983009808
    %v4605 = vunpack.c.0.s8 %v4604
    %v4606 = vlaneseq
    %v4607 = vshrl.u32 %v4606, 7
    %v4608 = vsub.s32 %v4605, %v4607
    %v4609 = vrot.slane %v4601, %v4608
    %v4611 = vunpack.c.l.s4 1983009808
    %v4612 = vunpack.c.0.s8 %v4611
    %v4613 = vlaneseq
    %v4614 = vshrl.u32 %v4613, 7
    %v4615 = vsub.s32 %v4612, %v4614
    %v4616 = vrot.slane %v4602, %v4615
    %v4617 = vcombine.low %v2808, %v2810
    %v4618 = vcombine.high %v2808, %v2810
    %v4620 = vunpack.c.l.s4 1983009808
    %v4621 = vunpack.c.0.s8 %v4620
    %v4622 = vlaneseq
    %v4623 = vshrl.u32 %v4622, 7
    %v4624 = vsub.s32 %v4621, %v4623
    %v4625 = vrot.slane %v4617, %v4624
    %v4627 = vunpack.c.l.s4 1983009808
    %v4628 = vunpack.c.0.s8 %v4627
    %v4629 = vlaneseq
    %v4630 = vshrl.u32 %v4629, 7
    %v4631 = vsub.s32 %v4628, %v4630
    %v4632 = vrot.slane %v4618, %v4631
    %v4633 = vcombine.low %v2811, %v2813
    %v4634 = vcombine.high %v2811, %v2813
    %v4636 = vunpack.c.l.s4 1983009808
    %v4637 = vunpack.c.0.s8 %v4636
    %v4638 = vlaneseq
    %v4639 = vshrl.u32 %v4638, 7
    %v4640 = vsub.s32 %v4637, %v4639
    %v4641 = vrot.slane %v4633, %v4640
    %v4643 = vunpack.c.l.s4 1983009808
    %v4644 = vunpack.c.0.s8 %v4643
    %v4645 = vlaneseq
    %v4646 = vshrl.u32 %v4645, 7
    %v4647 = vsub.s32 %v4644, %v4646
    %v4648 = vrot.slane %v4634, %v4647
    %v4649 = vcombine.low %v2812, %v2814
    %v4650 = vcombine.high %v2812, %v2814
    %v4652 = vunpack.c.l.s4 1983009808
    %v4653 = vunpack.c.0.s8 %v4652
    %v4654 = vlaneseq
    %v4655 = vshrl.u32 %v4654, 7
    %v4656 = vsub.s32 %v4653, %v4655
    %v4657 = vrot.slane %v4649, %v4656
    %v4659 = vunpack.c.l.s4 1983009808
    %v4660 = vunpack.c.0.s8 %v4659
    %v4661 = vlaneseq
    %v4662 = vshrl.u32 %v4661, 7
    %v4663 = vsub.s32 %v4660, %v4662
    %v4664 = vrot.slane %v4650, %v4663
    %v4665 = vcombine.low %v4609, %v4625
    %v4666 = vcombine.high %v4609, %v4625
    %v4668 = vunpack.c.l.s4 1934713408
    %v4669 = vunpack.c.0.s8 %v4668
    %v4670 = vlaneseq
    %v4671 = vshrl.u32 %v4670, 7
    %v4672 = vsub.s32 %v4669, %v4671
    %v4673 = vrot.slane %v4665, %v4672
    %v4675 = vunpack.c.l.s4 1934713408
    %v4676 = vunpack.c.0.s8 %v4675
    %v4677 = vlaneseq
    %v4678 = vshrl.u32 %v4677, 7
    %v4679 = vsub.s32 %v4676, %v4678
    %v4680 = vrot.slane %v4666, %v4679
    %v4681 = vcombine.low %v4616, %v4632
    %v4683 = vunpack.c.l.s4 1934713408
    %v4684 = vunpack.c.0.s8 %v4683
    %v4685 = vlaneseq
    %v4686 = vshrl.u32 %v4685, 7
    %v4687 = vsub.s32 %v4684, %v4686
    %v4688 = vrot.slane %v4681, %v4687
    %v4689 = vcombine.low %v4641, %v4657
    %v4690 = vcombine.high %v4641, %v4657
    %v4692 = vunpack.c.l.s4 1934713408
    %v4693 = vunpack.c.0.s8 %v4692
    %v4694 = vlaneseq
    %v4695 = vshrl.u32 %v4694, 7
    %v4696 = vsub.s32 %v4693, %v4695
    %v4697 = vrot.slane %v4689, %v4696
    %v4699 = vunpack.c.l.s4 1934713408
    %v4700 = vunpack.c.0.s8 %v4699
    %v4701 = vlaneseq
    %v4702 = vshrl.u32 %v4701, 7
    %v4703 = vsub.s32 %v4700, %v4702
    %v4704 = vrot.slane %v4690, %v4703
    %v4705 = vcombine.low %v4648, %v4664
    %v4707 = vunpack.c.l.s4 1934713408
    %v4708 = vunpack.c.0.s8 %v4707
    %v4709 = vlaneseq
    %v4710 = vshrl.u32 %v4709, 7
    %v4711 = vsub.s32 %v4708, %v4710
    %v4712 = vrot.slane %v4705, %v4711
    %v4713 = vcombine.low %v4673, %v4697
    %v4714 = vcombine.high %v4673, %v4697
    %v4715 = vcombine.low %v4680, %v4704
    %v4716 = vcombine.high %v4680, %v4704
    %v4717 = vcombine.low %v4688, %v4712
    %v4718 = vcombine.high %v4688, %v4712
    %v4719 = vcombine.low %v2941, %v2943
    %v4720 = vcombine.high %v2941, %v2943
    %v4722 = vunpack.c.l.s4 1983009808
    %v4723 = vunpack.c.0.s8 %v4722
    %v4724 = vlaneseq
    %v4725 = vshrl.u32 %v4724, 7
    %v4726 = vsub.s32 %v4723, %v4725
    %v4727 = vrot.slane %v4719, %v4726
    %v4729 = vunpack.c.l.s4 1983009808
    %v4730 = vunpack.c.0.s8 %v4729
    %v4731 = vlaneseq
    %v4732 = vshrl.u32 %v4731, 7
    %v4733 = vsub.s32 %v4730, %v4732
    %v4734 = vrot.slane %v4720, %v4733
    %v4735 = vcombine.low %v2942, %v2944
    %v4736 = vcombine.high %v2942, %v2944
    %v4738 = vunpack.c.l.s4 1983009808
    %v4739 = vunpack.c.0.s8 %v4738
    %v4740 = vlaneseq
    %v4741 = vshrl.u32 %v4740, 7
    %v4742 = vsub.s32 %v4739, %v4741
    %v4743 = vrot.slane %v4735, %v4742
    %v4745 = vunpack.c.l.s4 1983009808
    %v4746 = vunpack.c.0.s8 %v4745
    %v4747 = vlaneseq
    %v4748 = vshrl.u32 %v4747, 7
    %v4749 = vsub.s32 %v4746, %v4748
    %v4750 = vrot.slane %v4736, %v4749
    %v4751 = vcombine.low %v2945, %v2947
    %v4752 = vcombine.high %v2945, %v2947
    %v4754 = vunpack.c.l.s4 1983009808
    %v4755 = vunpack.c.0.s8 %v4754
    %v4756 = vlaneseq
    %v4757 = vshrl.u32 %v4756, 7
    %v4758 = vsub.s32 %v4755, %v4757
    %v4759 = vrot.slane %v4751, %v4758
    %v4761 = vunpack.c.l.s4 1983009808
    %v4762 = vunpack.c.0.s8 %v4761
    %v4763 = vlaneseq
    %v4764 = vshrl.u32 %v4763, 7
    %v4765 = vsub.s32 %v4762, %v4764
    %v4766 = vrot.slane %v4752, %v4765
    %v4767 = vcombine.low %v2946, %v2948
    %v4768 = vcombine.high %v2946, %v2948
    %v4770 = vunpack.c.l.s4 1983009808
    %v4771 = vunpack.c.0.s8 %v4770
    %v4772 = vlaneseq
    %v4773 = vshrl.u32 %v4772, 7
    %v4774 = vsub.s32 %v4771, %v4773
    %v4775 = vrot.slane %v4767, %v4774
    %v4777 = vunpack.c.l.s4 1983009808
    %v4778 = vunpack.c.0.s8 %v4777
    %v4779 = vlaneseq
    %v4780 = vshrl.u32 %v4779, 7
    %v4781 = vsub.s32 %v4778, %v4780
    %v4782 = vrot.slane %v4768, %v4781
    %v4783 = vcombine.low %v4727, %v4743
    %v4784 = vcombine.high %v4727, %v4743
    %v4786 = vunpack.c.l.s4 1934713408
    %v4787 = vunpack.c.0.s8 %v4786
    %v4788 = vlaneseq
    %v4789 = vshrl.u32 %v4788, 7
    %v4790 = vsub.s32 %v4787, %v4789
    %v4791 = vrot.slane %v4783, %v4790
    %v4793 = vunpack.c.l.s4 1934713408
    %v4794 = vunpack.c.0.s8 %v4793
    %v4795 = vlaneseq
    %v4796 = vshrl.u32 %v4795, 7
    %v4797 = vsub.s32 %v4794, %v4796
    %v4798 = vrot.slane %v4784, %v4797
    %v4799 = vcombine.low %v4734, %v4750
    %v4801 = vunpack.c.l.s4 1934713408
    %v4802 = vunpack.c.0.s8 %v4801
    %v4803 = vlaneseq
    %v4804 = vshrl.u32 %v4803, 7
    %v4805 = vsub.s32 %v4802, %v4804
    %v4806 = vrot.slane %v4799, %v4805
    %v4807 = vcombine.low %v4759, %v4775
    %v4808 = vcombine.high %v4759, %v4775
    %v4810 = vunpack.c.l.s4 1934713408
    %v4811 = vunpack.c.0.s8 %v4810
    %v4812 = vlaneseq
    %v4813 = vshrl.u32 %v4812, 7
    %v4814 = vsub.s32 %v4811, %v4813
    %v4815 = vrot.slane %v4807, %v4814
    %v4817 = vunpack.c.l.s4 1934713408
    %v4818 = vunpack.c.0.s8 %v4817
    %v4819 = vlaneseq
    %v4820 = vshrl.u32 %v4819, 7
    %v4821 = vsub.s32 %v4818, %v4820
    %v4822 = vrot.slane %v4808, %v4821
    %v4823 = vcombine.low %v4766, %v4782
    %v4825 = vunpack.c.l.s4 1934713408
    %v4826 = vunpack.c.0.s8 %v4825
    %v4827 = vlaneseq
    %v4828 = vshrl.u32 %v4827, 7
    %v4829 = vsub.s32 %v4826, %v4828
    %v4830 = vrot.slane %v4823, %v4829
    %v4831 = vcombine.low %v4791, %v4815
    %v4832 = vcombine.high %v4791, %v4815
    %v4833 = vcombine.low %v4798, %v4822
    %v4834 = vcombine.high %v4798, %v4822
    %v4835 = vcombine.low %v4806, %v4830
    %v4836 = vcombine.high %v4806, %v4830
    %v4839 = vpack.i.b16 %v3179, %v3061
    %v4840 = vshrl.u32 %v3061, 16
    %v4841 = vshrl.u32 %v3179, 16
    %v4842 = vpack.i.b16 %v4841, %v4840
    %v4845 = vpack.i.b16 %v3180, %v3062
    %v4846 = vshrl.u32 %v3062, 16
    %v4847 = vshrl.u32 %v3180, 16
    %v4848 = vpack.i.b16 %v4847, %v4846
    %v4851 = vpack.i.b16 %v3181, %v3063
    %v4852 = vshrl.u32 %v3063, 16
    %v4853 = vshrl.u32 %v3181, 16
    %v4854 = vpack.i.b16 %v4853, %v4852
    %v4857 = vpack.i.b16 %v3182, %v3064
    %v4858 = vshrl.u32 %v3064, 16
    %v4859 = vshrl.u32 %v3182, 16
    %v4860 = vpack.i.b16 %v4859, %v4858
    %v4863 = vpack.i.b16 %v3183, %v3065
    %v4865 = vshrl.u32 %v3065, 16
    %v4866 = vshrl.u32 %v3183, 16
    %v4867 = vpack.i.b16 %v4866, %v4865
    %v4871 = vpack.i.b16 %v3184, %v3066
    %v4873 = vshrl.u32 %v3066, 16
    %v4874 = vshrl.u32 %v3184, 16
    %v4875 = vpack.i.b16 %v4874, %v4873
    %v4879 = vpack.i.b16 %v3415, %v3297
    %v4880 = vshrl.u32 %v3297, 16
    %v4881 = vshrl.u32 %v3415, 16
    %v4882 = vpack.i.b16 %v4881, %v4880
    %v4885 = vpack.i.b16 %v3416, %v3298
    %v4886 = vshrl.u32 %v3298, 16
    %v4887 = vshrl.u32 %v3416, 16
    %v4888 = vpack.i.b16 %v4887, %v4886
    %v4891 = vpack.i.b16 %v3417, %v3299
    %v4892 = vshrl.u32 %v3299, 16
    %v4893 = vshrl.u32 %v3417, 16
    %v4894 = vpack.i.b16 %v4893, %v4892
    %v4897 = vpack.i.b16 %v3418, %v3300
    %v4898 = vshrl.u32 %v3300, 16
    %v4899 = vshrl.u32 %v3418, 16
    %v4900 = vpack.i.b16 %v4899, %v4898
    %v4903 = vpack.i.b16 %v3419, %v3301
    %v4905 = vshrl.u32 %v3301, 16
    %v4906 = vshrl.u32 %v3419, 16
    %v4907 = vpack.i.b16 %v4906, %v4905
    %v4911 = vpack.i.b16 %v3420, %v3302
    %v4913 = vshrl.u32 %v3302, 16
    %v4914 = vshrl.u32 %v3420, 16
    %v4915 = vpack.i.b16 %v4914, %v4913
    %v4919 = vpack.i.b16 %v3651, %v3533
    %v4920 = vshrl.u32 %v3533, 16
    %v4921 = vshrl.u32 %v3651, 16
    %v4922 = vpack.i.b16 %v4921, %v4920
    %v4925 = vpack.i.b16 %v3652, %v3534
    %v4926 = vshrl.u32 %v3534, 16
    %v4927 = vshrl.u32 %v3652, 16
    %v4928 = vpack.i.b16 %v4927, %v4926
    %v4931 = vpack.i.b16 %v3653, %v3535
    %v4932 = vshrl.u32 %v3535, 16
    %v4933 = vshrl.u32 %v3653, 16
    %v4934 = vpack.i.b16 %v4933, %v4932
    %v4937 = vpack.i.b16 %v3654, %v3536
    %v4938 = vshrl.u32 %v3536, 16
    %v4939 = vshrl.u32 %v3654, 16
    %v4940 = vpack.i.b16 %v4939, %v4938
    %v4943 = vpack.i.b16 %v3655, %v3537
    %v4945 = vshrl.u32 %v3537, 16
    %v4946 = vshrl.u32 %v3655, 16
    %v4947 = vpack.i.b16 %v4946, %v4945
    %v4951 = vpack.i.b16 %v3656, %v3538
    %v4953 = vshrl.u32 %v3538, 16
    %v4954 = vshrl.u32 %v3656, 16
    %v4955 = vpack.i.b16 %v4954, %v4953
    %v4959 = vpack.i.b16 %v3887, %v3769
    %v4960 = vshrl.u32 %v3769, 16
    %v4961 = vshrl.u32 %v3887, 16
    %v4962 = vpack.i.b16 %v4961, %v4960
    %v4965 = vpack.i.b16 %v3888, %v3770
    %v4966 = vshrl.u32 %v3770, 16
    %v4967 = vshrl.u32 %v3888, 16
    %v4968 = vpack.i.b16 %v4967, %v4966
    %v4971 = vpack.i.b16 %v3889, %v3771
    %v4972 = vshrl.u32 %v3771, 16
    %v4973 = vshrl.u32 %v3889, 16
    %v4974 = vpack.i.b16 %v4973, %v4972
    %v4977 = vpack.i.b16 %v3890, %v3772
    %v4978 = vshrl.u32 %v3772, 16
    %v4979 = vshrl.u32 %v3890, 16
    %v4980 = vpack.i.b16 %v4979, %v4978
    %v4983 = vpack.i.b16 %v3891, %v3773
    %v4985 = vshrl.u32 %v3773, 16
    %v4986 = vshrl.u32 %v3891, 16
    %v4987 = vpack.i.b16 %v4986, %v4985
    %v4991 = vpack.i.b16 %v3892, %v3774
    %v4993 = vshrl.u32 %v3774, 16
    %v4994 = vshrl.u32 %v3892, 16
    %v4995 = vpack.i.b16 %v4994, %v4993
    %v4999 = vpack.i.b16 %v4123, %v4005
    %v5000 = vshrl.u32 %v4005, 16
    %v5001 = vshrl.u32 %v4123, 16
    %v5002 = vpack.i.b16 %v5001, %v5000
    %v5005 = vpack.i.b16 %v4124, %v4006
    %v5006 = vshrl.u32 %v4006, 16
    %v5007 = vshrl.u32 %v4124, 16
    %v5008 = vpack.i.b16 %v5007, %v5006
    %v5011 = vpack.i.b16 %v4125, %v4007
    %v5012 = vshrl.u32 %v4007, 16
    %v5013 = vshrl.u32 %v4125, 16
    %v5014 = vpack.i.b16 %v5013, %v5012
    %v5017 = vpack.i.b16 %v4126, %v4008
    %v5018 = vshrl.u32 %v4008, 16
    %v5019 = vshrl.u32 %v4126, 16
    %v5020 = vpack.i.b16 %v5019, %v5018
    %v5023 = vpack.i.b16 %v4127, %v4009
    %v5025 = vshrl.u32 %v4009, 16
    %v5026 = vshrl.u32 %v4127, 16
    %v5027 = vpack.i.b16 %v5026, %v5025
    %v5031 = vpack.i.b16 %v4128, %v4010
    %v5033 = vshrl.u32 %v4010, 16
    %v5034 = vshrl.u32 %v4128, 16
    %v5035 = vpack.i.b16 %v5034, %v5033
    %v5039 = vpack.i.b16 %v4359, %v4241
    %v5040 = vshrl.u32 %v4241, 16
    %v5041 = vshrl.u32 %v4359, 16
    %v5042 = vpack.i.b16 %v5041, %v5040
    %v5045 = vpack.i.b16 %v4360, %v4242
    %v5046 = vshrl.u32 %v4242, 16
    %v5047 = vshrl.u32 %v4360, 16
    %v5048 = vpack.i.b16 %v5047, %v5046
    %v5051 = vpack.i.b16 %v4361, %v4243
    %v5052 = vshrl.u32 %v4243, 16
    %v5053 = vshrl.u32 %v4361, 16
    %v5054 = vpack.i.b16 %v5053, %v5052
    %v5057 = vpack.i.b16 %v4362, %v4244
    %v5058 = vshrl.u32 %v4244, 16
    %v5059 = vshrl.u32 %v4362, 16
    %v5060 = vpack.i.b16 %v5059, %v5058
    %v5063 = vpack.i.b16 %v4363, %v4245
    %v5065 = vshrl.u32 %v4245, 16
    %v5066 = vshrl.u32 %v4363, 16
    %v5067 = vpack.i.b16 %v5066, %v5065
    %v5071 = vpack.i.b16 %v4364, %v4246
    %v5073 = vshrl.u32 %v4246, 16
    %v5074 = vshrl.u32 %v4364, 16
    %v5075 = vpack.i.b16 %v5074, %v5073
    %v5079 = vpack.i.b16 %v4595, %v4477
    %v5080 = vshrl.u32 %v4477, 16
    %v5081 = vshrl.u32 %v4595, 16
    %v5082 = vpack.i.b16 %v5081, %v5080
    %v5085 = vpack.i.b16 %v4596, %v4478
    %v5086 = vshrl.u32 %v4478, 16
    %v5087 = vshrl.u32 %v4596, 16
    %v5088 = vpack.i.b16 %v5087, %v5086
    %v5091 = vpack.i.b16 %v4597, %v4479
    %v5092 = vshrl.u32 %v4479, 16
    %v5093 = vshrl.u32 %v4597, 16
    %v5094 = vpack.i.b16 %v5093, %v5092
    %v5097 = vpack.i.b16 %v4598, %v4480
    %v5098 = vshrl.u32 %v4480, 16
    %v5099 = vshrl.u32 %v4598, 16
    %v5100 = vpack.i.b16 %v5099, %v5098
    %v5103 = vpack.i.b16 %v4599, %v4481
    %v5105 = vshrl.u32 %v4481, 16
    %v5106 = vshrl.u32 %v4599, 16
    %v5107 = vpack.i.b16 %v5106, %v5105
    %v5111 = vpack.i.b16 %v4600, %v4482
    %v5113 = vshrl.u32 %v4482, 16
    %v5114 = vshrl.u32 %v4600, 16
    %v5115 = vpack.i.b16 %v5114, %v5113
    %v5119 = vpack.i.b16 %v4831, %v4713
    %v5120 = vshrl.u32 %v4713, 16
    %v5121 = vshrl.u32 %v4831, 16
    %v5122 = vpack.i.b16 %v5121, %v5120
    %v5125 = vpack.i.b16 %v4832, %v4714
    %v5126 = vshrl.u32 %v4714, 16
    %v5127 = vshrl.u32 %v4832, 16
    %v5128 = vpack.i.b16 %v5127, %v5126
    %v5131 = vpack.i.b16 %v4833, %v4715
    %v5132 = vshrl.u32 %v4715, 16
    %v5133 = vshrl.u32 %v4833, 16
    %v5134 = vpack.i.b16 %v5133, %v5132
    %v5137 = vpack.i.b16 %v4834, %v4716
    %v5138 = vshrl.u32 %v4716, 16
    %v5139 = vshrl.u32 %v4834, 16
    %v5140 = vpack.i.b16 %v5139, %v5138
    %v5143 = vpack.i.b16 %v4835, %v4717
    %v5145 = vshrl.u32 %v4717, 16
    %v5146 = vshrl.u32 %v4835, 16
    %v5147 = vpack.i.b16 %v5146, %v5145
    %v5151 = vpack.i.b16 %v4836, %v4718
    %v5153 = vshrl.u32 %v4718, 16
    %v5154 = vshrl.u32 %v4836, 16
    %v5155 = vpack.i.b16 %v5154, %v5153
    %vm5157 = vcmask 64512
    %v5159 = vsel %vm5157, %v4839, 0
    %v5162 = vsel %vm5157, %v4879, 0
    %v5165 = vsel %vm5157, %v4919, 0
    %v5168 = vsel %vm5157, %v4959, 0
    %v5171 = vsel %vm5157, %v4851, 0
    %v5174 = vsel %vm5157, %v4891, 0
    %v5177 = vsel %vm5157, %v4931, 0
    %v5180 = vsel %vm5157, %v4971, 0
    %5182 = vmatprep.subr.bf16.mxu0 0
    %5183 = vmatpush1.bf16.xpose.msra.mxu0 %v5171
    %5184 = vmatprep.subr.bf16.mxu0 0
    %5185 = vmatpush1.bf16.xpose.msra.mxu0 %v5174
    %5186 = vmatprep.subr.bf16.mxu0 0
    %5187 = vmatpush1.bf16.xpose.msra.mxu0 %v5177
    %5188 = vmatprep.subr.bf16.mxu0 0
    %5189 = vmatpush1.bf16.xpose.msra.mxu0 %v5180
    %5190 = vmatprep.subr.bf16.mxu0 0
    %5191 = vmatpush1.bf16.xpose.msra.mxu0 0
    %5192 = vmatprep.subr.bf16.mxu0 0
    %5193 = vmatpush1.bf16.xpose.msra.mxu0 0
    %5194 = vmatprep.subr.bf16.mxu0 0
    %5195 = vmatpush1.bf16.xpose.msra.mxu0 0
    %5196 = vmatprep.subr.bf16.mxu0 0
    %5197 = vmatpush1.bf16.xpose.msra.mxu0 0
    %5198 = vmatprep.subr.bf16.mxu0 0
    %5199 = vmatpush1.bf16.xpose.msra.mxu0 0
    %5200 = vmatprep.subr.bf16.mxu0 0
    %5201 = vmatpush1.bf16.xpose.msra.mxu0 0
    %5202 = vmatprep.subr.bf16.mxu0 0
    %5203 = vmatpush1.bf16.xpose.msra.mxu0 0
    %5204 = vmatprep.subr.bf16.mxu0 0
    %5205 = vmatpush1.bf16.xpose.msra.mxu0 0
    %5206 = vmatprep.subr.bf16.mxu0 0
    %5207 = vmatpush1.bf16.xpose.msra.mxu0 0
    %5208 = vmatprep.subr.bf16.mxu0 0
    %5209 = vmatpush1.bf16.xpose.msra.mxu0 0
    %5210 = vmatprep.subr.bf16.mxu0 0
    %5211 = vmatpush1.bf16.xpose.msra.mxu0 0
    %5212 = vmatprep.subr.bf16.mxu0 0
    %5213 = vmatpush1.bf16.xpose.msra.mxu0 0
    %5214 = vmatprep.mubr.bf16.mxu0 0
    %5215 = vmatmul.mubr.bf16.gmra.mrb[0].mxu0 %v5159
    %v5216 = vpop.f32.mrb[0].mxu0
    %v5217 = vadd.f32 0.0, %v5216
    %v5218 = vpop.f32.mrb[0].mxu0
    %v5219 = vpop.f32.mrb[0].mxu0
    %v5220 = vadd.f32 0.0, %v5219
    %v5221 = vpop.f32.mrb[0].mxu0
    %5222 = vmatprep.mubr.bf16.mxu0 0
    %5223 = vmatmul.mubr.bf16.gmra.mrb[0].mxu0 %v5162
    %v5224 = vpop.f32.mrb[0].mxu0
    %v5225 = vadd.f32 0.0, %v5224
    %v5226 = vpop.f32.mrb[0].mxu0
    %v5227 = vpop.f32.mrb[0].mxu0
    %v5228 = vadd.f32 0.0, %v5227
    %v5229 = vpop.f32.mrb[0].mxu0
    %5230 = vmatprep.mubr.bf16.mxu0 0
    %5231 = vmatmul.mubr.bf16.gmra.mrb[0].mxu0 %v5165
    %v5232 = vpop.f32.mrb[0].mxu0
    %v5233 = vadd.f32 0.0, %v5232
    %v5234 = vpop.f32.mrb[0].mxu0
    %v5235 = vpop.f32.mrb[0].mxu0
    %v5236 = vadd.f32 0.0, %v5235
    %v5237 = vpop.f32.mrb[0].mxu0
    %5238 = vmatprep.mubr.bf16.mxu0 0
    %5239 = vmatmul.mubr.bf16.gmra.mrb[0].mxu0 %v5168
    %v5240 = vpop.f32.mrb[0].mxu0
    %v5241 = vadd.f32 0.0, %v5240
    %v5242 = vpop.f32.mrb[0].mxu0
    %v5243 = vpop.f32.mrb[0].mxu0
    %v5244 = vadd.f32 0.0, %v5243
    %v5245 = vpop.f32.mrb[0].mxu0
    %5246 = vdwg.mxu0
    %v5248 = vsel %vm5157, %v4842, 0
    %v5251 = vsel %vm5157, %v4882, 0
    %v5254 = vsel %vm5157, %v4922, 0
    %v5257 = vsel %vm5157, %v4962, 0
    %v5260 = vsel %vm5157, %v4854, 0
    %v5263 = vsel %vm5157, %v4894, 0
    %v5266 = vsel %vm5157, %v4934, 0
    %v5269 = vsel %vm5157, %v4974, 0
    %5271 = vmatprep.subr.bf16.mxu0 0
    %5272 = vmatpush1.bf16.xpose.msra.mxu0 %v5260
    %5273 = vmatprep.subr.bf16.mxu0 0
    %5274 = vmatpush1.bf16.xpose.msra.mxu0 %v5263
    %5275 = vmatprep.subr.bf16.mxu0 0
    %5276 = vmatpush1.bf16.xpose.msra.mxu0 %v5266
    %5277 = vmatprep.subr.bf16.mxu0 0
    %5278 = vmatpush1.bf16.xpose.msra.mxu0 %v5269
    %5279 = vmatprep.subr.bf16.mxu0 0
    %5280 = vmatpush1.bf16.xpose.msra.mxu0 0
    %5281 = vmatprep.subr.bf16.mxu0 0
    %5282 = vmatpush1.bf16.xpose.msra.mxu0 0
    %5283 = vmatprep.subr.bf16.mxu0 0
    %5284 = vmatpush1.bf16.xpose.msra.mxu0 0
    %5285 = vmatprep.subr.bf16.mxu0 0
    %5286 = vmatpush1.bf16.xpose.msra.mxu0 0
    %5287 = vmatprep.subr.bf16.mxu0 0
    %5288 = vmatpush1.bf16.xpose.msra.mxu0 0
    %5289 = vmatprep.subr.bf16.mxu0 0
    %5290 = vmatpush1.bf16.xpose.msra.mxu0 0
    %5291 = vmatprep.subr.bf16.mxu0 0
    %5292 = vmatpush1.bf16.xpose.msra.mxu0 0
    %5293 = vmatprep.subr.bf16.mxu0 0
    %5294 = vmatpush1.bf16.xpose.msra.mxu0 0
    %5295 = vmatprep.subr.bf16.mxu0 0
    %5296 = vmatpush1.bf16.xpose.msra.mxu0 0
    %5297 = vmatprep.subr.bf16.mxu0 0
    %5298 = vmatpush1.bf16.xpose.msra.mxu0 0
    %5299 = vmatprep.subr.bf16.mxu0 0
    %5300 = vmatpush1.bf16.xpose.msra.mxu0 0
    %5301 = vmatprep.subr.bf16.mxu0 0
    %5302 = vmatpush1.bf16.xpose.msra.mxu0 0
    %5303 = vmatprep.mubr.bf16.mxu0 0
    %5304 = vmatmul.mubr.bf16.gmra.mrb[0].mxu0 %v5248
    %v5305 = vpop.f32.mrb[0].mxu0
    %v5306 = vadd.f32 0.0, %v5305
    %v5307 = vpop.f32.mrb[0].mxu0
    %v5308 = vpop.f32.mrb[0].mxu0
    %v5309 = vadd.f32 0.0, %v5308
    %v5310 = vpop.f32.mrb[0].mxu0
    %5311 = vmatprep.mubr.bf16.mxu0 0
    %5312 = vmatmul.mubr.bf16.gmra.mrb[0].mxu0 %v5251
    %v5313 = vpop.f32.mrb[0].mxu0
    %v5314 = vadd.f32 0.0, %v5313
    %v5315 = vpop.f32.mrb[0].mxu0
    %v5316 = vpop.f32.mrb[0].mxu0
    %v5317 = vadd.f32 0.0, %v5316
    %v5318 = vpop.f32.mrb[0].mxu0
    %5319 = vmatprep.mubr.bf16.mxu0 0
    %5320 = vmatmul.mubr.bf16.gmra.mrb[0].mxu0 %v5254
    %v5321 = vpop.f32.mrb[0].mxu0
    %v5322 = vadd.f32 0.0, %v5321
    %v5323 = vpop.f32.mrb[0].mxu0
    %v5324 = vpop.f32.mrb[0].mxu0
    %v5325 = vadd.f32 0.0, %v5324
    %v5326 = vpop.f32.mrb[0].mxu0
    %5327 = vmatprep.mubr.bf16.mxu0 0
    %5328 = vmatmul.mubr.bf16.gmra.mrb[0].mxu0 %v5257
    %v5329 = vpop.f32.mrb[0].mxu0
    %v5330 = vadd.f32 0.0, %v5329
    %v5331 = vpop.f32.mrb[0].mxu0
    %v5332 = vpop.f32.mrb[0].mxu0
    %v5333 = vadd.f32 0.0, %v5332
    %v5334 = vpop.f32.mrb[0].mxu0
    %5335 = vdwg.mxu0
    %v5337 = vsel %vm5157, %v4845, 0
    %v5340 = vsel %vm5157, %v4885, 0
    %v5343 = vsel %vm5157, %v4925, 0
    %v5346 = vsel %vm5157, %v4965, 0
    %v5349 = vsel %vm5157, %v4857, 0
    %v5352 = vsel %vm5157, %v4897, 0
    %v5355 = vsel %vm5157, %v4937, 0
    %v5358 = vsel %vm5157, %v4977, 0
    %5360 = vmatprep.subr.bf16.mxu0 0
    %5361 = vmatpush1.bf16.xpose.msra.mxu0 %v5349
    %5362 = vmatprep.subr.bf16.mxu0 0
    %5363 = vmatpush1.bf16.xpose.msra.mxu0 %v5352
    %5364 = vmatprep.subr.bf16.mxu0 0
    %5365 = vmatpush1.bf16.xpose.msra.mxu0 %v5355
    %5366 = vmatprep.subr.bf16.mxu0 0
    %5367 = vmatpush1.bf16.xpose.msra.mxu0 %v5358
    %5368 = vmatprep.subr.bf16.mxu0 0
    %5369 = vmatpush1.bf16.xpose.msra.mxu0 0
    %5370 = vmatprep.subr.bf16.mxu0 0
    %5371 = vmatpush1.bf16.xpose.msra.mxu0 0
    %5372 = vmatprep.subr.bf16.mxu0 0
    %5373 = vmatpush1.bf16.xpose.msra.mxu0 0
    %5374 = vmatprep.subr.bf16.mxu0 0
    %5375 = vmatpush1.bf16.xpose.msra.mxu0 0
    %5376 = vmatprep.subr.bf16.mxu0 0
    %5377 = vmatpush1.bf16.xpose.msra.mxu0 0
    %5378 = vmatprep.subr.bf16.mxu0 0
    %5379 = vmatpush1.bf16.xpose.msra.mxu0 0
    %5380 = vmatprep.subr.bf16.mxu0 0
    %5381 = vmatpush1.bf16.xpose.msra.mxu0 0
    %5382 = vmatprep.subr.bf16.mxu0 0
    %5383 = vmatpush1.bf16.xpose.msra.mxu0 0
    %5384 = vmatprep.subr.bf16.mxu0 0
    %5385 = vmatpush1.bf16.xpose.msra.mxu0 0
    %5386 = vmatprep.subr.bf16.mxu0 0
    %5387 = vmatpush1.bf16.xpose.msra.mxu0 0
    %5388 = vmatprep.subr.bf16.mxu0 0
    %5389 = vmatpush1.bf16.xpose.msra.mxu0 0
    %5390 = vmatprep.subr.bf16.mxu0 0
    %5391 = vmatpush1.bf16.xpose.msra.mxu0 0
    %5392 = vmatprep.mubr.bf16.mxu0 0
    %5393 = vmatmul.mubr.bf16.gmra.mrb[0].mxu0 %v5337
    %v5394 = vpop.f32.mrb[0].mxu0
    %v5395 = vadd.f32 0.0, %v5394
    %v5396 = vpop.f32.mrb[0].mxu0
    %v5397 = vpop.f32.mrb[0].mxu0
    %v5398 = vadd.f32 0.0, %v5397
    %v5399 = vpop.f32.mrb[0].mxu0
    %5400 = vmatprep.mubr.bf16.mxu0 0
    %5401 = vmatmul.mubr.bf16.gmra.mrb[0].mxu0 %v5340
    %v5402 = vpop.f32.mrb[0].mxu0
    %v5403 = vadd.f32 0.0, %v5402
    %v5404 = vpop.f32.mrb[0].mxu0
    %v5405 = vpop.f32.mrb[0].mxu0
    %v5406 = vadd.f32 0.0, %v5405
    %v5407 = vpop.f32.mrb[0].mxu0
    %5408 = vmatprep.mubr.bf16.mxu0 0
    %5409 = vmatmul.mubr.bf16.gmra.mrb[0].mxu0 %v5343
    %v5410 = vpop.f32.mrb[0].mxu0
    %v5411 = vadd.f32 0.0, %v5410
    %v5412 = vpop.f32.mrb[0].mxu0
    %v5413 = vpop.f32.mrb[0].mxu0
    %v5414 = vadd.f32 0.0, %v5413
    %v5415 = vpop.f32.mrb[0].mxu0
    %5416 = vmatprep.mubr.bf16.mxu0 0
    %5417 = vmatmul.mubr.bf16.gmra.mrb[0].mxu0 %v5346
    %v5418 = vpop.f32.mrb[0].mxu0
    %v5419 = vadd.f32 0.0, %v5418
    %v5420 = vpop.f32.mrb[0].mxu0
    %v5421 = vpop.f32.mrb[0].mxu0
    %v5422 = vadd.f32 0.0, %v5421
    %v5423 = vpop.f32.mrb[0].mxu0
    %5424 = vdwg.mxu0
    %v5426 = vsel %vm5157, %v4848, 0
    %v5429 = vsel %vm5157, %v4888, 0
    %v5432 = vsel %vm5157, %v4928, 0
    %v5435 = vsel %vm5157, %v4968, 0
    %v5438 = vsel %vm5157, %v4860, 0
    %v5441 = vsel %vm5157, %v4900, 0
    %v5444 = vsel %vm5157, %v4940, 0
    %v5447 = vsel %vm5157, %v4980, 0
    %5449 = vmatprep.subr.bf16.mxu0 0
    %5450 = vmatpush1.bf16.xpose.msra.mxu0 %v5438
    %5451 = vmatprep.subr.bf16.mxu0 0
    %5452 = vmatpush1.bf16.xpose.msra.mxu0 %v5441
    %5453 = vmatprep.subr.bf16.mxu0 0
    %5454 = vmatpush1.bf16.xpose.msra.mxu0 %v5444
    %5455 = vmatprep.subr.bf16.mxu0 0
    %5456 = vmatpush1.bf16.xpose.msra.mxu0 %v5447
    %5457 = vmatprep.subr.bf16.mxu0 0
    %5458 = vmatpush1.bf16.xpose.msra.mxu0 0
    %5459 = vmatprep.subr.bf16.mxu0 0
    %5460 = vmatpush1.bf16.xpose.msra.mxu0 0
    %5461 = vmatprep.subr.bf16.mxu0 0
    %5462 = vmatpush1.bf16.xpose.msra.mxu0 0
    %5463 = vmatprep.subr.bf16.mxu0 0
    %5464 = vmatpush1.bf16.xpose.msra.mxu0 0
    %5465 = vmatprep.subr.bf16.mxu0 0
    %5466 = vmatpush1.bf16.xpose.msra.mxu0 0
    %5467 = vmatprep.subr.bf16.mxu0 0
    %5468 = vmatpush1.bf16.xpose.msra.mxu0 0
    %5469 = vmatprep.subr.bf16.mxu0 0
    %5470 = vmatpush1.bf16.xpose.msra.mxu0 0
    %5471 = vmatprep.subr.bf16.mxu0 0
    %5472 = vmatpush1.bf16.xpose.msra.mxu0 0
    %5473 = vmatprep.subr.bf16.mxu0 0
    %5474 = vmatpush1.bf16.xpose.msra.mxu0 0
    %5475 = vmatprep.subr.bf16.mxu0 0
    %5476 = vmatpush1.bf16.xpose.msra.mxu0 0
    %5477 = vmatprep.subr.bf16.mxu0 0
    %5478 = vmatpush1.bf16.xpose.msra.mxu0 0
    %5479 = vmatprep.subr.bf16.mxu0 0
    %5480 = vmatpush1.bf16.xpose.msra.mxu0 0
    %5481 = vmatprep.mubr.bf16.mxu0 0
    %5482 = vmatmul.mubr.bf16.gmra.mrb[0].mxu0 %v5426
    %v5483 = vpop.f32.mrb[0].mxu0
    %v5484 = vadd.f32 0.0, %v5483
    %v5485 = vpop.f32.mrb[0].mxu0
    %v5486 = vpop.f32.mrb[0].mxu0
    %v5487 = vadd.f32 0.0, %v5486
    %v5488 = vpop.f32.mrb[0].mxu0
    %5489 = vmatprep.mubr.bf16.mxu0 0
    %5490 = vmatmul.mubr.bf16.gmra.mrb[0].mxu0 %v5429
    %v5491 = vpop.f32.mrb[0].mxu0
    %v5492 = vadd.f32 0.0, %v5491
    %v5493 = vpop.f32.mrb[0].mxu0
    %v5494 = vpop.f32.mrb[0].mxu0
    %v5495 = vadd.f32 0.0, %v5494
    %v5496 = vpop.f32.mrb[0].mxu0
    %5497 = vmatprep.mubr.bf16.mxu0 0
    %5498 = vmatmul.mubr.bf16.gmra.mrb[0].mxu0 %v5432
    %v5499 = vpop.f32.mrb[0].mxu0
    %v5500 = vadd.f32 0.0, %v5499
    %v5501 = vpop.f32.mrb[0].mxu0
    %v5502 = vpop.f32.mrb[0].mxu0
    %v5503 = vadd.f32 0.0, %v5502
    %v5504 = vpop.f32.mrb[0].mxu0
    %5505 = vmatprep.mubr.bf16.mxu0 0
    %5506 = vmatmul.mubr.bf16.gmra.mrb[0].mxu0 %v5435
    %v5507 = vpop.f32.mrb[0].mxu0
    %v5508 = vadd.f32 0.0, %v5507
    %v5509 = vpop.f32.mrb[0].mxu0
    %v5510 = vpop.f32.mrb[0].mxu0
    %v5511 = vadd.f32 0.0, %v5510
    %v5512 = vpop.f32.mrb[0].mxu0
    %5513 = vdwg.mxu0
    %v5515 = vsel %vm5157, %v4999, 0
    %v5518 = vsel %vm5157, %v5039, 0
    %v5521 = vsel %vm5157, %v5079, 0
    %v5524 = vsel %vm5157, %v5119, 0
    %v5527 = vsel %vm5157, %v5011, 0
    %v5530 = vsel %vm5157, %v5051, 0
    %v5533 = vsel %vm5157, %v5091, 0
    %v5536 = vsel %vm5157, %v5131, 0
    %5538 = vmatprep.subr.bf16.mxu0 0
    %5539 = vmatpush1.bf16.xpose.msra.mxu0 %v5527
    %5540 = vmatprep.subr.bf16.mxu0 0
    %5541 = vmatpush1.bf16.xpose.msra.mxu0 %v5530
    %5542 = vmatprep.subr.bf16.mxu0 0
    %5543 = vmatpush1.bf16.xpose.msra.mxu0 %v5533
    %5544 = vmatprep.subr.bf16.mxu0 0
    %5545 = vmatpush1.bf16.xpose.msra.mxu0 %v5536
    %5546 = vmatprep.subr.bf16.mxu0 0
    %5547 = vmatpush1.bf16.xpose.msra.mxu0 0
    %5548 = vmatprep.subr.bf16.mxu0 0
    %5549 = vmatpush1.bf16.xpose.msra.mxu0 0
    %5550 = vmatprep.subr.bf16.mxu0 0
    %5551 = vmatpush1.bf16.xpose.msra.mxu0 0
    %5552 = vmatprep.subr.bf16.mxu0 0
    %5553 = vmatpush1.bf16.xpose.msra.mxu0 0
    %5554 = vmatprep.subr.bf16.mxu0 0
    %5555 = vmatpush1.bf16.xpose.msra.mxu0 0
    %5556 = vmatprep.subr.bf16.mxu0 0
    %5557 = vmatpush1.bf16.xpose.msra.mxu0 0
    %5558 = vmatprep.subr.bf16.mxu0 0
    %5559 = vmatpush1.bf16.xpose.msra.mxu0 0
    %5560 = vmatprep.subr.bf16.mxu0 0
    %5561 = vmatpush1.bf16.xpose.msra.mxu0 0
    %5562 = vmatprep.subr.bf16.mxu0 0
    %5563 = vmatpush1.bf16.xpose.msra.mxu0 0
    %5564 = vmatprep.subr.bf16.mxu0 0
    %5565 = vmatpush1.bf16.xpose.msra.mxu0 0
    %5566 = vmatprep.subr.bf16.mxu0 0
    %5567 = vmatpush1.bf16.xpose.msra.mxu0 0
    %5568 = vmatprep.subr.bf16.mxu0 0
    %5569 = vmatpush1.bf16.xpose.msra.mxu0 0
    %5570 = vmatprep.mubr.bf16.mxu0 0
    %5571 = vmatmul.mubr.bf16.gmra.mrb[0].mxu0 %v5515
    %v5572 = vpop.f32.mrb[0].mxu0
    %v5573 = vadd.f32 0.0, %v5572
    %v5574 = vpop.f32.mrb[0].mxu0
    %v5575 = vpop.f32.mrb[0].mxu0
    %v5576 = vadd.f32 0.0, %v5575
    %v5577 = vpop.f32.mrb[0].mxu0
    %5578 = vmatprep.mubr.bf16.mxu0 0
    %5579 = vmatmul.mubr.bf16.gmra.mrb[0].mxu0 %v5518
    %v5580 = vpop.f32.mrb[0].mxu0
    %v5581 = vadd.f32 0.0, %v5580
    %v5582 = vpop.f32.mrb[0].mxu0
    %v5583 = vpop.f32.mrb[0].mxu0
    %v5584 = vadd.f32 0.0, %v5583
    %v5585 = vpop.f32.mrb[0].mxu0
    %5586 = vmatprep.mubr.bf16.mxu0 0
    %5587 = vmatmul.mubr.bf16.gmra.mrb[0].mxu0 %v5521
    %v5588 = vpop.f32.mrb[0].mxu0
    %v5589 = vadd.f32 0.0, %v5588
    %v5590 = vpop.f32.mrb[0].mxu0
    %v5591 = vpop.f32.mrb[0].mxu0
    %v5592 = vadd.f32 0.0, %v5591
    %v5593 = vpop.f32.mrb[0].mxu0
    %5594 = vmatprep.mubr.bf16.mxu0 0
    %5595 = vmatmul.mubr.bf16.gmra.mrb[0].mxu0 %v5524
    %v5596 = vpop.f32.mrb[0].mxu0
    %v5597 = vadd.f32 0.0, %v5596
    %v5598 = vpop.f32.mrb[0].mxu0
    %v5599 = vpop.f32.mrb[0].mxu0
    %v5600 = vadd.f32 0.0, %v5599
    %v5601 = vpop.f32.mrb[0].mxu0
    %5602 = vdwg.mxu0
    %v5604 = vsel %vm5157, %v5002, 0
    %v5607 = vsel %vm5157, %v5042, 0
    %v5610 = vsel %vm5157, %v5082, 0
    %v5613 = vsel %vm5157, %v5122, 0
    %v5616 = vsel %vm5157, %v5014, 0
    %v5619 = vsel %vm5157, %v5054, 0
    %v5622 = vsel %vm5157, %v5094, 0
    %v5625 = vsel %vm5157, %v5134, 0
    %5627 = vmatprep.subr.bf16.mxu0 0
    %5628 = vmatpush1.bf16.xpose.msra.mxu0 %v5616
    %5629 = vmatprep.subr.bf16.mxu0 0
    %5630 = vmatpush1.bf16.xpose.msra.mxu0 %v5619
    %5631 = vmatprep.subr.bf16.mxu0 0
    %5632 = vmatpush1.bf16.xpose.msra.mxu0 %v5622
    %5633 = vmatprep.subr.bf16.mxu0 0
    %5634 = vmatpush1.bf16.xpose.msra.mxu0 %v5625
    %5635 = vmatprep.subr.bf16.mxu0 0
    %5636 = vmatpush1.bf16.xpose.msra.mxu0 0
    %5637 = vmatprep.subr.bf16.mxu0 0
    %5638 = vmatpush1.bf16.xpose.msra.mxu0 0
    %5639 = vmatprep.subr.bf16.mxu0 0
    %5640 = vmatpush1.bf16.xpose.msra.mxu0 0
    %5641 = vmatprep.subr.bf16.mxu0 0
    %5642 = vmatpush1.bf16.xpose.msra.mxu0 0
    %5643 = vmatprep.subr.bf16.mxu0 0
    %5644 = vmatpush1.bf16.xpose.msra.mxu0 0
    %5645 = vmatprep.subr.bf16.mxu0 0
    %5646 = vmatpush1.bf16.xpose.msra.mxu0 0
    %5647 = vmatprep.subr.bf16.mxu0 0
    %5648 = vmatpush1.bf16.xpose.msra.mxu0 0
    %5649 = vmatprep.subr.bf16.mxu0 0
    %5650 = vmatpush1.bf16.xpose.msra.mxu0 0
    %5651 = vmatprep.subr.bf16.mxu0 0
    %5652 = vmatpush1.bf16.xpose.msra.mxu0 0
    %5653 = vmatprep.subr.bf16.mxu0 0
    %5654 = vmatpush1.bf16.xpose.msra.mxu0 0
    %5655 = vmatprep.subr.bf16.mxu0 0
    %5656 = vmatpush1.bf16.xpose.msra.mxu0 0
    %5657 = vmatprep.subr.bf16.mxu0 0
    %5658 = vmatpush1.bf16.xpose.msra.mxu0 0
    %5659 = vmatprep.mubr.bf16.mxu0 0
    %5660 = vmatmul.mubr.bf16.gmra.mrb[0].mxu0 %v5604
    %v5661 = vpop.f32.mrb[0].mxu0
    %v5662 = vadd.f32 0.0, %v5661
    %v5663 = vpop.f32.mrb[0].mxu0
    %v5664 = vpop.f32.mrb[0].mxu0
    %v5665 = vadd.f32 0.0, %v5664
    %v5666 = vpop.f32.mrb[0].mxu0
    %5667 = vmatprep.mubr.bf16.mxu0 0
    %5668 = vmatmul.mubr.bf16.gmra.mrb[0].mxu0 %v5607
    %v5669 = vpop.f32.mrb[0].mxu0
    %v5670 = vadd.f32 0.0, %v5669
    %v5671 = vpop.f32.mrb[0].mxu0
    %v5672 = vpop.f32.mrb[0].mxu0
    %v5673 = vadd.f32 0.0, %v5672
    %v5674 = vpop.f32.mrb[0].mxu0
    %5675 = vmatprep.mubr.bf16.mxu0 0
    %5676 = vmatmul.mubr.bf16.gmra.mrb[0].mxu0 %v5610
    %v5677 = vpop.f32.mrb[0].mxu0
    %v5678 = vadd.f32 0.0, %v5677
    %v5679 = vpop.f32.mrb[0].mxu0
    %v5680 = vpop.f32.mrb[0].mxu0
    %v5681 = vadd.f32 0.0, %v5680
    %v5682 = vpop.f32.mrb[0].mxu0
    %5683 = vmatprep.mubr.bf16.mxu0 0
    %5684 = vmatmul.mubr.bf16.gmra.mrb[0].mxu0 %v5613
    %v5685 = vpop.f32.mrb[0].mxu0
    %v5686 = vadd.f32 0.0, %v5685
    %v5687 = vpop.f32.mrb[0].mxu0
    %v5688 = vpop.f32.mrb[0].mxu0
    %v5689 = vadd.f32 0.0, %v5688
    %v5690 = vpop.f32.mrb[0].mxu0
    %5691 = vdwg.mxu0
    %v5693 = vsel %vm5157, %v5005, 0
    %v5696 = vsel %vm5157, %v5045, 0
    %v5699 = vsel %vm5157, %v5085, 0
    %v5702 = vsel %vm5157, %v5125, 0
    %v5705 = vsel %vm5157, %v5017, 0
    %v5708 = vsel %vm5157, %v5057, 0
    %v5711 = vsel %vm5157, %v5097, 0
    %v5714 = vsel %vm5157, %v5137, 0
    %5716 = vmatprep.subr.bf16.mxu0 0
    %5717 = vmatpush1.bf16.xpose.msra.mxu0 %v5705
    %5718 = vmatprep.subr.bf16.mxu0 0
    %5719 = vmatpush1.bf16.xpose.msra.mxu0 %v5708
    %5720 = vmatprep.subr.bf16.mxu0 0
    %5721 = vmatpush1.bf16.xpose.msra.mxu0 %v5711
    %5722 = vmatprep.subr.bf16.mxu0 0
    %5723 = vmatpush1.bf16.xpose.msra.mxu0 %v5714
    %5724 = vmatprep.subr.bf16.mxu0 0
    %5725 = vmatpush1.bf16.xpose.msra.mxu0 0
    %5726 = vmatprep.subr.bf16.mxu0 0
    %5727 = vmatpush1.bf16.xpose.msra.mxu0 0
    %5728 = vmatprep.subr.bf16.mxu0 0
    %5729 = vmatpush1.bf16.xpose.msra.mxu0 0
    %5730 = vmatprep.subr.bf16.mxu0 0
    %5731 = vmatpush1.bf16.xpose.msra.mxu0 0
    %5732 = vmatprep.subr.bf16.mxu0 0
    %5733 = vmatpush1.bf16.xpose.msra.mxu0 0
    %5734 = vmatprep.subr.bf16.mxu0 0
    %5735 = vmatpush1.bf16.xpose.msra.mxu0 0
    %5736 = vmatprep.subr.bf16.mxu0 0
    %5737 = vmatpush1.bf16.xpose.msra.mxu0 0
    %5738 = vmatprep.subr.bf16.mxu0 0
    %5739 = vmatpush1.bf16.xpose.msra.mxu0 0
    %5740 = vmatprep.subr.bf16.mxu0 0
    %5741 = vmatpush1.bf16.xpose.msra.mxu0 0
    %5742 = vmatprep.subr.bf16.mxu0 0
    %5743 = vmatpush1.bf16.xpose.msra.mxu0 0
    %5744 = vmatprep.subr.bf16.mxu0 0
    %5745 = vmatpush1.bf16.xpose.msra.mxu0 0
    %5746 = vmatprep.subr.bf16.mxu0 0
    %5747 = vmatpush1.bf16.xpose.msra.mxu0 0
    %5748 = vmatprep.mubr.bf16.mxu0 0
    %5749 = vmatmul.mubr.bf16.gmra.mrb[0].mxu0 %v5693
    %v5750 = vpop.f32.mrb[0].mxu0
    %v5751 = vadd.f32 0.0, %v5750
    %v5752 = vpop.f32.mrb[0].mxu0
    %v5753 = vpop.f32.mrb[0].mxu0
    %v5754 = vadd.f32 0.0, %v5753
    %v5755 = vpop.f32.mrb[0].mxu0
    %5756 = vmatprep.mubr.bf16.mxu0 0
    %5757 = vmatmul.mubr.bf16.gmra.mrb[0].mxu0 %v5696
    %v5758 = vpop.f32.mrb[0].mxu0
    %v5759 = vadd.f32 0.0, %v5758
    %v5760 = vpop.f32.mrb[0].mxu0
    %v5761 = vpop.f32.mrb[0].mxu0
    %v5762 = vadd.f32 0.0, %v5761
    %v5763 = vpop.f32.mrb[0].mxu0
    %5764 = vmatprep.mubr.bf16.mxu0 0
    %5765 = vmatmul.mubr.bf16.gmra.mrb[0].mxu0 %v5699
    %v5766 = vpop.f32.mrb[0].mxu0
    %v5767 = vadd.f32 0.0, %v5766
    %v5768 = vpop.f32.mrb[0].mxu0
    %v5769 = vpop.f32.mrb[0].mxu0
    %v5770 = vadd.f32 0.0, %v5769
    %v5771 = vpop.f32.mrb[0].mxu0
    %5772 = vmatprep.mubr.bf16.mxu0 0
    %5773 = vmatmul.mubr.bf16.gmra.mrb[0].mxu0 %v5702
    %v5774 = vpop.f32.mrb[0].mxu0
    %v5775 = vadd.f32 0.0, %v5774
    %v5776 = vpop.f32.mrb[0].mxu0
    %v5777 = vpop.f32.mrb[0].mxu0
    %v5778 = vadd.f32 0.0, %v5777
    %v5779 = vpop.f32.mrb[0].mxu0
    %5780 = vdwg.mxu0
    %v5782 = vsel %vm5157, %v5008, 0
    %v5785 = vsel %vm5157, %v5048, 0
    %v5788 = vsel %vm5157, %v5088, 0
    %v5791 = vsel %vm5157, %v5128, 0
    %v5794 = vsel %vm5157, %v5020, 0
    %v5797 = vsel %vm5157, %v5060, 0
    %v5800 = vsel %vm5157, %v5100, 0
    %v5803 = vsel %vm5157, %v5140, 0
    %5805 = vmatprep.subr.bf16.mxu0 0
    %5806 = vmatpush1.bf16.xpose.msra.mxu0 %v5794
    %5807 = vmatprep.subr.bf16.mxu0 0
    %5808 = vmatpush1.bf16.xpose.msra.mxu0 %v5797
    %5809 = vmatprep.subr.bf16.mxu0 0
    %5810 = vmatpush1.bf16.xpose.msra.mxu0 %v5800
    %5811 = vmatprep.subr.bf16.mxu0 0
    %5812 = vmatpush1.bf16.xpose.msra.mxu0 %v5803
    %5813 = vmatprep.subr.bf16.mxu0 0
    %5814 = vmatpush1.bf16.xpose.msra.mxu0 0
    %5815 = vmatprep.subr.bf16.mxu0 0
    %5816 = vmatpush1.bf16.xpose.msra.mxu0 0
    %5817 = vmatprep.subr.bf16.mxu0 0
    %5818 = vmatpush1.bf16.xpose.msra.mxu0 0
    %5819 = vmatprep.subr.bf16.mxu0 0
    %5820 = vmatpush1.bf16.xpose.msra.mxu0 0
    %5821 = vmatprep.subr.bf16.mxu0 0
    %5822 = vmatpush1.bf16.xpose.msra.mxu0 0
    %5823 = vmatprep.subr.bf16.mxu0 0
    %5824 = vmatpush1.bf16.xpose.msra.mxu0 0
    %5825 = vmatprep.subr.bf16.mxu0 0
    %5826 = vmatpush1.bf16.xpose.msra.mxu0 0
    %5827 = vmatprep.subr.bf16.mxu0 0
    %5828 = vmatpush1.bf16.xpose.msra.mxu0 0
    %5829 = vmatprep.subr.bf16.mxu0 0
    %5830 = vmatpush1.bf16.xpose.msra.mxu0 0
    %5831 = vmatprep.subr.bf16.mxu0 0
    %5832 = vmatpush1.bf16.xpose.msra.mxu0 0
    %5833 = vmatprep.subr.bf16.mxu0 0
    %5834 = vmatpush1.bf16.xpose.msra.mxu0 0
    %5835 = vmatprep.subr.bf16.mxu0 0
    %5836 = vmatpush1.bf16.xpose.msra.mxu0 0
    %5837 = vmatprep.mubr.bf16.mxu0 0
    %5838 = vmatmul.mubr.bf16.gmra.mrb[0].mxu0 %v5782
    %v5839 = vpop.f32.mrb[0].mxu0
    %v5840 = vadd.f32 0.0, %v5839
    %v5841 = vpop.f32.mrb[0].mxu0
    %v5842 = vpop.f32.mrb[0].mxu0
    %v5843 = vadd.f32 0.0, %v5842
    %v5844 = vpop.f32.mrb[0].mxu0
    %5845 = vmatprep.mubr.bf16.mxu0 0
    %5846 = vmatmul.mubr.bf16.gmra.mrb[0].mxu0 %v5785
    %v5847 = vpop.f32.mrb[0].mxu0
    %v5848 = vadd.f32 0.0, %v5847
    %v5849 = vpop.f32.mrb[0].mxu0
    %v5850 = vpop.f32.mrb[0].mxu0
    %v5851 = vadd.f32 0.0, %v5850
    %v5852 = vpop.f32.mrb[0].mxu0
    %5853 = vmatprep.mubr.bf16.mxu0 0
    %5854 = vmatmul.mubr.bf16.gmra.mrb[0].mxu0 %v5788
    %v5855 = vpop.f32.mrb[0].mxu0
    %v5856 = vadd.f32 0.0, %v5855
    %v5857 = vpop.f32.mrb[0].mxu0
    %v5858 = vpop.f32.mrb[0].mxu0
    %v5859 = vadd.f32 0.0, %v5858
    %v5860 = vpop.f32.mrb[0].mxu0
    %5861 = vmatprep.mubr.bf16.mxu0 0
    %5862 = vmatmul.mubr.bf16.gmra.mrb[0].mxu0 %v5791
    %v5863 = vpop.f32.mrb[0].mxu0
    %v5864 = vadd.f32 0.0, %v5863
    %v5865 = vpop.f32.mrb[0].mxu0
    %v5866 = vpop.f32.mrb[0].mxu0
    %v5867 = vadd.f32 0.0, %v5866
    %v5868 = vpop.f32.mrb[0].mxu0
    %5869 = vdwg.mxu0
    %vm5870 = vcmask 523264
    %v5871 = vsel %vm5870, %v5217, -inf
    %5872 = vmax.xlane.f32.xlu0 %v5871
    %v5873 = vpop.xlane.xlu0 %5872
    %v5874 = vsel %vm5870, %v5220, -inf
    %5875 = vmax.xlane.f32.xlu0 %v5874
    %v5876 = vpop.xlane.xlu0 %5875
    %v5877 = vsel %vm5870, %v5225, -inf
    %5878 = vmax.xlane.f32.xlu0 %v5877
    %v5879 = vpop.xlane.xlu0 %5878
    %v5880 = vsel %vm5870, %v5228, -inf
    %5881 = vmax.xlane.f32.xlu0 %v5880
    %v5882 = vpop.xlane.xlu0 %5881
    %v5883 = vsel %vm5870, %v5233, -inf
    %5884 = vmax.xlane.f32.xlu0 %v5883
    %v5885 = vpop.xlane.xlu0 %5884
    %v5886 = vsel %vm5870, %v5236, -inf
    %5887 = vmax.xlane.f32.xlu0 %v5886
    %v5888 = vpop.xlane.xlu0 %5887
    %v5889 = vsel %vm5870, %v5241, -inf
    %5890 = vmax.xlane.f32.xlu0 %v5889
    %v5891 = vpop.xlane.xlu0 %5890
    %v5892 = vsel %vm5870, %v5244, -inf
    %5893 = vmax.xlane.f32.xlu0 %v5892
    %v5894 = vpop.xlane.xlu0 %5893
    %v5895 = vsel %vm5870, %v5306, -inf
    %5896 = vmax.xlane.f32.xlu0 %v5895
    %v5897 = vpop.xlane.xlu0 %5896
    %v5898 = vsel %vm5870, %v5309, -inf
    %5899 = vmax.xlane.f32.xlu0 %v5898
    %v5900 = vpop.xlane.xlu0 %5899
    %v5901 = vsel %vm5870, %v5314, -inf
    %5902 = vmax.xlane.f32.xlu0 %v5901
    %v5903 = vpop.xlane.xlu0 %5902
    %v5904 = vsel %vm5870, %v5317, -inf
    %5905 = vmax.xlane.f32.xlu0 %v5904
    %v5906 = vpop.xlane.xlu0 %5905
    %v5907 = vsel %vm5870, %v5322, -inf
    %5908 = vmax.xlane.f32.xlu0 %v5907
    %v5909 = vpop.xlane.xlu0 %5908
    %v5910 = vsel %vm5870, %v5325, -inf
    %5911 = vmax.xlane.f32.xlu0 %v5910
    %v5912 = vpop.xlane.xlu0 %5911
    %v5913 = vsel %vm5870, %v5330, -inf
    %5914 = vmax.xlane.f32.xlu0 %v5913
    %v5915 = vpop.xlane.xlu0 %5914
    %v5916 = vsel %vm5870, %v5333, -inf
    %5917 = vmax.xlane.f32.xlu0 %v5916
    %v5918 = vpop.xlane.xlu0 %5917
    %v5919 = vsel %vm5870, %v5395, -inf
    %5920 = vmax.xlane.f32.xlu0 %v5919
    %v5921 = vpop.xlane.xlu0 %5920
    %v5922 = vsel %vm5870, %v5398, -inf
    %5923 = vmax.xlane.f32.xlu0 %v5922
    %v5924 = vpop.xlane.xlu0 %5923
    %v5925 = vsel %vm5870, %v5403, -inf
    %5926 = vmax.xlane.f32.xlu0 %v5925
    %v5927 = vpop.xlane.xlu0 %5926
    %v5928 = vsel %vm5870, %v5406, -inf
    %5929 = vmax.xlane.f32.xlu0 %v5928
    %v5930 = vpop.xlane.xlu0 %5929
    %v5931 = vsel %vm5870, %v5411, -inf
    %5932 = vmax.xlane.f32.xlu0 %v5931
    %v5933 = vpop.xlane.xlu0 %5932
    %v5934 = vsel %vm5870, %v5414, -inf
    %5935 = vmax.xlane.f32.xlu0 %v5934
    %v5936 = vpop.xlane.xlu0 %5935
    %v5937 = vsel %vm5870, %v5419, -inf
    %5938 = vmax.xlane.f32.xlu0 %v5937
    %v5939 = vpop.xlane.xlu0 %5938
    %v5940 = vsel %vm5870, %v5422, -inf
    %5941 = vmax.xlane.f32.xlu0 %v5940
    %v5942 = vpop.xlane.xlu0 %5941
    %v5943 = vsel %vm5870, %v5484, -inf
    %5944 = vmax.xlane.f32.xlu0 %v5943
    %v5945 = vpop.xlane.xlu0 %5944
    %v5946 = vsel %vm5870, %v5487, -inf
    %5947 = vmax.xlane.f32.xlu0 %v5946
    %v5948 = vpop.xlane.xlu0 %5947
    %v5949 = vsel %vm5870, %v5492, -inf
    %5950 = vmax.xlane.f32.xlu0 %v5949
    %v5951 = vpop.xlane.xlu0 %5950
    %v5952 = vsel %vm5870, %v5495, -inf
    %5953 = vmax.xlane.f32.xlu0 %v5952
    %v5954 = vpop.xlane.xlu0 %5953
    %v5955 = vsel %vm5870, %v5500, -inf
    %5956 = vmax.xlane.f32.xlu0 %v5955
    %v5957 = vpop.xlane.xlu0 %5956
    %v5958 = vsel %vm5870, %v5503, -inf
    %5959 = vmax.xlane.f32.xlu0 %v5958
    %v5960 = vpop.xlane.xlu0 %5959
    %v5961 = vsel %vm5870, %v5508, -inf
    %5962 = vmax.xlane.f32.xlu0 %v5961
    %v5963 = vpop.xlane.xlu0 %5962
    %v5964 = vsel %vm5870, %v5511, -inf
    %5965 = vmax.xlane.f32.xlu0 %v5964
    %v5966 = vpop.xlane.xlu0 %5965
    %v5967 = vsel %vm5870, %v5573, -inf
    %5968 = vmax.xlane.f32.xlu0 %v5967
    %v5969 = vpop.xlane.xlu0 %5968
    %v5970 = vsel %vm5870, %v5576, -inf
    %5971 = vmax.xlane.f32.xlu0 %v5970
    %v5972 = vpop.xlane.xlu0 %5971
    %v5973 = vsel %vm5870, %v5581, -inf
    %5974 = vmax.xlane.f32.xlu0 %v5973
    %v5975 = vpop.xlane.xlu0 %5974
    %v5976 = vsel %vm5870, %v5584, -inf
    %5977 = vmax.xlane.f32.xlu0 %v5976
    %v5978 = vpop.xlane.xlu0 %5977
    %v5979 = vsel %vm5870, %v5589, -inf
    %5980 = vmax.xlane.f32.xlu0 %v5979
    %v5981 = vpop.xlane.xlu0 %5980
    %v5982 = vsel %vm5870, %v5592, -inf
    %5983 = vmax.xlane.f32.xlu0 %v5982
    %v5984 = vpop.xlane.xlu0 %5983
    %v5985 = vsel %vm5870, %v5597, -inf
    %5986 = vmax.xlane.f32.xlu0 %v5985
    %v5987 = vpop.xlane.xlu0 %5986
    %v5988 = vsel %vm5870, %v5600, -inf
    %5989 = vmax.xlane.f32.xlu0 %v5988
    %v5990 = vpop.xlane.xlu0 %5989
    %v5991 = vsel %vm5870, %v5662, -inf
    %5992 = vmax.xlane.f32.xlu0 %v5991
    %v5993 = vpop.xlane.xlu0 %5992
    %v5994 = vsel %vm5870, %v5665, -inf
    %5995 = vmax.xlane.f32.xlu0 %v5994
    %v5996 = vpop.xlane.xlu0 %5995
    %v5997 = vsel %vm5870, %v5670, -inf
    %5998 = vmax.xlane.f32.xlu0 %v5997
    %v5999 = vpop.xlane.xlu0 %5998
    %v6000 = vsel %vm5870, %v5673, -inf
    %6001 = vmax.xlane.f32.xlu0 %v6000
    %v6002 = vpop.xlane.xlu0 %6001
    %v6003 = vsel %vm5870, %v5678, -inf
    %6004 = vmax.xlane.f32.xlu0 %v6003
    %v6005 = vpop.xlane.xlu0 %6004
    %v6006 = vsel %vm5870, %v5681, -inf
    %6007 = vmax.xlane.f32.xlu0 %v6006
    %v6008 = vpop.xlane.xlu0 %6007
    %v6009 = vsel %vm5870, %v5686, -inf
    %6010 = vmax.xlane.f32.xlu0 %v6009
    %v6011 = vpop.xlane.xlu0 %6010
    %v6012 = vsel %vm5870, %v5689, -inf
    %6013 = vmax.xlane.f32.xlu0 %v6012
    %v6014 = vpop.xlane.xlu0 %6013
    %v6015 = vsel %vm5870, %v5751, -inf
    %6016 = vmax.xlane.f32.xlu0 %v6015
    %v6017 = vpop.xlane.xlu0 %6016
    %v6018 = vsel %vm5870, %v5754, -inf
    %6019 = vmax.xlane.f32.xlu0 %v6018
    %v6020 = vpop.xlane.xlu0 %6019
    %v6021 = vsel %vm5870, %v5759, -inf
    %6022 = vmax.xlane.f32.xlu0 %v6021
    %v6023 = vpop.xlane.xlu0 %6022
    %v6024 = vsel %vm5870, %v5762, -inf
    %6025 = vmax.xlane.f32.xlu0 %v6024
    %v6026 = vpop.xlane.xlu0 %6025
    %v6027 = vsel %vm5870, %v5767, -inf
    %6028 = vmax.xlane.f32.xlu0 %v6027
    %v6029 = vpop.xlane.xlu0 %6028
    %v6030 = vsel %vm5870, %v5770, -inf
    %6031 = vmax.xlane.f32.xlu0 %v6030
    %v6032 = vpop.xlane.xlu0 %6031
    %v6033 = vsel %vm5870, %v5775, -inf
    %6034 = vmax.xlane.f32.xlu0 %v6033
    %v6035 = vpop.xlane.xlu0 %6034
    %v6036 = vsel %vm5870, %v5778, -inf
    %6037 = vmax.xlane.f32.xlu0 %v6036
    %v6038 = vpop.xlane.xlu0 %6037
    %v6039 = vsel %vm5870, %v5840, -inf
    %6040 = vmax.xlane.f32.xlu0 %v6039
    %v6041 = vpop.xlane.xlu0 %6040
    %v6042 = vsel %vm5870, %v5843, -inf
    %6043 = vmax.xlane.f32.xlu0 %v6042
    %v6044 = vpop.xlane.xlu0 %6043
    %v6045 = vsel %vm5870, %v5848, -inf
    %6046 = vmax.xlane.f32.xlu0 %v6045
    %v6047 = vpop.xlane.xlu0 %6046
    %v6048 = vsel %vm5870, %v5851, -inf
    %6049 = vmax.xlane.f32.xlu0 %v6048
    %v6050 = vpop.xlane.xlu0 %6049
    %v6051 = vsel %vm5870, %v5856, -inf
    %6052 = vmax.xlane.f32.xlu0 %v6051
    %v6053 = vpop.xlane.xlu0 %6052
    %v6054 = vsel %vm5870, %v5859, -inf
    %6055 = vmax.xlane.f32.xlu0 %v6054
    %v6056 = vpop.xlane.xlu0 %6055
    %v6057 = vsel %vm5870, %v5864, -inf
    %6058 = vmax.xlane.f32.xlu0 %v6057
    %v6059 = vpop.xlane.xlu0 %6058
    %v6060 = vsel %vm5870, %v5867, -inf
    %6061 = vmax.xlane.f32.xlu0 %v6060
    %v6062 = vpop.xlane.xlu0 %6061
    %v6063 = vsub.f32 %v5217, %v5873
    %v6064 = vsub.f32 %v5220, %v5876
    %v6065 = vsub.f32 %v5225, %v5879
    %v6066 = vsub.f32 %v5228, %v5882
    %v6067 = vsub.f32 %v5233, %v5885
    %v6068 = vsub.f32 %v5236, %v5888
    %v6069 = vsub.f32 %v5241, %v5891
    %v6070 = vsub.f32 %v5244, %v5894
    %v6071 = vsub.f32 %v5306, %v5897
    %v6072 = vsub.f32 %v5309, %v5900
    %v6073 = vsub.f32 %v5314, %v5903
    %v6074 = vsub.f32 %v5317, %v5906
    %v6075 = vsub.f32 %v5322, %v5909
    %v6076 = vsub.f32 %v5325, %v5912
    %v6077 = vsub.f32 %v5330, %v5915
    %v6078 = vsub.f32 %v5333, %v5918
    %v6079 = vsub.f32 %v5395, %v5921
    %v6080 = vsub.f32 %v5398, %v5924
    %v6081 = vsub.f32 %v5403, %v5927
    %v6082 = vsub.f32 %v5406, %v5930
    %v6083 = vsub.f32 %v5411, %v5933
    %v6084 = vsub.f32 %v5414, %v5936
    %v6085 = vsub.f32 %v5419, %v5939
    %v6086 = vsub.f32 %v5422, %v5942
    %v6087 = vsub.f32 %v5484, %v5945
    %v6088 = vsub.f32 %v5487, %v5948
    %v6089 = vsub.f32 %v5492, %v5951
    %v6090 = vsub.f32 %v5495, %v5954
    %v6091 = vsub.f32 %v5500, %v5957
    %v6092 = vsub.f32 %v5503, %v5960
    %v6093 = vsub.f32 %v5508, %v5963
    %v6094 = vsub.f32 %v5511, %v5966
    %v6095 = vsub.f32 %v5573, %v5969
    %v6096 = vsub.f32 %v5576, %v5972
    %v6097 = vsub.f32 %v5581, %v5975
    %v6098 = vsub.f32 %v5584, %v5978
    %v6099 = vsub.f32 %v5589, %v5981
    %v6100 = vsub.f32 %v5592, %v5984
    %v6101 = vsub.f32 %v5597, %v5987
    %v6102 = vsub.f32 %v5600, %v5990
    %v6103 = vsub.f32 %v5662, %v5993
    %v6104 = vsub.f32 %v5665, %v5996
    %v6105 = vsub.f32 %v5670, %v5999
    %v6106 = vsub.f32 %v5673, %v6002
    %v6107 = vsub.f32 %v5678, %v6005
    %v6108 = vsub.f32 %v5681, %v6008
    %v6109 = vsub.f32 %v5686, %v6011
    %v6110 = vsub.f32 %v5689, %v6014
    %v6111 = vsub.f32 %v5751, %v6017
    %v6112 = vsub.f32 %v5754, %v6020
    %v6113 = vsub.f32 %v5759, %v6023
    %v6114 = vsub.f32 %v5762, %v6026
    %v6115 = vsub.f32 %v5767, %v6029
    %v6116 = vsub.f32 %v5770, %v6032
    %v6117 = vsub.f32 %v5775, %v6035
    %v6118 = vsub.f32 %v5778, %v6038
    %v6119 = vsub.f32 %v5840, %v6041
    %v6120 = vsub.f32 %v5843, %v6044
    %v6121 = vsub.f32 %v5848, %v6047
    %v6122 = vsub.f32 %v5851, %v6050
    %v6123 = vsub.f32 %v5856, %v6053
    %v6124 = vsub.f32 %v5859, %v6056
    %v6125 = vsub.f32 %v5864, %v6059
    %v6126 = vsub.f32 %v5867, %v6062
    %v6127 = vmul.f32 %v6063, 1.442695
    %v6128 = vpow.pop %v6127
    %v6129 = vmul.f32 %v6064, 1.442695
    %v6130 = vpow.pop %v6129
    %v6131 = vmul.f32 %v6065, 1.442695
    %v6132 = vpow.pop %v6131
    %v6133 = vmul.f32 %v6066, 1.442695
    %v6134 = vpow.pop %v6133
    %v6135 = vmul.f32 %v6067, 1.442695
    %v6136 = vpow.pop %v6135
    %v6137 = vmul.f32 %v6068, 1.442695
    %v6138 = vpow.pop %v6137
    %v6139 = vmul.f32 %v6069, 1.442695
    %v6140 = vpow.pop %v6139
    %v6141 = vmul.f32 %v6070, 1.442695
    %v6142 = vpow.pop %v6141
    %v6143 = vmul.f32 %v6071, 1.442695
    %v6144 = vpow.pop %v6143
    %v6145 = vmul.f32 %v6072, 1.442695
    %v6146 = vpow.pop %v6145
    %v6147 = vmul.f32 %v6073, 1.442695
    %v6148 = vpow.pop %v6147
    %v6149 = vmul.f32 %v6074, 1.442695
    %v6150 = vpow.pop %v6149
    %v6151 = vmul.f32 %v6075, 1.442695
    %v6152 = vpow.pop %v6151
    %v6153 = vmul.f32 %v6076, 1.442695
    %v6154 = vpow.pop %v6153
    %v6155 = vmul.f32 %v6077, 1.442695
    %v6156 = vpow.pop %v6155
    %v6157 = vmul.f32 %v6078, 1.442695
    %v6158 = vpow.pop %v6157
    %v6159 = vmul.f32 %v6079, 1.442695
    %v6160 = vpow.pop %v6159
    %v6161 = vmul.f32 %v6080, 1.442695
    %v6162 = vpow.pop %v6161
    %v6163 = vmul.f32 %v6081, 1.442695
    %v6164 = vpow.pop %v6163
    %v6165 = vmul.f32 %v6082, 1.442695
    %v6166 = vpow.pop %v6165
    %v6167 = vmul.f32 %v6083, 1.442695
    %v6168 = vpow.pop %v6167
    %v6169 = vmul.f32 %v6084, 1.442695
    %v6170 = vpow.pop %v6169
    %v6171 = vmul.f32 %v6085, 1.442695
    %v6172 = vpow.pop %v6171
    %v6173 = vmul.f32 %v6086, 1.442695
    %v6174 = vpow.pop %v6173
    %v6175 = vmul.f32 %v6087, 1.442695
    %v6176 = vpow.pop %v6175
    %v6177 = vmul.f32 %v6088, 1.442695
    %v6178 = vpow.pop %v6177
    %v6179 = vmul.f32 %v6089, 1.442695
    %v6180 = vpow.pop %v6179
    %v6181 = vmul.f32 %v6090, 1.442695
    %v6182 = vpow.pop %v6181
    %v6183 = vmul.f32 %v6091, 1.442695
    %v6184 = vpow.pop %v6183
    %v6185 = vmul.f32 %v6092, 1.442695
    %v6186 = vpow.pop %v6185
    %v6187 = vmul.f32 %v6093, 1.442695
    %v6188 = vpow.pop %v6187
    %v6189 = vmul.f32 %v6094, 1.442695
    %v6190 = vpow.pop %v6189
    %v6191 = vmul.f32 %v6095, 1.442695
    %v6192 = vpow.pop %v6191
    %v6193 = vmul.f32 %v6096, 1.442695
    %v6194 = vpow.pop %v6193
    %v6195 = vmul.f32 %v6097, 1.442695
    %v6196 = vpow.pop %v6195
    %v6197 = vmul.f32 %v6098, 1.442695
    %v6198 = vpow.pop %v6197
    %v6199 = vmul.f32 %v6099, 1.442695
    %v6200 = vpow.pop %v6199
    %v6201 = vmul.f32 %v6100, 1.442695
    %v6202 = vpow.pop %v6201
    %v6203 = vmul.f32 %v6101, 1.442695
    %v6204 = vpow.pop %v6203
    %v6205 = vmul.f32 %v6102, 1.442695
    %v6206 = vpow.pop %v6205
    %v6207 = vmul.f32 %v6103, 1.442695
    %v6208 = vpow.pop %v6207
    %v6209 = vmul.f32 %v6104, 1.442695
    %v6210 = vpow.pop %v6209
    %v6211 = vmul.f32 %v6105, 1.442695
    %v6212 = vpow.pop %v6211
    %v6213 = vmul.f32 %v6106, 1.442695
    %v6214 = vpow.pop %v6213
    %v6215 = vmul.f32 %v6107, 1.442695
    %v6216 = vpow.pop %v6215
    %v6217 = vmul.f32 %v6108, 1.442695
    %v6218 = vpow.pop %v6217
    %v6219 = vmul.f32 %v6109, 1.442695
    %v6220 = vpow.pop %v6219
    %v6221 = vmul.f32 %v6110, 1.442695
    %v6222 = vpow.pop %v6221
    %v6223 = vmul.f32 %v6111, 1.442695
    %v6224 = vpow.pop %v6223
    %v6225 = vmul.f32 %v6112, 1.442695
    %v6226 = vpow.pop %v6225
    %v6227 = vmul.f32 %v6113, 1.442695
    %v6228 = vpow.pop %v6227
    %v6229 = vmul.f32 %v6114, 1.442695
    %v6230 = vpow.pop %v6229
    %v6231 = vmul.f32 %v6115, 1.442695
    %v6232 = vpow.pop %v6231
    %v6233 = vmul.f32 %v6116, 1.442695
    %v6234 = vpow.pop %v6233
    %v6235 = vmul.f32 %v6117, 1.442695
    %v6236 = vpow.pop %v6235
    %v6237 = vmul.f32 %v6118, 1.442695
    %v6238 = vpow.pop %v6237
    %v6239 = vmul.f32 %v6119, 1.442695
    %v6240 = vpow.pop %v6239
    %v6241 = vmul.f32 %v6120, 1.442695
    %v6242 = vpow.pop %v6241
    %v6243 = vmul.f32 %v6121, 1.442695
    %v6244 = vpow.pop %v6243
    %v6245 = vmul.f32 %v6122, 1.442695
    %v6246 = vpow.pop %v6245
    %v6247 = vmul.f32 %v6123, 1.442695
    %v6248 = vpow.pop %v6247
    %v6249 = vmul.f32 %v6124, 1.442695
    %v6250 = vpow.pop %v6249
    %v6251 = vmul.f32 %v6125, 1.442695
    %v6252 = vpow.pop %v6251
    %v6253 = vmul.f32 %v6126, 1.442695
    %v6254 = vpow.pop %v6253
    %v6255 = vsel %vm5870, %v6128, 0.0
    %6256 = vadd.xlane.f32.xlu0 %v6255
    %v6257 = vpop.xlane.xlu0 %6256
    %v6258 = vsel %vm5870, %v6130, 0.0
    %6259 = vadd.xlane.f32.xlu0 %v6258
    %v6260 = vpop.xlane.xlu0 %6259
    %v6261 = vsel %vm5870, %v6132, 0.0
    %6262 = vadd.xlane.f32.xlu0 %v6261
    %v6263 = vpop.xlane.xlu0 %6262
    %v6264 = vsel %vm5870, %v6134, 0.0
    %6265 = vadd.xlane.f32.xlu0 %v6264
    %v6266 = vpop.xlane.xlu0 %6265
    %v6267 = vsel %vm5870, %v6136, 0.0
    %6268 = vadd.xlane.f32.xlu0 %v6267
    %v6269 = vpop.xlane.xlu0 %6268
    %v6270 = vsel %vm5870, %v6138, 0.0
    %6271 = vadd.xlane.f32.xlu0 %v6270
    %v6272 = vpop.xlane.xlu0 %6271
    %v6273 = vsel %vm5870, %v6140, 0.0
    %6274 = vadd.xlane.f32.xlu0 %v6273
    %v6275 = vpop.xlane.xlu0 %6274
    %v6276 = vsel %vm5870, %v6142, 0.0
    %6277 = vadd.xlane.f32.xlu0 %v6276
    %v6278 = vpop.xlane.xlu0 %6277
    %v6279 = vsel %vm5870, %v6144, 0.0
    %6280 = vadd.xlane.f32.xlu0 %v6279
    %v6281 = vpop.xlane.xlu0 %6280
    %v6282 = vsel %vm5870, %v6146, 0.0
    %6283 = vadd.xlane.f32.xlu0 %v6282
    %v6284 = vpop.xlane.xlu0 %6283
    %v6285 = vsel %vm5870, %v6148, 0.0
    %6286 = vadd.xlane.f32.xlu0 %v6285
    %v6287 = vpop.xlane.xlu0 %6286
    %v6288 = vsel %vm5870, %v6150, 0.0
    %6289 = vadd.xlane.f32.xlu0 %v6288
    %v6290 = vpop.xlane.xlu0 %6289
    %v6291 = vsel %vm5870, %v6152, 0.0
    %6292 = vadd.xlane.f32.xlu0 %v6291
    %v6293 = vpop.xlane.xlu0 %6292
    %v6294 = vsel %vm5870, %v6154, 0.0
    %6295 = vadd.xlane.f32.xlu0 %v6294
    %v6296 = vpop.xlane.xlu0 %6295
    %v6297 = vsel %vm5870, %v6156, 0.0
    %6298 = vadd.xlane.f32.xlu0 %v6297
    %v6299 = vpop.xlane.xlu0 %6298
    %v6300 = vsel %vm5870, %v6158, 0.0
    %6301 = vadd.xlane.f32.xlu0 %v6300
    %v6302 = vpop.xlane.xlu0 %6301
    %v6303 = vsel %vm5870, %v6160, 0.0
    %6304 = vadd.xlane.f32.xlu0 %v6303
    %v6305 = vpop.xlane.xlu0 %6304
    %v6306 = vsel %vm5870, %v6162, 0.0
    %6307 = vadd.xlane.f32.xlu0 %v6306
    %v6308 = vpop.xlane.xlu0 %6307
    %v6309 = vsel %vm5870, %v6164, 0.0
    %6310 = vadd.xlane.f32.xlu0 %v6309
    %v6311 = vpop.xlane.xlu0 %6310
    %v6312 = vsel %vm5870, %v6166, 0.0
    %6313 = vadd.xlane.f32.xlu0 %v6312
    %v6314 = vpop.xlane.xlu0 %6313
    %v6315 = vsel %vm5870, %v6168, 0.0
    %6316 = vadd.xlane.f32.xlu0 %v6315
    %v6317 = vpop.xlane.xlu0 %6316
    %v6318 = vsel %vm5870, %v6170, 0.0
    %6319 = vadd.xlane.f32.xlu0 %v6318
    %v6320 = vpop.xlane.xlu0 %6319
    %v6321 = vsel %vm5870, %v6172, 0.0
    %6322 = vadd.xlane.f32.xlu0 %v6321
    %v6323 = vpop.xlane.xlu0 %6322
    %v6324 = vsel %vm5870, %v6174, 0.0
    %6325 = vadd.xlane.f32.xlu0 %v6324
    %v6326 = vpop.xlane.xlu0 %6325
    %v6327 = vsel %vm5870, %v6176, 0.0
    %6328 = vadd.xlane.f32.xlu0 %v6327
    %v6329 = vpop.xlane.xlu0 %6328
    %v6330 = vsel %vm5870, %v6178, 0.0
    %6331 = vadd.xlane.f32.xlu0 %v6330
    %v6332 = vpop.xlane.xlu0 %6331
    %v6333 = vsel %vm5870, %v6180, 0.0
    %6334 = vadd.xlane.f32.xlu0 %v6333
    %v6335 = vpop.xlane.xlu0 %6334
    %v6336 = vsel %vm5870, %v6182, 0.0
    %6337 = vadd.xlane.f32.xlu0 %v6336
    %v6338 = vpop.xlane.xlu0 %6337
    %v6339 = vsel %vm5870, %v6184, 0.0
    %6340 = vadd.xlane.f32.xlu0 %v6339
    %v6341 = vpop.xlane.xlu0 %6340
    %v6342 = vsel %vm5870, %v6186, 0.0
    %6343 = vadd.xlane.f32.xlu0 %v6342
    %v6344 = vpop.xlane.xlu0 %6343
    %v6345 = vsel %vm5870, %v6188, 0.0
    %6346 = vadd.xlane.f32.xlu0 %v6345
    %v6347 = vpop.xlane.xlu0 %6346
    %v6348 = vsel %vm5870, %v6190, 0.0
    %6349 = vadd.xlane.f32.xlu0 %v6348
    %v6350 = vpop.xlane.xlu0 %6349
    %v6351 = vsel %vm5870, %v6192, 0.0
    %6352 = vadd.xlane.f32.xlu0 %v6351
    %v6353 = vpop.xlane.xlu0 %6352
    %v6354 = vsel %vm5870, %v6194, 0.0
    %6355 = vadd.xlane.f32.xlu0 %v6354
    %v6356 = vpop.xlane.xlu0 %6355
    %v6357 = vsel %vm5870, %v6196, 0.0
    %6358 = vadd.xlane.f32.xlu0 %v6357
    %v6359 = vpop.xlane.xlu0 %6358
    %v6360 = vsel %vm5870, %v6198, 0.0
    %6361 = vadd.xlane.f32.xlu0 %v6360
    %v6362 = vpop.xlane.xlu0 %6361
    %v6363 = vsel %vm5870, %v6200, 0.0
    %6364 = vadd.xlane.f32.xlu0 %v6363
    %v6365 = vpop.xlane.xlu0 %6364
    %v6366 = vsel %vm5870, %v6202, 0.0
    %6367 = vadd.xlane.f32.xlu0 %v6366
    %v6368 = vpop.xlane.xlu0 %6367
    %v6369 = vsel %vm5870, %v6204, 0.0
    %6370 = vadd.xlane.f32.xlu0 %v6369
    %v6371 = vpop.xlane.xlu0 %6370
    %v6372 = vsel %vm5870, %v6206, 0.0
    %6373 = vadd.xlane.f32.xlu0 %v6372
    %v6374 = vpop.xlane.xlu0 %6373
    %v6375 = vsel %vm5870, %v6208, 0.0
    %6376 = vadd.xlane.f32.xlu0 %v6375
    %v6377 = vpop.xlane.xlu0 %6376
    %v6378 = vsel %vm5870, %v6210, 0.0
    %6379 = vadd.xlane.f32.xlu0 %v6378
    %v6380 = vpop.xlane.xlu0 %6379
    %v6381 = vsel %vm5870, %v6212, 0.0
    %6382 = vadd.xlane.f32.xlu0 %v6381
    %v6383 = vpop.xlane.xlu0 %6382
    %v6384 = vsel %vm5870, %v6214, 0.0
    %6385 = vadd.xlane.f32.xlu0 %v6384
    %v6386 = vpop.xlane.xlu0 %6385
    %v6387 = vsel %vm5870, %v6216, 0.0
    %6388 = vadd.xlane.f32.xlu0 %v6387
    %v6389 = vpop.xlane.xlu0 %6388
    %v6390 = vsel %vm5870, %v6218, 0.0
    %6391 = vadd.xlane.f32.xlu0 %v6390
    %v6392 = vpop.xlane.xlu0 %6391
    %v6393 = vsel %vm5870, %v6220, 0.0
    %6394 = vadd.xlane.f32.xlu0 %v6393
    %v6395 = vpop.xlane.xlu0 %6394
    %v6396 = vsel %vm5870, %v6222, 0.0
    %6397 = vadd.xlane.f32.xlu0 %v6396
    %v6398 = vpop.xlane.xlu0 %6397
    %v6399 = vsel %vm5870, %v6224, 0.0
    %6400 = vadd.xlane.f32.xlu0 %v6399
    %v6401 = vpop.xlane.xlu0 %6400
    %v6402 = vsel %vm5870, %v6226, 0.0
    %6403 = vadd.xlane.f32.xlu0 %v6402
    %v6404 = vpop.xlane.xlu0 %6403
    %v6405 = vsel %vm5870, %v6228, 0.0
    %6406 = vadd.xlane.f32.xlu0 %v6405
    %v6407 = vpop.xlane.xlu0 %6406
    %v6408 = vsel %vm5870, %v6230, 0.0
    %6409 = vadd.xlane.f32.xlu0 %v6408
    %v6410 = vpop.xlane.xlu0 %6409
    %v6411 = vsel %vm5870, %v6232, 0.0
    %6412 = vadd.xlane.f32.xlu0 %v6411
    %v6413 = vpop.xlane.xlu0 %6412
    %v6414 = vsel %vm5870, %v6234, 0.0
    %6415 = vadd.xlane.f32.xlu0 %v6414
    %v6416 = vpop.xlane.xlu0 %6415
    %v6417 = vsel %vm5870, %v6236, 0.0
    %6418 = vadd.xlane.f32.xlu0 %v6417
    %v6419 = vpop.xlane.xlu0 %6418
    %v6420 = vsel %vm5870, %v6238, 0.0
    %6421 = vadd.xlane.f32.xlu0 %v6420
    %v6422 = vpop.xlane.xlu0 %6421
    %v6423 = vsel %vm5870, %v6240, 0.0
    %6424 = vadd.xlane.f32.xlu0 %v6423
    %v6425 = vpop.xlane.xlu0 %6424
    %v6426 = vsel %vm5870, %v6242, 0.0
    %6427 = vadd.xlane.f32.xlu0 %v6426
    %v6428 = vpop.xlane.xlu0 %6427
    %v6429 = vsel %vm5870, %v6244, 0.0
    %6430 = vadd.xlane.f32.xlu0 %v6429
    %v6431 = vpop.xlane.xlu0 %6430
    %v6432 = vsel %vm5870, %v6246, 0.0
    %6433 = vadd.xlane.f32.xlu0 %v6432
    %v6434 = vpop.xlane.xlu0 %6433
    %v6435 = vsel %vm5870, %v6248, 0.0
    %6436 = vadd.xlane.f32.xlu0 %v6435
    %v6437 = vpop.xlane.xlu0 %6436
    %v6438 = vsel %vm5870, %v6250, 0.0
    %6439 = vadd.xlane.f32.xlu0 %v6438
    %v6440 = vpop.xlane.xlu0 %6439
    %v6441 = vsel %vm5870, %v6252, 0.0
    %6442 = vadd.xlane.f32.xlu0 %v6441
    %v6443 = vpop.xlane.xlu0 %6442
    %v6444 = vsel %vm5870, %v6254, 0.0
    %6445 = vadd.xlane.f32.xlu0 %v6444
    %v6446 = vpop.xlane.xlu0 %6445
    %v6447 = vrcp.pop %v6257
    %v6448 = vrcp.pop %v6260
    %v6449 = vrcp.pop %v6263
    %v6450 = vrcp.pop %v6266
    %v6451 = vrcp.pop %v6269
    %v6452 = vrcp.pop %v6272
    %v6453 = vrcp.pop %v6275
    %v6454 = vrcp.pop %v6278
    %v6455 = vrcp.pop %v6281
    %v6456 = vrcp.pop %v6284
    %v6457 = vrcp.pop %v6287
    %v6458 = vrcp.pop %v6290
    %v6459 = vrcp.pop %v6293
    %v6460 = vrcp.pop %v6296
    %v6461 = vrcp.pop %v6299
    %v6462 = vrcp.pop %v6302
    %v6463 = vrcp.pop %v6305
    %v6464 = vrcp.pop %v6308
    %v6465 = vrcp.pop %v6311
    %v6466 = vrcp.pop %v6314
    %v6467 = vrcp.pop %v6317
    %v6468 = vrcp.pop %v6320
    %v6469 = vrcp.pop %v6323
    %v6470 = vrcp.pop %v6326
    %v6471 = vrcp.pop %v6329
    %v6472 = vrcp.pop %v6332
    %v6473 = vrcp.pop %v6335
    %v6474 = vrcp.pop %v6338
    %v6475 = vrcp.pop %v6341
    %v6476 = vrcp.pop %v6344
    %v6477 = vrcp.pop %v6347
    %v6478 = vrcp.pop %v6350
    %v6479 = vrcp.pop %v6353
    %v6480 = vrcp.pop %v6356
    %v6481 = vrcp.pop %v6359
    %v6482 = vrcp.pop %v6362
    %v6483 = vrcp.pop %v6365
    %v6484 = vrcp.pop %v6368
    %v6485 = vrcp.pop %v6371
    %v6486 = vrcp.pop %v6374
    %v6487 = vrcp.pop %v6377
    %v6488 = vrcp.pop %v6380
    %v6489 = vrcp.pop %v6383
    %v6490 = vrcp.pop %v6386
    %v6491 = vrcp.pop %v6389
    %v6492 = vrcp.pop %v6392
    %v6493 = vrcp.pop %v6395
    %v6494 = vrcp.pop %v6398
    %v6495 = vrcp.pop %v6401
    %v6496 = vrcp.pop %v6404
    %v6497 = vrcp.pop %v6407
    %v6498 = vrcp.pop %v6410
    %v6499 = vrcp.pop %v6413
    %v6500 = vrcp.pop %v6416
    %v6501 = vrcp.pop %v6419
    %v6502 = vrcp.pop %v6422
    %v6503 = vrcp.pop %v6425
    %v6504 = vrcp.pop %v6428
    %v6505 = vrcp.pop %v6431
    %v6506 = vrcp.pop %v6434
    %v6507 = vrcp.pop %v6437
    %v6508 = vrcp.pop %v6440
    %v6509 = vrcp.pop %v6443
    %v6510 = vrcp.pop %v6446
    %v6511 = vmul.f32 %v6128, %v6447
    %v6512 = vmul.f32 %v6130, %v6448
    %v6513 = vmul.f32 %v6132, %v6449
    %v6514 = vmul.f32 %v6134, %v6450
    %v6515 = vmul.f32 %v6136, %v6451
    %v6516 = vmul.f32 %v6138, %v6452
    %v6517 = vmul.f32 %v6140, %v6453
    %v6518 = vmul.f32 %v6142, %v6454
    %v6519 = vmul.f32 %v6144, %v6455
    %v6520 = vmul.f32 %v6146, %v6456
    %v6521 = vmul.f32 %v6148, %v6457
    %v6522 = vmul.f32 %v6150, %v6458
    %v6523 = vmul.f32 %v6152, %v6459
    %v6524 = vmul.f32 %v6154, %v6460
    %v6525 = vmul.f32 %v6156, %v6461
    %v6526 = vmul.f32 %v6158, %v6462
    %v6527 = vmul.f32 %v6160, %v6463
    %v6528 = vmul.f32 %v6162, %v6464
    %v6529 = vmul.f32 %v6164, %v6465
    %v6530 = vmul.f32 %v6166, %v6466
    %v6531 = vmul.f32 %v6168, %v6467
    %v6532 = vmul.f32 %v6170, %v6468
    %v6533 = vmul.f32 %v6172, %v6469
    %v6534 = vmul.f32 %v6174, %v6470
    %v6535 = vmul.f32 %v6176, %v6471
    %v6536 = vmul.f32 %v6178, %v6472
    %v6537 = vmul.f32 %v6180, %v6473
    %v6538 = vmul.f32 %v6182, %v6474
    %v6539 = vmul.f32 %v6184, %v6475
    %v6540 = vmul.f32 %v6186, %v6476
    %v6541 = vmul.f32 %v6188, %v6477
    %v6542 = vmul.f32 %v6190, %v6478
    %v6543 = vmul.f32 %v6192, %v6479
    %v6544 = vmul.f32 %v6194, %v6480
    %v6545 = vmul.f32 %v6196, %v6481
    %v6546 = vmul.f32 %v6198, %v6482
    %v6547 = vmul.f32 %v6200, %v6483
    %v6548 = vmul.f32 %v6202, %v6484
    %v6549 = vmul.f32 %v6204, %v6485
    %v6550 = vmul.f32 %v6206, %v6486
    %v6551 = vmul.f32 %v6208, %v6487
    %v6552 = vmul.f32 %v6210, %v6488
    %v6553 = vmul.f32 %v6212, %v6489
    %v6554 = vmul.f32 %v6214, %v6490
    %v6555 = vmul.f32 %v6216, %v6491
    %v6556 = vmul.f32 %v6218, %v6492
    %v6557 = vmul.f32 %v6220, %v6493
    %v6558 = vmul.f32 %v6222, %v6494
    %v6559 = vmul.f32 %v6224, %v6495
    %v6560 = vmul.f32 %v6226, %v6496
    %v6561 = vmul.f32 %v6228, %v6497
    %v6562 = vmul.f32 %v6230, %v6498
    %v6563 = vmul.f32 %v6232, %v6499
    %v6564 = vmul.f32 %v6234, %v6500
    %v6565 = vmul.f32 %v6236, %v6501
    %v6566 = vmul.f32 %v6238, %v6502
    %v6567 = vmul.f32 %v6240, %v6503
    %v6568 = vmul.f32 %v6242, %v6504
    %v6569 = vmul.f32 %v6244, %v6505
    %v6570 = vmul.f32 %v6246, %v6506
    %v6571 = vmul.f32 %v6248, %v6507
    %v6572 = vmul.f32 %v6250, %v6508
    %v6573 = vmul.f32 %v6252, %v6509
    %v6574 = vmul.f32 %v6254, %v6510
    %v6575 = vpack.c.bf16 %v6512, %v6511
    %v6576 = vpack.c.bf16 %v6514, %v6513
    %v6577 = vpack.c.bf16 %v6516, %v6515
    %v6578 = vpack.c.bf16 %v6518, %v6517
    %v6579 = vpack.c.bf16 %v6520, %v6519
    %v6580 = vpack.c.bf16 %v6522, %v6521
    %v6581 = vpack.c.bf16 %v6524, %v6523
    %v6582 = vpack.c.bf16 %v6526, %v6525
    %v6583 = vpack.c.bf16 %v6528, %v6527
    %v6584 = vpack.c.bf16 %v6530, %v6529
    %v6585 = vpack.c.bf16 %v6532, %v6531
    %v6586 = vpack.c.bf16 %v6534, %v6533
    %v6587 = vpack.c.bf16 %v6536, %v6535
    %v6588 = vpack.c.bf16 %v6538, %v6537
    %v6589 = vpack.c.bf16 %v6540, %v6539
    %v6590 = vpack.c.bf16 %v6542, %v6541
    %v6591 = vpack.c.bf16 %v6544, %v6543
    %v6592 = vpack.c.bf16 %v6546, %v6545
    %v6593 = vpack.c.bf16 %v6548, %v6547
    %v6594 = vpack.c.bf16 %v6550, %v6549
    %v6595 = vpack.c.bf16 %v6552, %v6551
    %v6596 = vpack.c.bf16 %v6554, %v6553
    %v6597 = vpack.c.bf16 %v6556, %v6555
    %v6598 = vpack.c.bf16 %v6558, %v6557
    %v6599 = vpack.c.bf16 %v6560, %v6559
    %v6600 = vpack.c.bf16 %v6562, %v6561
    %v6601 = vpack.c.bf16 %v6564, %v6563
    %v6602 = vpack.c.bf16 %v6566, %v6565
    %v6603 = vpack.c.bf16 %v6568, %v6567
    %v6604 = vpack.c.bf16 %v6570, %v6569
    %v6605 = vpack.c.bf16 %v6572, %v6571
    %v6606 = vpack.c.bf16 %v6574, %v6573
    %v6608 = vsel %vm5870, %v6575, 0
    %v6611 = vsel %vm5870, %v6576, 0
    %v6614 = vsel %vm5870, %v6577, 0
    %v6617 = vsel %vm5870, %v6578, 0
    %6619 = vmatprep.subr.bf16.mxu0 0
    %6620 = vmatpush1.bf16.msra.mxu0 %v4863
    %6621 = vmatprep.subr.bf16.mxu0 0
    %6622 = vmatpush1.bf16.msra.mxu0 %v4903
    %6623 = vmatprep.subr.bf16.mxu0 0
    %6624 = vmatpush1.bf16.msra.mxu0 %v4943
    %6625 = vmatprep.subr.bf16.mxu0 0
    %6626 = vmatpush1.bf16.msra.mxu0 %v4983
    %6627 = vmatprep.subr.bf16.mxu0 0
    %6628 = vmatpush1.bf16.msra.mxu0 0
    %6629 = vmatprep.subr.bf16.mxu0 0
    %6630 = vmatpush1.bf16.msra.mxu0 0
    %6631 = vmatprep.subr.bf16.mxu0 0
    %6632 = vmatpush1.bf16.msra.mxu0 0
    %6633 = vmatprep.subr.bf16.mxu0 0
    %6634 = vmatpush1.bf16.msra.mxu0 0
    %6635 = vmatprep.subr.bf16.mxu0 0
    %6636 = vmatpush1.bf16.msra.mxu0 0
    %6637 = vmatprep.subr.bf16.mxu0 0
    %6638 = vmatpush1.bf16.msra.mxu0 0
    %6639 = vmatprep.subr.bf16.mxu0 0
    %6640 = vmatpush1.bf16.msra.mxu0 0
    %6641 = vmatprep.subr.bf16.mxu0 0
    %6642 = vmatpush1.bf16.msra.mxu0 0
    %6643 = vmatprep.subr.bf16.mxu0 0
    %6644 = vmatpush1.bf16.msra.mxu0 0
    %6645 = vmatprep.subr.bf16.mxu0 0
    %6646 = vmatpush1.bf16.msra.mxu0 0
    %6647 = vmatprep.subr.bf16.mxu0 0
    %6648 = vmatpush1.bf16.msra.mxu0 0
    %6649 = vmatprep.subr.bf16.mxu0 0
    %6650 = vmatpush1.bf16.msra.mxu0 0
    %6651 = vmatprep.mubr.bf16.mxu0 0
    %6652 = vmatmul.mubr.bf16.gmra.mrb[0].mxu0 %v6608
    %v6653 = vpop.f32.mrb[0].mxu0
    %v6654 = vadd.f32 0.0, %v6653
    %v6655 = vpop.f32.mrb[0].mxu0
    %v6656 = vpop.f32.mrb[0].mxu0
    %v6657 = vadd.f32 0.0, %v6656
    %v6658 = vpop.f32.mrb[0].mxu0
    %6659 = vmatprep.mubr.bf16.mxu0 0
    %6660 = vmatmul.mubr.bf16.gmra.mrb[0].mxu0 %v6611
    %v6661 = vpop.f32.mrb[0].mxu0
    %v6662 = vadd.f32 0.0, %v6661
    %v6663 = vpop.f32.mrb[0].mxu0
    %v6664 = vpop.f32.mrb[0].mxu0
    %v6665 = vadd.f32 0.0, %v6664
    %v6666 = vpop.f32.mrb[0].mxu0
    %6667 = vmatprep.mubr.bf16.mxu0 0
    %6668 = vmatmul.mubr.bf16.gmra.mrb[0].mxu0 %v6614
    %v6669 = vpop.f32.mrb[0].mxu0
    %v6670 = vadd.f32 0.0, %v6669
    %v6671 = vpop.f32.mrb[0].mxu0
    %v6672 = vpop.f32.mrb[0].mxu0
    %v6673 = vadd.f32 0.0, %v6672
    %v6674 = vpop.f32.mrb[0].mxu0
    %6675 = vmatprep.mubr.bf16.mxu0 0
    %6676 = vmatmul.mubr.bf16.gmra.mrb[0].mxu0 %v6617
    %v6677 = vpop.f32.mrb[0].mxu0
    %v6678 = vadd.f32 0.0, %v6677
    %v6679 = vpop.f32.mrb[0].mxu0
    %v6680 = vpop.f32.mrb[0].mxu0
    %v6681 = vadd.f32 0.0, %v6680
    %v6682 = vpop.f32.mrb[0].mxu0
    %6683 = vdwg.mxu0
    %v6685 = vsel %vm5870, %v6579, 0
    %v6688 = vsel %vm5870, %v6580, 0
    %v6691 = vsel %vm5870, %v6581, 0
    %v6694 = vsel %vm5870, %v6582, 0
    %6696 = vmatprep.subr.bf16.mxu0 0
    %6697 = vmatpush1.bf16.msra.mxu0 %v4867
    %6698 = vmatprep.subr.bf16.mxu0 0
    %6699 = vmatpush1.bf16.msra.mxu0 %v4907
    %6700 = vmatprep.subr.bf16.mxu0 0
    %6701 = vmatpush1.bf16.msra.mxu0 %v4947
    %6702 = vmatprep.subr.bf16.mxu0 0
    %6703 = vmatpush1.bf16.msra.mxu0 %v4987
    %6704 = vmatprep.subr.bf16.mxu0 0
    %6705 = vmatpush1.bf16.msra.mxu0 0
    %6706 = vmatprep.subr.bf16.mxu0 0
    %6707 = vmatpush1.bf16.msra.mxu0 0
    %6708 = vmatprep.subr.bf16.mxu0 0
    %6709 = vmatpush1.bf16.msra.mxu0 0
    %6710 = vmatprep.subr.bf16.mxu0 0
    %6711 = vmatpush1.bf16.msra.mxu0 0
    %6712 = vmatprep.subr.bf16.mxu0 0
    %6713 = vmatpush1.bf16.msra.mxu0 0
    %6714 = vmatprep.subr.bf16.mxu0 0
    %6715 = vmatpush1.bf16.msra.mxu0 0
    %6716 = vmatprep.subr.bf16.mxu0 0
    %6717 = vmatpush1.bf16.msra.mxu0 0
    %6718 = vmatprep.subr.bf16.mxu0 0
    %6719 = vmatpush1.bf16.msra.mxu0 0
    %6720 = vmatprep.subr.bf16.mxu0 0
    %6721 = vmatpush1.bf16.msra.mxu0 0
    %6722 = vmatprep.subr.bf16.mxu0 0
    %6723 = vmatpush1.bf16.msra.mxu0 0
    %6724 = vmatprep.subr.bf16.mxu0 0
    %6725 = vmatpush1.bf16.msra.mxu0 0
    %6726 = vmatprep.subr.bf16.mxu0 0
    %6727 = vmatpush1.bf16.msra.mxu0 0
    %6728 = vmatprep.mubr.bf16.mxu0 0
    %6729 = vmatmul.mubr.bf16.gmra.mrb[0].mxu0 %v6685
    %v6730 = vpop.f32.mrb[0].mxu0
    %v6731 = vadd.f32 0.0, %v6730
    %v6732 = vpop.f32.mrb[0].mxu0
    %v6733 = vpop.f32.mrb[0].mxu0
    %v6734 = vadd.f32 0.0, %v6733
    %v6735 = vpop.f32.mrb[0].mxu0
    %6736 = vmatprep.mubr.bf16.mxu0 0
    %6737 = vmatmul.mubr.bf16.gmra.mrb[0].mxu0 %v6688
    %v6738 = vpop.f32.mrb[0].mxu0
    %v6739 = vadd.f32 0.0, %v6738
    %v6740 = vpop.f32.mrb[0].mxu0
    %v6741 = vpop.f32.mrb[0].mxu0
    %v6742 = vadd.f32 0.0, %v6741
    %v6743 = vpop.f32.mrb[0].mxu0
    %6744 = vmatprep.mubr.bf16.mxu0 0
    %6745 = vmatmul.mubr.bf16.gmra.mrb[0].mxu0 %v6691
    %v6746 = vpop.f32.mrb[0].mxu0
    %v6747 = vadd.f32 0.0, %v6746
    %v6748 = vpop.f32.mrb[0].mxu0
    %v6749 = vpop.f32.mrb[0].mxu0
    %v6750 = vadd.f32 0.0, %v6749
    %v6751 = vpop.f32.mrb[0].mxu0
    %6752 = vmatprep.mubr.bf16.mxu0 0
    %6753 = vmatmul.mubr.bf16.gmra.mrb[0].mxu0 %v6694
    %v6754 = vpop.f32.mrb[0].mxu0
    %v6755 = vadd.f32 0.0, %v6754
    %v6756 = vpop.f32.mrb[0].mxu0
    %v6757 = vpop.f32.mrb[0].mxu0
    %v6758 = vadd.f32 0.0, %v6757
    %v6759 = vpop.f32.mrb[0].mxu0
    %6760 = vdwg.mxu0
    %v6762 = vsel %vm5870, %v6583, 0
    %v6765 = vsel %vm5870, %v6584, 0
    %v6768 = vsel %vm5870, %v6585, 0
    %v6771 = vsel %vm5870, %v6586, 0
    %6773 = vmatprep.subr.bf16.mxu0 0
    %6774 = vmatpush1.bf16.msra.mxu0 %v4871
    %6775 = vmatprep.subr.bf16.mxu0 0
    %6776 = vmatpush1.bf16.msra.mxu0 %v4911
    %6777 = vmatprep.subr.bf16.mxu0 0
    %6778 = vmatpush1.bf16.msra.mxu0 %v4951
    %6779 = vmatprep.subr.bf16.mxu0 0
    %6780 = vmatpush1.bf16.msra.mxu0 %v4991
    %6781 = vmatprep.subr.bf16.mxu0 0
    %6782 = vmatpush1.bf16.msra.mxu0 0
    %6783 = vmatprep.subr.bf16.mxu0 0
    %6784 = vmatpush1.bf16.msra.mxu0 0
    %6785 = vmatprep.subr.bf16.mxu0 0
    %6786 = vmatpush1.bf16.msra.mxu0 0
    %6787 = vmatprep.subr.bf16.mxu0 0
    %6788 = vmatpush1.bf16.msra.mxu0 0
    %6789 = vmatprep.subr.bf16.mxu0 0
    %6790 = vmatpush1.bf16.msra.mxu0 0
    %6791 = vmatprep.subr.bf16.mxu0 0
    %6792 = vmatpush1.bf16.msra.mxu0 0
    %6793 = vmatprep.subr.bf16.mxu0 0
    %6794 = vmatpush1.bf16.msra.mxu0 0
    %6795 = vmatprep.subr.bf16.mxu0 0
    %6796 = vmatpush1.bf16.msra.mxu0 0
    %6797 = vmatprep.subr.bf16.mxu0 0
    %6798 = vmatpush1.bf16.msra.mxu0 0
    %6799 = vmatprep.subr.bf16.mxu0 0
    %6800 = vmatpush1.bf16.msra.mxu0 0
    %6801 = vmatprep.subr.bf16.mxu0 0
    %6802 = vmatpush1.bf16.msra.mxu0 0
    %6803 = vmatprep.subr.bf16.mxu0 0
    %6804 = vmatpush1.bf16.msra.mxu0 0
    %6805 = vmatprep.mubr.bf16.mxu0 0
    %6806 = vmatmul.mubr.bf16.gmra.mrb[0].mxu0 %v6762
    %v6807 = vpop.f32.mrb[0].mxu0
    %v6808 = vadd.f32 0.0, %v6807
    %v6809 = vpop.f32.mrb[0].mxu0
    %v6810 = vpop.f32.mrb[0].mxu0
    %v6811 = vadd.f32 0.0, %v6810
    %v6812 = vpop.f32.mrb[0].mxu0
    %6813 = vmatprep.mubr.bf16.mxu0 0
    %6814 = vmatmul.mubr.bf16.gmra.mrb[0].mxu0 %v6765
    %v6815 = vpop.f32.mrb[0].mxu0
    %v6816 = vadd.f32 0.0, %v6815
    %v6817 = vpop.f32.mrb[0].mxu0
    %v6818 = vpop.f32.mrb[0].mxu0
    %v6819 = vadd.f32 0.0, %v6818
    %v6820 = vpop.f32.mrb[0].mxu0
    %6821 = vmatprep.mubr.bf16.mxu0 0
    %6822 = vmatmul.mubr.bf16.gmra.mrb[0].mxu0 %v6768
    %v6823 = vpop.f32.mrb[0].mxu0
    %v6824 = vadd.f32 0.0, %v6823
    %v6825 = vpop.f32.mrb[0].mxu0
    %v6826 = vpop.f32.mrb[0].mxu0
    %v6827 = vadd.f32 0.0, %v6826
    %v6828 = vpop.f32.mrb[0].mxu0
    %6829 = vmatprep.mubr.bf16.mxu0 0
    %6830 = vmatmul.mubr.bf16.gmra.mrb[0].mxu0 %v6771
    %v6831 = vpop.f32.mrb[0].mxu0
    %v6832 = vadd.f32 0.0, %v6831
    %v6833 = vpop.f32.mrb[0].mxu0
    %v6834 = vpop.f32.mrb[0].mxu0
    %v6835 = vadd.f32 0.0, %v6834
    %v6836 = vpop.f32.mrb[0].mxu0
    %6837 = vdwg.mxu0
    %v6839 = vsel %vm5870, %v6587, 0
    %v6842 = vsel %vm5870, %v6588, 0
    %v6845 = vsel %vm5870, %v6589, 0
    %v6848 = vsel %vm5870, %v6590, 0
    %6850 = vmatprep.subr.bf16.mxu0 0
    %6851 = vmatpush1.bf16.msra.mxu0 %v4875
    %6852 = vmatprep.subr.bf16.mxu0 0
    %6853 = vmatpush1.bf16.msra.mxu0 %v4915
    %6854 = vmatprep.subr.bf16.mxu0 0
    %6855 = vmatpush1.bf16.msra.mxu0 %v4955
    %6856 = vmatprep.subr.bf16.mxu0 0
    %6857 = vmatpush1.bf16.msra.mxu0 %v4995
    %6858 = vmatprep.subr.bf16.mxu0 0
    %6859 = vmatpush1.bf16.msra.mxu0 0
    %6860 = vmatprep.subr.bf16.mxu0 0
    %6861 = vmatpush1.bf16.msra.mxu0 0
    %6862 = vmatprep.subr.bf16.mxu0 0
    %6863 = vmatpush1.bf16.msra.mxu0 0
    %6864 = vmatprep.subr.bf16.mxu0 0
    %6865 = vmatpush1.bf16.msra.mxu0 0
    %6866 = vmatprep.subr.bf16.mxu0 0
    %6867 = vmatpush1.bf16.msra.mxu0 0
    %6868 = vmatprep.subr.bf16.mxu0 0
    %6869 = vmatpush1.bf16.msra.mxu0 0
    %6870 = vmatprep.subr.bf16.mxu0 0
    %6871 = vmatpush1.bf16.msra.mxu0 0
    %6872 = vmatprep.subr.bf16.mxu0 0
    %6873 = vmatpush1.bf16.msra.mxu0 0
    %6874 = vmatprep.subr.bf16.mxu0 0
    %6875 = vmatpush1.bf16.msra.mxu0 0
    %6876 = vmatprep.subr.bf16.mxu0 0
    %6877 = vmatpush1.bf16.msra.mxu0 0
    %6878 = vmatprep.subr.bf16.mxu0 0
    %6879 = vmatpush1.bf16.msra.mxu0 0
    %6880 = vmatprep.subr.bf16.mxu0 0
    %6881 = vmatpush1.bf16.msra.mxu0 0
    %6882 = vmatprep.mubr.bf16.mxu0 0
    %6883 = vmatmul.mubr.bf16.gmra.mrb[0].mxu0 %v6839
    %v6884 = vpop.f32.mrb[0].mxu0
    %v6885 = vadd.f32 0.0, %v6884
    %v6886 = vpop.f32.mrb[0].mxu0
    %v6887 = vpop.f32.mrb[0].mxu0
    %v6888 = vadd.f32 0.0, %v6887
    %v6889 = vpop.f32.mrb[0].mxu0
    %6890 = vmatprep.mubr.bf16.mxu0 0
    %6891 = vmatmul.mubr.bf16.gmra.mrb[0].mxu0 %v6842
    %v6892 = vpop.f32.mrb[0].mxu0
    %v6893 = vadd.f32 0.0, %v6892
    %v6894 = vpop.f32.mrb[0].mxu0
    %v6895 = vpop.f32.mrb[0].mxu0
    %v6896 = vadd.f32 0.0, %v6895
    %v6897 = vpop.f32.mrb[0].mxu0
    %6898 = vmatprep.mubr.bf16.mxu0 0
    %6899 = vmatmul.mubr.bf16.gmra.mrb[0].mxu0 %v6845
    %v6900 = vpop.f32.mrb[0].mxu0
    %v6901 = vadd.f32 0.0, %v6900
    %v6902 = vpop.f32.mrb[0].mxu0
    %v6903 = vpop.f32.mrb[0].mxu0
    %v6904 = vadd.f32 0.0, %v6903
    %v6905 = vpop.f32.mrb[0].mxu0
    %6906 = vmatprep.mubr.bf16.mxu0 0
    %6907 = vmatmul.mubr.bf16.gmra.mrb[0].mxu0 %v6848
    %v6908 = vpop.f32.mrb[0].mxu0
    %v6909 = vadd.f32 0.0, %v6908
    %v6910 = vpop.f32.mrb[0].mxu0
    %v6911 = vpop.f32.mrb[0].mxu0
    %v6912 = vadd.f32 0.0, %v6911
    %v6913 = vpop.f32.mrb[0].mxu0
    %6914 = vdwg.mxu0
    %v6916 = vsel %vm5870, %v6591, 0
    %v6919 = vsel %vm5870, %v6592, 0
    %v6922 = vsel %vm5870, %v6593, 0
    %v6925 = vsel %vm5870, %v6594, 0
    %6927 = vmatprep.subr.bf16.mxu0 0
    %6928 = vmatpush1.bf16.msra.mxu0 %v5023
    %6929 = vmatprep.subr.bf16.mxu0 0
    %6930 = vmatpush1.bf16.msra.mxu0 %v5063
    %6931 = vmatprep.subr.bf16.mxu0 0
    %6932 = vmatpush1.bf16.msra.mxu0 %v5103
    %6933 = vmatprep.subr.bf16.mxu0 0
    %6934 = vmatpush1.bf16.msra.mxu0 %v5143
    %6935 = vmatprep.subr.bf16.mxu0 0
    %6936 = vmatpush1.bf16.msra.mxu0 0
    %6937 = vmatprep.subr.bf16.mxu0 0
    %6938 = vmatpush1.bf16.msra.mxu0 0
    %6939 = vmatprep.subr.bf16.mxu0 0
    %6940 = vmatpush1.bf16.msra.mxu0 0
    %6941 = vmatprep.subr.bf16.mxu0 0
    %6942 = vmatpush1.bf16.msra.mxu0 0
    %6943 = vmatprep.subr.bf16.mxu0 0
    %6944 = vmatpush1.bf16.msra.mxu0 0
    %6945 = vmatprep.subr.bf16.mxu0 0
    %6946 = vmatpush1.bf16.msra.mxu0 0
    %6947 = vmatprep.subr.bf16.mxu0 0
    %6948 = vmatpush1.bf16.msra.mxu0 0
    %6949 = vmatprep.subr.bf16.mxu0 0
    %6950 = vmatpush1.bf16.msra.mxu0 0
    %6951 = vmatprep.subr.bf16.mxu0 0
    %6952 = vmatpush1.bf16.msra.mxu0 0
    %6953 = vmatprep.subr.bf16.mxu0 0
    %6954 = vmatpush1.bf16.msra.mxu0 0
    %6955 = vmatprep.subr.bf16.mxu0 0
    %6956 = vmatpush1.bf16.msra.mxu0 0
    %6957 = vmatprep.subr.bf16.mxu0 0
    %6958 = vmatpush1.bf16.msra.mxu0 0
    %6959 = vmatprep.mubr.bf16.mxu0 0
    %6960 = vmatmul.mubr.bf16.gmra.mrb[0].mxu0 %v6916
    %v6961 = vpop.f32.mrb[0].mxu0
    %v6962 = vadd.f32 0.0, %v6961
    %v6963 = vpop.f32.mrb[0].mxu0
    %v6964 = vpop.f32.mrb[0].mxu0
    %v6965 = vadd.f32 0.0, %v6964
    %v6966 = vpop.f32.mrb[0].mxu0
    %6967 = vmatprep.mubr.bf16.mxu0 0
    %6968 = vmatmul.mubr.bf16.gmra.mrb[0].mxu0 %v6919
    %v6969 = vpop.f32.mrb[0].mxu0
    %v6970 = vadd.f32 0.0, %v6969
    %v6971 = vpop.f32.mrb[0].mxu0
    %v6972 = vpop.f32.mrb[0].mxu0
    %v6973 = vadd.f32 0.0, %v6972
    %v6974 = vpop.f32.mrb[0].mxu0
    %6975 = vmatprep.mubr.bf16.mxu0 0
    %6976 = vmatmul.mubr.bf16.gmra.mrb[0].mxu0 %v6922
    %v6977 = vpop.f32.mrb[0].mxu0
    %v6978 = vadd.f32 0.0, %v6977
    %v6979 = vpop.f32.mrb[0].mxu0
    %v6980 = vpop.f32.mrb[0].mxu0
    %v6981 = vadd.f32 0.0, %v6980
    %v6982 = vpop.f32.mrb[0].mxu0
    %6983 = vmatprep.mubr.bf16.mxu0 0
    %6984 = vmatmul.mubr.bf16.gmra.mrb[0].mxu0 %v6925
    %v6985 = vpop.f32.mrb[0].mxu0
    %v6986 = vadd.f32 0.0, %v6985
    %v6987 = vpop.f32.mrb[0].mxu0
    %v6988 = vpop.f32.mrb[0].mxu0
    %v6989 = vadd.f32 0.0, %v6988
    %v6990 = vpop.f32.mrb[0].mxu0
    %6991 = vdwg.mxu0
    %v6993 = vsel %vm5870, %v6595, 0
    %v6996 = vsel %vm5870, %v6596, 0
    %v6999 = vsel %vm5870, %v6597, 0
    %v7002 = vsel %vm5870, %v6598, 0
    %7004 = vmatprep.subr.bf16.mxu0 0
    %7005 = vmatpush1.bf16.msra.mxu0 %v5027
    %7006 = vmatprep.subr.bf16.mxu0 0
    %7007 = vmatpush1.bf16.msra.mxu0 %v5067
    %7008 = vmatprep.subr.bf16.mxu0 0
    %7009 = vmatpush1.bf16.msra.mxu0 %v5107
    %7010 = vmatprep.subr.bf16.mxu0 0
    %7011 = vmatpush1.bf16.msra.mxu0 %v5147
    %7012 = vmatprep.subr.bf16.mxu0 0
    %7013 = vmatpush1.bf16.msra.mxu0 0
    %7014 = vmatprep.subr.bf16.mxu0 0
    %7015 = vmatpush1.bf16.msra.mxu0 0
    %7016 = vmatprep.subr.bf16.mxu0 0
    %7017 = vmatpush1.bf16.msra.mxu0 0
    %7018 = vmatprep.subr.bf16.mxu0 0
    %7019 = vmatpush1.bf16.msra.mxu0 0
    %7020 = vmatprep.subr.bf16.mxu0 0
    %7021 = vmatpush1.bf16.msra.mxu0 0
    %7022 = vmatprep.subr.bf16.mxu0 0
    %7023 = vmatpush1.bf16.msra.mxu0 0
    %7024 = vmatprep.subr.bf16.mxu0 0
    %7025 = vmatpush1.bf16.msra.mxu0 0
    %7026 = vmatprep.subr.bf16.mxu0 0
    %7027 = vmatpush1.bf16.msra.mxu0 0
    %7028 = vmatprep.subr.bf16.mxu0 0
    %7029 = vmatpush1.bf16.msra.mxu0 0
    %7030 = vmatprep.subr.bf16.mxu0 0
    %7031 = vmatpush1.bf16.msra.mxu0 0
    %7032 = vmatprep.subr.bf16.mxu0 0
    %7033 = vmatpush1.bf16.msra.mxu0 0
    %7034 = vmatprep.subr.bf16.mxu0 0
    %7035 = vmatpush1.bf16.msra.mxu0 0
    %7036 = vmatprep.mubr.bf16.mxu0 0
    %7037 = vmatmul.mubr.bf16.gmra.mrb[0].mxu0 %v6993
    %v7038 = vpop.f32.mrb[0].mxu0
    %v7039 = vadd.f32 0.0, %v7038
    %v7040 = vpop.f32.mrb[0].mxu0
    %v7041 = vpop.f32.mrb[0].mxu0
    %v7042 = vadd.f32 0.0, %v7041
    %v7043 = vpop.f32.mrb[0].mxu0
    %7044 = vmatprep.mubr.bf16.mxu0 0
    %7045 = vmatmul.mubr.bf16.gmra.mrb[0].mxu0 %v6996
    %v7046 = vpop.f32.mrb[0].mxu0
    %v7047 = vadd.f32 0.0, %v7046
    %v7048 = vpop.f32.mrb[0].mxu0
    %v7049 = vpop.f32.mrb[0].mxu0
    %v7050 = vadd.f32 0.0, %v7049
    %v7051 = vpop.f32.mrb[0].mxu0
    %7052 = vmatprep.mubr.bf16.mxu0 0
    %7053 = vmatmul.mubr.bf16.gmra.mrb[0].mxu0 %v6999
    %v7054 = vpop.f32.mrb[0].mxu0
    %v7055 = vadd.f32 0.0, %v7054
    %v7056 = vpop.f32.mrb[0].mxu0
    %v7057 = vpop.f32.mrb[0].mxu0
    %v7058 = vadd.f32 0.0, %v7057
    %v7059 = vpop.f32.mrb[0].mxu0
    %7060 = vmatprep.mubr.bf16.mxu0 0
    %7061 = vmatmul.mubr.bf16.gmra.mrb[0].mxu0 %v7002
    %v7062 = vpop.f32.mrb[0].mxu0
    %v7063 = vadd.f32 0.0, %v7062
    %v7064 = vpop.f32.mrb[0].mxu0
    %v7065 = vpop.f32.mrb[0].mxu0
    %v7066 = vadd.f32 0.0, %v7065
    %v7067 = vpop.f32.mrb[0].mxu0
    %7068 = vdwg.mxu0
    %v7070 = vsel %vm5870, %v6599, 0
    %v7073 = vsel %vm5870, %v6600, 0
    %v7076 = vsel %vm5870, %v6601, 0
    %v7079 = vsel %vm5870, %v6602, 0
    %7081 = vmatprep.subr.bf16.mxu0 0
    %7082 = vmatpush1.bf16.msra.mxu0 %v5031
    %7083 = vmatprep.subr.bf16.mxu0 0
    %7084 = vmatpush1.bf16.msra.mxu0 %v5071
    %7085 = vmatprep.subr.bf16.mxu0 0
    %7086 = vmatpush1.bf16.msra.mxu0 %v5111
    %7087 = vmatprep.subr.bf16.mxu0 0
    %7088 = vmatpush1.bf16.msra.mxu0 %v5151
    %7089 = vmatprep.subr.bf16.mxu0 0
    %7090 = vmatpush1.bf16.msra.mxu0 0
    %7091 = vmatprep.subr.bf16.mxu0 0
    %7092 = vmatpush1.bf16.msra.mxu0 0
    %7093 = vmatprep.subr.bf16.mxu0 0
    %7094 = vmatpush1.bf16.msra.mxu0 0
    %7095 = vmatprep.subr.bf16.mxu0 0
    %7096 = vmatpush1.bf16.msra.mxu0 0
    %7097 = vmatprep.subr.bf16.mxu0 0
    %7098 = vmatpush1.bf16.msra.mxu0 0
    %7099 = vmatprep.subr.bf16.mxu0 0
    %7100 = vmatpush1.bf16.msra.mxu0 0
    %7101 = vmatprep.subr.bf16.mxu0 0
    %7102 = vmatpush1.bf16.msra.mxu0 0
    %7103 = vmatprep.subr.bf16.mxu0 0
    %7104 = vmatpush1.bf16.msra.mxu0 0
    %7105 = vmatprep.subr.bf16.mxu0 0
    %7106 = vmatpush1.bf16.msra.mxu0 0
    %7107 = vmatprep.subr.bf16.mxu0 0
    %7108 = vmatpush1.bf16.msra.mxu0 0
    %7109 = vmatprep.subr.bf16.mxu0 0
    %7110 = vmatpush1.bf16.msra.mxu0 0
    %7111 = vmatprep.subr.bf16.mxu0 0
    %7112 = vmatpush1.bf16.msra.mxu0 0
    %7113 = vmatprep.mubr.bf16.mxu0 0
    %7114 = vmatmul.mubr.bf16.gmra.mrb[0].mxu0 %v7070
    %v7115 = vpop.f32.mrb[0].mxu0
    %v7116 = vadd.f32 0.0, %v7115
    %v7117 = vpop.f32.mrb[0].mxu0
    %v7118 = vpop.f32.mrb[0].mxu0
    %v7119 = vadd.f32 0.0, %v7118
    %v7120 = vpop.f32.mrb[0].mxu0
    %7121 = vmatprep.mubr.bf16.mxu0 0
    %7122 = vmatmul.mubr.bf16.gmra.mrb[0].mxu0 %v7073
    %v7123 = vpop.f32.mrb[0].mxu0
    %v7124 = vadd.f32 0.0, %v7123
    %v7125 = vpop.f32.mrb[0].mxu0
    %v7126 = vpop.f32.mrb[0].mxu0
    %v7127 = vadd.f32 0.0, %v7126
    %v7128 = vpop.f32.mrb[0].mxu0
    %7129 = vmatprep.mubr.bf16.mxu0 0
    %7130 = vmatmul.mubr.bf16.gmra.mrb[0].mxu0 %v7076
    %v7131 = vpop.f32.mrb[0].mxu0
    %v7132 = vadd.f32 0.0, %v7131
    %v7133 = vpop.f32.mrb[0].mxu0
    %v7134 = vpop.f32.mrb[0].mxu0
    %v7135 = vadd.f32 0.0, %v7134
    %v7136 = vpop.f32.mrb[0].mxu0
    %7137 = vmatprep.mubr.bf16.mxu0 0
    %7138 = vmatmul.mubr.bf16.gmra.mrb[0].mxu0 %v7079
    %v7139 = vpop.f32.mrb[0].mxu0
    %v7140 = vadd.f32 0.0, %v7139
    %v7141 = vpop.f32.mrb[0].mxu0
    %v7142 = vpop.f32.mrb[0].mxu0
    %v7143 = vadd.f32 0.0, %v7142
    %v7144 = vpop.f32.mrb[0].mxu0
    %7145 = vdwg.mxu0
    %v7147 = vsel %vm5870, %v6603, 0
    %v7150 = vsel %vm5870, %v6604, 0
    %v7153 = vsel %vm5870, %v6605, 0
    %v7156 = vsel %vm5870, %v6606, 0
    %7158 = vmatprep.subr.bf16.mxu0 0
    %7159 = vmatpush1.bf16.msra.mxu0 %v5035
    %7160 = vmatprep.subr.bf16.mxu0 0
    %7161 = vmatpush1.bf16.msra.mxu0 %v5075
    %7162 = vmatprep.subr.bf16.mxu0 0
    %7163 = vmatpush1.bf16.msra.mxu0 %v5115
    %7164 = vmatprep.subr.bf16.mxu0 0
    %7165 = vmatpush1.bf16.msra.mxu0 %v5155
    %7166 = vmatprep.subr.bf16.mxu0 0
    %7167 = vmatpush1.bf16.msra.mxu0 0
    %7168 = vmatprep.subr.bf16.mxu0 0
    %7169 = vmatpush1.bf16.msra.mxu0 0
    %7170 = vmatprep.subr.bf16.mxu0 0
    %7171 = vmatpush1.bf16.msra.mxu0 0
    %7172 = vmatprep.subr.bf16.mxu0 0
    %7173 = vmatpush1.bf16.msra.mxu0 0
    %7174 = vmatprep.subr.bf16.mxu0 0
    %7175 = vmatpush1.bf16.msra.mxu0 0
    %7176 = vmatprep.subr.bf16.mxu0 0
    %7177 = vmatpush1.bf16.msra.mxu0 0
    %7178 = vmatprep.subr.bf16.mxu0 0
    %7179 = vmatpush1.bf16.msra.mxu0 0
    %7180 = vmatprep.subr.bf16.mxu0 0
    %7181 = vmatpush1.bf16.msra.mxu0 0
    %7182 = vmatprep.subr.bf16.mxu0 0
    %7183 = vmatpush1.bf16.msra.mxu0 0
    %7184 = vmatprep.subr.bf16.mxu0 0
    %7185 = vmatpush1.bf16.msra.mxu0 0
    %7186 = vmatprep.subr.bf16.mxu0 0
    %7187 = vmatpush1.bf16.msra.mxu0 0
    %7188 = vmatprep.subr.bf16.mxu0 0
    %7189 = vmatpush1.bf16.msra.mxu0 0
    %7190 = vmatprep.mubr.bf16.mxu0 0
    %7191 = vmatmul.mubr.bf16.gmra.mrb[0].mxu0 %v7147
    %v7192 = vpop.f32.mrb[0].mxu0
    %v7193 = vadd.f32 0.0, %v7192
    %v7194 = vpop.f32.mrb[0].mxu0
    %v7195 = vpop.f32.mrb[0].mxu0
    %v7196 = vadd.f32 0.0, %v7195
    %v7197 = vpop.f32.mrb[0].mxu0
    %7198 = vmatprep.mubr.bf16.mxu0 0
    %7199 = vmatmul.mubr.bf16.gmra.mrb[0].mxu0 %v7150
    %v7200 = vpop.f32.mrb[0].mxu0
    %v7201 = vadd.f32 0.0, %v7200
    %v7202 = vpop.f32.mrb[0].mxu0
    %v7203 = vpop.f32.mrb[0].mxu0
    %v7204 = vadd.f32 0.0, %v7203
    %v7205 = vpop.f32.mrb[0].mxu0
    %7206 = vmatprep.mubr.bf16.mxu0 0
    %7207 = vmatmul.mubr.bf16.gmra.mrb[0].mxu0 %v7153
    %v7208 = vpop.f32.mrb[0].mxu0
    %v7209 = vadd.f32 0.0, %v7208
    %v7210 = vpop.f32.mrb[0].mxu0
    %v7211 = vpop.f32.mrb[0].mxu0
    %v7212 = vadd.f32 0.0, %v7211
    %v7213 = vpop.f32.mrb[0].mxu0
    %7214 = vmatprep.mubr.bf16.mxu0 0
    %7215 = vmatmul.mubr.bf16.gmra.mrb[0].mxu0 %v7156
    %v7216 = vpop.f32.mrb[0].mxu0
    %v7217 = vadd.f32 0.0, %v7216
    %v7218 = vpop.f32.mrb[0].mxu0
    %v7219 = vpop.f32.mrb[0].mxu0
    %v7220 = vadd.f32 0.0, %v7219
    %v7221 = vpop.f32.mrb[0].mxu0
    %7222 = vdwg.mxu0
    %v7223 = vpack.c.bf16 %v6657, %v6654
    %v7224 = vpack.c.bf16 %v6665, %v6662
    %v7225 = vpack.c.bf16 %v6673, %v6670
    %v7226 = vpack.c.bf16 %v6681, %v6678
    %v7227 = vpack.c.bf16 %v6734, %v6731
    %v7228 = vpack.c.bf16 %v6742, %v6739
    %v7229 = vpack.c.bf16 %v6750, %v6747
    %v7230 = vpack.c.bf16 %v6758, %v6755
    %v7231 = vpack.c.bf16 %v6811, %v6808
    %v7232 = vpack.c.bf16 %v6819, %v6816
    %v7233 = vpack.c.bf16 %v6827, %v6824
    %v7234 = vpack.c.bf16 %v6835, %v6832
    %v7235 = vpack.c.bf16 %v6888, %v6885
    %v7236 = vpack.c.bf16 %v6896, %v6893
    %v7237 = vpack.c.bf16 %v6904, %v6901
    %v7238 = vpack.c.bf16 %v6912, %v6909
    %v7239 = vpack.c.bf16 %v6965, %v6962
    %v7240 = vpack.c.bf16 %v6973, %v6970
    %v7241 = vpack.c.bf16 %v6981, %v6978
    %v7242 = vpack.c.bf16 %v6989, %v6986
    %v7243 = vpack.c.bf16 %v7042, %v7039
    %v7244 = vpack.c.bf16 %v7050, %v7047
    %v7245 = vpack.c.bf16 %v7058, %v7055
    %v7246 = vpack.c.bf16 %v7066, %v7063
    %v7247 = vpack.c.bf16 %v7119, %v7116
    %v7248 = vpack.c.bf16 %v7127, %v7124
    %v7249 = vpack.c.bf16 %v7135, %v7132
    %v7250 = vpack.c.bf16 %v7143, %v7140
    %v7251 = vpack.c.bf16 %v7196, %v7193
    %v7252 = vpack.c.bf16 %v7204, %v7201
    %v7253 = vpack.c.bf16 %v7212, %v7209
    %v7254 = vpack.c.bf16 %v7220, %v7217
    %v7255 = vld [vmem:[%s3] sm:$0xf]
    %v7256 = vld [vmem:[%s3 + $0x4] sm:$0xf]
    %v7257 = vld [vmem:[%s3 + $0x8] sm:$0xf]
    %v7258 = vld [vmem:[%s3 + $0xc] sm:$0xf]
    %v7259 = vld [vmem:[%s3 + $0x10] sm:$0xf]
    %v7260 = vld [vmem:[%s3 + $0x14] sm:$0xf]
    %v7261 = vld [vmem:[%s3 + $0x18] sm:$0xf]
    %v7262 = vld [vmem:[%s3 + $0x1c] sm:$0xf]
    %v7264 = vsel %vm5157, %v7223, 0
    %v7267 = vsel %vm5157, %v7224, 0
    %v7270 = vsel %vm5157, %v7225, 0
    %v7273 = vsel %vm5157, %v7226, 0
    %vm7275 = vcmask 1043456
    %v7277 = vsel %vm7275, %v7255, 0
    %7279 = vmatprep.subr.bf16.mxu0 0
    %7280 = vmatpush1.bf16.msra.mxu0 %v7277
    %7281 = vmatprep.subr.bf16.mxu0 0
    %7282 = vmatpush1.bf16.msra.mxu0 0
    %7283 = vmatprep.subr.bf16.mxu0 0
    %7284 = vmatpush1.bf16.msra.mxu0 0
    %7285 = vmatprep.subr.bf16.mxu0 0
    %7286 = vmatpush1.bf16.msra.mxu0 0
    %7287 = vmatprep.subr.bf16.mxu0 0
    %7288 = vmatpush1.bf16.msra.mxu0 0
    %7289 = vmatprep.subr.bf16.mxu0 0
    %7290 = vmatpush1.bf16.msra.mxu0 0
    %7291 = vmatprep.subr.bf16.mxu0 0
    %7292 = vmatpush1.bf16.msra.mxu0 0
    %7293 = vmatprep.subr.bf16.mxu0 0
    %7294 = vmatpush1.bf16.msra.mxu0 0
    %7295 = vmatprep.subr.bf16.mxu0 0
    %7296 = vmatpush1.bf16.msra.mxu0 0
    %7297 = vmatprep.subr.bf16.mxu0 0
    %7298 = vmatpush1.bf16.msra.mxu0 0
    %7299 = vmatprep.subr.bf16.mxu0 0
    %7300 = vmatpush1.bf16.msra.mxu0 0
    %7301 = vmatprep.subr.bf16.mxu0 0
    %7302 = vmatpush1.bf16.msra.mxu0 0
    %7303 = vmatprep.subr.bf16.mxu0 0
    %7304 = vmatpush1.bf16.msra.mxu0 0
    %7305 = vmatprep.subr.bf16.mxu0 0
    %7306 = vmatpush1.bf16.msra.mxu0 0
    %7307 = vmatprep.subr.bf16.mxu0 0
    %7308 = vmatpush1.bf16.msra.mxu0 0
    %7309 = vmatprep.subr.bf16.mxu0 0
    %7310 = vmatpush1.bf16.msra.mxu0 0
    %7311 = vmatprep.mubr.bf16.mxu0 0
    %7312 = vmatmul.mubr.bf16.gmra.mrb[0].mxu0 %v7264
    %v7313 = vpop.f32.mrb[0].mxu0
    %v7314 = vadd.f32 0.0, %v7313
    %v7315 = vpop.f32.mrb[0].mxu0
    %v7316 = vpop.f32.mrb[0].mxu0
    %v7317 = vadd.f32 0.0, %v7316
    %v7318 = vpop.f32.mrb[0].mxu0
    %7319 = vmatprep.mubr.bf16.mxu0 0
    %7320 = vmatmul.mubr.bf16.gmra.mrb[0].mxu0 %v7267
    %v7321 = vpop.f32.mrb[0].mxu0
    %v7322 = vadd.f32 0.0, %v7321
    %v7323 = vpop.f32.mrb[0].mxu0
    %v7324 = vpop.f32.mrb[0].mxu0
    %v7325 = vadd.f32 0.0, %v7324
    %v7326 = vpop.f32.mrb[0].mxu0
    %7327 = vmatprep.mubr.bf16.mxu0 0
    %7328 = vmatmul.mubr.bf16.gmra.mrb[0].mxu0 %v7270
    %v7329 = vpop.f32.mrb[0].mxu0
    %v7330 = vadd.f32 0.0, %v7329
    %v7331 = vpop.f32.mrb[0].mxu0
    %v7332 = vpop.f32.mrb[0].mxu0
    %v7333 = vadd.f32 0.0, %v7332
    %v7334 = vpop.f32.mrb[0].mxu0
    %7335 = vmatprep.mubr.bf16.mxu0 0
    %7336 = vmatmul.mubr.bf16.gmra.mrb[0].mxu0 %v7273
    %v7337 = vpop.f32.mrb[0].mxu0
    %v7338 = vadd.f32 0.0, %v7337
    %v7339 = vpop.f32.mrb[0].mxu0
    %v7340 = vpop.f32.mrb[0].mxu0
    %v7341 = vadd.f32 0.0, %v7340
    %v7342 = vpop.f32.mrb[0].mxu0
    %7343 = vdwg.mxu0
    %v7345 = vsel %vm5157, %v7227, 0
    %v7348 = vsel %vm5157, %v7228, 0
    %v7351 = vsel %vm5157, %v7229, 0
    %v7354 = vsel %vm5157, %v7230, 0
    %v7357 = vsel %vm7275, %v7256, 0
    %7359 = vmatprep.subr.bf16.mxu0 0
    %7360 = vmatpush1.bf16.msra.mxu0 %v7357
    %7361 = vmatprep.subr.bf16.mxu0 0
    %7362 = vmatpush1.bf16.msra.mxu0 0
    %7363 = vmatprep.subr.bf16.mxu0 0
    %7364 = vmatpush1.bf16.msra.mxu0 0
    %7365 = vmatprep.subr.bf16.mxu0 0
    %7366 = vmatpush1.bf16.msra.mxu0 0
    %7367 = vmatprep.subr.bf16.mxu0 0
    %7368 = vmatpush1.bf16.msra.mxu0 0
    %7369 = vmatprep.subr.bf16.mxu0 0
    %7370 = vmatpush1.bf16.msra.mxu0 0
    %7371 = vmatprep.subr.bf16.mxu0 0
    %7372 = vmatpush1.bf16.msra.mxu0 0
    %7373 = vmatprep.subr.bf16.mxu0 0
    %7374 = vmatpush1.bf16.msra.mxu0 0
    %7375 = vmatprep.subr.bf16.mxu0 0
    %7376 = vmatpush1.bf16.msra.mxu0 0
    %7377 = vmatprep.subr.bf16.mxu0 0
    %7378 = vmatpush1.bf16.msra.mxu0 0
    %7379 = vmatprep.subr.bf16.mxu0 0
    %7380 = vmatpush1.bf16.msra.mxu0 0
    %7381 = vmatprep.subr.bf16.mxu0 0
    %7382 = vmatpush1.bf16.msra.mxu0 0
    %7383 = vmatprep.subr.bf16.mxu0 0
    %7384 = vmatpush1.bf16.msra.mxu0 0
    %7385 = vmatprep.subr.bf16.mxu0 0
    %7386 = vmatpush1.bf16.msra.mxu0 0
    %7387 = vmatprep.subr.bf16.mxu0 0
    %7388 = vmatpush1.bf16.msra.mxu0 0
    %7389 = vmatprep.subr.bf16.mxu0 0
    %7390 = vmatpush1.bf16.msra.mxu0 0
    %7391 = vmatprep.mubr.bf16.mxu0 0
    %7392 = vmatmul.mubr.bf16.gmra.mrb[0].mxu0 %v7345
    %v7393 = vpop.f32.mrb[0].mxu0
    %v7394 = vadd.f32 0.0, %v7393
    %v7395 = vpop.f32.mrb[0].mxu0
    %v7396 = vpop.f32.mrb[0].mxu0
    %v7397 = vadd.f32 0.0, %v7396
    %v7398 = vpop.f32.mrb[0].mxu0
    %7399 = vmatprep.mubr.bf16.mxu0 0
    %7400 = vmatmul.mubr.bf16.gmra.mrb[0].mxu0 %v7348
    %v7401 = vpop.f32.mrb[0].mxu0
    %v7402 = vadd.f32 0.0, %v7401
    %v7403 = vpop.f32.mrb[0].mxu0
    %v7404 = vpop.f32.mrb[0].mxu0
    %v7405 = vadd.f32 0.0, %v7404
    %v7406 = vpop.f32.mrb[0].mxu0
    %7407 = vmatprep.mubr.bf16.mxu0 0
    %7408 = vmatmul.mubr.bf16.gmra.mrb[0].mxu0 %v7351
    %v7409 = vpop.f32.mrb[0].mxu0
    %v7410 = vadd.f32 0.0, %v7409
    %v7411 = vpop.f32.mrb[0].mxu0
    %v7412 = vpop.f32.mrb[0].mxu0
    %v7413 = vadd.f32 0.0, %v7412
    %v7414 = vpop.f32.mrb[0].mxu0
    %7415 = vmatprep.mubr.bf16.mxu0 0
    %7416 = vmatmul.mubr.bf16.gmra.mrb[0].mxu0 %v7354
    %v7417 = vpop.f32.mrb[0].mxu0
    %v7418 = vadd.f32 0.0, %v7417
    %v7419 = vpop.f32.mrb[0].mxu0
    %v7420 = vpop.f32.mrb[0].mxu0
    %v7421 = vadd.f32 0.0, %v7420
    %v7422 = vpop.f32.mrb[0].mxu0
    %7423 = vdwg.mxu0
    %v7425 = vsel %vm5157, %v7231, 0
    %v7428 = vsel %vm5157, %v7232, 0
    %v7431 = vsel %vm5157, %v7233, 0
    %v7434 = vsel %vm5157, %v7234, 0
    %v7437 = vsel %vm7275, %v7257, 0
    %7439 = vmatprep.subr.bf16.mxu0 0
    %7440 = vmatpush1.bf16.msra.mxu0 %v7437
    %7441 = vmatprep.subr.bf16.mxu0 0
    %7442 = vmatpush1.bf16.msra.mxu0 0
    %7443 = vmatprep.subr.bf16.mxu0 0
    %7444 = vmatpush1.bf16.msra.mxu0 0
    %7445 = vmatprep.subr.bf16.mxu0 0
    %7446 = vmatpush1.bf16.msra.mxu0 0
    %7447 = vmatprep.subr.bf16.mxu0 0
    %7448 = vmatpush1.bf16.msra.mxu0 0
    %7449 = vmatprep.subr.bf16.mxu0 0
    %7450 = vmatpush1.bf16.msra.mxu0 0
    %7451 = vmatprep.subr.bf16.mxu0 0
    %7452 = vmatpush1.bf16.msra.mxu0 0
    %7453 = vmatprep.subr.bf16.mxu0 0
    %7454 = vmatpush1.bf16.msra.mxu0 0
    %7455 = vmatprep.subr.bf16.mxu0 0
    %7456 = vmatpush1.bf16.msra.mxu0 0
    %7457 = vmatprep.subr.bf16.mxu0 0
    %7458 = vmatpush1.bf16.msra.mxu0 0
    %7459 = vmatprep.subr.bf16.mxu0 0
    %7460 = vmatpush1.bf16.msra.mxu0 0
    %7461 = vmatprep.subr.bf16.mxu0 0
    %7462 = vmatpush1.bf16.msra.mxu0 0
    %7463 = vmatprep.subr.bf16.mxu0 0
    %7464 = vmatpush1.bf16.msra.mxu0 0
    %7465 = vmatprep.subr.bf16.mxu0 0
    %7466 = vmatpush1.bf16.msra.mxu0 0
    %7467 = vmatprep.subr.bf16.mxu0 0
    %7468 = vmatpush1.bf16.msra.mxu0 0
    %7469 = vmatprep.subr.bf16.mxu0 0
    %7470 = vmatpush1.bf16.msra.mxu0 0
    %7471 = vmatprep.mubr.bf16.mxu0 0
    %7472 = vmatmul.mubr.bf16.gmra.mrb[0].mxu0 %v7425
    %v7473 = vpop.f32.mrb[0].mxu0
    %v7474 = vadd.f32 0.0, %v7473
    %v7475 = vpop.f32.mrb[0].mxu0
    %v7476 = vpop.f32.mrb[0].mxu0
    %v7477 = vadd.f32 0.0, %v7476
    %v7478 = vpop.f32.mrb[0].mxu0
    %7479 = vmatprep.mubr.bf16.mxu0 0
    %7480 = vmatmul.mubr.bf16.gmra.mrb[0].mxu0 %v7428
    %v7481 = vpop.f32.mrb[0].mxu0
    %v7482 = vadd.f32 0.0, %v7481
    %v7483 = vpop.f32.mrb[0].mxu0
    %v7484 = vpop.f32.mrb[0].mxu0
    %v7485 = vadd.f32 0.0, %v7484
    %v7486 = vpop.f32.mrb[0].mxu0
    %7487 = vmatprep.mubr.bf16.mxu0 0
    %7488 = vmatmul.mubr.bf16.gmra.mrb[0].mxu0 %v7431
    %v7489 = vpop.f32.mrb[0].mxu0
    %v7490 = vadd.f32 0.0, %v7489
    %v7491 = vpop.f32.mrb[0].mxu0
    %v7492 = vpop.f32.mrb[0].mxu0
    %v7493 = vadd.f32 0.0, %v7492
    %v7494 = vpop.f32.mrb[0].mxu0
    %7495 = vmatprep.mubr.bf16.mxu0 0
    %7496 = vmatmul.mubr.bf16.gmra.mrb[0].mxu0 %v7434
    %v7497 = vpop.f32.mrb[0].mxu0
    %v7498 = vadd.f32 0.0, %v7497
    %v7499 = vpop.f32.mrb[0].mxu0
    %v7500 = vpop.f32.mrb[0].mxu0
    %v7501 = vadd.f32 0.0, %v7500
    %v7502 = vpop.f32.mrb[0].mxu0
    %7503 = vdwg.mxu0
    %v7505 = vsel %vm5157, %v7235, 0
    %v7508 = vsel %vm5157, %v7236, 0
    %v7511 = vsel %vm5157, %v7237, 0
    %v7514 = vsel %vm5157, %v7238, 0
    %v7517 = vsel %vm7275, %v7258, 0
    %7519 = vmatprep.subr.bf16.mxu0 0
    %7520 = vmatpush1.bf16.msra.mxu0 %v7517
    %7521 = vmatprep.subr.bf16.mxu0 0
    %7522 = vmatpush1.bf16.msra.mxu0 0
    %7523 = vmatprep.subr.bf16.mxu0 0
    %7524 = vmatpush1.bf16.msra.mxu0 0
    %7525 = vmatprep.subr.bf16.mxu0 0
    %7526 = vmatpush1.bf16.msra.mxu0 0
    %7527 = vmatprep.subr.bf16.mxu0 0
    %7528 = vmatpush1.bf16.msra.mxu0 0
    %7529 = vmatprep.subr.bf16.mxu0 0
    %7530 = vmatpush1.bf16.msra.mxu0 0
    %7531 = vmatprep.subr.bf16.mxu0 0
    %7532 = vmatpush1.bf16.msra.mxu0 0
    %7533 = vmatprep.subr.bf16.mxu0 0
    %7534 = vmatpush1.bf16.msra.mxu0 0
    %7535 = vmatprep.subr.bf16.mxu0 0
    %7536 = vmatpush1.bf16.msra.mxu0 0
    %7537 = vmatprep.subr.bf16.mxu0 0
    %7538 = vmatpush1.bf16.msra.mxu0 0
    %7539 = vmatprep.subr.bf16.mxu0 0
    %7540 = vmatpush1.bf16.msra.mxu0 0
    %7541 = vmatprep.subr.bf16.mxu0 0
    %7542 = vmatpush1.bf16.msra.mxu0 0
    %7543 = vmatprep.subr.bf16.mxu0 0
    %7544 = vmatpush1.bf16.msra.mxu0 0
    %7545 = vmatprep.subr.bf16.mxu0 0
    %7546 = vmatpush1.bf16.msra.mxu0 0
    %7547 = vmatprep.subr.bf16.mxu0 0
    %7548 = vmatpush1.bf16.msra.mxu0 0
    %7549 = vmatprep.subr.bf16.mxu0 0
    %7550 = vmatpush1.bf16.msra.mxu0 0
    %7551 = vmatprep.mubr.bf16.mxu0 0
    %7552 = vmatmul.mubr.bf16.gmra.mrb[0].mxu0 %v7505
    %v7553 = vpop.f32.mrb[0].mxu0
    %v7554 = vadd.f32 0.0, %v7553
    %v7555 = vpop.f32.mrb[0].mxu0
    %v7556 = vpop.f32.mrb[0].mxu0
    %v7557 = vadd.f32 0.0, %v7556
    %v7558 = vpop.f32.mrb[0].mxu0
    %7559 = vmatprep.mubr.bf16.mxu0 0
    %7560 = vmatmul.mubr.bf16.gmra.mrb[0].mxu0 %v7508
    %v7561 = vpop.f32.mrb[0].mxu0
    %v7562 = vadd.f32 0.0, %v7561
    %v7563 = vpop.f32.mrb[0].mxu0
    %v7564 = vpop.f32.mrb[0].mxu0
    %v7565 = vadd.f32 0.0, %v7564
    %v7566 = vpop.f32.mrb[0].mxu0
    %7567 = vmatprep.mubr.bf16.mxu0 0
    %7568 = vmatmul.mubr.bf16.gmra.mrb[0].mxu0 %v7511
    %v7569 = vpop.f32.mrb[0].mxu0
    %v7570 = vadd.f32 0.0, %v7569
    %v7571 = vpop.f32.mrb[0].mxu0
    %v7572 = vpop.f32.mrb[0].mxu0
    %v7573 = vadd.f32 0.0, %v7572
    %v7574 = vpop.f32.mrb[0].mxu0
    %7575 = vmatprep.mubr.bf16.mxu0 0
    %7576 = vmatmul.mubr.bf16.gmra.mrb[0].mxu0 %v7514
    %v7577 = vpop.f32.mrb[0].mxu0
    %v7578 = vadd.f32 0.0, %v7577
    %v7579 = vpop.f32.mrb[0].mxu0
    %v7580 = vpop.f32.mrb[0].mxu0
    %v7581 = vadd.f32 0.0, %v7580
    %v7582 = vpop.f32.mrb[0].mxu0
    %7583 = vdwg.mxu0
    %v7585 = vsel %vm5157, %v7239, 0
    %v7588 = vsel %vm5157, %v7240, 0
    %v7591 = vsel %vm5157, %v7241, 0
    %v7594 = vsel %vm5157, %v7242, 0
    %v7597 = vsel %vm7275, %v7259, 0
    %7599 = vmatprep.subr.bf16.mxu0 0
    %7600 = vmatpush1.bf16.msra.mxu0 %v7597
    %7601 = vmatprep.subr.bf16.mxu0 0
    %7602 = vmatpush1.bf16.msra.mxu0 0
    %7603 = vmatprep.subr.bf16.mxu0 0
    %7604 = vmatpush1.bf16.msra.mxu0 0
    %7605 = vmatprep.subr.bf16.mxu0 0
    %7606 = vmatpush1.bf16.msra.mxu0 0
    %7607 = vmatprep.subr.bf16.mxu0 0
    %7608 = vmatpush1.bf16.msra.mxu0 0
    %7609 = vmatprep.subr.bf16.mxu0 0
    %7610 = vmatpush1.bf16.msra.mxu0 0
    %7611 = vmatprep.subr.bf16.mxu0 0
    %7612 = vmatpush1.bf16.msra.mxu0 0
    %7613 = vmatprep.subr.bf16.mxu0 0
    %7614 = vmatpush1.bf16.msra.mxu0 0
    %7615 = vmatprep.subr.bf16.mxu0 0
    %7616 = vmatpush1.bf16.msra.mxu0 0
    %7617 = vmatprep.subr.bf16.mxu0 0
    %7618 = vmatpush1.bf16.msra.mxu0 0
    %7619 = vmatprep.subr.bf16.mxu0 0
    %7620 = vmatpush1.bf16.msra.mxu0 0
    %7621 = vmatprep.subr.bf16.mxu0 0
    %7622 = vmatpush1.bf16.msra.mxu0 0
    %7623 = vmatprep.subr.bf16.mxu0 0
    %7624 = vmatpush1.bf16.msra.mxu0 0
    %7625 = vmatprep.subr.bf16.mxu0 0
    %7626 = vmatpush1.bf16.msra.mxu0 0
    %7627 = vmatprep.subr.bf16.mxu0 0
    %7628 = vmatpush1.bf16.msra.mxu0 0
    %7629 = vmatprep.subr.bf16.mxu0 0
    %7630 = vmatpush1.bf16.msra.mxu0 0
    %7631 = vmatprep.mubr.bf16.mxu0 0
    %7632 = vmatmul.mubr.bf16.gmra.mrb[0].mxu0 %v7585
    %v7633 = vpop.f32.mrb[0].mxu0
    %v7634 = vadd.f32 0.0, %v7633
    %v7635 = vpop.f32.mrb[0].mxu0
    %v7636 = vpop.f32.mrb[0].mxu0
    %v7637 = vadd.f32 0.0, %v7636
    %v7638 = vpop.f32.mrb[0].mxu0
    %7639 = vmatprep.mubr.bf16.mxu0 0
    %7640 = vmatmul.mubr.bf16.gmra.mrb[0].mxu0 %v7588
    %v7641 = vpop.f32.mrb[0].mxu0
    %v7642 = vadd.f32 0.0, %v7641
    %v7643 = vpop.f32.mrb[0].mxu0
    %v7644 = vpop.f32.mrb[0].mxu0
    %v7645 = vadd.f32 0.0, %v7644
    %v7646 = vpop.f32.mrb[0].mxu0
    %7647 = vmatprep.mubr.bf16.mxu0 0
    %7648 = vmatmul.mubr.bf16.gmra.mrb[0].mxu0 %v7591
    %v7649 = vpop.f32.mrb[0].mxu0
    %v7650 = vadd.f32 0.0, %v7649
    %v7651 = vpop.f32.mrb[0].mxu0
    %v7652 = vpop.f32.mrb[0].mxu0
    %v7653 = vadd.f32 0.0, %v7652
    %v7654 = vpop.f32.mrb[0].mxu0
    %7655 = vmatprep.mubr.bf16.mxu0 0
    %7656 = vmatmul.mubr.bf16.gmra.mrb[0].mxu0 %v7594
    %v7657 = vpop.f32.mrb[0].mxu0
    %v7658 = vadd.f32 0.0, %v7657
    %v7659 = vpop.f32.mrb[0].mxu0
    %v7660 = vpop.f32.mrb[0].mxu0
    %v7661 = vadd.f32 0.0, %v7660
    %v7662 = vpop.f32.mrb[0].mxu0
    %7663 = vdwg.mxu0
    %v7665 = vsel %vm5157, %v7243, 0
    %v7668 = vsel %vm5157, %v7244, 0
    %v7671 = vsel %vm5157, %v7245, 0
    %v7674 = vsel %vm5157, %v7246, 0
    %v7677 = vsel %vm7275, %v7260, 0
    %7679 = vmatprep.subr.bf16.mxu0 0
    %7680 = vmatpush1.bf16.msra.mxu0 %v7677
    %7681 = vmatprep.subr.bf16.mxu0 0
    %7682 = vmatpush1.bf16.msra.mxu0 0
    %7683 = vmatprep.subr.bf16.mxu0 0
    %7684 = vmatpush1.bf16.msra.mxu0 0
    %7685 = vmatprep.subr.bf16.mxu0 0
    %7686 = vmatpush1.bf16.msra.mxu0 0
    %7687 = vmatprep.subr.bf16.mxu0 0
    %7688 = vmatpush1.bf16.msra.mxu0 0
    %7689 = vmatprep.subr.bf16.mxu0 0
    %7690 = vmatpush1.bf16.msra.mxu0 0
    %7691 = vmatprep.subr.bf16.mxu0 0
    %7692 = vmatpush1.bf16.msra.mxu0 0
    %7693 = vmatprep.subr.bf16.mxu0 0
    %7694 = vmatpush1.bf16.msra.mxu0 0
    %7695 = vmatprep.subr.bf16.mxu0 0
    %7696 = vmatpush1.bf16.msra.mxu0 0
    %7697 = vmatprep.subr.bf16.mxu0 0
    %7698 = vmatpush1.bf16.msra.mxu0 0
    %7699 = vmatprep.subr.bf16.mxu0 0
    %7700 = vmatpush1.bf16.msra.mxu0 0
    %7701 = vmatprep.subr.bf16.mxu0 0
    %7702 = vmatpush1.bf16.msra.mxu0 0
    %7703 = vmatprep.subr.bf16.mxu0 0
    %7704 = vmatpush1.bf16.msra.mxu0 0
    %7705 = vmatprep.subr.bf16.mxu0 0
    %7706 = vmatpush1.bf16.msra.mxu0 0
    %7707 = vmatprep.subr.bf16.mxu0 0
    %7708 = vmatpush1.bf16.msra.mxu0 0
    %7709 = vmatprep.subr.bf16.mxu0 0
    %7710 = vmatpush1.bf16.msra.mxu0 0
    %7711 = vmatprep.mubr.bf16.mxu0 0
    %7712 = vmatmul.mubr.bf16.gmra.mrb[0].mxu0 %v7665
    %v7713 = vpop.f32.mrb[0].mxu0
    %v7714 = vadd.f32 0.0, %v7713
    %v7715 = vpop.f32.mrb[0].mxu0
    %v7716 = vpop.f32.mrb[0].mxu0
    %v7717 = vadd.f32 0.0, %v7716
    %v7718 = vpop.f32.mrb[0].mxu0
    %7719 = vmatprep.mubr.bf16.mxu0 0
    %7720 = vmatmul.mubr.bf16.gmra.mrb[0].mxu0 %v7668
    %v7721 = vpop.f32.mrb[0].mxu0
    %v7722 = vadd.f32 0.0, %v7721
    %v7723 = vpop.f32.mrb[0].mxu0
    %v7724 = vpop.f32.mrb[0].mxu0
    %v7725 = vadd.f32 0.0, %v7724
    %v7726 = vpop.f32.mrb[0].mxu0
    %7727 = vmatprep.mubr.bf16.mxu0 0
    %7728 = vmatmul.mubr.bf16.gmra.mrb[0].mxu0 %v7671
    %v7729 = vpop.f32.mrb[0].mxu0
    %v7730 = vadd.f32 0.0, %v7729
    %v7731 = vpop.f32.mrb[0].mxu0
    %v7732 = vpop.f32.mrb[0].mxu0
    %v7733 = vadd.f32 0.0, %v7732
    %v7734 = vpop.f32.mrb[0].mxu0
    %7735 = vmatprep.mubr.bf16.mxu0 0
    %7736 = vmatmul.mubr.bf16.gmra.mrb[0].mxu0 %v7674
    %v7737 = vpop.f32.mrb[0].mxu0
    %v7738 = vadd.f32 0.0, %v7737
    %v7739 = vpop.f32.mrb[0].mxu0
    %v7740 = vpop.f32.mrb[0].mxu0
    %v7741 = vadd.f32 0.0, %v7740
    %v7742 = vpop.f32.mrb[0].mxu0
    %7743 = vdwg.mxu0
    %v7745 = vsel %vm5157, %v7247, 0
    %v7748 = vsel %vm5157, %v7248, 0
    %v7751 = vsel %vm5157, %v7249, 0
    %v7754 = vsel %vm5157, %v7250, 0
    %v7757 = vsel %vm7275, %v7261, 0
    %7759 = vmatprep.subr.bf16.mxu0 0
    %7760 = vmatpush1.bf16.msra.mxu0 %v7757
    %7761 = vmatprep.subr.bf16.mxu0 0
    %7762 = vmatpush1.bf16.msra.mxu0 0
    %7763 = vmatprep.subr.bf16.mxu0 0
    %7764 = vmatpush1.bf16.msra.mxu0 0
    %7765 = vmatprep.subr.bf16.mxu0 0
    %7766 = vmatpush1.bf16.msra.mxu0 0
    %7767 = vmatprep.subr.bf16.mxu0 0
    %7768 = vmatpush1.bf16.msra.mxu0 0
    %7769 = vmatprep.subr.bf16.mxu0 0
    %7770 = vmatpush1.bf16.msra.mxu0 0
    %7771 = vmatprep.subr.bf16.mxu0 0
    %7772 = vmatpush1.bf16.msra.mxu0 0
    %7773 = vmatprep.subr.bf16.mxu0 0
    %7774 = vmatpush1.bf16.msra.mxu0 0
    %7775 = vmatprep.subr.bf16.mxu0 0
    %7776 = vmatpush1.bf16.msra.mxu0 0
    %7777 = vmatprep.subr.bf16.mxu0 0
    %7778 = vmatpush1.bf16.msra.mxu0 0
    %7779 = vmatprep.subr.bf16.mxu0 0
    %7780 = vmatpush1.bf16.msra.mxu0 0
    %7781 = vmatprep.subr.bf16.mxu0 0
    %7782 = vmatpush1.bf16.msra.mxu0 0
    %7783 = vmatprep.subr.bf16.mxu0 0
    %7784 = vmatpush1.bf16.msra.mxu0 0
    %7785 = vmatprep.subr.bf16.mxu0 0
    %7786 = vmatpush1.bf16.msra.mxu0 0
    %7787 = vmatprep.subr.bf16.mxu0 0
    %7788 = vmatpush1.bf16.msra.mxu0 0
    %7789 = vmatprep.subr.bf16.mxu0 0
    %7790 = vmatpush1.bf16.msra.mxu0 0
    %7791 = vmatprep.mubr.bf16.mxu0 0
    %7792 = vmatmul.mubr.bf16.gmra.mrb[0].mxu0 %v7745
    %v7793 = vpop.f32.mrb[0].mxu0
    %v7794 = vadd.f32 0.0, %v7793
    %v7795 = vpop.f32.mrb[0].mxu0
    %v7796 = vpop.f32.mrb[0].mxu0
    %v7797 = vadd.f32 0.0, %v7796
    %v7798 = vpop.f32.mrb[0].mxu0
    %7799 = vmatprep.mubr.bf16.mxu0 0
    %7800 = vmatmul.mubr.bf16.gmra.mrb[0].mxu0 %v7748
    %v7801 = vpop.f32.mrb[0].mxu0
    %v7802 = vadd.f32 0.0, %v7801
    %v7803 = vpop.f32.mrb[0].mxu0
    %v7804 = vpop.f32.mrb[0].mxu0
    %v7805 = vadd.f32 0.0, %v7804
    %v7806 = vpop.f32.mrb[0].mxu0
    %7807 = vmatprep.mubr.bf16.mxu0 0
    %7808 = vmatmul.mubr.bf16.gmra.mrb[0].mxu0 %v7751
    %v7809 = vpop.f32.mrb[0].mxu0
    %v7810 = vadd.f32 0.0, %v7809
    %v7811 = vpop.f32.mrb[0].mxu0
    %v7812 = vpop.f32.mrb[0].mxu0
    %v7813 = vadd.f32 0.0, %v7812
    %v7814 = vpop.f32.mrb[0].mxu0
    %7815 = vmatprep.mubr.bf16.mxu0 0
    %7816 = vmatmul.mubr.bf16.gmra.mrb[0].mxu0 %v7754
    %v7817 = vpop.f32.mrb[0].mxu0
    %v7818 = vadd.f32 0.0, %v7817
    %v7819 = vpop.f32.mrb[0].mxu0
    %v7820 = vpop.f32.mrb[0].mxu0
    %v7821 = vadd.f32 0.0, %v7820
    %v7822 = vpop.f32.mrb[0].mxu0
    %7823 = vdwg.mxu0
    %v7825 = vsel %vm5157, %v7251, 0
    %v7828 = vsel %vm5157, %v7252, 0
    %v7831 = vsel %vm5157, %v7253, 0
    %v7834 = vsel %vm5157, %v7254, 0
    %v7837 = vsel %vm7275, %v7262, 0
    %7839 = vmatprep.subr.bf16.mxu0 0
    %7840 = vmatpush1.bf16.msra.mxu0 %v7837
    %7841 = vmatprep.subr.bf16.mxu0 0
    %7842 = vmatpush1.bf16.msra.mxu0 0
    %7843 = vmatprep.subr.bf16.mxu0 0
    %7844 = vmatpush1.bf16.msra.mxu0 0
    %7845 = vmatprep.subr.bf16.mxu0 0
    %7846 = vmatpush1.bf16.msra.mxu0 0
    %7847 = vmatprep.subr.bf16.mxu0 0
    %7848 = vmatpush1.bf16.msra.mxu0 0
    %7849 = vmatprep.subr.bf16.mxu0 0
    %7850 = vmatpush1.bf16.msra.mxu0 0
    %7851 = vmatprep.subr.bf16.mxu0 0
    %7852 = vmatpush1.bf16.msra.mxu0 0
    %7853 = vmatprep.subr.bf16.mxu0 0
    %7854 = vmatpush1.bf16.msra.mxu0 0
    %7855 = vmatprep.subr.bf16.mxu0 0
    %7856 = vmatpush1.bf16.msra.mxu0 0
    %7857 = vmatprep.subr.bf16.mxu0 0
    %7858 = vmatpush1.bf16.msra.mxu0 0
    %7859 = vmatprep.subr.bf16.mxu0 0
    %7860 = vmatpush1.bf16.msra.mxu0 0
    %7861 = vmatprep.subr.bf16.mxu0 0
    %7862 = vmatpush1.bf16.msra.mxu0 0
    %7863 = vmatprep.subr.bf16.mxu0 0
    %7864 = vmatpush1.bf16.msra.mxu0 0
    %7865 = vmatprep.subr.bf16.mxu0 0
    %7866 = vmatpush1.bf16.msra.mxu0 0
    %7867 = vmatprep.subr.bf16.mxu0 0
    %7868 = vmatpush1.bf16.msra.mxu0 0
    %7869 = vmatprep.subr.bf16.mxu0 0
    %7870 = vmatpush1.bf16.msra.mxu0 0
    %7871 = vmatprep.mubr.bf16.mxu0 0
    %7872 = vmatmul.mubr.bf16.gmra.mrb[0].mxu0 %v7825
    %v7873 = vpop.f32.mrb[0].mxu0
    %v7874 = vadd.f32 0.0, %v7873
    %v7875 = vpop.f32.mrb[0].mxu0
    %v7876 = vpop.f32.mrb[0].mxu0
    %v7877 = vadd.f32 0.0, %v7876
    %v7878 = vpop.f32.mrb[0].mxu0
    %7879 = vmatprep.mubr.bf16.mxu0 0
    %7880 = vmatmul.mubr.bf16.gmra.mrb[0].mxu0 %v7828
    %v7881 = vpop.f32.mrb[0].mxu0
    %v7882 = vadd.f32 0.0, %v7881
    %v7883 = vpop.f32.mrb[0].mxu0
    %v7884 = vpop.f32.mrb[0].mxu0
    %v7885 = vadd.f32 0.0, %v7884
    %v7886 = vpop.f32.mrb[0].mxu0
    %7887 = vmatprep.mubr.bf16.mxu0 0
    %7888 = vmatmul.mubr.bf16.gmra.mrb[0].mxu0 %v7831
    %v7889 = vpop.f32.mrb[0].mxu0
    %v7890 = vadd.f32 0.0, %v7889
    %v7891 = vpop.f32.mrb[0].mxu0
    %v7892 = vpop.f32.mrb[0].mxu0
    %v7893 = vadd.f32 0.0, %v7892
    %v7894 = vpop.f32.mrb[0].mxu0
    %7895 = vmatprep.mubr.bf16.mxu0 0
    %7896 = vmatmul.mubr.bf16.gmra.mrb[0].mxu0 %v7834
    %v7897 = vpop.f32.mrb[0].mxu0
    %v7898 = vadd.f32 0.0, %v7897
    %v7899 = vpop.f32.mrb[0].mxu0
    %v7900 = vpop.f32.mrb[0].mxu0
    %v7901 = vadd.f32 0.0, %v7900
    %v7902 = vpop.f32.mrb[0].mxu0
    %7903 = vdwg.mxu0
    %v7904 = vsel %vm101, %v7314, 0.0
    %v7905 = vsel %vm101, %v7394, 0.0
    %v7906 = vadd.f32 %v7904, %v7905
    %v7907 = vsel %vm101, %v7474, 0.0
    %v7908 = vadd.f32 %v7906, %v7907
    %v7909 = vsel %vm101, %v7554, 0.0
    %v7910 = vadd.f32 %v7908, %v7909
    %v7911 = vsel %vm101, %v7317, 0.0
    %v7912 = vsel %vm101, %v7397, 0.0
    %v7913 = vadd.f32 %v7911, %v7912
    %v7914 = vsel %vm101, %v7477, 0.0
    %v7915 = vadd.f32 %v7913, %v7914
    %v7916 = vsel %vm101, %v7557, 0.0
    %v7917 = vadd.f32 %v7915, %v7916
    %v7918 = vsel %vm101, %v7322, 0.0
    %v7919 = vsel %vm101, %v7402, 0.0
    %v7920 = vadd.f32 %v7918, %v7919
    %v7921 = vsel %vm101, %v7482, 0.0
    %v7922 = vadd.f32 %v7920, %v7921
    %v7923 = vsel %vm101, %v7562, 0.0
    %v7924 = vadd.f32 %v7922, %v7923
    %v7925 = vsel %vm101, %v7325, 0.0
    %v7926 = vsel %vm101, %v7405, 0.0
    %v7927 = vadd.f32 %v7925, %v7926
    %v7928 = vsel %vm101, %v7485, 0.0
    %v7929 = vadd.f32 %v7927, %v7928
    %v7930 = vsel %vm101, %v7565, 0.0
    %v7931 = vadd.f32 %v7929, %v7930
    %v7932 = vsel %vm101, %v7330, 0.0
    %v7933 = vsel %vm101, %v7410, 0.0
    %v7934 = vadd.f32 %v7932, %v7933
    %v7935 = vsel %vm101, %v7490, 0.0
    %v7936 = vadd.f32 %v7934, %v7935
    %v7937 = vsel %vm101, %v7570, 0.0
    %v7938 = vadd.f32 %v7936, %v7937
    %v7939 = vsel %vm101, %v7333, 0.0
    %v7940 = vsel %vm101, %v7413, 0.0
    %v7941 = vadd.f32 %v7939, %v7940
    %v7942 = vsel %vm101, %v7493, 0.0
    %v7943 = vadd.f32 %v7941, %v7942
    %v7944 = vsel %vm101, %v7573, 0.0
    %v7945 = vadd.f32 %v7943, %v7944
    %v7946 = vsel %vm101, %v7338, 0.0
    %v7947 = vsel %vm101, %v7418, 0.0
    %v7948 = vadd.f32 %v7946, %v7947
    %v7949 = vsel %vm101, %v7498, 0.0
    %v7950 = vadd.f32 %v7948, %v7949
    %v7951 = vsel %vm101, %v7578, 0.0
    %v7952 = vadd.f32 %v7950, %v7951
    %v7953 = vsel %vm101, %v7341, 0.0
    %v7954 = vsel %vm101, %v7421, 0.0
    %v7955 = vadd.f32 %v7953, %v7954
    %v7956 = vsel %vm101, %v7501, 0.0
    %v7957 = vadd.f32 %v7955, %v7956
    %v7958 = vsel %vm101, %v7581, 0.0
    %v7959 = vadd.f32 %v7957, %v7958
    %v7960 = vsel %vm101, %v7634, 0.0
    %v7961 = vsel %vm101, %v7714, 0.0
    %v7962 = vadd.f32 %v7960, %v7961
    %v7963 = vsel %vm101, %v7794, 0.0
    %v7964 = vadd.f32 %v7962, %v7963
    %v7965 = vsel %vm101, %v7874, 0.0
    %v7966 = vadd.f32 %v7964, %v7965
    %v7967 = vsel %vm101, %v7637, 0.0
    %v7968 = vsel %vm101, %v7717, 0.0
    %v7969 = vadd.f32 %v7967, %v7968
    %v7970 = vsel %vm101, %v7797, 0.0
    %v7971 = vadd.f32 %v7969, %v7970
    %v7972 = vsel %vm101, %v7877, 0.0
    %v7973 = vadd.f32 %v7971, %v7972
    %v7974 = vsel %vm101, %v7642, 0.0
    %v7975 = vsel %vm101, %v7722, 0.0
    %v7976 = vadd.f32 %v7974, %v7975
    %v7977 = vsel %vm101, %v7802, 0.0
    %v7978 = vadd.f32 %v7976, %v7977
    %v7979 = vsel %vm101, %v7882, 0.0
    %v7980 = vadd.f32 %v7978, %v7979
    %v7981 = vsel %vm101, %v7645, 0.0
    %v7982 = vsel %vm101, %v7725, 0.0
    %v7983 = vadd.f32 %v7981, %v7982
    %v7984 = vsel %vm101, %v7805, 0.0
    %v7985 = vadd.f32 %v7983, %v7984
    %v7986 = vsel %vm101, %v7885, 0.0
    %v7987 = vadd.f32 %v7985, %v7986
    %v7988 = vsel %vm101, %v7650, 0.0
    %v7989 = vsel %vm101, %v7730, 0.0
    %v7990 = vadd.f32 %v7988, %v7989
    %v7991 = vsel %vm101, %v7810, 0.0
    %v7992 = vadd.f32 %v7990, %v7991
    %v7993 = vsel %vm101, %v7890, 0.0
    %v7994 = vadd.f32 %v7992, %v7993
    %v7995 = vsel %vm101, %v7653, 0.0
    %v7996 = vsel %vm101, %v7733, 0.0
    %v7997 = vadd.f32 %v7995, %v7996
    %v7998 = vsel %vm101, %v7813, 0.0
    %v7999 = vadd.f32 %v7997, %v7998
    %v8000 = vsel %vm101, %v7893, 0.0
    %v8001 = vadd.f32 %v7999, %v8000
    %v8002 = vsel %vm101, %v7658, 0.0
    %v8003 = vsel %vm101, %v7738, 0.0
    %v8004 = vadd.f32 %v8002, %v8003
    %v8005 = vsel %vm101, %v7818, 0.0
    %v8006 = vadd.f32 %v8004, %v8005
    %v8007 = vsel %vm101, %v7898, 0.0
    %v8008 = vadd.f32 %v8006, %v8007
    %v8009 = vsel %vm101, %v7661, 0.0
    %v8010 = vsel %vm101, %v7741, 0.0
    %v8011 = vadd.f32 %v8009, %v8010
    %v8012 = vsel %vm101, %v7821, 0.0
    %v8013 = vadd.f32 %v8011, %v8012
    %v8014 = vsel %vm101, %v7901, 0.0
    %v8015 = vadd.f32 %v8013, %v8014
    %v8016 = vld [vmem:[%s4] sm:$0x1]
    %v8018 = vlaneseq
    %v8019 = vshrl.u32 %v8018, 7
    %v8020 = vsub.s32 0, %v8019
    %v8021 = vrot.slane %v8016, %v8020
    %v8023 = vadd.f32 %v7910, %v8021
    %v8024 = vadd.f32 %v7917, %v8021
    %v8025 = vadd.f32 %v7924, %v8021
    %v8026 = vadd.f32 %v7931, %v8021
    %v8027 = vadd.f32 %v7938, %v8021
    %v8028 = vadd.f32 %v7945, %v8021
    %v8029 = vadd.f32 %v7952, %v8021
    %v8030 = vadd.f32 %v7959, %v8021
    %v8031 = vadd.f32 %v7966, %v8021
    %v8032 = vadd.f32 %v7973, %v8021
    %v8033 = vadd.f32 %v7980, %v8021
    %v8034 = vadd.f32 %v7987, %v8021
    %v8035 = vadd.f32 %v7994, %v8021
    %v8036 = vadd.f32 %v8001, %v8021
    %v8037 = vadd.f32 %v8008, %v8021
    %v8038 = vadd.f32 %v8015, %v8021
    %v8039 = vcombine.high %v8023, 0.0
    %v8041 = vunpack.c.l.s4 1983009808
    %v8042 = vunpack.c.0.s8 %v8041
    %v8043 = vlaneseq
    %v8044 = vshrl.u32 %v8043, 7
    %v8045 = vsub.s32 %v8042, %v8044
    %v8046 = vrot.slane %v8023, %v8045
    %v8048 = vunpack.c.l.s4 1983009808
    %v8049 = vunpack.c.0.s8 %v8048
    %v8050 = vlaneseq
    %v8051 = vshrl.u32 %v8050, 7
    %v8052 = vsub.s32 %v8049, %v8051
    %v8053 = vrot.slane %v8039, %v8052
    %v8054 = vcombine.high %v8031, 0.0
    %v8056 = vunpack.c.l.s4 1983009808
    %v8057 = vunpack.c.0.s8 %v8056
    %v8058 = vlaneseq
    %v8059 = vshrl.u32 %v8058, 7
    %v8060 = vsub.s32 %v8057, %v8059
    %v8061 = vrot.slane %v8031, %v8060
    %v8063 = vunpack.c.l.s4 1983009808
    %v8064 = vunpack.c.0.s8 %v8063
    %v8065 = vlaneseq
    %v8066 = vshrl.u32 %v8065, 7
    %v8067 = vsub.s32 %v8064, %v8066
    %v8068 = vrot.slane %v8054, %v8067
    %v8069 = vcombine.low %v8046, %v8061
    %v8070 = vcombine.high %v8046, %v8061
    %v8072 = vunpack.c.l.s4 1934713408
    %v8073 = vunpack.c.0.s8 %v8072
    %v8074 = vlaneseq
    %v8075 = vshrl.u32 %v8074, 7
    %v8076 = vsub.s32 %v8073, %v8075
    %v8077 = vrot.slane %v8069, %v8076
    %v8079 = vunpack.c.l.s4 1934713408
    %v8080 = vunpack.c.0.s8 %v8079
    %v8081 = vlaneseq
    %v8082 = vshrl.u32 %v8081, 7
    %v8083 = vsub.s32 %v8080, %v8082
    %v8084 = vrot.slane %v8070, %v8083
    %v8085 = vcombine.low %v8053, %v8068
    %v8086 = vcombine.high %v8053, %v8068
    %v8088 = vunpack.c.l.s4 1934713408
    %v8089 = vunpack.c.0.s8 %v8088
    %v8090 = vlaneseq
    %v8091 = vshrl.u32 %v8090, 7
    %v8092 = vsub.s32 %v8089, %v8091
    %v8093 = vrot.slane %v8085, %v8092
    %v8095 = vunpack.c.l.s4 1934713408
    %v8096 = vunpack.c.0.s8 %v8095
    %v8097 = vlaneseq
    %v8098 = vshrl.u32 %v8097, 7
    %v8099 = vsub.s32 %v8096, %v8098
    %v8100 = vrot.slane %v8086, %v8099
    %v8101 = vcombine.high %v8077, 0.0
    %v8102 = vcombine.high %v8084, 0.0
    %v8103 = vcombine.high %v8093, 0.0
    %v8104 = vcombine.high %v8100, 0.0
    %v8105 = vcombine.high %v8024, 0.0
    %v8107 = vunpack.c.l.s4 1983009808
    %v8108 = vunpack.c.0.s8 %v8107
    %v8109 = vlaneseq
    %v8110 = vshrl.u32 %v8109, 7
    %v8111 = vsub.s32 %v8108, %v8110
    %v8112 = vrot.slane %v8024, %v8111
    %v8114 = vunpack.c.l.s4 1983009808
    %v8115 = vunpack.c.0.s8 %v8114
    %v8116 = vlaneseq
    %v8117 = vshrl.u32 %v8116, 7
    %v8118 = vsub.s32 %v8115, %v8117
    %v8119 = vrot.slane %v8105, %v8118
    %v8120 = vcombine.high %v8032, 0.0
    %v8122 = vunpack.c.l.s4 1983009808
    %v8123 = vunpack.c.0.s8 %v8122
    %v8124 = vlaneseq
    %v8125 = vshrl.u32 %v8124, 7
    %v8126 = vsub.s32 %v8123, %v8125
    %v8127 = vrot.slane %v8032, %v8126
    %v8129 = vunpack.c.l.s4 1983009808
    %v8130 = vunpack.c.0.s8 %v8129
    %v8131 = vlaneseq
    %v8132 = vshrl.u32 %v8131, 7
    %v8133 = vsub.s32 %v8130, %v8132
    %v8134 = vrot.slane %v8120, %v8133
    %v8135 = vcombine.low %v8112, %v8127
    %v8136 = vcombine.high %v8112, %v8127
    %v8138 = vunpack.c.l.s4 1934713408
    %v8139 = vunpack.c.0.s8 %v8138
    %v8140 = vlaneseq
    %v8141 = vshrl.u32 %v8140, 7
    %v8142 = vsub.s32 %v8139, %v8141
    %v8143 = vrot.slane %v8135, %v8142
    %v8145 = vunpack.c.l.s4 1934713408
    %v8146 = vunpack.c.0.s8 %v8145
    %v8147 = vlaneseq
    %v8148 = vshrl.u32 %v8147, 7
    %v8149 = vsub.s32 %v8146, %v8148
    %v8150 = vrot.slane %v8136, %v8149
    %v8151 = vcombine.low %v8119, %v8134
    %v8152 = vcombine.high %v8119, %v8134
    %v8154 = vunpack.c.l.s4 1934713408
    %v8155 = vunpack.c.0.s8 %v8154
    %v8156 = vlaneseq
    %v8157 = vshrl.u32 %v8156, 7
    %v8158 = vsub.s32 %v8155, %v8157
    %v8159 = vrot.slane %v8151, %v8158
    %v8161 = vunpack.c.l.s4 1934713408
    %v8162 = vunpack.c.0.s8 %v8161
    %v8163 = vlaneseq
    %v8164 = vshrl.u32 %v8163, 7
    %v8165 = vsub.s32 %v8162, %v8164
    %v8166 = vrot.slane %v8152, %v8165
    %v8167 = vcombine.high %v8143, 0.0
    %v8168 = vcombine.high %v8150, 0.0
    %v8169 = vcombine.high %v8159, 0.0
    %v8170 = vcombine.high %v8166, 0.0
    %v8171 = vcombine.high %v8025, 0.0
    %v8173 = vunpack.c.l.s4 1983009808
    %v8174 = vunpack.c.0.s8 %v8173
    %v8175 = vlaneseq
    %v8176 = vshrl.u32 %v8175, 7
    %v8177 = vsub.s32 %v8174, %v8176
    %v8178 = vrot.slane %v8025, %v8177
    %v8180 = vunpack.c.l.s4 1983009808
    %v8181 = vunpack.c.0.s8 %v8180
    %v8182 = vlaneseq
    %v8183 = vshrl.u32 %v8182, 7
    %v8184 = vsub.s32 %v8181, %v8183
    %v8185 = vrot.slane %v8171, %v8184
    %v8186 = vcombine.high %v8033, 0.0
    %v8188 = vunpack.c.l.s4 1983009808
    %v8189 = vunpack.c.0.s8 %v8188
    %v8190 = vlaneseq
    %v8191 = vshrl.u32 %v8190, 7
    %v8192 = vsub.s32 %v8189, %v8191
    %v8193 = vrot.slane %v8033, %v8192
    %v8195 = vunpack.c.l.s4 1983009808
    %v8196 = vunpack.c.0.s8 %v8195
    %v8197 = vlaneseq
    %v8198 = vshrl.u32 %v8197, 7
    %v8199 = vsub.s32 %v8196, %v8198
    %v8200 = vrot.slane %v8186, %v8199
    %v8201 = vcombine.low %v8178, %v8193
    %v8202 = vcombine.high %v8178, %v8193
    %v8204 = vunpack.c.l.s4 1934713408
    %v8205 = vunpack.c.0.s8 %v8204
    %v8206 = vlaneseq
    %v8207 = vshrl.u32 %v8206, 7
    %v8208 = vsub.s32 %v8205, %v8207
    %v8209 = vrot.slane %v8201, %v8208
    %v8211 = vunpack.c.l.s4 1934713408
    %v8212 = vunpack.c.0.s8 %v8211
    %v8213 = vlaneseq
    %v8214 = vshrl.u32 %v8213, 7
    %v8215 = vsub.s32 %v8212, %v8214
    %v8216 = vrot.slane %v8202, %v8215
    %v8217 = vcombine.low %v8185, %v8200
    %v8218 = vcombine.high %v8185, %v8200
    %v8220 = vunpack.c.l.s4 1934713408
    %v8221 = vunpack.c.0.s8 %v8220
    %v8222 = vlaneseq
    %v8223 = vshrl.u32 %v8222, 7
    %v8224 = vsub.s32 %v8221, %v8223
    %v8225 = vrot.slane %v8217, %v8224
    %v8227 = vunpack.c.l.s4 1934713408
    %v8228 = vunpack.c.0.s8 %v8227
    %v8229 = vlaneseq
    %v8230 = vshrl.u32 %v8229, 7
    %v8231 = vsub.s32 %v8228, %v8230
    %v8232 = vrot.slane %v8218, %v8231
    %v8233 = vcombine.high %v8209, 0.0
    %v8234 = vcombine.high %v8216, 0.0
    %v8235 = vcombine.high %v8225, 0.0
    %v8236 = vcombine.high %v8232, 0.0
    %v8237 = vcombine.high %v8026, 0.0
    %v8239 = vunpack.c.l.s4 1983009808
    %v8240 = vunpack.c.0.s8 %v8239
    %v8241 = vlaneseq
    %v8242 = vshrl.u32 %v8241, 7
    %v8243 = vsub.s32 %v8240, %v8242
    %v8244 = vrot.slane %v8026, %v8243
    %v8246 = vunpack.c.l.s4 1983009808
    %v8247 = vunpack.c.0.s8 %v8246
    %v8248 = vlaneseq
    %v8249 = vshrl.u32 %v8248, 7
    %v8250 = vsub.s32 %v8247, %v8249
    %v8251 = vrot.slane %v8237, %v8250
    %v8252 = vcombine.high %v8034, 0.0
    %v8254 = vunpack.c.l.s4 1983009808
    %v8255 = vunpack.c.0.s8 %v8254
    %v8256 = vlaneseq
    %v8257 = vshrl.u32 %v8256, 7
    %v8258 = vsub.s32 %v8255, %v8257
    %v8259 = vrot.slane %v8034, %v8258
    %v8261 = vunpack.c.l.s4 1983009808
    %v8262 = vunpack.c.0.s8 %v8261
    %v8263 = vlaneseq
    %v8264 = vshrl.u32 %v8263, 7
    %v8265 = vsub.s32 %v8262, %v8264
    %v8266 = vrot.slane %v8252, %v8265
    %v8267 = vcombine.low %v8244, %v8259
    %v8268 = vcombine.high %v8244, %v8259
    %v8270 = vunpack.c.l.s4 1934713408
    %v8271 = vunpack.c.0.s8 %v8270
    %v8272 = vlaneseq
    %v8273 = vshrl.u32 %v8272, 7
    %v8274 = vsub.s32 %v8271, %v8273
    %v8275 = vrot.slane %v8267, %v8274
    %v8277 = vunpack.c.l.s4 1934713408
    %v8278 = vunpack.c.0.s8 %v8277
    %v8279 = vlaneseq
    %v8280 = vshrl.u32 %v8279, 7
    %v8281 = vsub.s32 %v8278, %v8280
    %v8282 = vrot.slane %v8268, %v8281
    %v8283 = vcombine.low %v8251, %v8266
    %v8284 = vcombine.high %v8251, %v8266
    %v8286 = vunpack.c.l.s4 1934713408
    %v8287 = vunpack.c.0.s8 %v8286
    %v8288 = vlaneseq
    %v8289 = vshrl.u32 %v8288, 7
    %v8290 = vsub.s32 %v8287, %v8289
    %v8291 = vrot.slane %v8283, %v8290
    %v8293 = vunpack.c.l.s4 1934713408
    %v8294 = vunpack.c.0.s8 %v8293
    %v8295 = vlaneseq
    %v8296 = vshrl.u32 %v8295, 7
    %v8297 = vsub.s32 %v8294, %v8296
    %v8298 = vrot.slane %v8284, %v8297
    %v8299 = vcombine.high %v8275, 0.0
    %v8300 = vcombine.high %v8282, 0.0
    %v8301 = vcombine.high %v8291, 0.0
    %v8302 = vcombine.high %v8298, 0.0
    %v8303 = vcombine.high %v8027, 0.0
    %v8305 = vunpack.c.l.s4 1983009808
    %v8306 = vunpack.c.0.s8 %v8305
    %v8307 = vlaneseq
    %v8308 = vshrl.u32 %v8307, 7
    %v8309 = vsub.s32 %v8306, %v8308
    %v8310 = vrot.slane %v8027, %v8309
    %v8312 = vunpack.c.l.s4 1983009808
    %v8313 = vunpack.c.0.s8 %v8312
    %v8314 = vlaneseq
    %v8315 = vshrl.u32 %v8314, 7
    %v8316 = vsub.s32 %v8313, %v8315
    %v8317 = vrot.slane %v8303, %v8316
    %v8318 = vcombine.high %v8035, 0.0
    %v8320 = vunpack.c.l.s4 1983009808
    %v8321 = vunpack.c.0.s8 %v8320
    %v8322 = vlaneseq
    %v8323 = vshrl.u32 %v8322, 7
    %v8324 = vsub.s32 %v8321, %v8323
    %v8325 = vrot.slane %v8035, %v8324
    %v8327 = vunpack.c.l.s4 1983009808
    %v8328 = vunpack.c.0.s8 %v8327
    %v8329 = vlaneseq
    %v8330 = vshrl.u32 %v8329, 7
    %v8331 = vsub.s32 %v8328, %v8330
    %v8332 = vrot.slane %v8318, %v8331
    %v8333 = vcombine.low %v8310, %v8325
    %v8334 = vcombine.high %v8310, %v8325
    %v8336 = vunpack.c.l.s4 1934713408
    %v8337 = vunpack.c.0.s8 %v8336
    %v8338 = vlaneseq
    %v8339 = vshrl.u32 %v8338, 7
    %v8340 = vsub.s32 %v8337, %v8339
    %v8341 = vrot.slane %v8333, %v8340
    %v8343 = vunpack.c.l.s4 1934713408
    %v8344 = vunpack.c.0.s8 %v8343
    %v8345 = vlaneseq
    %v8346 = vshrl.u32 %v8345, 7
    %v8347 = vsub.s32 %v8344, %v8346
    %v8348 = vrot.slane %v8334, %v8347
    %v8349 = vcombine.low %v8317, %v8332
    %v8350 = vcombine.high %v8317, %v8332
    %v8352 = vunpack.c.l.s4 1934713408
    %v8353 = vunpack.c.0.s8 %v8352
    %v8354 = vlaneseq
    %v8355 = vshrl.u32 %v8354, 7
    %v8356 = vsub.s32 %v8353, %v8355
    %v8357 = vrot.slane %v8349, %v8356
    %v8359 = vunpack.c.l.s4 1934713408
    %v8360 = vunpack.c.0.s8 %v8359
    %v8361 = vlaneseq
    %v8362 = vshrl.u32 %v8361, 7
    %v8363 = vsub.s32 %v8360, %v8362
    %v8364 = vrot.slane %v8350, %v8363
    %v8365 = vcombine.high %v8341, 0.0
    %v8366 = vcombine.high %v8348, 0.0
    %v8367 = vcombine.high %v8357, 0.0
    %v8368 = vcombine.high %v8364, 0.0
    %v8369 = vcombine.high %v8028, 0.0
    %v8371 = vunpack.c.l.s4 1983009808
    %v8372 = vunpack.c.0.s8 %v8371
    %v8373 = vlaneseq
    %v8374 = vshrl.u32 %v8373, 7
    %v8375 = vsub.s32 %v8372, %v8374
    %v8376 = vrot.slane %v8028, %v8375
    %v8378 = vunpack.c.l.s4 1983009808
    %v8379 = vunpack.c.0.s8 %v8378
    %v8380 = vlaneseq
    %v8381 = vshrl.u32 %v8380, 7
    %v8382 = vsub.s32 %v8379, %v8381
    %v8383 = vrot.slane %v8369, %v8382
    %v8384 = vcombine.high %v8036, 0.0
    %v8386 = vunpack.c.l.s4 1983009808
    %v8387 = vunpack.c.0.s8 %v8386
    %v8388 = vlaneseq
    %v8389 = vshrl.u32 %v8388, 7
    %v8390 = vsub.s32 %v8387, %v8389
    %v8391 = vrot.slane %v8036, %v8390
    %v8393 = vunpack.c.l.s4 1983009808
    %v8394 = vunpack.c.0.s8 %v8393
    %v8395 = vlaneseq
    %v8396 = vshrl.u32 %v8395, 7
    %v8397 = vsub.s32 %v8394, %v8396
    %v8398 = vrot.slane %v8384, %v8397
    %v8399 = vcombine.low %v8376, %v8391
    %v8400 = vcombine.high %v8376, %v8391
    %v8402 = vunpack.c.l.s4 1934713408
    %v8403 = vunpack.c.0.s8 %v8402
    %v8404 = vlaneseq
    %v8405 = vshrl.u32 %v8404, 7
    %v8406 = vsub.s32 %v8403, %v8405
    %v8407 = vrot.slane %v8399, %v8406
    %v8409 = vunpack.c.l.s4 1934713408
    %v8410 = vunpack.c.0.s8 %v8409
    %v8411 = vlaneseq
    %v8412 = vshrl.u32 %v8411, 7
    %v8413 = vsub.s32 %v8410, %v8412
    %v8414 = vrot.slane %v8400, %v8413
    %v8415 = vcombine.low %v8383, %v8398
    %v8416 = vcombine.high %v8383, %v8398
    %v8418 = vunpack.c.l.s4 1934713408
    %v8419 = vunpack.c.0.s8 %v8418
    %v8420 = vlaneseq
    %v8421 = vshrl.u32 %v8420, 7
    %v8422 = vsub.s32 %v8419, %v8421
    %v8423 = vrot.slane %v8415, %v8422
    %v8425 = vunpack.c.l.s4 1934713408
    %v8426 = vunpack.c.0.s8 %v8425
    %v8427 = vlaneseq
    %v8428 = vshrl.u32 %v8427, 7
    %v8429 = vsub.s32 %v8426, %v8428
    %v8430 = vrot.slane %v8416, %v8429
    %v8431 = vcombine.high %v8407, 0.0
    %v8432 = vcombine.high %v8414, 0.0
    %v8433 = vcombine.high %v8423, 0.0
    %v8434 = vcombine.high %v8430, 0.0
    %v8435 = vcombine.high %v8029, 0.0
    %v8437 = vunpack.c.l.s4 1983009808
    %v8438 = vunpack.c.0.s8 %v8437
    %v8439 = vlaneseq
    %v8440 = vshrl.u32 %v8439, 7
    %v8441 = vsub.s32 %v8438, %v8440
    %v8442 = vrot.slane %v8029, %v8441
    %v8444 = vunpack.c.l.s4 1983009808
    %v8445 = vunpack.c.0.s8 %v8444
    %v8446 = vlaneseq
    %v8447 = vshrl.u32 %v8446, 7
    %v8448 = vsub.s32 %v8445, %v8447
    %v8449 = vrot.slane %v8435, %v8448
    %v8450 = vcombine.high %v8037, 0.0
    %v8452 = vunpack.c.l.s4 1983009808
    %v8453 = vunpack.c.0.s8 %v8452
    %v8454 = vlaneseq
    %v8455 = vshrl.u32 %v8454, 7
    %v8456 = vsub.s32 %v8453, %v8455
    %v8457 = vrot.slane %v8037, %v8456
    %v8459 = vunpack.c.l.s4 1983009808
    %v8460 = vunpack.c.0.s8 %v8459
    %v8461 = vlaneseq
    %v8462 = vshrl.u32 %v8461, 7
    %v8463 = vsub.s32 %v8460, %v8462
    %v8464 = vrot.slane %v8450, %v8463
    %v8465 = vcombine.low %v8442, %v8457
    %v8466 = vcombine.high %v8442, %v8457
    %v8468 = vunpack.c.l.s4 1934713408
    %v8469 = vunpack.c.0.s8 %v8468
    %v8470 = vlaneseq
    %v8471 = vshrl.u32 %v8470, 7
    %v8472 = vsub.s32 %v8469, %v8471
    %v8473 = vrot.slane %v8465, %v8472
    %v8475 = vunpack.c.l.s4 1934713408
    %v8476 = vunpack.c.0.s8 %v8475
    %v8477 = vlaneseq
    %v8478 = vshrl.u32 %v8477, 7
    %v8479 = vsub.s32 %v8476, %v8478
    %v8480 = vrot.slane %v8466, %v8479
    %v8481 = vcombine.low %v8449, %v8464
    %v8482 = vcombine.high %v8449, %v8464
    %v8484 = vunpack.c.l.s4 1934713408
    %v8485 = vunpack.c.0.s8 %v8484
    %v8486 = vlaneseq
    %v8487 = vshrl.u32 %v8486, 7
    %v8488 = vsub.s32 %v8485, %v8487
    %v8489 = vrot.slane %v8481, %v8488
    %v8491 = vunpack.c.l.s4 1934713408
    %v8492 = vunpack.c.0.s8 %v8491
    %v8493 = vlaneseq
    %v8494 = vshrl.u32 %v8493, 7
    %v8495 = vsub.s32 %v8492, %v8494
    %v8496 = vrot.slane %v8482, %v8495
    %v8497 = vcombine.high %v8473, 0.0
    %v8498 = vcombine.high %v8480, 0.0
    %v8499 = vcombine.high %v8489, 0.0
    %v8500 = vcombine.high %v8496, 0.0
    %v8501 = vcombine.high %v8030, 0.0
    %v8503 = vunpack.c.l.s4 1983009808
    %v8504 = vunpack.c.0.s8 %v8503
    %v8505 = vlaneseq
    %v8506 = vshrl.u32 %v8505, 7
    %v8507 = vsub.s32 %v8504, %v8506
    %v8508 = vrot.slane %v8030, %v8507
    %v8510 = vunpack.c.l.s4 1983009808
    %v8511 = vunpack.c.0.s8 %v8510
    %v8512 = vlaneseq
    %v8513 = vshrl.u32 %v8512, 7
    %v8514 = vsub.s32 %v8511, %v8513
    %v8515 = vrot.slane %v8501, %v8514
    %v8516 = vcombine.high %v8038, 0.0
    %v8518 = vunpack.c.l.s4 1983009808
    %v8519 = vunpack.c.0.s8 %v8518
    %v8520 = vlaneseq
    %v8521 = vshrl.u32 %v8520, 7
    %v8522 = vsub.s32 %v8519, %v8521
    %v8523 = vrot.slane %v8038, %v8522
    %v8525 = vunpack.c.l.s4 1983009808
    %v8526 = vunpack.c.0.s8 %v8525
    %v8527 = vlaneseq
    %v8528 = vshrl.u32 %v8527, 7
    %v8529 = vsub.s32 %v8526, %v8528
    %v8530 = vrot.slane %v8516, %v8529
    %v8531 = vcombine.low %v8508, %v8523
    %v8532 = vcombine.high %v8508, %v8523
    %v8534 = vunpack.c.l.s4 1934713408
    %v8535 = vunpack.c.0.s8 %v8534
    %v8536 = vlaneseq
    %v8537 = vshrl.u32 %v8536, 7
    %v8538 = vsub.s32 %v8535, %v8537
    %v8539 = vrot.slane %v8531, %v8538
    %v8541 = vunpack.c.l.s4 1934713408
    %v8542 = vunpack.c.0.s8 %v8541
    %v8543 = vlaneseq
    %v8544 = vshrl.u32 %v8543, 7
    %v8545 = vsub.s32 %v8542, %v8544
    %v8546 = vrot.slane %v8532, %v8545
    %v8547 = vcombine.low %v8515, %v8530
    %v8548 = vcombine.high %v8515, %v8530
    %v8550 = vunpack.c.l.s4 1934713408
    %v8551 = vunpack.c.0.s8 %v8550
    %v8552 = vlaneseq
    %v8553 = vshrl.u32 %v8552, 7
    %v8554 = vsub.s32 %v8551, %v8553
    %v8555 = vrot.slane %v8547, %v8554
    %v8557 = vunpack.c.l.s4 1934713408
    %v8558 = vunpack.c.0.s8 %v8557
    %v8559 = vlaneseq
    %v8560 = vshrl.u32 %v8559, 7
    %v8561 = vsub.s32 %v8558, %v8560
    %v8562 = vrot.slane %v8548, %v8561
    %v8563 = vcombine.high %v8539, 0.0
    %v8564 = vcombine.high %v8546, 0.0
    %v8565 = vcombine.high %v8555, 0.0
    %v8566 = vcombine.high %v8562, 0.0
    %8568 = vrot.lane.b32.xlu0 %v8101, 32
    %v8569 = vpop.permute.xlu0 %8568
    %8572 = vrot.lane.b32.xlu0 %v8084, 64
    %v8573 = vpop.permute.xlu0 %8572
    %8576 = vrot.lane.b32.xlu0 %v8102, 96
    %v8577 = vpop.permute.xlu0 %8576
    %8580 = vrot.lane.b32.xlu0 %v8103, 32
    %v8581 = vpop.permute.xlu0 %8580
    %8584 = vrot.lane.b32.xlu0 %v8100, 64
    %v8585 = vpop.permute.xlu0 %8584
    %8588 = vrot.lane.b32.xlu0 %v8104, 96
    %v8589 = vpop.permute.xlu0 %8588
    %8592 = vrot.lane.b32.xlu0 %v8167, 32
    %v8593 = vpop.permute.xlu0 %8592
    %8596 = vrot.lane.b32.xlu0 %v8150, 64
    %v8597 = vpop.permute.xlu0 %8596
    %8600 = vrot.lane.b32.xlu0 %v8168, 96
    %v8601 = vpop.permute.xlu0 %8600
    %8604 = vrot.lane.b32.xlu0 %v8169, 32
    %v8605 = vpop.permute.xlu0 %8604
    %8608 = vrot.lane.b32.xlu0 %v8166, 64
    %v8609 = vpop.permute.xlu0 %8608
    %8612 = vrot.lane.b32.xlu0 %v8170, 96
    %v8613 = vpop.permute.xlu0 %8612
    %8616 = vrot.lane.b32.xlu0 %v8233, 32
    %v8617 = vpop.permute.xlu0 %8616
    %8620 = vrot.lane.b32.xlu0 %v8216, 64
    %v8621 = vpop.permute.xlu0 %8620
    %8624 = vrot.lane.b32.xlu0 %v8234, 96
    %v8625 = vpop.permute.xlu0 %8624
    %8628 = vrot.lane.b32.xlu0 %v8235, 32
    %v8629 = vpop.permute.xlu0 %8628
    %8632 = vrot.lane.b32.xlu0 %v8232, 64
    %v8633 = vpop.permute.xlu0 %8632
    %8636 = vrot.lane.b32.xlu0 %v8236, 96
    %v8637 = vpop.permute.xlu0 %8636
    %8640 = vrot.lane.b32.xlu0 %v8299, 32
    %v8641 = vpop.permute.xlu0 %8640
    %8644 = vrot.lane.b32.xlu0 %v8282, 64
    %v8645 = vpop.permute.xlu0 %8644
    %8648 = vrot.lane.b32.xlu0 %v8300, 96
    %v8649 = vpop.permute.xlu0 %8648
    %8652 = vrot.lane.b32.xlu0 %v8301, 32
    %v8653 = vpop.permute.xlu0 %8652
    %8656 = vrot.lane.b32.xlu0 %v8298, 64
    %v8657 = vpop.permute.xlu0 %8656
    %8660 = vrot.lane.b32.xlu0 %v8302, 96
    %v8661 = vpop.permute.xlu0 %8660
    %8664 = vrot.lane.b32.xlu0 %v8365, 32
    %v8665 = vpop.permute.xlu0 %8664
    %8668 = vrot.lane.b32.xlu0 %v8348, 64
    %v8669 = vpop.permute.xlu0 %8668
    %8672 = vrot.lane.b32.xlu0 %v8366, 96
    %v8673 = vpop.permute.xlu0 %8672
    %8676 = vrot.lane.b32.xlu0 %v8367, 32
    %v8677 = vpop.permute.xlu0 %8676
    %8680 = vrot.lane.b32.xlu0 %v8364, 64
    %v8681 = vpop.permute.xlu0 %8680
    %8684 = vrot.lane.b32.xlu0 %v8368, 96
    %v8685 = vpop.permute.xlu0 %8684
    %8688 = vrot.lane.b32.xlu0 %v8431, 32
    %v8689 = vpop.permute.xlu0 %8688
    %8692 = vrot.lane.b32.xlu0 %v8414, 64
    %v8693 = vpop.permute.xlu0 %8692
    %8696 = vrot.lane.b32.xlu0 %v8432, 96
    %v8697 = vpop.permute.xlu0 %8696
    %8700 = vrot.lane.b32.xlu0 %v8433, 32
    %v8701 = vpop.permute.xlu0 %8700
    %8704 = vrot.lane.b32.xlu0 %v8430, 64
    %v8705 = vpop.permute.xlu0 %8704
    %8708 = vrot.lane.b32.xlu0 %v8434, 96
    %v8709 = vpop.permute.xlu0 %8708
    %8712 = vrot.lane.b32.xlu0 %v8497, 32
    %v8713 = vpop.permute.xlu0 %8712
    %8716 = vrot.lane.b32.xlu0 %v8480, 64
    %v8717 = vpop.permute.xlu0 %8716
    %8720 = vrot.lane.b32.xlu0 %v8498, 96
    %v8721 = vpop.permute.xlu0 %8720
    %8724 = vrot.lane.b32.xlu0 %v8499, 32
    %v8725 = vpop.permute.xlu0 %8724
    %8728 = vrot.lane.b32.xlu0 %v8496, 64
    %v8729 = vpop.permute.xlu0 %8728
    %8732 = vrot.lane.b32.xlu0 %v8500, 96
    %v8733 = vpop.permute.xlu0 %8732
    %8736 = vrot.lane.b32.xlu0 %v8563, 32
    %v8737 = vpop.permute.xlu0 %8736
    %8740 = vrot.lane.b32.xlu0 %v8546, 64
    %v8741 = vpop.permute.xlu0 %8740
    %8744 = vrot.lane.b32.xlu0 %v8564, 96
    %v8745 = vpop.permute.xlu0 %8744
    %8748 = vrot.lane.b32.xlu0 %v8565, 32
    %v8749 = vpop.permute.xlu0 %8748
    %8752 = vrot.lane.b32.xlu0 %v8562, 64
    %v8753 = vpop.permute.xlu0 %8752
    %8756 = vrot.lane.b32.xlu0 %v8566, 96
    %v8757 = vpop.permute.xlu0 %8756
    %v8759 = vsel %vm101, %v8077, %v8569
    %v8760 = vsel %vm5870, %v8759, %v8573
    %vm8761 = vcmask 785408
    %v8762 = vsel %vm8761, %v8760, %v8577
    %v8763 = vsel %vm101, %v8093, %v8581
    %v8764 = vsel %vm5870, %v8763, %v8585
    %v8765 = vsel %vm8761, %v8764, %v8589
    %v8766 = vsel %vm101, %v8143, %v8593
    %v8767 = vsel %vm5870, %v8766, %v8597
    %v8768 = vsel %vm8761, %v8767, %v8601
    %v8769 = vsel %vm101, %v8159, %v8605
    %v8770 = vsel %vm5870, %v8769, %v8609
    %v8771 = vsel %vm8761, %v8770, %v8613
    %v8772 = vsel %vm101, %v8209, %v8617
    %v8773 = vsel %vm5870, %v8772, %v8621
    %v8774 = vsel %vm8761, %v8773, %v8625
    %v8775 = vsel %vm101, %v8225, %v8629
    %v8776 = vsel %vm5870, %v8775, %v8633
    %v8777 = vsel %vm8761, %v8776, %v8637
    %v8778 = vsel %vm101, %v8275, %v8641
    %v8779 = vsel %vm5870, %v8778, %v8645
    %v8780 = vsel %vm8761, %v8779, %v8649
    %v8781 = vsel %vm101, %v8291, %v8653
    %v8782 = vsel %vm5870, %v8781, %v8657
    %v8783 = vsel %vm8761, %v8782, %v8661
    %v8784 = vsel %vm101, %v8341, %v8665
    %v8785 = vsel %vm5870, %v8784, %v8669
    %v8786 = vsel %vm8761, %v8785, %v8673
    %v8787 = vsel %vm101, %v8357, %v8677
    %v8788 = vsel %vm5870, %v8787, %v8681
    %v8789 = vsel %vm8761, %v8788, %v8685
    %v8790 = vsel %vm101, %v8407, %v8689
    %v8791 = vsel %vm5870, %v8790, %v8693
    %v8792 = vsel %vm8761, %v8791, %v8697
    %v8793 = vsel %vm101, %v8423, %v8701
    %v8794 = vsel %vm5870, %v8793, %v8705
    %v8795 = vsel %vm8761, %v8794, %v8709
    %v8796 = vsel %vm101, %v8473, %v8713
    %v8797 = vsel %vm5870, %v8796, %v8717
    %v8798 = vsel %vm8761, %v8797, %v8721
    %v8799 = vsel %vm101, %v8489, %v8725
    %v8800 = vsel %vm5870, %v8799, %v8729
    %v8801 = vsel %vm8761, %v8800, %v8733
    %v8802 = vsel %vm101, %v8539, %v8737
    %v8803 = vsel %vm5870, %v8802, %v8741
    %v8804 = vsel %vm8761, %v8803, %v8745
    %v8805 = vsel %vm101, %v8555, %v8749
    %v8806 = vsel %vm5870, %v8805, %v8753
    %v8807 = vsel %vm8761, %v8806, %v8757
    %v8824 = vcombine.low %v8762, %v8765
    %v8825 = vcombine.low %v8768, %v8771
    %v8827 = vunpack.c.l.s4 1983009808
    %v8828 = vunpack.c.0.s8 %v8827
    %v8829 = vlaneseq
    %v8830 = vshrl.u32 %v8829, 7
    %v8831 = vsub.s32 %v8828, %v8830
    %v8832 = vrot.slane %v8824, %v8831
    %v8834 = vunpack.c.l.s4 1983009808
    %v8835 = vunpack.c.0.s8 %v8834
    %v8836 = vlaneseq
    %v8837 = vshrl.u32 %v8836, 7
    %v8838 = vsub.s32 %v8835, %v8837
    %v8839 = vrot.slane %v8825, %v8838
    %v8840 = vcombine.low %v8832, %v8839
    %v8841 = vcombine.low %v8774, %v8777
    %v8842 = vcombine.low %v8780, %v8783
    %v8844 = vunpack.c.l.s4 1983009808
    %v8845 = vunpack.c.0.s8 %v8844
    %v8846 = vlaneseq
    %v8847 = vshrl.u32 %v8846, 7
    %v8848 = vsub.s32 %v8845, %v8847
    %v8849 = vrot.slane %v8841, %v8848
    %v8851 = vunpack.c.l.s4 1983009808
    %v8852 = vunpack.c.0.s8 %v8851
    %v8853 = vlaneseq
    %v8854 = vshrl.u32 %v8853, 7
    %v8855 = vsub.s32 %v8852, %v8854
    %v8856 = vrot.slane %v8842, %v8855
    %v8857 = vcombine.low %v8849, %v8856
    %v8858 = vcombine.low %v8786, %v8789
    %v8859 = vcombine.low %v8792, %v8795
    %v8861 = vunpack.c.l.s4 1983009808
    %v8862 = vunpack.c.0.s8 %v8861
    %v8863 = vlaneseq
    %v8864 = vshrl.u32 %v8863, 7
    %v8865 = vsub.s32 %v8862, %v8864
    %v8866 = vrot.slane %v8858, %v8865
    %v8868 = vunpack.c.l.s4 1983009808
    %v8869 = vunpack.c.0.s8 %v8868
    %v8870 = vlaneseq
    %v8871 = vshrl.u32 %v8870, 7
    %v8872 = vsub.s32 %v8869, %v8871
    %v8873 = vrot.slane %v8859, %v8872
    %v8874 = vcombine.low %v8866, %v8873
    %v8875 = vcombine.low %v8798, %v8801
    %v8876 = vcombine.low %v8804, %v8807
    %v8878 = vunpack.c.l.s4 1983009808
    %v8879 = vunpack.c.0.s8 %v8878
    %v8880 = vlaneseq
    %v8881 = vshrl.u32 %v8880, 7
    %v8882 = vsub.s32 %v8879, %v8881
    %v8883 = vrot.slane %v8875, %v8882
    %v8885 = vunpack.c.l.s4 1983009808
    %v8886 = vunpack.c.0.s8 %v8885
    %v8887 = vlaneseq
    %v8888 = vshrl.u32 %v8887, 7
    %v8889 = vsub.s32 %v8886, %v8888
    %v8890 = vrot.slane %v8876, %v8889
    %v8891 = vcombine.low %v8883, %v8890
    %8896 = vst [vmem:[#allocation2] sm:$0xff] %v8840
    %8897 = vst [vmem:[#allocation2 + $0x8] sm:$0xff] %v8857
    %8898 = vst [vmem:[#allocation2 + $0x10] sm:$0xff] %v8874
    %8899 = vst [vmem:[#allocation2 + $0x18] sm:$0xff] %v8891
    // Predicated region
    $region22: #{tpu_custom_call.1} parent=1 // pred_check
      _
    $region23: #{tpu_custom_call.1} parent=1 // pred_check_branch
      %8901 = sbr.rel (0) target = $region25
    $region24: #{tpu_custom_call.1} parent=1 // pred_region
      %s8903 = ssub.s32 512, 512
      %8904 = vsyncadd [#allocation3], %s8903
      %s8906 = sshll.u32 [#allocation2], 4
      %s8907 = int_to_ptr.vmem [resolvable:$true] %s8906
      %8909 = dma.vmem_to_hbm [thread:$0]  %s8907, 512, %s5, [#allocation3]
    $region25: #{tpu_custom_call.1} parent=1 // pred_fallthru
      _
    // Predicated region
    $region26: #{tpu_custom_call.1} parent=1 // pred_check
      _
    $region27: #{tpu_custom_call.1} parent=1 // pred_check_branch
      %8911 = sbr.rel (0) target = $region29
    $region28: #{tpu_custom_call.1} parent=1 // pred_region
      %8912 = dma.done [#allocation3], 512
    $region29: #{tpu_custom_call.1} parent=1 // pred_fallthru
      _
    %8913 = vsyncpa [#allocation3], 1

</llo_original>
